<compile_context>
chip_gen: v7x
topology: tpu7x:2x2x1
jax: 0.10.0
libtpu: 0.0.40
codegen_flags: <defaults>
</compile_context>

<pallas_src>
import jax
import jax.numpy as jnp
from jax.experimental import pallas as pl
from jax.experimental.pallas import tpu as pltpu


# (kh, kw, stride, pad) per conv layer — defined ONCE (previous version had a
# duplicate definition that silently shadowed the first).
CONV_CFG = ((5, 5, 2, 2), (3, 3, 2, 1), (3, 3, 2, 1), (3, 3, 1, 1))
HIDDEN = (16, 32, 64, 32)
BN_EPS = 1e-5


# ----------------------------------------------------------------------------
# Pallas kernel 1: fused conv-as-matmul (BN + bias folded), lane-dense output.
#   w_ref: (Cout, Kp) bf16   x_ref: (Kp, tm) bf16   b_ref: (Cout, 1) f32
#   o_ref: (Cout, tm) bf16
# ----------------------------------------------------------------------------
def _conv_mm_kernel(w_ref, x_ref, b_ref, o_ref):
    acc = jnp.dot(w_ref[...], x_ref[...], preferred_element_type=jnp.float32)
    o_ref[...] = jnp.maximum(acc + b_ref[...], 0.0).astype(o_ref.dtype)


def _pick_tm(m):
    # Largest tile that divides M while keeping >= 2 grid steps (so the
    # parallel axis can shard across 2 TCs on v7x); otherwise take all of M.
    # Largest block here is (128..640, 8192) bf16 -> <= ~5 MiB double-buffered,
    # well inside the scoped-VMEM default on v5e (16 MiB) / v6e / v7x (32 MiB).
    for cand in (8192, 4096, 2048, 1024, 512, 256, 128):
        if m % cand == 0 and m // cand >= 2:
            return cand
    return m


def conv_matmul(w, x, b):
    """w: (Cout, Kp) bf16, x: (Kp, M) bf16, b: (Cout, 1) f32 -> (Cout, M) bf16."""
    cout, kp = w.shape
    kp2, m = x.shape
    assert kp == kp2
    tm = _pick_tm(m)
    assert m % tm == 0, (m, tm)
    return pl.pallas_call(
        _conv_mm_kernel,
        out_shape=jax.ShapeDtypeStruct((cout, m), jnp.bfloat16),
        grid=(m // tm,),
        in_specs=[
            pl.BlockSpec((cout, kp), lambda i: (0, 0)),   # weights: resident
            pl.BlockSpec((kp, tm), lambda i: (0, i)),     # patches: streamed
            pl.BlockSpec((cout, 1), lambda i: (0, 0)),    # folded bias: resident
        ],
        out_specs=pl.BlockSpec((cout, tm), lambda i: (0, i)),
        compiler_params=pltpu.CompilerParams(
            dimension_semantics=("parallel",)),
    )(w, x, b)


# ----------------------------------------------------------------------------
# Pallas kernel 2: merged fc1(+ReLU) + fc2 head in a single launch.
#   xt: (F, N) bf16   w1: (64, F) bf16   b1: (64, 1) f32
#   w2: (C, 64) f32   b2: (C, 1) f32     out: (C, N) f32
# ----------------------------------------------------------------------------
def _fc_fused_kernel(xt_ref, w1_ref, b1_ref, w2_ref, b2_ref, o_ref):
    h = jnp.dot(w1_ref[...], xt_ref[...], preferred_element_type=jnp.float32)
    h = jnp.maximum(h + b1_ref[...], 0.0)
    # TODO(synk): Dropout(0.4) is identity in inference mode (no RNG applied).
    out = jnp.dot(w2_ref[...], h, preferred_element_type=jnp.float32)
    o_ref[...] = out + b2_ref[...]


def fc_head(xt, w1, b1, w2, b2):
    out_classes = w2.shape[0]
    n = xt.shape[1]
    out_t = pl.pallas_call(
        _fc_fused_kernel,
        out_shape=jax.ShapeDtypeStruct((out_classes, n), jnp.float32),
    )(xt, w1, b1, w2, b2)
    return out_t.T  # (N, out_classes); tiny


# ----------------------------------------------------------------------------
# Glue: transposed im2col.  Input/activations are (C, N, H, W); patches come
# out directly in the kernel's (K, M) layout (cin-major, then kh, kw — same
# flattening PyTorch uses for Conv2d weights), with no large 6-D permute.
# ----------------------------------------------------------------------------
def im2col_t(x, kh, kw, stride, pad, k_pad):
    c, n, h, w = x.shape
    oh = (h + 2 * pad - kh) // stride + 1
    ow = (w + 2 * pad - kw) // stride + 1
    xp = jnp.pad(x, ((0, 0), (0, 0), (pad, pad), (pad, pad)))
    taps = []
    for i in range(kh):
        for j in range(kw):
            taps.append(
                xp[:, :, i:i + stride * oh:stride, j:j + stride * ow:stride])
    # (C, KH*KW, N, OH, OW) -> (C*KH*KW, N*OH*OW); trailing dims stay contiguous.
    p = jnp.stack(taps, axis=1).reshape(c * kh * kw, n * oh * ow)
    k = c * kh * kw
    if k_pad > k:  # zero-pad contraction dim to a multiple of 128 (free zeros)
        p = jnp.concatenate(
            [p, jnp.zeros((k_pad - k, n * oh * ow), p.dtype)], axis=0)
    return p, oh, ow


def conv_block(x_cnhw, w_folded, b_folded, cfg):
    kh, kw, stride, pad = cfg
    _, n, _, _ = x_cnhw.shape
    patches, oh, ow = im2col_t(x_cnhw, kh, kw, stride, pad, w_folded.shape[1])
    out_t = conv_matmul(w_folded, patches, b_folded)      # (Cout, N*OH*OW)
    return out_t.reshape(w_folded.shape[0], n, oh, ow)    # (Cout, N, OH, OW)


def maxpool2x2(x):
    # Operates directly in the kernel's (C, N, H, W) layout — no permutes.
    # TODO(synk): could be fused into the conv kernel epilogue (XLU slot).
    c, n, h, w = x.shape
    return x.reshape(c, n, h // 2, 2, w // 2, 2).max(axis=(3, 5))


# ----------------------------------------------------------------------------
# Parameters: synthetic raw params (matching nn.Module init structure), then a
# one-time prep step that folds BatchNorm (eval mode) + bias into the conv
# weights, zero-pads K to a multiple of 128, and casts MXU operands to bf16.
# ----------------------------------------------------------------------------
def init_params(key, in_channels=3, out_classes=2):
    chans = (in_channels,) + HIDDEN
    keys = jax.random.split(key, 12)
    params = {"convs": [], "bns": []}
    k = 0
    for li in range(4):
        cin, cout = chans[li], chans[li + 1]
        kh, kw, _, _ = CONV_CFG[li]
        w = jax.random.normal(keys[k], (cout, cin, kh, kw), jnp.float32) * 0.05
        k += 1
        b = jax.random.normal(keys[k], (cout,), jnp.float32) * 0.01
        k += 1
        params["convs"].append((w, b))
        # BatchNorm2d default init, eval mode.
        params["bns"].append((
            jnp.ones((cout,), jnp.float32),    # gamma
            jnp.zeros((cout,), jnp.float32),   # beta
            jnp.zeros((cout,), jnp.float32),   # running_mean
            jnp.ones((cout,), jnp.float32),    # running_var
        ))
    w1 = jax.random.normal(keys[k], (64, HIDDEN[-1] * 4 * 4), jnp.float32) * 0.05
    k += 1
    b1 = jax.random.normal(keys[k], (64,), jnp.float32) * 0.01
    k += 1
    w2 = jax.random.normal(keys[k], (out_classes, 64), jnp.float32) * 0.05
    k += 1
    b2 = jax.random.normal(keys[k], (out_classes,), jnp.float32) * 0.01
    params["fc1"] = (w1, b1)
    params["fc2"] = (w2, b2)
    return params


def prepare_params(raw, eps=BN_EPS):
    prep = {"convs": []}
    for (w, b), (gamma, beta, mean, var) in zip(raw["convs"], raw["bns"]):
        cout, cin, kh, kw = w.shape
        k = cin * kh * kw
        kp = ((k + 127) // 128) * 128
        scale = gamma * jax.lax.rsqrt(var + eps)
        shift = beta - mean * scale
        wf = (w * scale[:, None, None, None]).reshape(cout, k)
        wf = jnp.pad(wf, ((0, 0), (0, kp - k))).astype(jnp.bfloat16)
        bf = (b * scale + shift).reshape(cout, 1).astype(jnp.float32)
        prep["convs"].append((wf, bf))
    w1, b1 = raw["fc1"]
    w2, b2 = raw["fc2"]
    prep["fc1"] = (w1.astype(jnp.bfloat16), b1.reshape(-1, 1).astype(jnp.float32))
    prep["fc2"] = (w2.astype(jnp.float32), b2.reshape(-1, 1).astype(jnp.float32))
    return prep


# ----------------------------------------------------------------------------
# Forward pass
# ----------------------------------------------------------------------------
def convnet_forward(params, x):
    # NCHW -> (C, N, H, W) once; activations stay in the kernel's channel-major
    # layout (bf16) until the final flatten.
    x = jnp.transpose(x, (1, 0, 2, 3)).astype(jnp.bfloat16)
    for li in range(4):
        wf, bf = params["convs"][li]
        x = conv_block(x, wf, bf, CONV_CFG[li])
        if li < 3:
            x = maxpool2x2(x)
    # Flatten to torch's (N, C*H*W) feature order, presented transposed as
    # (C*H*W, N) for the fused FC head (tiny tensor: 512 x N).
    c, n, h, w = x.shape
    xt = jnp.transpose(x, (0, 2, 3, 1)).reshape(c * h * w, n)
    w1, b1 = params["fc1"]
    w2, b2 = params["fc2"]
    return fc_head(xt, w1, b1, w2, b2)


if __name__ == "__main__":
    key = jax.random.PRNGKey(0)
    pkey, xkey = jax.random.split(key)
    raw_params = init_params(pkey, in_channels=3, out_classes=2)
    params = prepare_params(raw_params)
    # fc1 expects 32*4*4 = 512 flattened features => input spatial must be 256.
    x = jax.random.normal(xkey, (2, 3, 256, 256), jnp.float32)
    fwd = jax.jit(convnet_forward)
    out = jax.block_until_ready(fwd(params, x))
    assert out.shape == (2, 2), out.shape
    print("KERNEL_OK")
</pallas_src>

<mosaic_0001>
module attributes {stable_mosaic.version = 11 : i64} {
  func.func @_conv_mm_kernel(%arg0: i32, %arg1: memref<16x128xbf16, #tpu.memory_space<vmem>>, %arg2: memref<128x8192xbf16, #tpu.memory_space<vmem>>, %arg3: memref<16x1xf32, #tpu.memory_space<vmem>>, %arg4: memref<16x8192xbf16, #tpu.memory_space<vmem>>) attributes {dimension_semantics = [#tpu.dimension_semantics<parallel>], iteration_bounds = array<i64: 4>, scalar_prefetch = 0 : i64, scratch_operands = 0 : i64, tpu.core_type = #tpu.core_type<tc>, window_params = [{pipeline_mode = #tpu.pipeline_mode<synchronous>, transform_indices = @transform_0, window_bounds = array<i64: 16, 128>}, {transform_indices = @transform_1, window_bounds = array<i64: 128, 8192>}, {pipeline_mode = #tpu.pipeline_mode<synchronous>, transform_indices = @transform_2, window_bounds = array<i64: 16, 1>}, {transform_indices = @transform_3, window_bounds = array<i64: 16, 8192>}]} {
    %c0 = arith.constant 0 : index
    %c0_0 = arith.constant 0 : index
    %0 = vector.load %arg1[%c0, %c0_0] : memref<16x128xbf16, #tpu.memory_space<vmem>>, vector<16x128xbf16>
    %c0_1 = arith.constant 0 : index
    %c0_2 = arith.constant 0 : index
    %1 = vector.load %arg2[%c0_1, %c0_2] : memref<128x8192xbf16, #tpu.memory_space<vmem>>, vector<128x8192xbf16>
    %cst = arith.constant dense<0.000000e+00> : vector<16x8192xf32>
    %2 = tpu.matmul %0, %1, %cst {dimension_numbers = #tpu.dot_dimension_numbers<[1], [0], [0], [1], [0, 0, 1, 1], [], []>} : vector<16x128xbf16>, vector<128x8192xbf16>, vector<16x8192xf32> -> vector<16x8192xf32>
    %c0_3 = arith.constant 0 : index
    %c0_4 = arith.constant 0 : index
    %3 = vector.load %arg3[%c0_3, %c0_4] : memref<16x1xf32, #tpu.memory_space<vmem>>, vector<16x1xf32>
    %4 = vector.broadcast %3 : vector<16x1xf32> to vector<16x8192xf32>
    %5 = arith.addf %2, %4 : vector<16x8192xf32>
    %cst_5 = arith.constant 0.000000e+00 : f32
    %6 = vector.broadcast %cst_5 : f32 to vector<16x8192xf32>
    %7 = arith.maximumf %5, %6 : vector<16x8192xf32>
    %8 = arith.truncf %7 : vector<16x8192xf32> to vector<16x8192xbf16>
    %c0_6 = arith.constant 0 : index
    %c0_7 = arith.constant 0 : index
    %9 = vector.load %arg4[%c0_6, %c0_7] : memref<16x8192xbf16, #tpu.memory_space<vmem>>, vector<16x8192xbf16>
    tpu.vector_store %arg4[%c0_6, %c0_7], %8 {strides = array<i32>} : memref<16x8192xbf16, #tpu.memory_space<vmem>>, vector<16x8192xbf16>,
    return
  }
  func.func @transform_0(%arg0: i32) -> (i32, i32) {
    %c0_i32 = arith.constant 0 : i32
    %c0_i32_0 = arith.constant 0 : i32
    %c0_i32_1 = arith.constant 0 : i32
    return %c0_i32, %c0_i32_0 : i32, i32
  }
  func.func @transform_1(%arg0: i32) -> (i32, i32) {
    %c0_i32 = arith.constant 0 : i32
    %c0_i32_0 = arith.constant 0 : i32
    return %c0_i32, %arg0 : i32, i32
  }
  func.func @transform_2(%arg0: i32) -> (i32, i32) {
    %c0_i32 = arith.constant 0 : i32
    %c0_i32_0 = arith.constant 0 : i32
    %c0_i32_1 = arith.constant 0 : i32
    return %c0_i32, %c0_i32_0 : i32, i32
  }
  func.func @transform_3(%arg0: i32) -> (i32, i32) {
    %c0_i32 = arith.constant 0 : i32
    %c0_i32_0 = arith.constant 0 : i32
    return %c0_i32, %arg0 : i32, i32
  }
}

module attributes {stable_mosaic.version = 11 : i64} {
  func.func @_conv_mm_kernel(%arg0: i32, %arg1: memref<32x256xbf16, #tpu.memory_space<vmem>>, %arg2: memref<256x1024xbf16, #tpu.memory_space<vmem>>, %arg3: memref<32x1xf32, #tpu.memory_space<vmem>>, %arg4: memref<32x1024xbf16, #tpu.memory_space<vmem>>) attributes {dimension_semantics = [#tpu.dimension_semantics<parallel>], iteration_bounds = array<i64: 2>, scalar_prefetch = 0 : i64, scratch_operands = 0 : i64, tpu.core_type = #tpu.core_type<tc>, window_params = [{pipeline_mode = #tpu.pipeline_mode<synchronous>, transform_indices = @transform_0, window_bounds = array<i64: 32, 256>}, {transform_indices = @transform_1, window_bounds = array<i64: 256, 1024>}, {pipeline_mode = #tpu.pipeline_mode<synchronous>, transform_indices = @transform_2, window_bounds = array<i64: 32, 1>}, {transform_indices = @transform_3, window_bounds = array<i64: 32, 1024>}]} {
    %c0 = arith.constant 0 : index
    %c0_0 = arith.constant 0 : index
    %0 = vector.load %arg1[%c0, %c0_0] : memref<32x256xbf16, #tpu.memory_space<vmem>>, vector<32x256xbf16>
    %c0_1 = arith.constant 0 : index
    %c0_2 = arith.constant 0 : index
    %1 = vector.load %arg2[%c0_1, %c0_2] : memref<256x1024xbf16, #tpu.memory_space<vmem>>, vector<256x1024xbf16>
    %cst = arith.constant dense<0.000000e+00> : vector<32x1024xf32>
    %2 = tpu.matmul %0, %1, %cst {dimension_numbers = #tpu.dot_dimension_numbers<[1], [0], [0], [1], [0, 0, 1, 1], [], []>} : vector<32x256xbf16>, vector<256x1024xbf16>, vector<32x1024xf32> -> vector<32x1024xf32>
    %c0_3 = arith.constant 0 : index
    %c0_4 = arith.constant 0 : index
    %3 = vector.load %arg3[%c0_3, %c0_4] : memref<32x1xf32, #tpu.memory_space<vmem>>, vector<32x1xf32>
    %4 = vector.broadcast %3 : vector<32x1xf32> to vector<32x1024xf32>
    %5 = arith.addf %2, %4 : vector<32x1024xf32>
    %cst_5 = arith.constant 0.000000e+00 : f32
    %6 = vector.broadcast %cst_5 : f32 to vector<32x1024xf32>
    %7 = arith.maximumf %5, %6 : vector<32x1024xf32>
    %8 = arith.truncf %7 : vector<32x1024xf32> to vector<32x1024xbf16>
    %c0_6 = arith.constant 0 : index
    %c0_7 = arith.constant 0 : index
    %9 = vector.load %arg4[%c0_6, %c0_7] : memref<32x1024xbf16, #tpu.memory_space<vmem>>, vector<32x1024xbf16>
    tpu.vector_store %arg4[%c0_6, %c0_7], %8 {strides = array<i32>} : memref<32x1024xbf16, #tpu.memory_space<vmem>>, vector<32x1024xbf16>,
    return
  }
  func.func @transform_0(%arg0: i32) -> (i32, i32) {
    %c0_i32 = arith.constant 0 : i32
    %c0_i32_0 = arith.constant 0 : i32
    %c0_i32_1 = arith.constant 0 : i32
    return %c0_i32, %c0_i32_0 : i32, i32
  }
  func.func @transform_1(%arg0: i32) -> (i32, i32) {
    %c0_i32 = arith.constant 0 : i32
    %c0_i32_0 = arith.constant 0 : i32
    return %c0_i32, %arg0 : i32, i32
  }
  func.func @transform_2(%arg0: i32) -> (i32, i32) {
    %c0_i32 = arith.constant 0 : i32
    %c0_i32_0 = arith.constant 0 : i32
    %c0_i32_1 = arith.constant 0 : i32
    return %c0_i32, %c0_i32_0 : i32, i32
  }
  func.func @transform_3(%arg0: i32) -> (i32, i32) {
    %c0_i32 = arith.constant 0 : i32
    %c0_i32_0 = arith.constant 0 : i32
    return %c0_i32, %arg0 : i32, i32
  }
}

module attributes {stable_mosaic.version = 11 : i64} {
  func.func @_conv_mm_kernel(%arg0: i32, %arg1: memref<64x384xbf16, #tpu.memory_space<vmem>>, %arg2: memref<384x128xbf16, #tpu.memory_space<vmem>>, %arg3: memref<64x1xf32, #tpu.memory_space<vmem>>, %arg4: memref<64x128xbf16, #tpu.memory_space<vmem>>) attributes {dimension_semantics = [#tpu.dimension_semantics<parallel>], iteration_bounds = array<i64: 1>, scalar_prefetch = 0 : i64, scratch_operands = 0 : i64, tpu.core_type = #tpu.core_type<tc>, window_params = [{pipeline_mode = #tpu.pipeline_mode<synchronous>, transform_indices = @transform_0, window_bounds = array<i64: 64, 384>}, {transform_indices = @transform_1, window_bounds = array<i64: 384, 128>}, {pipeline_mode = #tpu.pipeline_mode<synchronous>, transform_indices = @transform_2, window_bounds = array<i64: 64, 1>}, {transform_indices = @transform_3, window_bounds = array<i64: 64, 128>}]} {
    %c0 = arith.constant 0 : index
    %c0_0 = arith.constant 0 : index
    %0 = vector.load %arg1[%c0, %c0_0] : memref<64x384xbf16, #tpu.memory_space<vmem>>, vector<64x384xbf16>
    %c0_1 = arith.constant 0 : index
    %c0_2 = arith.constant 0 : index
    %1 = vector.load %arg2[%c0_1, %c0_2] : memref<384x128xbf16, #tpu.memory_space<vmem>>, vector<384x128xbf16>
    %cst = arith.constant dense<0.000000e+00> : vector<64x128xf32>
    %2 = tpu.matmul %0, %1, %cst {dimension_numbers = #tpu.dot_dimension_numbers<[1], [0], [0], [1], [0, 0, 1, 1], [], []>} : vector<64x384xbf16>, vector<384x128xbf16>, vector<64x128xf32> -> vector<64x128xf32>
    %c0_3 = arith.constant 0 : index
    %c0_4 = arith.constant 0 : index
    %3 = vector.load %arg3[%c0_3, %c0_4] : memref<64x1xf32, #tpu.memory_space<vmem>>, vector<64x1xf32>
    %4 = vector.broadcast %3 : vector<64x1xf32> to vector<64x128xf32>
    %5 = arith.addf %2, %4 : vector<64x128xf32>
    %cst_5 = arith.constant 0.000000e+00 : f32
    %6 = vector.broadcast %cst_5 : f32 to vector<64x128xf32>
    %7 = arith.maximumf %5, %6 : vector<64x128xf32>
    %8 = arith.truncf %7 : vector<64x128xf32> to vector<64x128xbf16>
    %c0_6 = arith.constant 0 : index
    %c0_7 = arith.constant 0 : index
    %9 = vector.load %arg4[%c0_6, %c0_7] : memref<64x128xbf16, #tpu.memory_space<vmem>>, vector<64x128xbf16>
    tpu.vector_store %arg4[%c0_6, %c0_7], %8 {strides = array<i32>} : memref<64x128xbf16, #tpu.memory_space<vmem>>, vector<64x128xbf16>,
    return
  }
  func.func @transform_0(%arg0: i32) -> (i32, i32) {
    %c0_i32 = arith.constant 0 : i32
    %c0_i32_0 = arith.constant 0 : i32
    %c0_i32_1 = arith.constant 0 : i32
    return %c0_i32, %c0_i32_0 : i32, i32
  }
  func.func @transform_1(%arg0: i32) -> (i32, i32) {
    %c0_i32 = arith.constant 0 : i32
    %c0_i32_0 = arith.constant 0 : i32
    return %c0_i32, %arg0 : i32, i32
  }
  func.func @transform_2(%arg0: i32) -> (i32, i32) {
    %c0_i32 = arith.constant 0 : i32
    %c0_i32_0 = arith.constant 0 : i32
    %c0_i32_1 = arith.constant 0 : i32
    return %c0_i32, %c0_i32_0 : i32, i32
  }
  func.func @transform_3(%arg0: i32) -> (i32, i32) {
    %c0_i32 = arith.constant 0 : i32
    %c0_i32_0 = arith.constant 0 : i32
    return %c0_i32, %arg0 : i32, i32
  }
}

module attributes {stable_mosaic.version = 11 : i64} {
  func.func @_conv_mm_kernel(%arg0: i32, %arg1: memref<32x640xbf16, #tpu.memory_space<vmem>>, %arg2: memref<640x32xbf16, #tpu.memory_space<vmem>>, %arg3: memref<32x1xf32, #tpu.memory_space<vmem>>, %arg4: memref<32x32xbf16, #tpu.memory_space<vmem>>) attributes {dimension_semantics = [#tpu.dimension_semantics<parallel>], iteration_bounds = array<i64: 1>, scalar_prefetch = 0 : i64, scratch_operands = 0 : i64, tpu.core_type = #tpu.core_type<tc>, window_params = [{pipeline_mode = #tpu.pipeline_mode<synchronous>, transform_indices = @transform_0, window_bounds = array<i64: 32, 640>}, {transform_indices = @transform_1, window_bounds = array<i64: 640, 32>}, {pipeline_mode = #tpu.pipeline_mode<synchronous>, transform_indices = @transform_2, window_bounds = array<i64: 32, 1>}, {transform_indices = @transform_3, window_bounds = array<i64: 32, 32>}]} {
    %c0 = arith.constant 0 : index
    %c0_0 = arith.constant 0 : index
    %0 = vector.load %arg1[%c0, %c0_0] : memref<32x640xbf16, #tpu.memory_space<vmem>>, vector<32x640xbf16>
    %c0_1 = arith.constant 0 : index
    %c0_2 = arith.constant 0 : index
    %1 = vector.load %arg2[%c0_1, %c0_2] : memref<640x32xbf16, #tpu.memory_space<vmem>>, vector<640x32xbf16>
    %cst = arith.constant dense<0.000000e+00> : vector<32x32xf32>
    %2 = tpu.matmul %0, %1, %cst {dimension_numbers = #tpu.dot_dimension_numbers<[1], [0], [0], [1], [0, 0, 1, 1], [], []>} : vector<32x640xbf16>, vector<640x32xbf16>, vector<32x32xf32> -> vector<32x32xf32>
    %c0_3 = arith.constant 0 : index
    %c0_4 = arith.constant 0 : index
    %3 = vector.load %arg3[%c0_3, %c0_4] : memref<32x1xf32, #tpu.memory_space<vmem>>, vector<32x1xf32>
    %4 = vector.broadcast %3 : vector<32x1xf32> to vector<32x32xf32>
    %5 = arith.addf %2, %4 : vector<32x32xf32>
    %cst_5 = arith.constant 0.000000e+00 : f32
    %6 = vector.broadcast %cst_5 : f32 to vector<32x32xf32>
    %7 = arith.maximumf %5, %6 : vector<32x32xf32>
    %8 = arith.truncf %7 : vector<32x32xf32> to vector<32x32xbf16>
    %c0_6 = arith.constant 0 : index
    %c0_7 = arith.constant 0 : index
    %9 = vector.load %arg4[%c0_6, %c0_7] : memref<32x32xbf16, #tpu.memory_space<vmem>>, vector<32x32xbf16>
    tpu.vector_store %arg4[%c0_6, %c0_7], %8 {strides = array<i32>} : memref<32x32xbf16, #tpu.memory_space<vmem>>, vector<32x32xbf16>,
    return
  }
  func.func @transform_0(%arg0: i32) -> (i32, i32) {
    %c0_i32 = arith.constant 0 : i32
    %c0_i32_0 = arith.constant 0 : i32
    %c0_i32_1 = arith.constant 0 : i32
    return %c0_i32, %c0_i32_0 : i32, i32
  }
  func.func @transform_1(%arg0: i32) -> (i32, i32) {
    %c0_i32 = arith.constant 0 : i32
    %c0_i32_0 = arith.constant 0 : i32
    return %c0_i32, %arg0 : i32, i32
  }
  func.func @transform_2(%arg0: i32) -> (i32, i32) {
    %c0_i32 = arith.constant 0 : i32
    %c0_i32_0 = arith.constant 0 : i32
    %c0_i32_1 = arith.constant 0 : i32
    return %c0_i32, %c0_i32_0 : i32, i32
  }
  func.func @transform_3(%arg0: i32) -> (i32, i32) {
    %c0_i32 = arith.constant 0 : i32
    %c0_i32_0 = arith.constant 0 : i32
    return %c0_i32, %arg0 : i32, i32
  }
}

module attributes {stable_mosaic.version = 11 : i64} {
  func.func @_fc_fused_kernel(%arg0: memref<512x2xbf16, #tpu.memory_space<vmem>>, %arg1: memref<64x512xbf16, #tpu.memory_space<vmem>>, %arg2: memref<64x1xf32, #tpu.memory_space<vmem>>, %arg3: memref<2x64xf32, #tpu.memory_space<vmem>>, %arg4: memref<2x1xf32, #tpu.memory_space<vmem>>, %arg5: memref<2x2xf32, #tpu.memory_space<vmem>>) attributes {dimension_semantics = [], scalar_prefetch = 0 : i64, scratch_operands = 0 : i64, tpu.core_type = #tpu.core_type<tc>} {
    %c0 = arith.constant 0 : index
    %c0_0 = arith.constant 0 : index
    %0 = vector.load %arg1[%c0, %c0_0] : memref<64x512xbf16, #tpu.memory_space<vmem>>, vector<64x512xbf16>
    %c0_1 = arith.constant 0 : index
    %c0_2 = arith.constant 0 : index
    %1 = vector.load %arg0[%c0_1, %c0_2] : memref<512x2xbf16, #tpu.memory_space<vmem>>, vector<512x2xbf16>
    %cst = arith.constant dense<0.000000e+00> : vector<64x2xf32>
    %2 = tpu.matmul %0, %1, %cst {dimension_numbers = #tpu.dot_dimension_numbers<[1], [0], [0], [1], [0, 0, 1, 1], [], []>} : vector<64x512xbf16>, vector<512x2xbf16>, vector<64x2xf32> -> vector<64x2xf32>
    %c0_3 = arith.constant 0 : index
    %c0_4 = arith.constant 0 : index
    %3 = vector.load %arg2[%c0_3, %c0_4] : memref<64x1xf32, #tpu.memory_space<vmem>>, vector<64x1xf32>
    %4 = vector.broadcast %3 : vector<64x1xf32> to vector<64x2xf32>
    %5 = arith.addf %2, %4 : vector<64x2xf32>
    %cst_5 = arith.constant 0.000000e+00 : f32
    %6 = vector.broadcast %cst_5 : f32 to vector<64x2xf32>
    %7 = arith.maximumf %5, %6 : vector<64x2xf32>
    %c0_6 = arith.constant 0 : index
    %c0_7 = arith.constant 0 : index
    %8 = vector.load %arg3[%c0_6, %c0_7] : memref<2x64xf32, #tpu.memory_space<vmem>>, vector<2x64xf32>
    %cst_8 = arith.constant dense<0.000000e+00> : vector<2x2xf32>
    %9 = tpu.matmul %8, %7, %cst_8 {dimension_numbers = #tpu.dot_dimension_numbers<[1], [0], [0], [1], [0, 0, 1, 1], [], []>} : vector<2x64xf32>, vector<64x2xf32>, vector<2x2xf32> -> vector<2x2xf32>
    %c0_9 = arith.constant 0 : index
    %c0_10 = arith.constant 0 : index
    %10 = vector.load %arg4[%c0_9, %c0_10] : memref<2x1xf32, #tpu.memory_space<vmem>>, vector<2x1xf32>
    %11 = vector.broadcast %10 : vector<2x1xf32> to vector<2x2xf32>
    %12 = arith.addf %9, %11 : vector<2x2xf32>
    %c0_11 = arith.constant 0 : index
    %c0_12 = arith.constant 0 : index
    %13 = vector.load %arg5[%c0_11, %c0_12] : memref<2x2xf32, #tpu.memory_space<vmem>>, vector<2x2xf32>
    tpu.vector_store %arg5[%c0_11, %c0_12], %12 {strides = array<i32>} : memref<2x2xf32, #tpu.memory_space<vmem>>, vector<2x2xf32>,
    return
  }
}

</mosaic_0001>

<llo_original>
// kernel: convnet_forward.5
$region0: #{convnet_forward.5}
  #allocation0 [shape = 'u32[]', space=smem, size = 0x4, offset = 0x4, fixed_abs, tag = 'smem constant byte address 0x4 - core index']
  #allocation1 [shape = 'u32[144,128]{1,0:T(1,128)}', space=vmem, size = 0x12000, scoped, tag = 'internal scratch']
  %s0 = inlined_call_operand.vmem [shape: bf16[16,128], index: 0, kind: input, shape index: {}]
  %s1 = inlined_call_operand.vmem [shape: bf16[128,32768], index: 1, kind: input, shape index: {}]
  %s2 = inlined_call_operand.vmem [shape: f32[16,1], index: 2, kind: input, shape index: {}]
  %s3 = inlined_call_operand.vmem [shape: bf16[16,32768], index: 3, kind: output, shape index: {}]
  %s4 = sld [smem:[#allocation0]]
  $region87: #{convnet_forward.5} parent=0
    _
  %s6 = ssub.s32 1, %s4
  %s7 = scalar_select 0, %s6, %s4
  $region1: #{convnet_forward.5} parent=0
    #allocation2 [shape = 'u8[4194304]{0}', space=vmem, size = 0x400000, scoped, tag = 'input window, operand 1']
    #allocation3 [shape = 'u8[524288]{0}', space=vmem, size = 0x80000, scoped, tag = 'output window, operand 0']
    loop: start=0, step=1, limit=6
    $region2: #{convnet_forward.5} parent=1 // loop_pre_header
      _
    $region3: #{convnet_forward.5} parent=1 // loop_header
      %s9 = sphi 0, %s13
      %p10 = scmp.ge.s32.totalorder %s9, 6
      %s17 = sphi 0, %s17
      %s19 = sphi 0, %s17
      %s20 = sphi 0, %s19
      %s34 = sphi 0, %s20
      %s40 = sphi 0, %s42
      %s43 = sphi 0, %s40
      %s44 = sphi 0, %s43
      %s60 = sphi 0, %s44
      %s64 = sphi 0, %s64
      %s66 = sphi 0, %s64
      %s67 = sphi 0, %s66
      %s81 = sphi 0, %s67
      %s87 = sphi 0, %s89
      %s90 = sphi 0, %s87
      %s91 = sphi 0, %s90
      %s107 = sphi 0, %s91
    $region4: #{convnet_forward.5} parent=1 // loop_header_branch
      %12 = sbr.rel (%p10) target = $region8
    $region5: #{convnet_forward.5} parent=1 // loop_body
      %s14 = ssub.s32 %s9, 1
      %s15 = ssub.s32 %s9, 2
      %s16 = sadd.s32 %s9, 1
      %s18 = sadd.s32 %s17, 1
      %p21 = scmp.eq.s32.totalorder %s9, 3
      %p22 = scmp.ne.s32.totalorder %s17, %s19
      %p23 = scmp.eq.s32.totalorder %s9, 0
      %p24 = por %p22, %p23
      %p25 = scmp.ne.s32.totalorder %s17, %s19
      %p26 = scmp.eq.s32.totalorder %s14, 3
      %p27 = por %p25, %p26
      %p28 = scmp.ne.s32.totalorder %s19, %s20
      %p29 = scmp.eq.s32.totalorder %s14, 0
      %p30 = por %p28, %p29
      %p31 = scmp.ne.s32.totalorder %s19, %s20
      %p32 = scmp.eq.s32.totalorder %s15, 3
      %p33 = por %p31, %p32
      %p35 = scmp.ne.s32.totalorder %s20, %s34
      %p36 = scmp.eq.s32.totalorder %s15, 0
      %p37 = por %p35, %p36
      %s38 = ssub.s32 %s9, %s16
      %p39 = scmp.eq.s32.totalorder %s38, 0
      %s41 = sadd.s32 %s40, 1
      %s42 = scalar_select %p39, %s40, %s41
      %p45 = pneg %p39
      %p46 = scmp.eq.s32.totalorder %s9, 3
      %p47 = por %p45, %p46
      %p48 = scmp.ne.s32.totalorder %s40, %s43
      %p49 = scmp.eq.s32.totalorder %s9, 0
      %p50 = por %p48, %p49
      %p51 = scmp.ne.s32.totalorder %s40, %s43
      %p52 = scmp.eq.s32.totalorder %s14, 3
      %p53 = por %p51, %p52
      %p54 = scmp.ne.s32.totalorder %s43, %s44
      %p55 = scmp.eq.s32.totalorder %s14, 0
      %p56 = por %p54, %p55
      %p57 = scmp.ne.s32.totalorder %s43, %s44
      %p58 = scmp.eq.s32.totalorder %s15, 3
      %p59 = por %p57, %p58
      %p61 = scmp.ne.s32.totalorder %s44, %s60
      %p62 = scmp.eq.s32.totalorder %s15, 0
      %p63 = por %p61, %p62
      %s65 = sadd.s32 %s64, 1
      %p68 = scmp.eq.s32.totalorder %s9, 3
      %p69 = scmp.ne.s32.totalorder %s64, %s66
      %p70 = scmp.eq.s32.totalorder %s9, 0
      %p71 = por %p69, %p70
      %p72 = scmp.ne.s32.totalorder %s64, %s66
      %p73 = scmp.eq.s32.totalorder %s14, 3
      %p74 = por %p72, %p73
      %p75 = scmp.ne.s32.totalorder %s66, %s67
      %p76 = scmp.eq.s32.totalorder %s14, 0
      %p77 = por %p75, %p76
      %p78 = scmp.ne.s32.totalorder %s66, %s67
      %p79 = scmp.eq.s32.totalorder %s15, 3
      %p80 = por %p78, %p79
      %p82 = scmp.ne.s32.totalorder %s67, %s81
      %p83 = scmp.eq.s32.totalorder %s15, 0
      %p84 = por %p82, %p83
      %s85 = ssub.s32 %s9, %s16
      %p86 = scmp.eq.s32.totalorder %s85, 0
      %s88 = sadd.s32 %s87, 1
      %s89 = scalar_select %p86, %s87, %s88
      %p92 = pneg %p86
      %p93 = scmp.eq.s32.totalorder %s9, 3
      %p94 = por %p92, %p93
      %p95 = scmp.ne.s32.totalorder %s87, %s90
      %p96 = scmp.eq.s32.totalorder %s9, 0
      %p97 = por %p95, %p96
      %p98 = scmp.ne.s32.totalorder %s87, %s90
      %p99 = scmp.eq.s32.totalorder %s14, 3
      %p100 = por %p98, %p99
      %p101 = scmp.ne.s32.totalorder %s90, %s91
      %p102 = scmp.eq.s32.totalorder %s14, 0
      %p103 = por %p101, %p102
      %p104 = scmp.ne.s32.totalorder %s90, %s91
      %p105 = scmp.eq.s32.totalorder %s15, 3
      %p106 = por %p104, %p105
      %p108 = scmp.ne.s32.totalorder %s91, %s107
      %p109 = scmp.eq.s32.totalorder %s15, 0
      %p110 = por %p108, %p109
      %p111 = scmp.le.s32.totalorder 1, %s9
      %p112 = scmp.lt.s32.totalorder %s9, 5
      %p113 = pnand %p111, %p112
      %p114 = pneg %p113
      // Predicated region
      $region9: #{convnet_forward.5} parent=5 // pred_check
        _
      $region10: #{convnet_forward.5} parent=5 // pred_check_branch
        %116 = sbr.rel (%p113) target = $region12
      $region11: #{convnet_forward.5} parent=5 // pred_region
        %s117 = ssub.s32 %s9, 1
        // Predicated region
        $region13: #{convnet_forward.5} parent=11 // pred_check
          %p118 = pneg %p30
        $region14: #{convnet_forward.5} parent=11 // pred_check_branch
          %120 = sbr.rel (%p118) target = $region16
        $region15: #{convnet_forward.5} parent=11 // pred_region
          _
        $region16: #{convnet_forward.5} parent=11 // pred_fallthru
          _
        // Predicated region
        $region17: #{convnet_forward.5} parent=11 // pred_check
          %p121 = pneg %p77
        $region18: #{convnet_forward.5} parent=11 // pred_check_branch
          %123 = sbr.rel (%p121) target = $region20
        $region19: #{convnet_forward.5} parent=11 // pred_region
          _
        $region20: #{convnet_forward.5} parent=11 // pred_fallthru
          _
      $region12: #{convnet_forward.5} parent=5 // pred_fallthru
        _
      %p124 = scmp.lt.s32.totalorder %s9, 4
      // Predicated region
      $region21: #{convnet_forward.5} parent=5 // pred_check
        %p125 = pneg %p124
      $region22: #{convnet_forward.5} parent=5 // pred_check_branch
        %127 = sbr.rel (%p125) target = $region24
      $region23: #{convnet_forward.5} parent=5 // pred_region
        // Predicated region
        $region25: #{convnet_forward.5} parent=23 // pred_check
          %p128 = pneg %p50
        $region26: #{convnet_forward.5} parent=23 // pred_check_branch
          %130 = sbr.rel (%p128) target = $region28
        $region27: #{convnet_forward.5} parent=23 // pred_region
          %s131 = sand.u32 %s40, 1
          %s132 = sand.u32 %s40, 1
          %s133 = smul.addr %s132, 4096
          %s134 = scalar_lea.vmem [#allocation2], %s133
          %s135 = smul.u32 64, %s9
          %s136 = smul.addr %s135, 4
          %s137 = scalar_lea.vmem %s1, %s136
          // Predicated region
          $region29: #{convnet_forward.5} parent=27 // pred_check
            _
          $region30: #{convnet_forward.5} parent=27 // pred_check_branch
            %139 = sbr.rel (0) target = $region32
          $region31: #{convnet_forward.5} parent=27 // pred_region
            // Predicated region
            $region33: #{convnet_forward.5} parent=31 // pred_check
              _
            $region34: #{convnet_forward.5} parent=31 // pred_check_branch
              %141 = sbr.rel (0) target = $region36
            $region35: #{convnet_forward.5} parent=31 // pred_region
              loop: start=0, step=1, limit=1
              $region37: #{convnet_forward.5} parent=35 // loop_pre_header
                _
              $region38: #{convnet_forward.5} parent=35 // loop_header
                %s143 = sphi 0, %s147
                %p144 = scmp.ge.s32.totalorder %s143, 1
                %s148 = sphi %s137, %s137
                %s149 = sphi %s134, %s134
              $region39: #{convnet_forward.5} parent=35 // loop_header_branch
                %146 = sbr.rel (%p144) target = $region43
              $region40: #{convnet_forward.5} parent=35 // loop_body
                %v150 = vld [vmem:[%s148] sm:$0xff]
                %151 = vst [vmem:[%s149] sm:$0xff] %v150
                %v152 = vld [vmem:[%s148 + $0x8] sm:$0xff]
                %153 = vst [vmem:[%s149 + $0x8] sm:$0xff] %v152
                %v154 = vld [vmem:[%s148 + $0x10] sm:$0xff]
                %155 = vst [vmem:[%s149 + $0x10] sm:$0xff] %v154
                %v156 = vld [vmem:[%s148 + $0x18] sm:$0xff]
                %157 = vst [vmem:[%s149 + $0x18] sm:$0xff] %v156
                %v158 = vld [vmem:[%s148 + $0x20] sm:$0xff]
                %159 = vst [vmem:[%s149 + $0x20] sm:$0xff] %v158
                %v160 = vld [vmem:[%s148 + $0x28] sm:$0xff]
                %161 = vst [vmem:[%s149 + $0x28] sm:$0xff] %v160
                %v162 = vld [vmem:[%s148 + $0x30] sm:$0xff]
                %163 = vst [vmem:[%s149 + $0x30] sm:$0xff] %v162
                %v164 = vld [vmem:[%s148 + $0x38] sm:$0xff]
                %165 = vst [vmem:[%s149 + $0x38] sm:$0xff] %v164
                %v166 = vld [vmem:[%s148 + $0x40] sm:$0xff]
                %167 = vst [vmem:[%s149 + $0x40] sm:$0xff] %v166
                %v168 = vld [vmem:[%s148 + $0x48] sm:$0xff]
                %169 = vst [vmem:[%s149 + $0x48] sm:$0xff] %v168
                %v170 = vld [vmem:[%s148 + $0x50] sm:$0xff]
                %171 = vst [vmem:[%s149 + $0x50] sm:$0xff] %v170
                %v172 = vld [vmem:[%s148 + $0x58] sm:$0xff]
                %173 = vst [vmem:[%s149 + $0x58] sm:$0xff] %v172
                %v174 = vld [vmem:[%s148 + $0x60] sm:$0xff]
                %175 = vst [vmem:[%s149 + $0x60] sm:$0xff] %v174
                %v176 = vld [vmem:[%s148 + $0x68] sm:$0xff]
                %177 = vst [vmem:[%s149 + $0x68] sm:$0xff] %v176
                %v178 = vld [vmem:[%s148 + $0x70] sm:$0xff]
                %179 = vst [vmem:[%s149 + $0x70] sm:$0xff] %v178
                %v180 = vld [vmem:[%s148 + $0x78] sm:$0xff]
                %181 = vst [vmem:[%s149 + $0x78] sm:$0xff] %v180
                %v182 = vld [vmem:[%s148 + $0x80] sm:$0xff]
                %183 = vst [vmem:[%s149 + $0x80] sm:$0xff] %v182
                %v184 = vld [vmem:[%s148 + $0x88] sm:$0xff]
                %185 = vst [vmem:[%s149 + $0x88] sm:$0xff] %v184
                %v186 = vld [vmem:[%s148 + $0x90] sm:$0xff]
                %187 = vst [vmem:[%s149 + $0x90] sm:$0xff] %v186
                %v188 = vld [vmem:[%s148 + $0x98] sm:$0xff]
                %189 = vst [vmem:[%s149 + $0x98] sm:$0xff] %v188
                %v190 = vld [vmem:[%s148 + $0xa0] sm:$0xff]
                %191 = vst [vmem:[%s149 + $0xa0] sm:$0xff] %v190
                %v192 = vld [vmem:[%s148 + $0xa8] sm:$0xff]
                %193 = vst [vmem:[%s149 + $0xa8] sm:$0xff] %v192
                %v194 = vld [vmem:[%s148 + $0xb0] sm:$0xff]
                %195 = vst [vmem:[%s149 + $0xb0] sm:$0xff] %v194
                %v196 = vld [vmem:[%s148 + $0xb8] sm:$0xff]
                %197 = vst [vmem:[%s149 + $0xb8] sm:$0xff] %v196
                %v198 = vld [vmem:[%s148 + $0xc0] sm:$0xff]
                %199 = vst [vmem:[%s149 + $0xc0] sm:$0xff] %v198
                %v200 = vld [vmem:[%s148 + $0xc8] sm:$0xff]
                %201 = vst [vmem:[%s149 + $0xc8] sm:$0xff] %v200
                %v202 = vld [vmem:[%s148 + $0xd0] sm:$0xff]
                %203 = vst [vmem:[%s149 + $0xd0] sm:$0xff] %v202
                %v204 = vld [vmem:[%s148 + $0xd8] sm:$0xff]
                %205 = vst [vmem:[%s149 + $0xd8] sm:$0xff] %v204
                %v206 = vld [vmem:[%s148 + $0xe0] sm:$0xff]
                %207 = vst [vmem:[%s149 + $0xe0] sm:$0xff] %v206
                %v208 = vld [vmem:[%s148 + $0xe8] sm:$0xff]
                %209 = vst [vmem:[%s149 + $0xe8] sm:$0xff] %v208
                %v210 = vld [vmem:[%s148 + $0xf0] sm:$0xff]
                %211 = vst [vmem:[%s149 + $0xf0] sm:$0xff] %v210
                %v212 = vld [vmem:[%s148 + $0xf8] sm:$0xff]
                %213 = vst [vmem:[%s149 + $0xf8] sm:$0xff] %v212
                %v214 = vld [vmem:[%s148 + $0x400] sm:$0xff]
                %215 = vst [vmem:[%s149 + $0x100] sm:$0xff] %v214
                %v216 = vld [vmem:[%s148 + $0x408] sm:$0xff]
                %217 = vst [vmem:[%s149 + $0x108] sm:$0xff] %v216
                %v218 = vld [vmem:[%s148 + $0x410] sm:$0xff]
                %219 = vst [vmem:[%s149 + $0x110] sm:$0xff] %v218
                %v220 = vld [vmem:[%s148 + $0x418] sm:$0xff]
                %221 = vst [vmem:[%s149 + $0x118] sm:$0xff] %v220
                %v222 = vld [vmem:[%s148 + $0x420] sm:$0xff]
                %223 = vst [vmem:[%s149 + $0x120] sm:$0xff] %v222
                %v224 = vld [vmem:[%s148 + $0x428] sm:$0xff]
                %225 = vst [vmem:[%s149 + $0x128] sm:$0xff] %v224
                %v226 = vld [vmem:[%s148 + $0x430] sm:$0xff]
                %227 = vst [vmem:[%s149 + $0x130] sm:$0xff] %v226
                %v228 = vld [vmem:[%s148 + $0x438] sm:$0xff]
                %229 = vst [vmem:[%s149 + $0x138] sm:$0xff] %v228
                %v230 = vld [vmem:[%s148 + $0x440] sm:$0xff]
                %231 = vst [vmem:[%s149 + $0x140] sm:$0xff] %v230
                %v232 = vld [vmem:[%s148 + $0x448] sm:$0xff]
                %233 = vst [vmem:[%s149 + $0x148] sm:$0xff] %v232
                %v234 = vld [vmem:[%s148 + $0x450] sm:$0xff]
                %235 = vst [vmem:[%s149 + $0x150] sm:$0xff] %v234
                %v236 = vld [vmem:[%s148 + $0x458] sm:$0xff]
                %237 = vst [vmem:[%s149 + $0x158] sm:$0xff] %v236
                %v238 = vld [vmem:[%s148 + $0x460] sm:$0xff]
                %239 = vst [vmem:[%s149 + $0x160] sm:$0xff] %v238
                %v240 = vld [vmem:[%s148 + $0x468] sm:$0xff]
                %241 = vst [vmem:[%s149 + $0x168] sm:$0xff] %v240
                %v242 = vld [vmem:[%s148 + $0x470] sm:$0xff]
                %243 = vst [vmem:[%s149 + $0x170] sm:$0xff] %v242
                %v244 = vld [vmem:[%s148 + $0x478] sm:$0xff]
                %245 = vst [vmem:[%s149 + $0x178] sm:$0xff] %v244
                %v246 = vld [vmem:[%s148 + $0x480] sm:$0xff]
                %247 = vst [vmem:[%s149 + $0x180] sm:$0xff] %v246
                %v248 = vld [vmem:[%s148 + $0x488] sm:$0xff]
                %249 = vst [vmem:[%s149 + $0x188] sm:$0xff] %v248
                %v250 = vld [vmem:[%s148 + $0x490] sm:$0xff]
                %251 = vst [vmem:[%s149 + $0x190] sm:$0xff] %v250
                %v252 = vld [vmem:[%s148 + $0x498] sm:$0xff]
                %253 = vst [vmem:[%s149 + $0x198] sm:$0xff] %v252
                %v254 = vld [vmem:[%s148 + $0x4a0] sm:$0xff]
                %255 = vst [vmem:[%s149 + $0x1a0] sm:$0xff] %v254
                %v256 = vld [vmem:[%s148 + $0x4a8] sm:$0xff]
                %257 = vst [vmem:[%s149 + $0x1a8] sm:$0xff] %v256
                %v258 = vld [vmem:[%s148 + $0x4b0] sm:$0xff]
                %259 = vst [vmem:[%s149 + $0x1b0] sm:$0xff] %v258
                %v260 = vld [vmem:[%s148 + $0x4b8] sm:$0xff]
                %261 = vst [vmem:[%s149 + $0x1b8] sm:$0xff] %v260
                %v262 = vld [vmem:[%s148 + $0x4c0] sm:$0xff]
                %263 = vst [vmem:[%s149 + $0x1c0] sm:$0xff] %v262
                %v264 = vld [vmem:[%s148 + $0x4c8] sm:$0xff]
                %265 = vst [vmem:[%s149 + $0x1c8] sm:$0xff] %v264
                %v266 = vld [vmem:[%s148 + $0x4d0] sm:$0xff]
                %267 = vst [vmem:[%s149 + $0x1d0] sm:$0xff] %v266
                %v268 = vld [vmem:[%s148 + $0x4d8] sm:$0xff]
                %269 = vst [vmem:[%s149 + $0x1d8] sm:$0xff] %v268
                %v270 = vld [vmem:[%s148 + $0x4e0] sm:$0xff]
                %271 = vst [vmem:[%s149 + $0x1e0] sm:$0xff] %v270
                %v272 = vld [vmem:[%s148 + $0x4e8] sm:$0xff]
                %273 = vst [vmem:[%s149 + $0x1e8] sm:$0xff] %v272
                %v274 = vld [vmem:[%s148 + $0x4f0] sm:$0xff]
                %275 = vst [vmem:[%s149 + $0x1f0] sm:$0xff] %v274
                %v276 = vld [vmem:[%s148 + $0x4f8] sm:$0xff]
                %277 = vst [vmem:[%s149 + $0x1f8] sm:$0xff] %v276
                %v278 = vld [vmem:[%s148 + $0x800] sm:$0xff]
                %279 = vst [vmem:[%s149 + $0x200] sm:$0xff] %v278
                %v280 = vld [vmem:[%s148 + $0x808] sm:$0xff]
                %281 = vst [vmem:[%s149 + $0x208] sm:$0xff] %v280
                %v282 = vld [vmem:[%s148 + $0x810] sm:$0xff]
                %283 = vst [vmem:[%s149 + $0x210] sm:$0xff] %v282
                %v284 = vld [vmem:[%s148 + $0x818] sm:$0xff]
                %285 = vst [vmem:[%s149 + $0x218] sm:$0xff] %v284
                %v286 = vld [vmem:[%s148 + $0x820] sm:$0xff]
                %287 = vst [vmem:[%s149 + $0x220] sm:$0xff] %v286
                %v288 = vld [vmem:[%s148 + $0x828] sm:$0xff]
                %289 = vst [vmem:[%s149 + $0x228] sm:$0xff] %v288
                %v290 = vld [vmem:[%s148 + $0x830] sm:$0xff]
                %291 = vst [vmem:[%s149 + $0x230] sm:$0xff] %v290
                %v292 = vld [vmem:[%s148 + $0x838] sm:$0xff]
                %293 = vst [vmem:[%s149 + $0x238] sm:$0xff] %v292
                %v294 = vld [vmem:[%s148 + $0x840] sm:$0xff]
                %295 = vst [vmem:[%s149 + $0x240] sm:$0xff] %v294
                %v296 = vld [vmem:[%s148 + $0x848] sm:$0xff]
                %297 = vst [vmem:[%s149 + $0x248] sm:$0xff] %v296
                %v298 = vld [vmem:[%s148 + $0x850] sm:$0xff]
                %299 = vst [vmem:[%s149 + $0x250] sm:$0xff] %v298
                %v300 = vld [vmem:[%s148 + $0x858] sm:$0xff]
                %301 = vst [vmem:[%s149 + $0x258] sm:$0xff] %v300
                %v302 = vld [vmem:[%s148 + $0x860] sm:$0xff]
                %303 = vst [vmem:[%s149 + $0x260] sm:$0xff] %v302
                %v304 = vld [vmem:[%s148 + $0x868] sm:$0xff]
                %305 = vst [vmem:[%s149 + $0x268] sm:$0xff] %v304
                %v306 = vld [vmem:[%s148 + $0x870] sm:$0xff]
                %307 = vst [vmem:[%s149 + $0x270] sm:$0xff] %v306
                %v308 = vld [vmem:[%s148 + $0x878] sm:$0xff]
                %309 = vst [vmem:[%s149 + $0x278] sm:$0xff] %v308
                %v310 = vld [vmem:[%s148 + $0x880] sm:$0xff]
                %311 = vst [vmem:[%s149 + $0x280] sm:$0xff] %v310
                %v312 = vld [vmem:[%s148 + $0x888] sm:$0xff]
                %313 = vst [vmem:[%s149 + $0x288] sm:$0xff] %v312
                %v314 = vld [vmem:[%s148 + $0x890] sm:$0xff]
                %315 = vst [vmem:[%s149 + $0x290] sm:$0xff] %v314
                %v316 = vld [vmem:[%s148 + $0x898] sm:$0xff]
                %317 = vst [vmem:[%s149 + $0x298] sm:$0xff] %v316
                %v318 = vld [vmem:[%s148 + $0x8a0] sm:$0xff]
                %319 = vst [vmem:[%s149 + $0x2a0] sm:$0xff] %v318
                %v320 = vld [vmem:[%s148 + $0x8a8] sm:$0xff]
                %321 = vst [vmem:[%s149 + $0x2a8] sm:$0xff] %v320
                %v322 = vld [vmem:[%s148 + $0x8b0] sm:$0xff]
                %323 = vst [vmem:[%s149 + $0x2b0] sm:$0xff] %v322
                %v324 = vld [vmem:[%s148 + $0x8b8] sm:$0xff]
                %325 = vst [vmem:[%s149 + $0x2b8] sm:$0xff] %v324
                %v326 = vld [vmem:[%s148 + $0x8c0] sm:$0xff]
                %327 = vst [vmem:[%s149 + $0x2c0] sm:$0xff] %v326
                %v328 = vld [vmem:[%s148 + $0x8c8] sm:$0xff]
                %329 = vst [vmem:[%s149 + $0x2c8] sm:$0xff] %v328
                %v330 = vld [vmem:[%s148 + $0x8d0] sm:$0xff]
                %331 = vst [vmem:[%s149 + $0x2d0] sm:$0xff] %v330
                %v332 = vld [vmem:[%s148 + $0x8d8] sm:$0xff]
                %333 = vst [vmem:[%s149 + $0x2d8] sm:$0xff] %v332
                %v334 = vld [vmem:[%s148 + $0x8e0] sm:$0xff]
                %335 = vst [vmem:[%s149 + $0x2e0] sm:$0xff] %v334
                %v336 = vld [vmem:[%s148 + $0x8e8] sm:$0xff]
                %337 = vst [vmem:[%s149 + $0x2e8] sm:$0xff] %v336
                %v338 = vld [vmem:[%s148 + $0x8f0] sm:$0xff]
                %339 = vst [vmem:[%s149 + $0x2f0] sm:$0xff] %v338
                %v340 = vld [vmem:[%s148 + $0x8f8] sm:$0xff]
                %341 = vst [vmem:[%s149 + $0x2f8] sm:$0xff] %v340
                %v342 = vld [vmem:[%s148 + $0xc00] sm:$0xff]
                %343 = vst [vmem:[%s149 + $0x300] sm:$0xff] %v342
                %v344 = vld [vmem:[%s148 + $0xc08] sm:$0xff]
                %345 = vst [vmem:[%s149 + $0x308] sm:$0xff] %v344
                %v346 = vld [vmem:[%s148 + $0xc10] sm:$0xff]
                %347 = vst [vmem:[%s149 + $0x310] sm:$0xff] %v346
                %v348 = vld [vmem:[%s148 + $0xc18] sm:$0xff]
                %349 = vst [vmem:[%s149 + $0x318] sm:$0xff] %v348
                %v350 = vld [vmem:[%s148 + $0xc20] sm:$0xff]
                %351 = vst [vmem:[%s149 + $0x320] sm:$0xff] %v350
                %v352 = vld [vmem:[%s148 + $0xc28] sm:$0xff]
                %353 = vst [vmem:[%s149 + $0x328] sm:$0xff] %v352
                %v354 = vld [vmem:[%s148 + $0xc30] sm:$0xff]
                %355 = vst [vmem:[%s149 + $0x330] sm:$0xff] %v354
                %v356 = vld [vmem:[%s148 + $0xc38] sm:$0xff]
                %357 = vst [vmem:[%s149 + $0x338] sm:$0xff] %v356
                %v358 = vld [vmem:[%s148 + $0xc40] sm:$0xff]
                %359 = vst [vmem:[%s149 + $0x340] sm:$0xff] %v358
                %v360 = vld [vmem:[%s148 + $0xc48] sm:$0xff]
                %361 = vst [vmem:[%s149 + $0x348] sm:$0xff] %v360
                %v362 = vld [vmem:[%s148 + $0xc50] sm:$0xff]
                %363 = vst [vmem:[%s149 + $0x350] sm:$0xff] %v362
                %v364 = vld [vmem:[%s148 + $0xc58] sm:$0xff]
                %365 = vst [vmem:[%s149 + $0x358] sm:$0xff] %v364
                %v366 = vld [vmem:[%s148 + $0xc60] sm:$0xff]
                %367 = vst [vmem:[%s149 + $0x360] sm:$0xff] %v366
                %v368 = vld [vmem:[%s148 + $0xc68] sm:$0xff]
                %369 = vst [vmem:[%s149 + $0x368] sm:$0xff] %v368
                %v370 = vld [vmem:[%s148 + $0xc70] sm:$0xff]
                %371 = vst [vmem:[%s149 + $0x370] sm:$0xff] %v370
                %v372 = vld [vmem:[%s148 + $0xc78] sm:$0xff]
                %373 = vst [vmem:[%s149 + $0x378] sm:$0xff] %v372
                %v374 = vld [vmem:[%s148 + $0xc80] sm:$0xff]
                %375 = vst [vmem:[%s149 + $0x380] sm:$0xff] %v374
                %v376 = vld [vmem:[%s148 + $0xc88] sm:$0xff]
                %377 = vst [vmem:[%s149 + $0x388] sm:$0xff] %v376
                %v378 = vld [vmem:[%s148 + $0xc90] sm:$0xff]
                %379 = vst [vmem:[%s149 + $0x390] sm:$0xff] %v378
                %v380 = vld [vmem:[%s148 + $0xc98] sm:$0xff]
                %381 = vst [vmem:[%s149 + $0x398] sm:$0xff] %v380
                %v382 = vld [vmem:[%s148 + $0xca0] sm:$0xff]
                %383 = vst [vmem:[%s149 + $0x3a0] sm:$0xff] %v382
                %v384 = vld [vmem:[%s148 + $0xca8] sm:$0xff]
                %385 = vst [vmem:[%s149 + $0x3a8] sm:$0xff] %v384
                %v386 = vld [vmem:[%s148 + $0xcb0] sm:$0xff]
                %387 = vst [vmem:[%s149 + $0x3b0] sm:$0xff] %v386
                %v388 = vld [vmem:[%s148 + $0xcb8] sm:$0xff]
                %389 = vst [vmem:[%s149 + $0x3b8] sm:$0xff] %v388
                %v390 = vld [vmem:[%s148 + $0xcc0] sm:$0xff]
                %391 = vst [vmem:[%s149 + $0x3c0] sm:$0xff] %v390
                %v392 = vld [vmem:[%s148 + $0xcc8] sm:$0xff]
                %393 = vst [vmem:[%s149 + $0x3c8] sm:$0xff] %v392
                %v394 = vld [vmem:[%s148 + $0xcd0] sm:$0xff]
                %395 = vst [vmem:[%s149 + $0x3d0] sm:$0xff] %v394
                %v396 = vld [vmem:[%s148 + $0xcd8] sm:$0xff]
                %397 = vst [vmem:[%s149 + $0x3d8] sm:$0xff] %v396
                %v398 = vld [vmem:[%s148 + $0xce0] sm:$0xff]
                %399 = vst [vmem:[%s149 + $0x3e0] sm:$0xff] %v398
                %v400 = vld [vmem:[%s148 + $0xce8] sm:$0xff]
                %401 = vst [vmem:[%s149 + $0x3e8] sm:$0xff] %v400
                %v402 = vld [vmem:[%s148 + $0xcf0] sm:$0xff]
                %403 = vst [vmem:[%s149 + $0x3f0] sm:$0xff] %v402
                %v404 = vld [vmem:[%s148 + $0xcf8] sm:$0xff]
                %405 = vst [vmem:[%s149 + $0x3f8] sm:$0xff] %v404
                %v406 = vld [vmem:[%s148 + $0x1000] sm:$0xff]
                %407 = vst [vmem:[%s149 + $0x400] sm:$0xff] %v406
                %v408 = vld [vmem:[%s148 + $0x1008] sm:$0xff]
                %409 = vst [vmem:[%s149 + $0x408] sm:$0xff] %v408
                %v410 = vld [vmem:[%s148 + $0x1010] sm:$0xff]
                %411 = vst [vmem:[%s149 + $0x410] sm:$0xff] %v410
                %v412 = vld [vmem:[%s148 + $0x1018] sm:$0xff]
                %413 = vst [vmem:[%s149 + $0x418] sm:$0xff] %v412
                %v414 = vld [vmem:[%s148 + $0x1020] sm:$0xff]
                %415 = vst [vmem:[%s149 + $0x420] sm:$0xff] %v414
                %v416 = vld [vmem:[%s148 + $0x1028] sm:$0xff]
                %417 = vst [vmem:[%s149 + $0x428] sm:$0xff] %v416
                %v418 = vld [vmem:[%s148 + $0x1030] sm:$0xff]
                %419 = vst [vmem:[%s149 + $0x430] sm:$0xff] %v418
                %v420 = vld [vmem:[%s148 + $0x1038] sm:$0xff]
                %421 = vst [vmem:[%s149 + $0x438] sm:$0xff] %v420
                %v422 = vld [vmem:[%s148 + $0x1040] sm:$0xff]
                %423 = vst [vmem:[%s149 + $0x440] sm:$0xff] %v422
                %v424 = vld [vmem:[%s148 + $0x1048] sm:$0xff]
                %425 = vst [vmem:[%s149 + $0x448] sm:$0xff] %v424
                %v426 = vld [vmem:[%s148 + $0x1050] sm:$0xff]
                %427 = vst [vmem:[%s149 + $0x450] sm:$0xff] %v426
                %v428 = vld [vmem:[%s148 + $0x1058] sm:$0xff]
                %429 = vst [vmem:[%s149 + $0x458] sm:$0xff] %v428
                %v430 = vld [vmem:[%s148 + $0x1060] sm:$0xff]
                %431 = vst [vmem:[%s149 + $0x460] sm:$0xff] %v430
                %v432 = vld [vmem:[%s148 + $0x1068] sm:$0xff]
                %433 = vst [vmem:[%s149 + $0x468] sm:$0xff] %v432
                %v434 = vld [vmem:[%s148 + $0x1070] sm:$0xff]
                %435 = vst [vmem:[%s149 + $0x470] sm:$0xff] %v434
                %v436 = vld [vmem:[%s148 + $0x1078] sm:$0xff]
                %437 = vst [vmem:[%s149 + $0x478] sm:$0xff] %v436
                %v438 = vld [vmem:[%s148 + $0x1080] sm:$0xff]
                %439 = vst [vmem:[%s149 + $0x480] sm:$0xff] %v438
                %v440 = vld [vmem:[%s148 + $0x1088] sm:$0xff]
                %441 = vst [vmem:[%s149 + $0x488] sm:$0xff] %v440
                %v442 = vld [vmem:[%s148 + $0x1090] sm:$0xff]
                %443 = vst [vmem:[%s149 + $0x490] sm:$0xff] %v442
                %v444 = vld [vmem:[%s148 + $0x1098] sm:$0xff]
                %445 = vst [vmem:[%s149 + $0x498] sm:$0xff] %v444
                %v446 = vld [vmem:[%s148 + $0x10a0] sm:$0xff]
                %447 = vst [vmem:[%s149 + $0x4a0] sm:$0xff] %v446
                %v448 = vld [vmem:[%s148 + $0x10a8] sm:$0xff]
                %449 = vst [vmem:[%s149 + $0x4a8] sm:$0xff] %v448
                %v450 = vld [vmem:[%s148 + $0x10b0] sm:$0xff]
                %451 = vst [vmem:[%s149 + $0x4b0] sm:$0xff] %v450
                %v452 = vld [vmem:[%s148 + $0x10b8] sm:$0xff]
                %453 = vst [vmem:[%s149 + $0x4b8] sm:$0xff] %v452
                %v454 = vld [vmem:[%s148 + $0x10c0] sm:$0xff]
                %455 = vst [vmem:[%s149 + $0x4c0] sm:$0xff] %v454
                %v456 = vld [vmem:[%s148 + $0x10c8] sm:$0xff]
                %457 = vst [vmem:[%s149 + $0x4c8] sm:$0xff] %v456
                %v458 = vld [vmem:[%s148 + $0x10d0] sm:$0xff]
                %459 = vst [vmem:[%s149 + $0x4d0] sm:$0xff] %v458
                %v460 = vld [vmem:[%s148 + $0x10d8] sm:$0xff]
                %461 = vst [vmem:[%s149 + $0x4d8] sm:$0xff] %v460
                %v462 = vld [vmem:[%s148 + $0x10e0] sm:$0xff]
                %463 = vst [vmem:[%s149 + $0x4e0] sm:$0xff] %v462
                %v464 = vld [vmem:[%s148 + $0x10e8] sm:$0xff]
                %465 = vst [vmem:[%s149 + $0x4e8] sm:$0xff] %v464
                %v466 = vld [vmem:[%s148 + $0x10f0] sm:$0xff]
                %467 = vst [vmem:[%s149 + $0x4f0] sm:$0xff] %v466
                %v468 = vld [vmem:[%s148 + $0x10f8] sm:$0xff]
                %469 = vst [vmem:[%s149 + $0x4f8] sm:$0xff] %v468
                %v470 = vld [vmem:[%s148 + $0x1400] sm:$0xff]
                %471 = vst [vmem:[%s149 + $0x500] sm:$0xff] %v470
                %v472 = vld [vmem:[%s148 + $0x1408] sm:$0xff]
                %473 = vst [vmem:[%s149 + $0x508] sm:$0xff] %v472
                %v474 = vld [vmem:[%s148 + $0x1410] sm:$0xff]
                %475 = vst [vmem:[%s149 + $0x510] sm:$0xff] %v474
                %v476 = vld [vmem:[%s148 + $0x1418] sm:$0xff]
                %477 = vst [vmem:[%s149 + $0x518] sm:$0xff] %v476
                %v478 = vld [vmem:[%s148 + $0x1420] sm:$0xff]
                %479 = vst [vmem:[%s149 + $0x520] sm:$0xff] %v478
                %v480 = vld [vmem:[%s148 + $0x1428] sm:$0xff]
                %481 = vst [vmem:[%s149 + $0x528] sm:$0xff] %v480
                %v482 = vld [vmem:[%s148 + $0x1430] sm:$0xff]
                %483 = vst [vmem:[%s149 + $0x530] sm:$0xff] %v482
                %v484 = vld [vmem:[%s148 + $0x1438] sm:$0xff]
                %485 = vst [vmem:[%s149 + $0x538] sm:$0xff] %v484
                %v486 = vld [vmem:[%s148 + $0x1440] sm:$0xff]
                %487 = vst [vmem:[%s149 + $0x540] sm:$0xff] %v486
                %v488 = vld [vmem:[%s148 + $0x1448] sm:$0xff]
                %489 = vst [vmem:[%s149 + $0x548] sm:$0xff] %v488
                %v490 = vld [vmem:[%s148 + $0x1450] sm:$0xff]
                %491 = vst [vmem:[%s149 + $0x550] sm:$0xff] %v490
                %v492 = vld [vmem:[%s148 + $0x1458] sm:$0xff]
                %493 = vst [vmem:[%s149 + $0x558] sm:$0xff] %v492
                %v494 = vld [vmem:[%s148 + $0x1460] sm:$0xff]
                %495 = vst [vmem:[%s149 + $0x560] sm:$0xff] %v494
                %v496 = vld [vmem:[%s148 + $0x1468] sm:$0xff]
                %497 = vst [vmem:[%s149 + $0x568] sm:$0xff] %v496
                %v498 = vld [vmem:[%s148 + $0x1470] sm:$0xff]
                %499 = vst [vmem:[%s149 + $0x570] sm:$0xff] %v498
                %v500 = vld [vmem:[%s148 + $0x1478] sm:$0xff]
                %501 = vst [vmem:[%s149 + $0x578] sm:$0xff] %v500
                %v502 = vld [vmem:[%s148 + $0x1480] sm:$0xff]
                %503 = vst [vmem:[%s149 + $0x580] sm:$0xff] %v502
                %v504 = vld [vmem:[%s148 + $0x1488] sm:$0xff]
                %505 = vst [vmem:[%s149 + $0x588] sm:$0xff] %v504
                %v506 = vld [vmem:[%s148 + $0x1490] sm:$0xff]
                %507 = vst [vmem:[%s149 + $0x590] sm:$0xff] %v506
                %v508 = vld [vmem:[%s148 + $0x1498] sm:$0xff]
                %509 = vst [vmem:[%s149 + $0x598] sm:$0xff] %v508
                %v510 = vld [vmem:[%s148 + $0x14a0] sm:$0xff]
                %511 = vst [vmem:[%s149 + $0x5a0] sm:$0xff] %v510
                %v512 = vld [vmem:[%s148 + $0x14a8] sm:$0xff]
                %513 = vst [vmem:[%s149 + $0x5a8] sm:$0xff] %v512
                %v514 = vld [vmem:[%s148 + $0x14b0] sm:$0xff]
                %515 = vst [vmem:[%s149 + $0x5b0] sm:$0xff] %v514
                %v516 = vld [vmem:[%s148 + $0x14b8] sm:$0xff]
                %517 = vst [vmem:[%s149 + $0x5b8] sm:$0xff] %v516
                %v518 = vld [vmem:[%s148 + $0x14c0] sm:$0xff]
                %519 = vst [vmem:[%s149 + $0x5c0] sm:$0xff] %v518
                %v520 = vld [vmem:[%s148 + $0x14c8] sm:$0xff]
                %521 = vst [vmem:[%s149 + $0x5c8] sm:$0xff] %v520
                %v522 = vld [vmem:[%s148 + $0x14d0] sm:$0xff]
                %523 = vst [vmem:[%s149 + $0x5d0] sm:$0xff] %v522
                %v524 = vld [vmem:[%s148 + $0x14d8] sm:$0xff]
                %525 = vst [vmem:[%s149 + $0x5d8] sm:$0xff] %v524
                %v526 = vld [vmem:[%s148 + $0x14e0] sm:$0xff]
                %527 = vst [vmem:[%s149 + $0x5e0] sm:$0xff] %v526
                %v528 = vld [vmem:[%s148 + $0x14e8] sm:$0xff]
                %529 = vst [vmem:[%s149 + $0x5e8] sm:$0xff] %v528
                %v530 = vld [vmem:[%s148 + $0x14f0] sm:$0xff]
                %531 = vst [vmem:[%s149 + $0x5f0] sm:$0xff] %v530
                %v532 = vld [vmem:[%s148 + $0x14f8] sm:$0xff]
                %533 = vst [vmem:[%s149 + $0x5f8] sm:$0xff] %v532
                %v534 = vld [vmem:[%s148 + $0x1800] sm:$0xff]
                %535 = vst [vmem:[%s149 + $0x600] sm:$0xff] %v534
                %v536 = vld [vmem:[%s148 + $0x1808] sm:$0xff]
                %537 = vst [vmem:[%s149 + $0x608] sm:$0xff] %v536
                %v538 = vld [vmem:[%s148 + $0x1810] sm:$0xff]
                %539 = vst [vmem:[%s149 + $0x610] sm:$0xff] %v538
                %v540 = vld [vmem:[%s148 + $0x1818] sm:$0xff]
                %541 = vst [vmem:[%s149 + $0x618] sm:$0xff] %v540
                %v542 = vld [vmem:[%s148 + $0x1820] sm:$0xff]
                %543 = vst [vmem:[%s149 + $0x620] sm:$0xff] %v542
                %v544 = vld [vmem:[%s148 + $0x1828] sm:$0xff]
                %545 = vst [vmem:[%s149 + $0x628] sm:$0xff] %v544
                %v546 = vld [vmem:[%s148 + $0x1830] sm:$0xff]
                %547 = vst [vmem:[%s149 + $0x630] sm:$0xff] %v546
                %v548 = vld [vmem:[%s148 + $0x1838] sm:$0xff]
                %549 = vst [vmem:[%s149 + $0x638] sm:$0xff] %v548
                %v550 = vld [vmem:[%s148 + $0x1840] sm:$0xff]
                %551 = vst [vmem:[%s149 + $0x640] sm:$0xff] %v550
                %v552 = vld [vmem:[%s148 + $0x1848] sm:$0xff]
                %553 = vst [vmem:[%s149 + $0x648] sm:$0xff] %v552
                %v554 = vld [vmem:[%s148 + $0x1850] sm:$0xff]
                %555 = vst [vmem:[%s149 + $0x650] sm:$0xff] %v554
                %v556 = vld [vmem:[%s148 + $0x1858] sm:$0xff]
                %557 = vst [vmem:[%s149 + $0x658] sm:$0xff] %v556
                %v558 = vld [vmem:[%s148 + $0x1860] sm:$0xff]
                %559 = vst [vmem:[%s149 + $0x660] sm:$0xff] %v558
                %v560 = vld [vmem:[%s148 + $0x1868] sm:$0xff]
                %561 = vst [vmem:[%s149 + $0x668] sm:$0xff] %v560
                %v562 = vld [vmem:[%s148 + $0x1870] sm:$0xff]
                %563 = vst [vmem:[%s149 + $0x670] sm:$0xff] %v562
                %v564 = vld [vmem:[%s148 + $0x1878] sm:$0xff]
                %565 = vst [vmem:[%s149 + $0x678] sm:$0xff] %v564
                %v566 = vld [vmem:[%s148 + $0x1880] sm:$0xff]
                %567 = vst [vmem:[%s149 + $0x680] sm:$0xff] %v566
                %v568 = vld [vmem:[%s148 + $0x1888] sm:$0xff]
                %569 = vst [vmem:[%s149 + $0x688] sm:$0xff] %v568
                %v570 = vld [vmem:[%s148 + $0x1890] sm:$0xff]
                %571 = vst [vmem:[%s149 + $0x690] sm:$0xff] %v570
                %v572 = vld [vmem:[%s148 + $0x1898] sm:$0xff]
                %573 = vst [vmem:[%s149 + $0x698] sm:$0xff] %v572
                %v574 = vld [vmem:[%s148 + $0x18a0] sm:$0xff]
                %575 = vst [vmem:[%s149 + $0x6a0] sm:$0xff] %v574
                %v576 = vld [vmem:[%s148 + $0x18a8] sm:$0xff]
                %577 = vst [vmem:[%s149 + $0x6a8] sm:$0xff] %v576
                %v578 = vld [vmem:[%s148 + $0x18b0] sm:$0xff]
                %579 = vst [vmem:[%s149 + $0x6b0] sm:$0xff] %v578
                %v580 = vld [vmem:[%s148 + $0x18b8] sm:$0xff]
                %581 = vst [vmem:[%s149 + $0x6b8] sm:$0xff] %v580
                %v582 = vld [vmem:[%s148 + $0x18c0] sm:$0xff]
                %583 = vst [vmem:[%s149 + $0x6c0] sm:$0xff] %v582
                %v584 = vld [vmem:[%s148 + $0x18c8] sm:$0xff]
                %585 = vst [vmem:[%s149 + $0x6c8] sm:$0xff] %v584
                %v586 = vld [vmem:[%s148 + $0x18d0] sm:$0xff]
                %587 = vst [vmem:[%s149 + $0x6d0] sm:$0xff] %v586
                %v588 = vld [vmem:[%s148 + $0x18d8] sm:$0xff]
                %589 = vst [vmem:[%s149 + $0x6d8] sm:$0xff] %v588
                %v590 = vld [vmem:[%s148 + $0x18e0] sm:$0xff]
                %591 = vst [vmem:[%s149 + $0x6e0] sm:$0xff] %v590
                %v592 = vld [vmem:[%s148 + $0x18e8] sm:$0xff]
                %593 = vst [vmem:[%s149 + $0x6e8] sm:$0xff] %v592
                %v594 = vld [vmem:[%s148 + $0x18f0] sm:$0xff]
                %595 = vst [vmem:[%s149 + $0x6f0] sm:$0xff] %v594
                %v596 = vld [vmem:[%s148 + $0x18f8] sm:$0xff]
                %597 = vst [vmem:[%s149 + $0x6f8] sm:$0xff] %v596
                %v598 = vld [vmem:[%s148 + $0x1c00] sm:$0xff]
                %599 = vst [vmem:[%s149 + $0x700] sm:$0xff] %v598
                %v600 = vld [vmem:[%s148 + $0x1c08] sm:$0xff]
                %601 = vst [vmem:[%s149 + $0x708] sm:$0xff] %v600
                %v602 = vld [vmem:[%s148 + $0x1c10] sm:$0xff]
                %603 = vst [vmem:[%s149 + $0x710] sm:$0xff] %v602
                %v604 = vld [vmem:[%s148 + $0x1c18] sm:$0xff]
                %605 = vst [vmem:[%s149 + $0x718] sm:$0xff] %v604
                %v606 = vld [vmem:[%s148 + $0x1c20] sm:$0xff]
                %607 = vst [vmem:[%s149 + $0x720] sm:$0xff] %v606
                %v608 = vld [vmem:[%s148 + $0x1c28] sm:$0xff]
                %609 = vst [vmem:[%s149 + $0x728] sm:$0xff] %v608
                %v610 = vld [vmem:[%s148 + $0x1c30] sm:$0xff]
                %611 = vst [vmem:[%s149 + $0x730] sm:$0xff] %v610
                %v612 = vld [vmem:[%s148 + $0x1c38] sm:$0xff]
                %613 = vst [vmem:[%s149 + $0x738] sm:$0xff] %v612
                %v614 = vld [vmem:[%s148 + $0x1c40] sm:$0xff]
                %615 = vst [vmem:[%s149 + $0x740] sm:$0xff] %v614
                %v616 = vld [vmem:[%s148 + $0x1c48] sm:$0xff]
                %617 = vst [vmem:[%s149 + $0x748] sm:$0xff] %v616
                %v618 = vld [vmem:[%s148 + $0x1c50] sm:$0xff]
                %619 = vst [vmem:[%s149 + $0x750] sm:$0xff] %v618
                %v620 = vld [vmem:[%s148 + $0x1c58] sm:$0xff]
                %621 = vst [vmem:[%s149 + $0x758] sm:$0xff] %v620
                %v622 = vld [vmem:[%s148 + $0x1c60] sm:$0xff]
                %623 = vst [vmem:[%s149 + $0x760] sm:$0xff] %v622
                %v624 = vld [vmem:[%s148 + $0x1c68] sm:$0xff]
                %625 = vst [vmem:[%s149 + $0x768] sm:$0xff] %v624
                %v626 = vld [vmem:[%s148 + $0x1c70] sm:$0xff]
                %627 = vst [vmem:[%s149 + $0x770] sm:$0xff] %v626
                %v628 = vld [vmem:[%s148 + $0x1c78] sm:$0xff]
                %629 = vst [vmem:[%s149 + $0x778] sm:$0xff] %v628
                %v630 = vld [vmem:[%s148 + $0x1c80] sm:$0xff]
                %631 = vst [vmem:[%s149 + $0x780] sm:$0xff] %v630
                %v632 = vld [vmem:[%s148 + $0x1c88] sm:$0xff]
                %633 = vst [vmem:[%s149 + $0x788] sm:$0xff] %v632
                %v634 = vld [vmem:[%s148 + $0x1c90] sm:$0xff]
                %635 = vst [vmem:[%s149 + $0x790] sm:$0xff] %v634
                %v636 = vld [vmem:[%s148 + $0x1c98] sm:$0xff]
                %637 = vst [vmem:[%s149 + $0x798] sm:$0xff] %v636
                %v638 = vld [vmem:[%s148 + $0x1ca0] sm:$0xff]
                %639 = vst [vmem:[%s149 + $0x7a0] sm:$0xff] %v638
                %v640 = vld [vmem:[%s148 + $0x1ca8] sm:$0xff]
                %641 = vst [vmem:[%s149 + $0x7a8] sm:$0xff] %v640
                %v642 = vld [vmem:[%s148 + $0x1cb0] sm:$0xff]
                %643 = vst [vmem:[%s149 + $0x7b0] sm:$0xff] %v642
                %v644 = vld [vmem:[%s148 + $0x1cb8] sm:$0xff]
                %645 = vst [vmem:[%s149 + $0x7b8] sm:$0xff] %v644
                %v646 = vld [vmem:[%s148 + $0x1cc0] sm:$0xff]
                %647 = vst [vmem:[%s149 + $0x7c0] sm:$0xff] %v646
                %v648 = vld [vmem:[%s148 + $0x1cc8] sm:$0xff]
                %649 = vst [vmem:[%s149 + $0x7c8] sm:$0xff] %v648
                %v650 = vld [vmem:[%s148 + $0x1cd0] sm:$0xff]
                %651 = vst [vmem:[%s149 + $0x7d0] sm:$0xff] %v650
                %v652 = vld [vmem:[%s148 + $0x1cd8] sm:$0xff]
                %653 = vst [vmem:[%s149 + $0x7d8] sm:$0xff] %v652
                %v654 = vld [vmem:[%s148 + $0x1ce0] sm:$0xff]
                %655 = vst [vmem:[%s149 + $0x7e0] sm:$0xff] %v654
                %v656 = vld [vmem:[%s148 + $0x1ce8] sm:$0xff]
                %657 = vst [vmem:[%s149 + $0x7e8] sm:$0xff] %v656
                %v658 = vld [vmem:[%s148 + $0x1cf0] sm:$0xff]
                %659 = vst [vmem:[%s149 + $0x7f0] sm:$0xff] %v658
                %v660 = vld [vmem:[%s148 + $0x1cf8] sm:$0xff]
                %661 = vst [vmem:[%s149 + $0x7f8] sm:$0xff] %v660
                %v662 = vld [vmem:[%s148 + $0x2000] sm:$0xff]
                %663 = vst [vmem:[%s149 + $0x800] sm:$0xff] %v662
                %v664 = vld [vmem:[%s148 + $0x2008] sm:$0xff]
                %665 = vst [vmem:[%s149 + $0x808] sm:$0xff] %v664
                %v666 = vld [vmem:[%s148 + $0x2010] sm:$0xff]
                %667 = vst [vmem:[%s149 + $0x810] sm:$0xff] %v666
                %v668 = vld [vmem:[%s148 + $0x2018] sm:$0xff]
                %669 = vst [vmem:[%s149 + $0x818] sm:$0xff] %v668
                %v670 = vld [vmem:[%s148 + $0x2020] sm:$0xff]
                %671 = vst [vmem:[%s149 + $0x820] sm:$0xff] %v670
                %v672 = vld [vmem:[%s148 + $0x2028] sm:$0xff]
                %673 = vst [vmem:[%s149 + $0x828] sm:$0xff] %v672
                %v674 = vld [vmem:[%s148 + $0x2030] sm:$0xff]
                %675 = vst [vmem:[%s149 + $0x830] sm:$0xff] %v674
                %v676 = vld [vmem:[%s148 + $0x2038] sm:$0xff]
                %677 = vst [vmem:[%s149 + $0x838] sm:$0xff] %v676
                %v678 = vld [vmem:[%s148 + $0x2040] sm:$0xff]
                %679 = vst [vmem:[%s149 + $0x840] sm:$0xff] %v678
                %v680 = vld [vmem:[%s148 + $0x2048] sm:$0xff]
                %681 = vst [vmem:[%s149 + $0x848] sm:$0xff] %v680
                %v682 = vld [vmem:[%s148 + $0x2050] sm:$0xff]
                %683 = vst [vmem:[%s149 + $0x850] sm:$0xff] %v682
                %v684 = vld [vmem:[%s148 + $0x2058] sm:$0xff]
                %685 = vst [vmem:[%s149 + $0x858] sm:$0xff] %v684
                %v686 = vld [vmem:[%s148 + $0x2060] sm:$0xff]
                %687 = vst [vmem:[%s149 + $0x860] sm:$0xff] %v686
                %v688 = vld [vmem:[%s148 + $0x2068] sm:$0xff]
                %689 = vst [vmem:[%s149 + $0x868] sm:$0xff] %v688
                %v690 = vld [vmem:[%s148 + $0x2070] sm:$0xff]
                %691 = vst [vmem:[%s149 + $0x870] sm:$0xff] %v690
                %v692 = vld [vmem:[%s148 + $0x2078] sm:$0xff]
                %693 = vst [vmem:[%s149 + $0x878] sm:$0xff] %v692
                %v694 = vld [vmem:[%s148 + $0x2080] sm:$0xff]
                %695 = vst [vmem:[%s149 + $0x880] sm:$0xff] %v694
                %v696 = vld [vmem:[%s148 + $0x2088] sm:$0xff]
                %697 = vst [vmem:[%s149 + $0x888] sm:$0xff] %v696
                %v698 = vld [vmem:[%s148 + $0x2090] sm:$0xff]
                %699 = vst [vmem:[%s149 + $0x890] sm:$0xff] %v698
                %v700 = vld [vmem:[%s148 + $0x2098] sm:$0xff]
                %701 = vst [vmem:[%s149 + $0x898] sm:$0xff] %v700
                %v702 = vld [vmem:[%s148 + $0x20a0] sm:$0xff]
                %703 = vst [vmem:[%s149 + $0x8a0] sm:$0xff] %v702
                %v704 = vld [vmem:[%s148 + $0x20a8] sm:$0xff]
                %705 = vst [vmem:[%s149 + $0x8a8] sm:$0xff] %v704
                %v706 = vld [vmem:[%s148 + $0x20b0] sm:$0xff]
                %707 = vst [vmem:[%s149 + $0x8b0] sm:$0xff] %v706
                %v708 = vld [vmem:[%s148 + $0x20b8] sm:$0xff]
                %709 = vst [vmem:[%s149 + $0x8b8] sm:$0xff] %v708
                %v710 = vld [vmem:[%s148 + $0x20c0] sm:$0xff]
                %711 = vst [vmem:[%s149 + $0x8c0] sm:$0xff] %v710
                %v712 = vld [vmem:[%s148 + $0x20c8] sm:$0xff]
                %713 = vst [vmem:[%s149 + $0x8c8] sm:$0xff] %v712
                %v714 = vld [vmem:[%s148 + $0x20d0] sm:$0xff]
                %715 = vst [vmem:[%s149 + $0x8d0] sm:$0xff] %v714
                %v716 = vld [vmem:[%s148 + $0x20d8] sm:$0xff]
                %717 = vst [vmem:[%s149 + $0x8d8] sm:$0xff] %v716
                %v718 = vld [vmem:[%s148 + $0x20e0] sm:$0xff]
                %719 = vst [vmem:[%s149 + $0x8e0] sm:$0xff] %v718
                %v720 = vld [vmem:[%s148 + $0x20e8] sm:$0xff]
                %721 = vst [vmem:[%s149 + $0x8e8] sm:$0xff] %v720
                %v722 = vld [vmem:[%s148 + $0x20f0] sm:$0xff]
                %723 = vst [vmem:[%s149 + $0x8f0] sm:$0xff] %v722
                %v724 = vld [vmem:[%s148 + $0x20f8] sm:$0xff]
                %725 = vst [vmem:[%s149 + $0x8f8] sm:$0xff] %v724
                %v726 = vld [vmem:[%s148 + $0x2400] sm:$0xff]
                %727 = vst [vmem:[%s149 + $0x900] sm:$0xff] %v726
                %v728 = vld [vmem:[%s148 + $0x2408] sm:$0xff]
                %729 = vst [vmem:[%s149 + $0x908] sm:$0xff] %v728
                %v730 = vld [vmem:[%s148 + $0x2410] sm:$0xff]
                %731 = vst [vmem:[%s149 + $0x910] sm:$0xff] %v730
                %v732 = vld [vmem:[%s148 + $0x2418] sm:$0xff]
                %733 = vst [vmem:[%s149 + $0x918] sm:$0xff] %v732
                %v734 = vld [vmem:[%s148 + $0x2420] sm:$0xff]
                %735 = vst [vmem:[%s149 + $0x920] sm:$0xff] %v734
                %v736 = vld [vmem:[%s148 + $0x2428] sm:$0xff]
                %737 = vst [vmem:[%s149 + $0x928] sm:$0xff] %v736
                %v738 = vld [vmem:[%s148 + $0x2430] sm:$0xff]
                %739 = vst [vmem:[%s149 + $0x930] sm:$0xff] %v738
                %v740 = vld [vmem:[%s148 + $0x2438] sm:$0xff]
                %741 = vst [vmem:[%s149 + $0x938] sm:$0xff] %v740
                %v742 = vld [vmem:[%s148 + $0x2440] sm:$0xff]
                %743 = vst [vmem:[%s149 + $0x940] sm:$0xff] %v742
                %v744 = vld [vmem:[%s148 + $0x2448] sm:$0xff]
                %745 = vst [vmem:[%s149 + $0x948] sm:$0xff] %v744
                %v746 = vld [vmem:[%s148 + $0x2450] sm:$0xff]
                %747 = vst [vmem:[%s149 + $0x950] sm:$0xff] %v746
                %v748 = vld [vmem:[%s148 + $0x2458] sm:$0xff]
                %749 = vst [vmem:[%s149 + $0x958] sm:$0xff] %v748
                %v750 = vld [vmem:[%s148 + $0x2460] sm:$0xff]
                %751 = vst [vmem:[%s149 + $0x960] sm:$0xff] %v750
                %v752 = vld [vmem:[%s148 + $0x2468] sm:$0xff]
                %753 = vst [vmem:[%s149 + $0x968] sm:$0xff] %v752
                %v754 = vld [vmem:[%s148 + $0x2470] sm:$0xff]
                %755 = vst [vmem:[%s149 + $0x970] sm:$0xff] %v754
                %v756 = vld [vmem:[%s148 + $0x2478] sm:$0xff]
                %757 = vst [vmem:[%s149 + $0x978] sm:$0xff] %v756
                %v758 = vld [vmem:[%s148 + $0x2480] sm:$0xff]
                %759 = vst [vmem:[%s149 + $0x980] sm:$0xff] %v758
                %v760 = vld [vmem:[%s148 + $0x2488] sm:$0xff]
                %761 = vst [vmem:[%s149 + $0x988] sm:$0xff] %v760
                %v762 = vld [vmem:[%s148 + $0x2490] sm:$0xff]
                %763 = vst [vmem:[%s149 + $0x990] sm:$0xff] %v762
                %v764 = vld [vmem:[%s148 + $0x2498] sm:$0xff]
                %765 = vst [vmem:[%s149 + $0x998] sm:$0xff] %v764
                %v766 = vld [vmem:[%s148 + $0x24a0] sm:$0xff]
                %767 = vst [vmem:[%s149 + $0x9a0] sm:$0xff] %v766
                %v768 = vld [vmem:[%s148 + $0x24a8] sm:$0xff]
                %769 = vst [vmem:[%s149 + $0x9a8] sm:$0xff] %v768
                %v770 = vld [vmem:[%s148 + $0x24b0] sm:$0xff]
                %771 = vst [vmem:[%s149 + $0x9b0] sm:$0xff] %v770
                %v772 = vld [vmem:[%s148 + $0x24b8] sm:$0xff]
                %773 = vst [vmem:[%s149 + $0x9b8] sm:$0xff] %v772
                %v774 = vld [vmem:[%s148 + $0x24c0] sm:$0xff]
                %775 = vst [vmem:[%s149 + $0x9c0] sm:$0xff] %v774
                %v776 = vld [vmem:[%s148 + $0x24c8] sm:$0xff]
                %777 = vst [vmem:[%s149 + $0x9c8] sm:$0xff] %v776
                %v778 = vld [vmem:[%s148 + $0x24d0] sm:$0xff]
                %779 = vst [vmem:[%s149 + $0x9d0] sm:$0xff] %v778
                %v780 = vld [vmem:[%s148 + $0x24d8] sm:$0xff]
                %781 = vst [vmem:[%s149 + $0x9d8] sm:$0xff] %v780
                %v782 = vld [vmem:[%s148 + $0x24e0] sm:$0xff]
                %783 = vst [vmem:[%s149 + $0x9e0] sm:$0xff] %v782
                %v784 = vld [vmem:[%s148 + $0x24e8] sm:$0xff]
                %785 = vst [vmem:[%s149 + $0x9e8] sm:$0xff] %v784
                %v786 = vld [vmem:[%s148 + $0x24f0] sm:$0xff]
                %787 = vst [vmem:[%s149 + $0x9f0] sm:$0xff] %v786
                %v788 = vld [vmem:[%s148 + $0x24f8] sm:$0xff]
                %789 = vst [vmem:[%s149 + $0x9f8] sm:$0xff] %v788
                %v790 = vld [vmem:[%s148 + $0x2800] sm:$0xff]
                %791 = vst [vmem:[%s149 + $0xa00] sm:$0xff] %v790
                %v792 = vld [vmem:[%s148 + $0x2808] sm:$0xff]
                %793 = vst [vmem:[%s149 + $0xa08] sm:$0xff] %v792
                %v794 = vld [vmem:[%s148 + $0x2810] sm:$0xff]
                %795 = vst [vmem:[%s149 + $0xa10] sm:$0xff] %v794
                %v796 = vld [vmem:[%s148 + $0x2818] sm:$0xff]
                %797 = vst [vmem:[%s149 + $0xa18] sm:$0xff] %v796
                %v798 = vld [vmem:[%s148 + $0x2820] sm:$0xff]
                %799 = vst [vmem:[%s149 + $0xa20] sm:$0xff] %v798
                %v800 = vld [vmem:[%s148 + $0x2828] sm:$0xff]
                %801 = vst [vmem:[%s149 + $0xa28] sm:$0xff] %v800
                %v802 = vld [vmem:[%s148 + $0x2830] sm:$0xff]
                %803 = vst [vmem:[%s149 + $0xa30] sm:$0xff] %v802
                %v804 = vld [vmem:[%s148 + $0x2838] sm:$0xff]
                %805 = vst [vmem:[%s149 + $0xa38] sm:$0xff] %v804
                %v806 = vld [vmem:[%s148 + $0x2840] sm:$0xff]
                %807 = vst [vmem:[%s149 + $0xa40] sm:$0xff] %v806
                %v808 = vld [vmem:[%s148 + $0x2848] sm:$0xff]
                %809 = vst [vmem:[%s149 + $0xa48] sm:$0xff] %v808
                %v810 = vld [vmem:[%s148 + $0x2850] sm:$0xff]
                %811 = vst [vmem:[%s149 + $0xa50] sm:$0xff] %v810
                %v812 = vld [vmem:[%s148 + $0x2858] sm:$0xff]
                %813 = vst [vmem:[%s149 + $0xa58] sm:$0xff] %v812
                %v814 = vld [vmem:[%s148 + $0x2860] sm:$0xff]
                %815 = vst [vmem:[%s149 + $0xa60] sm:$0xff] %v814
                %v816 = vld [vmem:[%s148 + $0x2868] sm:$0xff]
                %817 = vst [vmem:[%s149 + $0xa68] sm:$0xff] %v816
                %v818 = vld [vmem:[%s148 + $0x2870] sm:$0xff]
                %819 = vst [vmem:[%s149 + $0xa70] sm:$0xff] %v818
                %v820 = vld [vmem:[%s148 + $0x2878] sm:$0xff]
                %821 = vst [vmem:[%s149 + $0xa78] sm:$0xff] %v820
                %v822 = vld [vmem:[%s148 + $0x2880] sm:$0xff]
                %823 = vst [vmem:[%s149 + $0xa80] sm:$0xff] %v822
                %v824 = vld [vmem:[%s148 + $0x2888] sm:$0xff]
                %825 = vst [vmem:[%s149 + $0xa88] sm:$0xff] %v824
                %v826 = vld [vmem:[%s148 + $0x2890] sm:$0xff]
                %827 = vst [vmem:[%s149 + $0xa90] sm:$0xff] %v826
                %v828 = vld [vmem:[%s148 + $0x2898] sm:$0xff]
                %829 = vst [vmem:[%s149 + $0xa98] sm:$0xff] %v828
                %v830 = vld [vmem:[%s148 + $0x28a0] sm:$0xff]
                %831 = vst [vmem:[%s149 + $0xaa0] sm:$0xff] %v830
                %v832 = vld [vmem:[%s148 + $0x28a8] sm:$0xff]
                %833 = vst [vmem:[%s149 + $0xaa8] sm:$0xff] %v832
                %v834 = vld [vmem:[%s148 + $0x28b0] sm:$0xff]
                %835 = vst [vmem:[%s149 + $0xab0] sm:$0xff] %v834
                %v836 = vld [vmem:[%s148 + $0x28b8] sm:$0xff]
                %837 = vst [vmem:[%s149 + $0xab8] sm:$0xff] %v836
                %v838 = vld [vmem:[%s148 + $0x28c0] sm:$0xff]
                %839 = vst [vmem:[%s149 + $0xac0] sm:$0xff] %v838
                %v840 = vld [vmem:[%s148 + $0x28c8] sm:$0xff]
                %841 = vst [vmem:[%s149 + $0xac8] sm:$0xff] %v840
                %v842 = vld [vmem:[%s148 + $0x28d0] sm:$0xff]
                %843 = vst [vmem:[%s149 + $0xad0] sm:$0xff] %v842
                %v844 = vld [vmem:[%s148 + $0x28d8] sm:$0xff]
                %845 = vst [vmem:[%s149 + $0xad8] sm:$0xff] %v844
                %v846 = vld [vmem:[%s148 + $0x28e0] sm:$0xff]
                %847 = vst [vmem:[%s149 + $0xae0] sm:$0xff] %v846
                %v848 = vld [vmem:[%s148 + $0x28e8] sm:$0xff]
                %849 = vst [vmem:[%s149 + $0xae8] sm:$0xff] %v848
                %v850 = vld [vmem:[%s148 + $0x28f0] sm:$0xff]
                %851 = vst [vmem:[%s149 + $0xaf0] sm:$0xff] %v850
                %v852 = vld [vmem:[%s148 + $0x28f8] sm:$0xff]
                %853 = vst [vmem:[%s149 + $0xaf8] sm:$0xff] %v852
                %v854 = vld [vmem:[%s148 + $0x2c00] sm:$0xff]
                %855 = vst [vmem:[%s149 + $0xb00] sm:$0xff] %v854
                %v856 = vld [vmem:[%s148 + $0x2c08] sm:$0xff]
                %857 = vst [vmem:[%s149 + $0xb08] sm:$0xff] %v856
                %v858 = vld [vmem:[%s148 + $0x2c10] sm:$0xff]
                %859 = vst [vmem:[%s149 + $0xb10] sm:$0xff] %v858
                %v860 = vld [vmem:[%s148 + $0x2c18] sm:$0xff]
                %861 = vst [vmem:[%s149 + $0xb18] sm:$0xff] %v860
                %v862 = vld [vmem:[%s148 + $0x2c20] sm:$0xff]
                %863 = vst [vmem:[%s149 + $0xb20] sm:$0xff] %v862
                %v864 = vld [vmem:[%s148 + $0x2c28] sm:$0xff]
                %865 = vst [vmem:[%s149 + $0xb28] sm:$0xff] %v864
                %v866 = vld [vmem:[%s148 + $0x2c30] sm:$0xff]
                %867 = vst [vmem:[%s149 + $0xb30] sm:$0xff] %v866
                %v868 = vld [vmem:[%s148 + $0x2c38] sm:$0xff]
                %869 = vst [vmem:[%s149 + $0xb38] sm:$0xff] %v868
                %v870 = vld [vmem:[%s148 + $0x2c40] sm:$0xff]
                %871 = vst [vmem:[%s149 + $0xb40] sm:$0xff] %v870
                %v872 = vld [vmem:[%s148 + $0x2c48] sm:$0xff]
                %873 = vst [vmem:[%s149 + $0xb48] sm:$0xff] %v872
                %v874 = vld [vmem:[%s148 + $0x2c50] sm:$0xff]
                %875 = vst [vmem:[%s149 + $0xb50] sm:$0xff] %v874
                %v876 = vld [vmem:[%s148 + $0x2c58] sm:$0xff]
                %877 = vst [vmem:[%s149 + $0xb58] sm:$0xff] %v876
                %v878 = vld [vmem:[%s148 + $0x2c60] sm:$0xff]
                %879 = vst [vmem:[%s149 + $0xb60] sm:$0xff] %v878
                %v880 = vld [vmem:[%s148 + $0x2c68] sm:$0xff]
                %881 = vst [vmem:[%s149 + $0xb68] sm:$0xff] %v880
                %v882 = vld [vmem:[%s148 + $0x2c70] sm:$0xff]
                %883 = vst [vmem:[%s149 + $0xb70] sm:$0xff] %v882
                %v884 = vld [vmem:[%s148 + $0x2c78] sm:$0xff]
                %885 = vst [vmem:[%s149 + $0xb78] sm:$0xff] %v884
                %v886 = vld [vmem:[%s148 + $0x2c80] sm:$0xff]
                %887 = vst [vmem:[%s149 + $0xb80] sm:$0xff] %v886
                %v888 = vld [vmem:[%s148 + $0x2c88] sm:$0xff]
                %889 = vst [vmem:[%s149 + $0xb88] sm:$0xff] %v888
                %v890 = vld [vmem:[%s148 + $0x2c90] sm:$0xff]
                %891 = vst [vmem:[%s149 + $0xb90] sm:$0xff] %v890
                %v892 = vld [vmem:[%s148 + $0x2c98] sm:$0xff]
                %893 = vst [vmem:[%s149 + $0xb98] sm:$0xff] %v892
                %v894 = vld [vmem:[%s148 + $0x2ca0] sm:$0xff]
                %895 = vst [vmem:[%s149 + $0xba0] sm:$0xff] %v894
                %v896 = vld [vmem:[%s148 + $0x2ca8] sm:$0xff]
                %897 = vst [vmem:[%s149 + $0xba8] sm:$0xff] %v896
                %v898 = vld [vmem:[%s148 + $0x2cb0] sm:$0xff]
                %899 = vst [vmem:[%s149 + $0xbb0] sm:$0xff] %v898
                %v900 = vld [vmem:[%s148 + $0x2cb8] sm:$0xff]
                %901 = vst [vmem:[%s149 + $0xbb8] sm:$0xff] %v900
                %v902 = vld [vmem:[%s148 + $0x2cc0] sm:$0xff]
                %903 = vst [vmem:[%s149 + $0xbc0] sm:$0xff] %v902
                %v904 = vld [vmem:[%s148 + $0x2cc8] sm:$0xff]
                %905 = vst [vmem:[%s149 + $0xbc8] sm:$0xff] %v904
                %v906 = vld [vmem:[%s148 + $0x2cd0] sm:$0xff]
                %907 = vst [vmem:[%s149 + $0xbd0] sm:$0xff] %v906
                %v908 = vld [vmem:[%s148 + $0x2cd8] sm:$0xff]
                %909 = vst [vmem:[%s149 + $0xbd8] sm:$0xff] %v908
                %v910 = vld [vmem:[%s148 + $0x2ce0] sm:$0xff]
                %911 = vst [vmem:[%s149 + $0xbe0] sm:$0xff] %v910
                %v912 = vld [vmem:[%s148 + $0x2ce8] sm:$0xff]
                %913 = vst [vmem:[%s149 + $0xbe8] sm:$0xff] %v912
                %v914 = vld [vmem:[%s148 + $0x2cf0] sm:$0xff]
                %915 = vst [vmem:[%s149 + $0xbf0] sm:$0xff] %v914
                %v916 = vld [vmem:[%s148 + $0x2cf8] sm:$0xff]
                %917 = vst [vmem:[%s149 + $0xbf8] sm:$0xff] %v916
                %v918 = vld [vmem:[%s148 + $0x3000] sm:$0xff]
                %919 = vst [vmem:[%s149 + $0xc00] sm:$0xff] %v918
                %v920 = vld [vmem:[%s148 + $0x3008] sm:$0xff]
                %921 = vst [vmem:[%s149 + $0xc08] sm:$0xff] %v920
                %v922 = vld [vmem:[%s148 + $0x3010] sm:$0xff]
                %923 = vst [vmem:[%s149 + $0xc10] sm:$0xff] %v922
                %v924 = vld [vmem:[%s148 + $0x3018] sm:$0xff]
                %925 = vst [vmem:[%s149 + $0xc18] sm:$0xff] %v924
                %v926 = vld [vmem:[%s148 + $0x3020] sm:$0xff]
                %927 = vst [vmem:[%s149 + $0xc20] sm:$0xff] %v926
                %v928 = vld [vmem:[%s148 + $0x3028] sm:$0xff]
                %929 = vst [vmem:[%s149 + $0xc28] sm:$0xff] %v928
                %v930 = vld [vmem:[%s148 + $0x3030] sm:$0xff]
                %931 = vst [vmem:[%s149 + $0xc30] sm:$0xff] %v930
                %v932 = vld [vmem:[%s148 + $0x3038] sm:$0xff]
                %933 = vst [vmem:[%s149 + $0xc38] sm:$0xff] %v932
                %v934 = vld [vmem:[%s148 + $0x3040] sm:$0xff]
                %935 = vst [vmem:[%s149 + $0xc40] sm:$0xff] %v934
                %v936 = vld [vmem:[%s148 + $0x3048] sm:$0xff]
                %937 = vst [vmem:[%s149 + $0xc48] sm:$0xff] %v936
                %v938 = vld [vmem:[%s148 + $0x3050] sm:$0xff]
                %939 = vst [vmem:[%s149 + $0xc50] sm:$0xff] %v938
                %v940 = vld [vmem:[%s148 + $0x3058] sm:$0xff]
                %941 = vst [vmem:[%s149 + $0xc58] sm:$0xff] %v940
                %v942 = vld [vmem:[%s148 + $0x3060] sm:$0xff]
                %943 = vst [vmem:[%s149 + $0xc60] sm:$0xff] %v942
                %v944 = vld [vmem:[%s148 + $0x3068] sm:$0xff]
                %945 = vst [vmem:[%s149 + $0xc68] sm:$0xff] %v944
                %v946 = vld [vmem:[%s148 + $0x3070] sm:$0xff]
                %947 = vst [vmem:[%s149 + $0xc70] sm:$0xff] %v946
                %v948 = vld [vmem:[%s148 + $0x3078] sm:$0xff]
                %949 = vst [vmem:[%s149 + $0xc78] sm:$0xff] %v948
                %v950 = vld [vmem:[%s148 + $0x3080] sm:$0xff]
                %951 = vst [vmem:[%s149 + $0xc80] sm:$0xff] %v950
                %v952 = vld [vmem:[%s148 + $0x3088] sm:$0xff]
                %953 = vst [vmem:[%s149 + $0xc88] sm:$0xff] %v952
                %v954 = vld [vmem:[%s148 + $0x3090] sm:$0xff]
                %955 = vst [vmem:[%s149 + $0xc90] sm:$0xff] %v954
                %v956 = vld [vmem:[%s148 + $0x3098] sm:$0xff]
                %957 = vst [vmem:[%s149 + $0xc98] sm:$0xff] %v956
                %v958 = vld [vmem:[%s148 + $0x30a0] sm:$0xff]
                %959 = vst [vmem:[%s149 + $0xca0] sm:$0xff] %v958
                %v960 = vld [vmem:[%s148 + $0x30a8] sm:$0xff]
                %961 = vst [vmem:[%s149 + $0xca8] sm:$0xff] %v960
                %v962 = vld [vmem:[%s148 + $0x30b0] sm:$0xff]
                %963 = vst [vmem:[%s149 + $0xcb0] sm:$0xff] %v962
                %v964 = vld [vmem:[%s148 + $0x30b8] sm:$0xff]
                %965 = vst [vmem:[%s149 + $0xcb8] sm:$0xff] %v964
                %v966 = vld [vmem:[%s148 + $0x30c0] sm:$0xff]
                %967 = vst [vmem:[%s149 + $0xcc0] sm:$0xff] %v966
                %v968 = vld [vmem:[%s148 + $0x30c8] sm:$0xff]
                %969 = vst [vmem:[%s149 + $0xcc8] sm:$0xff] %v968
                %v970 = vld [vmem:[%s148 + $0x30d0] sm:$0xff]
                %971 = vst [vmem:[%s149 + $0xcd0] sm:$0xff] %v970
                %v972 = vld [vmem:[%s148 + $0x30d8] sm:$0xff]
                %973 = vst [vmem:[%s149 + $0xcd8] sm:$0xff] %v972
                %v974 = vld [vmem:[%s148 + $0x30e0] sm:$0xff]
                %975 = vst [vmem:[%s149 + $0xce0] sm:$0xff] %v974
                %v976 = vld [vmem:[%s148 + $0x30e8] sm:$0xff]
                %977 = vst [vmem:[%s149 + $0xce8] sm:$0xff] %v976
                %v978 = vld [vmem:[%s148 + $0x30f0] sm:$0xff]
                %979 = vst [vmem:[%s149 + $0xcf0] sm:$0xff] %v978
                %v980 = vld [vmem:[%s148 + $0x30f8] sm:$0xff]
                %981 = vst [vmem:[%s149 + $0xcf8] sm:$0xff] %v980
                %v982 = vld [vmem:[%s148 + $0x3400] sm:$0xff]
                %983 = vst [vmem:[%s149 + $0xd00] sm:$0xff] %v982
                %v984 = vld [vmem:[%s148 + $0x3408] sm:$0xff]
                %985 = vst [vmem:[%s149 + $0xd08] sm:$0xff] %v984
                %v986 = vld [vmem:[%s148 + $0x3410] sm:$0xff]
                %987 = vst [vmem:[%s149 + $0xd10] sm:$0xff] %v986
                %v988 = vld [vmem:[%s148 + $0x3418] sm:$0xff]
                %989 = vst [vmem:[%s149 + $0xd18] sm:$0xff] %v988
                %v990 = vld [vmem:[%s148 + $0x3420] sm:$0xff]
                %991 = vst [vmem:[%s149 + $0xd20] sm:$0xff] %v990
                %v992 = vld [vmem:[%s148 + $0x3428] sm:$0xff]
                %993 = vst [vmem:[%s149 + $0xd28] sm:$0xff] %v992
                %v994 = vld [vmem:[%s148 + $0x3430] sm:$0xff]
                %995 = vst [vmem:[%s149 + $0xd30] sm:$0xff] %v994
                %v996 = vld [vmem:[%s148 + $0x3438] sm:$0xff]
                %997 = vst [vmem:[%s149 + $0xd38] sm:$0xff] %v996
                %v998 = vld [vmem:[%s148 + $0x3440] sm:$0xff]
                %999 = vst [vmem:[%s149 + $0xd40] sm:$0xff] %v998
                %v1000 = vld [vmem:[%s148 + $0x3448] sm:$0xff]
                %1001 = vst [vmem:[%s149 + $0xd48] sm:$0xff] %v1000
                %v1002 = vld [vmem:[%s148 + $0x3450] sm:$0xff]
                %1003 = vst [vmem:[%s149 + $0xd50] sm:$0xff] %v1002
                %v1004 = vld [vmem:[%s148 + $0x3458] sm:$0xff]
                %1005 = vst [vmem:[%s149 + $0xd58] sm:$0xff] %v1004
                %v1006 = vld [vmem:[%s148 + $0x3460] sm:$0xff]
                %1007 = vst [vmem:[%s149 + $0xd60] sm:$0xff] %v1006
                %v1008 = vld [vmem:[%s148 + $0x3468] sm:$0xff]
                %1009 = vst [vmem:[%s149 + $0xd68] sm:$0xff] %v1008
                %v1010 = vld [vmem:[%s148 + $0x3470] sm:$0xff]
                %1011 = vst [vmem:[%s149 + $0xd70] sm:$0xff] %v1010
                %v1012 = vld [vmem:[%s148 + $0x3478] sm:$0xff]
                %1013 = vst [vmem:[%s149 + $0xd78] sm:$0xff] %v1012
                %v1014 = vld [vmem:[%s148 + $0x3480] sm:$0xff]
                %1015 = vst [vmem:[%s149 + $0xd80] sm:$0xff] %v1014
                %v1016 = vld [vmem:[%s148 + $0x3488] sm:$0xff]
                %1017 = vst [vmem:[%s149 + $0xd88] sm:$0xff] %v1016
                %v1018 = vld [vmem:[%s148 + $0x3490] sm:$0xff]
                %1019 = vst [vmem:[%s149 + $0xd90] sm:$0xff] %v1018
                %v1020 = vld [vmem:[%s148 + $0x3498] sm:$0xff]
                %1021 = vst [vmem:[%s149 + $0xd98] sm:$0xff] %v1020
                %v1022 = vld [vmem:[%s148 + $0x34a0] sm:$0xff]
                %1023 = vst [vmem:[%s149 + $0xda0] sm:$0xff] %v1022
                %v1024 = vld [vmem:[%s148 + $0x34a8] sm:$0xff]
                %1025 = vst [vmem:[%s149 + $0xda8] sm:$0xff] %v1024
                %v1026 = vld [vmem:[%s148 + $0x34b0] sm:$0xff]
                %1027 = vst [vmem:[%s149 + $0xdb0] sm:$0xff] %v1026
                %v1028 = vld [vmem:[%s148 + $0x34b8] sm:$0xff]
                %1029 = vst [vmem:[%s149 + $0xdb8] sm:$0xff] %v1028
                %v1030 = vld [vmem:[%s148 + $0x34c0] sm:$0xff]
                %1031 = vst [vmem:[%s149 + $0xdc0] sm:$0xff] %v1030
                %v1032 = vld [vmem:[%s148 + $0x34c8] sm:$0xff]
                %1033 = vst [vmem:[%s149 + $0xdc8] sm:$0xff] %v1032
                %v1034 = vld [vmem:[%s148 + $0x34d0] sm:$0xff]
                %1035 = vst [vmem:[%s149 + $0xdd0] sm:$0xff] %v1034
                %v1036 = vld [vmem:[%s148 + $0x34d8] sm:$0xff]
                %1037 = vst [vmem:[%s149 + $0xdd8] sm:$0xff] %v1036
                %v1038 = vld [vmem:[%s148 + $0x34e0] sm:$0xff]
                %1039 = vst [vmem:[%s149 + $0xde0] sm:$0xff] %v1038
                %v1040 = vld [vmem:[%s148 + $0x34e8] sm:$0xff]
                %1041 = vst [vmem:[%s149 + $0xde8] sm:$0xff] %v1040
                %v1042 = vld [vmem:[%s148 + $0x34f0] sm:$0xff]
                %1043 = vst [vmem:[%s149 + $0xdf0] sm:$0xff] %v1042
                %v1044 = vld [vmem:[%s148 + $0x34f8] sm:$0xff]
                %1045 = vst [vmem:[%s149 + $0xdf8] sm:$0xff] %v1044
                %v1046 = vld [vmem:[%s148 + $0x3800] sm:$0xff]
                %1047 = vst [vmem:[%s149 + $0xe00] sm:$0xff] %v1046
                %v1048 = vld [vmem:[%s148 + $0x3808] sm:$0xff]
                %1049 = vst [vmem:[%s149 + $0xe08] sm:$0xff] %v1048
                %v1050 = vld [vmem:[%s148 + $0x3810] sm:$0xff]
                %1051 = vst [vmem:[%s149 + $0xe10] sm:$0xff] %v1050
                %v1052 = vld [vmem:[%s148 + $0x3818] sm:$0xff]
                %1053 = vst [vmem:[%s149 + $0xe18] sm:$0xff] %v1052
                %v1054 = vld [vmem:[%s148 + $0x3820] sm:$0xff]
                %1055 = vst [vmem:[%s149 + $0xe20] sm:$0xff] %v1054
                %v1056 = vld [vmem:[%s148 + $0x3828] sm:$0xff]
                %1057 = vst [vmem:[%s149 + $0xe28] sm:$0xff] %v1056
                %v1058 = vld [vmem:[%s148 + $0x3830] sm:$0xff]
                %1059 = vst [vmem:[%s149 + $0xe30] sm:$0xff] %v1058
                %v1060 = vld [vmem:[%s148 + $0x3838] sm:$0xff]
                %1061 = vst [vmem:[%s149 + $0xe38] sm:$0xff] %v1060
                %v1062 = vld [vmem:[%s148 + $0x3840] sm:$0xff]
                %1063 = vst [vmem:[%s149 + $0xe40] sm:$0xff] %v1062
                %v1064 = vld [vmem:[%s148 + $0x3848] sm:$0xff]
                %1065 = vst [vmem:[%s149 + $0xe48] sm:$0xff] %v1064
                %v1066 = vld [vmem:[%s148 + $0x3850] sm:$0xff]
                %1067 = vst [vmem:[%s149 + $0xe50] sm:$0xff] %v1066
                %v1068 = vld [vmem:[%s148 + $0x3858] sm:$0xff]
                %1069 = vst [vmem:[%s149 + $0xe58] sm:$0xff] %v1068
                %v1070 = vld [vmem:[%s148 + $0x3860] sm:$0xff]
                %1071 = vst [vmem:[%s149 + $0xe60] sm:$0xff] %v1070
                %v1072 = vld [vmem:[%s148 + $0x3868] sm:$0xff]
                %1073 = vst [vmem:[%s149 + $0xe68] sm:$0xff] %v1072
                %v1074 = vld [vmem:[%s148 + $0x3870] sm:$0xff]
                %1075 = vst [vmem:[%s149 + $0xe70] sm:$0xff] %v1074
                %v1076 = vld [vmem:[%s148 + $0x3878] sm:$0xff]
                %1077 = vst [vmem:[%s149 + $0xe78] sm:$0xff] %v1076
                %v1078 = vld [vmem:[%s148 + $0x3880] sm:$0xff]
                %1079 = vst [vmem:[%s149 + $0xe80] sm:$0xff] %v1078
                %v1080 = vld [vmem:[%s148 + $0x3888] sm:$0xff]
                %1081 = vst [vmem:[%s149 + $0xe88] sm:$0xff] %v1080
                %v1082 = vld [vmem:[%s148 + $0x3890] sm:$0xff]
                %1083 = vst [vmem:[%s149 + $0xe90] sm:$0xff] %v1082
                %v1084 = vld [vmem:[%s148 + $0x3898] sm:$0xff]
                %1085 = vst [vmem:[%s149 + $0xe98] sm:$0xff] %v1084
                %v1086 = vld [vmem:[%s148 + $0x38a0] sm:$0xff]
                %1087 = vst [vmem:[%s149 + $0xea0] sm:$0xff] %v1086
                %v1088 = vld [vmem:[%s148 + $0x38a8] sm:$0xff]
                %1089 = vst [vmem:[%s149 + $0xea8] sm:$0xff] %v1088
                %v1090 = vld [vmem:[%s148 + $0x38b0] sm:$0xff]
                %1091 = vst [vmem:[%s149 + $0xeb0] sm:$0xff] %v1090
                %v1092 = vld [vmem:[%s148 + $0x38b8] sm:$0xff]
                %1093 = vst [vmem:[%s149 + $0xeb8] sm:$0xff] %v1092
                %v1094 = vld [vmem:[%s148 + $0x38c0] sm:$0xff]
                %1095 = vst [vmem:[%s149 + $0xec0] sm:$0xff] %v1094
                %v1096 = vld [vmem:[%s148 + $0x38c8] sm:$0xff]
                %1097 = vst [vmem:[%s149 + $0xec8] sm:$0xff] %v1096
                %v1098 = vld [vmem:[%s148 + $0x38d0] sm:$0xff]
                %1099 = vst [vmem:[%s149 + $0xed0] sm:$0xff] %v1098
                %v1100 = vld [vmem:[%s148 + $0x38d8] sm:$0xff]
                %1101 = vst [vmem:[%s149 + $0xed8] sm:$0xff] %v1100
                %v1102 = vld [vmem:[%s148 + $0x38e0] sm:$0xff]
                %1103 = vst [vmem:[%s149 + $0xee0] sm:$0xff] %v1102
                %v1104 = vld [vmem:[%s148 + $0x38e8] sm:$0xff]
                %1105 = vst [vmem:[%s149 + $0xee8] sm:$0xff] %v1104
                %v1106 = vld [vmem:[%s148 + $0x38f0] sm:$0xff]
                %1107 = vst [vmem:[%s149 + $0xef0] sm:$0xff] %v1106
                %v1108 = vld [vmem:[%s148 + $0x38f8] sm:$0xff]
                %1109 = vst [vmem:[%s149 + $0xef8] sm:$0xff] %v1108
                %v1110 = vld [vmem:[%s148 + $0x3c00] sm:$0xff]
                %1111 = vst [vmem:[%s149 + $0xf00] sm:$0xff] %v1110
                %v1112 = vld [vmem:[%s148 + $0x3c08] sm:$0xff]
                %1113 = vst [vmem:[%s149 + $0xf08] sm:$0xff] %v1112
                %v1114 = vld [vmem:[%s148 + $0x3c10] sm:$0xff]
                %1115 = vst [vmem:[%s149 + $0xf10] sm:$0xff] %v1114
                %v1116 = vld [vmem:[%s148 + $0x3c18] sm:$0xff]
                %1117 = vst [vmem:[%s149 + $0xf18] sm:$0xff] %v1116
                %v1118 = vld [vmem:[%s148 + $0x3c20] sm:$0xff]
                %1119 = vst [vmem:[%s149 + $0xf20] sm:$0xff] %v1118
                %v1120 = vld [vmem:[%s148 + $0x3c28] sm:$0xff]
                %1121 = vst [vmem:[%s149 + $0xf28] sm:$0xff] %v1120
                %v1122 = vld [vmem:[%s148 + $0x3c30] sm:$0xff]
                %1123 = vst [vmem:[%s149 + $0xf30] sm:$0xff] %v1122
                %v1124 = vld [vmem:[%s148 + $0x3c38] sm:$0xff]
                %1125 = vst [vmem:[%s149 + $0xf38] sm:$0xff] %v1124
                %v1126 = vld [vmem:[%s148 + $0x3c40] sm:$0xff]
                %1127 = vst [vmem:[%s149 + $0xf40] sm:$0xff] %v1126
                %v1128 = vld [vmem:[%s148 + $0x3c48] sm:$0xff]
                %1129 = vst [vmem:[%s149 + $0xf48] sm:$0xff] %v1128
                %v1130 = vld [vmem:[%s148 + $0x3c50] sm:$0xff]
                %1131 = vst [vmem:[%s149 + $0xf50] sm:$0xff] %v1130
                %v1132 = vld [vmem:[%s148 + $0x3c58] sm:$0xff]
                %1133 = vst [vmem:[%s149 + $0xf58] sm:$0xff] %v1132
                %v1134 = vld [vmem:[%s148 + $0x3c60] sm:$0xff]
                %1135 = vst [vmem:[%s149 + $0xf60] sm:$0xff] %v1134
                %v1136 = vld [vmem:[%s148 + $0x3c68] sm:$0xff]
                %1137 = vst [vmem:[%s149 + $0xf68] sm:$0xff] %v1136
                %v1138 = vld [vmem:[%s148 + $0x3c70] sm:$0xff]
                %1139 = vst [vmem:[%s149 + $0xf70] sm:$0xff] %v1138
                %v1140 = vld [vmem:[%s148 + $0x3c78] sm:$0xff]
                %1141 = vst [vmem:[%s149 + $0xf78] sm:$0xff] %v1140
                %v1142 = vld [vmem:[%s148 + $0x3c80] sm:$0xff]
                %1143 = vst [vmem:[%s149 + $0xf80] sm:$0xff] %v1142
                %v1144 = vld [vmem:[%s148 + $0x3c88] sm:$0xff]
                %1145 = vst [vmem:[%s149 + $0xf88] sm:$0xff] %v1144
                %v1146 = vld [vmem:[%s148 + $0x3c90] sm:$0xff]
                %1147 = vst [vmem:[%s149 + $0xf90] sm:$0xff] %v1146
                %v1148 = vld [vmem:[%s148 + $0x3c98] sm:$0xff]
                %1149 = vst [vmem:[%s149 + $0xf98] sm:$0xff] %v1148
                %v1150 = vld [vmem:[%s148 + $0x3ca0] sm:$0xff]
                %1151 = vst [vmem:[%s149 + $0xfa0] sm:$0xff] %v1150
                %v1152 = vld [vmem:[%s148 + $0x3ca8] sm:$0xff]
                %1153 = vst [vmem:[%s149 + $0xfa8] sm:$0xff] %v1152
                %v1154 = vld [vmem:[%s148 + $0x3cb0] sm:$0xff]
                %1155 = vst [vmem:[%s149 + $0xfb0] sm:$0xff] %v1154
                %v1156 = vld [vmem:[%s148 + $0x3cb8] sm:$0xff]
                %1157 = vst [vmem:[%s149 + $0xfb8] sm:$0xff] %v1156
                %v1158 = vld [vmem:[%s148 + $0x3cc0] sm:$0xff]
                %1159 = vst [vmem:[%s149 + $0xfc0] sm:$0xff] %v1158
                %v1160 = vld [vmem:[%s148 + $0x3cc8] sm:$0xff]
                %1161 = vst [vmem:[%s149 + $0xfc8] sm:$0xff] %v1160
                %v1162 = vld [vmem:[%s148 + $0x3cd0] sm:$0xff]
                %1163 = vst [vmem:[%s149 + $0xfd0] sm:$0xff] %v1162
                %v1164 = vld [vmem:[%s148 + $0x3cd8] sm:$0xff]
                %1165 = vst [vmem:[%s149 + $0xfd8] sm:$0xff] %v1164
                %v1166 = vld [vmem:[%s148 + $0x3ce0] sm:$0xff]
                %1167 = vst [vmem:[%s149 + $0xfe0] sm:$0xff] %v1166
                %v1168 = vld [vmem:[%s148 + $0x3ce8] sm:$0xff]
                %1169 = vst [vmem:[%s149 + $0xfe8] sm:$0xff] %v1168
                %v1170 = vld [vmem:[%s148 + $0x3cf0] sm:$0xff]
                %1171 = vst [vmem:[%s149 + $0xff0] sm:$0xff] %v1170
                %v1172 = vld [vmem:[%s148 + $0x3cf8] sm:$0xff]
                %1173 = vst [vmem:[%s149 + $0xff8] sm:$0xff] %v1172
              $region41: #{convnet_forward.5} parent=35 // loop_footer
                %s147 = sadd.s32 1, %s143
              $region42: #{convnet_forward.5} parent=35 // loop_footer_branch
                %142 = sbr.rel target = $region38
              $region43: #{convnet_forward.5} parent=35 // loop_exit
                _
            $region36: #{convnet_forward.5} parent=31 // pred_fallthru
              _
            // Predicated region
            $region44: #{convnet_forward.5} parent=31 // pred_check
              _
            $region45: #{convnet_forward.5} parent=31 // pred_check_branch
              %1175 = sbr.rel target = $region47
            $region46: #{convnet_forward.5} parent=31 // pred_region
              _
            $region47: #{convnet_forward.5} parent=31 // pred_fallthru
              _
          $region32: #{convnet_forward.5} parent=27 // pred_fallthru
            _
          %1176 = vnop
        $region28: #{convnet_forward.5} parent=23 // pred_fallthru
          _
      $region24: #{convnet_forward.5} parent=5 // pred_fallthru
        _
      %p1177 = scmp.le.s32.totalorder 1, %s9
      %p1178 = scmp.lt.s32.totalorder %s9, 5
      %p1179 = pnand %p1177, %p1178
      %p1180 = pneg %p1179
      // Predicated region
      $region48: #{convnet_forward.5} parent=5 // pred_check
        _
      $region49: #{convnet_forward.5} parent=5 // pred_check_branch
        %1182 = sbr.rel (%p1179) target = $region51
      $region50: #{convnet_forward.5} parent=5 // pred_region
        %s1183 = ssub.s32 %s9, 1
        %s1184 = sand.u32 %s43, 1
        %s1185 = sand.u32 %s43, 1
        %s1186 = smul.addr %s1185, 4096
        %s1187 = scalar_lea.vmem [#allocation2], %s1186
        // Predicated region
        $region52: #{convnet_forward.5} parent=50 // pred_check
          %p1188 = pneg %p56
        $region53: #{convnet_forward.5} parent=50 // pred_check_branch
          %1190 = sbr.rel (%p1188) target = $region55
        $region54: #{convnet_forward.5} parent=50 // pred_region
          _
        $region55: #{convnet_forward.5} parent=50 // pred_fallthru
          _
        %p1191 = pneg %p30
        %p1192 = pneg %p27
        %s1193 = sand.u32 %s43, 1
        %s1194 = sand.u32 %s43, 1
        %s1195 = smul.addr %s1194, 4096
        %s1196 = scalar_lea.vmem [#allocation2], %s1195
        %p1197 = pneg %p56
        %p1198 = pneg %p53
        %p1199 = pneg %p77
        %p1200 = pneg %p74
        %p1201 = pneg %p103
        %p1202 = pneg %p100
        %s1203 = sand.u32 %s90, 1
        %s1204 = sand.u32 %s90, 1
        %s1205 = smul.addr %s1204, 512
        %s1206 = scalar_lea.vmem [#allocation3], %s1205
        %s1207 = smul.u32 64, %s14
        %s1208 = smul.u32 64, %s14
        %v1210 = vld [vmem:[%s0] sm:$0xf]
        %v1211 = vld [vmem:[%s0 + $0x4] sm:$0xf]
        %v1212 = vld [vmem:[%s1187] sm:$0xff]
        %v1213 = vld [vmem:[%s1187 + $0x8] sm:$0xff]
        %v1214 = vld [vmem:[%s1187 + $0x10] sm:$0xff]
        %v1215 = vld [vmem:[%s1187 + $0x18] sm:$0xff]
        %v1216 = vld [vmem:[%s1187 + $0x20] sm:$0xff]
        %v1217 = vld [vmem:[%s1187 + $0x28] sm:$0xff]
        %v1218 = vld [vmem:[%s1187 + $0x30] sm:$0xff]
        %v1219 = vld [vmem:[%s1187 + $0x38] sm:$0xff]
        %v1220 = vld [vmem:[%s1187 + $0x40] sm:$0xff]
        %v1221 = vld [vmem:[%s1187 + $0x48] sm:$0xff]
        %v1222 = vld [vmem:[%s1187 + $0x50] sm:$0xff]
        %v1223 = vld [vmem:[%s1187 + $0x58] sm:$0xff]
        %v1224 = vld [vmem:[%s1187 + $0x60] sm:$0xff]
        %v1225 = vld [vmem:[%s1187 + $0x68] sm:$0xff]
        %v1226 = vld [vmem:[%s1187 + $0x70] sm:$0xff]
        %v1227 = vld [vmem:[%s1187 + $0x78] sm:$0xff]
        %v1228 = vld [vmem:[%s1187 + $0x80] sm:$0xff]
        %v1229 = vld [vmem:[%s1187 + $0x88] sm:$0xff]
        %v1230 = vld [vmem:[%s1187 + $0x90] sm:$0xff]
        %v1231 = vld [vmem:[%s1187 + $0x98] sm:$0xff]
        %v1232 = vld [vmem:[%s1187 + $0xa0] sm:$0xff]
        %v1233 = vld [vmem:[%s1187 + $0xa8] sm:$0xff]
        %v1234 = vld [vmem:[%s1187 + $0xb0] sm:$0xff]
        %v1235 = vld [vmem:[%s1187 + $0xb8] sm:$0xff]
        %v1236 = vld [vmem:[%s1187 + $0xc0] sm:$0xff]
        %v1237 = vld [vmem:[%s1187 + $0xc8] sm:$0xff]
        %v1238 = vld [vmem:[%s1187 + $0xd0] sm:$0xff]
        %v1239 = vld [vmem:[%s1187 + $0xd8] sm:$0xff]
        %v1240 = vld [vmem:[%s1187 + $0xe0] sm:$0xff]
        %v1241 = vld [vmem:[%s1187 + $0xe8] sm:$0xff]
        %v1242 = vld [vmem:[%s1187 + $0xf0] sm:$0xff]
        %v1243 = vld [vmem:[%s1187 + $0xf8] sm:$0xff]
        %v1244 = vld [vmem:[%s1187 + $0x100] sm:$0xff]
        %v1245 = vld [vmem:[%s1187 + $0x108] sm:$0xff]
        %v1246 = vld [vmem:[%s1187 + $0x110] sm:$0xff]
        %v1247 = vld [vmem:[%s1187 + $0x118] sm:$0xff]
        %v1248 = vld [vmem:[%s1187 + $0x120] sm:$0xff]
        %v1249 = vld [vmem:[%s1187 + $0x128] sm:$0xff]
        %v1250 = vld [vmem:[%s1187 + $0x130] sm:$0xff]
        %v1251 = vld [vmem:[%s1187 + $0x138] sm:$0xff]
        %v1252 = vld [vmem:[%s1187 + $0x140] sm:$0xff]
        %v1253 = vld [vmem:[%s1187 + $0x148] sm:$0xff]
        %v1254 = vld [vmem:[%s1187 + $0x150] sm:$0xff]
        %v1255 = vld [vmem:[%s1187 + $0x158] sm:$0xff]
        %v1256 = vld [vmem:[%s1187 + $0x160] sm:$0xff]
        %v1257 = vld [vmem:[%s1187 + $0x168] sm:$0xff]
        %v1258 = vld [vmem:[%s1187 + $0x170] sm:$0xff]
        %v1259 = vld [vmem:[%s1187 + $0x178] sm:$0xff]
        %v1260 = vld [vmem:[%s1187 + $0x180] sm:$0xff]
        %v1261 = vld [vmem:[%s1187 + $0x188] sm:$0xff]
        %v1262 = vld [vmem:[%s1187 + $0x190] sm:$0xff]
        %v1263 = vld [vmem:[%s1187 + $0x198] sm:$0xff]
        %v1264 = vld [vmem:[%s1187 + $0x1a0] sm:$0xff]
        %v1265 = vld [vmem:[%s1187 + $0x1a8] sm:$0xff]
        %v1266 = vld [vmem:[%s1187 + $0x1b0] sm:$0xff]
        %v1267 = vld [vmem:[%s1187 + $0x1b8] sm:$0xff]
        %v1268 = vld [vmem:[%s1187 + $0x1c0] sm:$0xff]
        %v1269 = vld [vmem:[%s1187 + $0x1c8] sm:$0xff]
        %v1270 = vld [vmem:[%s1187 + $0x1d0] sm:$0xff]
        %v1271 = vld [vmem:[%s1187 + $0x1d8] sm:$0xff]
        %v1272 = vld [vmem:[%s1187 + $0x1e0] sm:$0xff]
        %v1273 = vld [vmem:[%s1187 + $0x1e8] sm:$0xff]
        %v1274 = vld [vmem:[%s1187 + $0x1f0] sm:$0xff]
        %v1275 = vld [vmem:[%s1187 + $0x1f8] sm:$0xff]
        %v1276 = vld [vmem:[%s1187 + $0x200] sm:$0xff]
        %v1277 = vld [vmem:[%s1187 + $0x208] sm:$0xff]
        %v1278 = vld [vmem:[%s1187 + $0x210] sm:$0xff]
        %v1279 = vld [vmem:[%s1187 + $0x218] sm:$0xff]
        %v1280 = vld [vmem:[%s1187 + $0x220] sm:$0xff]
        %v1281 = vld [vmem:[%s1187 + $0x228] sm:$0xff]
        %v1282 = vld [vmem:[%s1187 + $0x230] sm:$0xff]
        %v1283 = vld [vmem:[%s1187 + $0x238] sm:$0xff]
        %v1284 = vld [vmem:[%s1187 + $0x240] sm:$0xff]
        %v1285 = vld [vmem:[%s1187 + $0x248] sm:$0xff]
        %v1286 = vld [vmem:[%s1187 + $0x250] sm:$0xff]
        %v1287 = vld [vmem:[%s1187 + $0x258] sm:$0xff]
        %v1288 = vld [vmem:[%s1187 + $0x260] sm:$0xff]
        %v1289 = vld [vmem:[%s1187 + $0x268] sm:$0xff]
        %v1290 = vld [vmem:[%s1187 + $0x270] sm:$0xff]
        %v1291 = vld [vmem:[%s1187 + $0x278] sm:$0xff]
        %v1292 = vld [vmem:[%s1187 + $0x280] sm:$0xff]
        %v1293 = vld [vmem:[%s1187 + $0x288] sm:$0xff]
        %v1294 = vld [vmem:[%s1187 + $0x290] sm:$0xff]
        %v1295 = vld [vmem:[%s1187 + $0x298] sm:$0xff]
        %v1296 = vld [vmem:[%s1187 + $0x2a0] sm:$0xff]
        %v1297 = vld [vmem:[%s1187 + $0x2a8] sm:$0xff]
        %v1298 = vld [vmem:[%s1187 + $0x2b0] sm:$0xff]
        %v1299 = vld [vmem:[%s1187 + $0x2b8] sm:$0xff]
        %v1300 = vld [vmem:[%s1187 + $0x2c0] sm:$0xff]
        %v1301 = vld [vmem:[%s1187 + $0x2c8] sm:$0xff]
        %v1302 = vld [vmem:[%s1187 + $0x2d0] sm:$0xff]
        %v1303 = vld [vmem:[%s1187 + $0x2d8] sm:$0xff]
        %v1304 = vld [vmem:[%s1187 + $0x2e0] sm:$0xff]
        %v1305 = vld [vmem:[%s1187 + $0x2e8] sm:$0xff]
        %v1306 = vld [vmem:[%s1187 + $0x2f0] sm:$0xff]
        %v1307 = vld [vmem:[%s1187 + $0x2f8] sm:$0xff]
        %v1308 = vld [vmem:[%s1187 + $0x300] sm:$0xff]
        %v1309 = vld [vmem:[%s1187 + $0x308] sm:$0xff]
        %v1310 = vld [vmem:[%s1187 + $0x310] sm:$0xff]
        %v1311 = vld [vmem:[%s1187 + $0x318] sm:$0xff]
        %v1312 = vld [vmem:[%s1187 + $0x320] sm:$0xff]
        %v1313 = vld [vmem:[%s1187 + $0x328] sm:$0xff]
        %v1314 = vld [vmem:[%s1187 + $0x330] sm:$0xff]
        %v1315 = vld [vmem:[%s1187 + $0x338] sm:$0xff]
        %v1316 = vld [vmem:[%s1187 + $0x340] sm:$0xff]
        %v1317 = vld [vmem:[%s1187 + $0x348] sm:$0xff]
        %v1318 = vld [vmem:[%s1187 + $0x350] sm:$0xff]
        %v1319 = vld [vmem:[%s1187 + $0x358] sm:$0xff]
        %v1320 = vld [vmem:[%s1187 + $0x360] sm:$0xff]
        %v1321 = vld [vmem:[%s1187 + $0x368] sm:$0xff]
        %v1322 = vld [vmem:[%s1187 + $0x370] sm:$0xff]
        %v1323 = vld [vmem:[%s1187 + $0x378] sm:$0xff]
        %v1324 = vld [vmem:[%s1187 + $0x380] sm:$0xff]
        %v1325 = vld [vmem:[%s1187 + $0x388] sm:$0xff]
        %v1326 = vld [vmem:[%s1187 + $0x390] sm:$0xff]
        %v1327 = vld [vmem:[%s1187 + $0x398] sm:$0xff]
        %v1328 = vld [vmem:[%s1187 + $0x3a0] sm:$0xff]
        %v1329 = vld [vmem:[%s1187 + $0x3a8] sm:$0xff]
        %v1330 = vld [vmem:[%s1187 + $0x3b0] sm:$0xff]
        %v1331 = vld [vmem:[%s1187 + $0x3b8] sm:$0xff]
        %v1332 = vld [vmem:[%s1187 + $0x3c0] sm:$0xff]
        %v1333 = vld [vmem:[%s1187 + $0x3c8] sm:$0xff]
        %v1334 = vld [vmem:[%s1187 + $0x3d0] sm:$0xff]
        %v1335 = vld [vmem:[%s1187 + $0x3d8] sm:$0xff]
        %v1336 = vld [vmem:[%s1187 + $0x3e0] sm:$0xff]
        %v1337 = vld [vmem:[%s1187 + $0x3e8] sm:$0xff]
        %v1338 = vld [vmem:[%s1187 + $0x3f0] sm:$0xff]
        %v1339 = vld [vmem:[%s1187 + $0x3f8] sm:$0xff]
        %v1340 = vld [vmem:[%s1187 + $0x400] sm:$0xff]
        %v1341 = vld [vmem:[%s1187 + $0x408] sm:$0xff]
        %v1342 = vld [vmem:[%s1187 + $0x410] sm:$0xff]
        %v1343 = vld [vmem:[%s1187 + $0x418] sm:$0xff]
        %v1344 = vld [vmem:[%s1187 + $0x420] sm:$0xff]
        %v1345 = vld [vmem:[%s1187 + $0x428] sm:$0xff]
        %v1346 = vld [vmem:[%s1187 + $0x430] sm:$0xff]
        %v1347 = vld [vmem:[%s1187 + $0x438] sm:$0xff]
        %v1348 = vld [vmem:[%s1187 + $0x440] sm:$0xff]
        %v1349 = vld [vmem:[%s1187 + $0x448] sm:$0xff]
        %v1350 = vld [vmem:[%s1187 + $0x450] sm:$0xff]
        %v1351 = vld [vmem:[%s1187 + $0x458] sm:$0xff]
        %v1352 = vld [vmem:[%s1187 + $0x460] sm:$0xff]
        %v1353 = vld [vmem:[%s1187 + $0x468] sm:$0xff]
        %v1354 = vld [vmem:[%s1187 + $0x470] sm:$0xff]
        %v1355 = vld [vmem:[%s1187 + $0x478] sm:$0xff]
        %v1356 = vld [vmem:[%s1187 + $0x480] sm:$0xff]
        %v1357 = vld [vmem:[%s1187 + $0x488] sm:$0xff]
        %v1358 = vld [vmem:[%s1187 + $0x490] sm:$0xff]
        %v1359 = vld [vmem:[%s1187 + $0x498] sm:$0xff]
        %v1360 = vld [vmem:[%s1187 + $0x4a0] sm:$0xff]
        %v1361 = vld [vmem:[%s1187 + $0x4a8] sm:$0xff]
        %v1362 = vld [vmem:[%s1187 + $0x4b0] sm:$0xff]
        %v1363 = vld [vmem:[%s1187 + $0x4b8] sm:$0xff]
        %v1364 = vld [vmem:[%s1187 + $0x4c0] sm:$0xff]
        %v1365 = vld [vmem:[%s1187 + $0x4c8] sm:$0xff]
        %v1366 = vld [vmem:[%s1187 + $0x4d0] sm:$0xff]
        %v1367 = vld [vmem:[%s1187 + $0x4d8] sm:$0xff]
        %v1368 = vld [vmem:[%s1187 + $0x4e0] sm:$0xff]
        %v1369 = vld [vmem:[%s1187 + $0x4e8] sm:$0xff]
        %v1370 = vld [vmem:[%s1187 + $0x4f0] sm:$0xff]
        %v1371 = vld [vmem:[%s1187 + $0x4f8] sm:$0xff]
        %v1372 = vld [vmem:[%s1187 + $0x500] sm:$0xff]
        %v1373 = vld [vmem:[%s1187 + $0x508] sm:$0xff]
        %v1374 = vld [vmem:[%s1187 + $0x510] sm:$0xff]
        %v1375 = vld [vmem:[%s1187 + $0x518] sm:$0xff]
        %v1376 = vld [vmem:[%s1187 + $0x520] sm:$0xff]
        %v1377 = vld [vmem:[%s1187 + $0x528] sm:$0xff]
        %v1378 = vld [vmem:[%s1187 + $0x530] sm:$0xff]
        %v1379 = vld [vmem:[%s1187 + $0x538] sm:$0xff]
        %v1380 = vld [vmem:[%s1187 + $0x540] sm:$0xff]
        %v1381 = vld [vmem:[%s1187 + $0x548] sm:$0xff]
        %v1382 = vld [vmem:[%s1187 + $0x550] sm:$0xff]
        %v1383 = vld [vmem:[%s1187 + $0x558] sm:$0xff]
        %v1384 = vld [vmem:[%s1187 + $0x560] sm:$0xff]
        %v1385 = vld [vmem:[%s1187 + $0x568] sm:$0xff]
        %v1386 = vld [vmem:[%s1187 + $0x570] sm:$0xff]
        %v1387 = vld [vmem:[%s1187 + $0x578] sm:$0xff]
        %v1388 = vld [vmem:[%s1187 + $0x580] sm:$0xff]
        %v1389 = vld [vmem:[%s1187 + $0x588] sm:$0xff]
        %v1390 = vld [vmem:[%s1187 + $0x590] sm:$0xff]
        %v1391 = vld [vmem:[%s1187 + $0x598] sm:$0xff]
        %v1392 = vld [vmem:[%s1187 + $0x5a0] sm:$0xff]
        %v1393 = vld [vmem:[%s1187 + $0x5a8] sm:$0xff]
        %v1394 = vld [vmem:[%s1187 + $0x5b0] sm:$0xff]
        %v1395 = vld [vmem:[%s1187 + $0x5b8] sm:$0xff]
        %v1396 = vld [vmem:[%s1187 + $0x5c0] sm:$0xff]
        %v1397 = vld [vmem:[%s1187 + $0x5c8] sm:$0xff]
        %v1398 = vld [vmem:[%s1187 + $0x5d0] sm:$0xff]
        %v1399 = vld [vmem:[%s1187 + $0x5d8] sm:$0xff]
        %v1400 = vld [vmem:[%s1187 + $0x5e0] sm:$0xff]
        %v1401 = vld [vmem:[%s1187 + $0x5e8] sm:$0xff]
        %v1402 = vld [vmem:[%s1187 + $0x5f0] sm:$0xff]
        %v1403 = vld [vmem:[%s1187 + $0x5f8] sm:$0xff]
        %v1404 = vld [vmem:[%s1187 + $0x600] sm:$0xff]
        %v1405 = vld [vmem:[%s1187 + $0x608] sm:$0xff]
        %v1406 = vld [vmem:[%s1187 + $0x610] sm:$0xff]
        %v1407 = vld [vmem:[%s1187 + $0x618] sm:$0xff]
        %v1408 = vld [vmem:[%s1187 + $0x620] sm:$0xff]
        %v1409 = vld [vmem:[%s1187 + $0x628] sm:$0xff]
        %v1410 = vld [vmem:[%s1187 + $0x630] sm:$0xff]
        %v1411 = vld [vmem:[%s1187 + $0x638] sm:$0xff]
        %v1412 = vld [vmem:[%s1187 + $0x640] sm:$0xff]
        %v1413 = vld [vmem:[%s1187 + $0x648] sm:$0xff]
        %v1414 = vld [vmem:[%s1187 + $0x650] sm:$0xff]
        %v1415 = vld [vmem:[%s1187 + $0x658] sm:$0xff]
        %v1416 = vld [vmem:[%s1187 + $0x660] sm:$0xff]
        %v1417 = vld [vmem:[%s1187 + $0x668] sm:$0xff]
        %v1418 = vld [vmem:[%s1187 + $0x670] sm:$0xff]
        %v1419 = vld [vmem:[%s1187 + $0x678] sm:$0xff]
        %v1420 = vld [vmem:[%s1187 + $0x680] sm:$0xff]
        %v1421 = vld [vmem:[%s1187 + $0x688] sm:$0xff]
        %v1422 = vld [vmem:[%s1187 + $0x690] sm:$0xff]
        %v1423 = vld [vmem:[%s1187 + $0x698] sm:$0xff]
        %v1424 = vld [vmem:[%s1187 + $0x6a0] sm:$0xff]
        %v1425 = vld [vmem:[%s1187 + $0x6a8] sm:$0xff]
        %v1426 = vld [vmem:[%s1187 + $0x6b0] sm:$0xff]
        %v1427 = vld [vmem:[%s1187 + $0x6b8] sm:$0xff]
        %v1428 = vld [vmem:[%s1187 + $0x6c0] sm:$0xff]
        %v1429 = vld [vmem:[%s1187 + $0x6c8] sm:$0xff]
        %v1430 = vld [vmem:[%s1187 + $0x6d0] sm:$0xff]
        %v1431 = vld [vmem:[%s1187 + $0x6d8] sm:$0xff]
        %v1432 = vld [vmem:[%s1187 + $0x6e0] sm:$0xff]
        %v1433 = vld [vmem:[%s1187 + $0x6e8] sm:$0xff]
        %v1434 = vld [vmem:[%s1187 + $0x6f0] sm:$0xff]
        %v1435 = vld [vmem:[%s1187 + $0x6f8] sm:$0xff]
        %v1436 = vld [vmem:[%s1187 + $0x700] sm:$0xff]
        %v1437 = vld [vmem:[%s1187 + $0x708] sm:$0xff]
        %v1438 = vld [vmem:[%s1187 + $0x710] sm:$0xff]
        %v1439 = vld [vmem:[%s1187 + $0x718] sm:$0xff]
        %v1440 = vld [vmem:[%s1187 + $0x720] sm:$0xff]
        %v1441 = vld [vmem:[%s1187 + $0x728] sm:$0xff]
        %v1442 = vld [vmem:[%s1187 + $0x730] sm:$0xff]
        %v1443 = vld [vmem:[%s1187 + $0x738] sm:$0xff]
        %v1444 = vld [vmem:[%s1187 + $0x740] sm:$0xff]
        %v1445 = vld [vmem:[%s1187 + $0x748] sm:$0xff]
        %v1446 = vld [vmem:[%s1187 + $0x750] sm:$0xff]
        %v1447 = vld [vmem:[%s1187 + $0x758] sm:$0xff]
        %v1448 = vld [vmem:[%s1187 + $0x760] sm:$0xff]
        %v1449 = vld [vmem:[%s1187 + $0x768] sm:$0xff]
        %v1450 = vld [vmem:[%s1187 + $0x770] sm:$0xff]
        %v1451 = vld [vmem:[%s1187 + $0x778] sm:$0xff]
        %v1452 = vld [vmem:[%s1187 + $0x780] sm:$0xff]
        %v1453 = vld [vmem:[%s1187 + $0x788] sm:$0xff]
        %v1454 = vld [vmem:[%s1187 + $0x790] sm:$0xff]
        %v1455 = vld [vmem:[%s1187 + $0x798] sm:$0xff]
        %v1456 = vld [vmem:[%s1187 + $0x7a0] sm:$0xff]
        %v1457 = vld [vmem:[%s1187 + $0x7a8] sm:$0xff]
        %v1458 = vld [vmem:[%s1187 + $0x7b0] sm:$0xff]
        %v1459 = vld [vmem:[%s1187 + $0x7b8] sm:$0xff]
        %v1460 = vld [vmem:[%s1187 + $0x7c0] sm:$0xff]
        %v1461 = vld [vmem:[%s1187 + $0x7c8] sm:$0xff]
        %v1462 = vld [vmem:[%s1187 + $0x7d0] sm:$0xff]
        %v1463 = vld [vmem:[%s1187 + $0x7d8] sm:$0xff]
        %v1464 = vld [vmem:[%s1187 + $0x7e0] sm:$0xff]
        %v1465 = vld [vmem:[%s1187 + $0x7e8] sm:$0xff]
        %v1466 = vld [vmem:[%s1187 + $0x7f0] sm:$0xff]
        %v1467 = vld [vmem:[%s1187 + $0x7f8] sm:$0xff]
        %v1468 = vld [vmem:[%s1187 + $0x800] sm:$0xff]
        %v1469 = vld [vmem:[%s1187 + $0x808] sm:$0xff]
        %v1470 = vld [vmem:[%s1187 + $0x810] sm:$0xff]
        %v1471 = vld [vmem:[%s1187 + $0x818] sm:$0xff]
        %v1472 = vld [vmem:[%s1187 + $0x820] sm:$0xff]
        %v1473 = vld [vmem:[%s1187 + $0x828] sm:$0xff]
        %v1474 = vld [vmem:[%s1187 + $0x830] sm:$0xff]
        %v1475 = vld [vmem:[%s1187 + $0x838] sm:$0xff]
        %v1476 = vld [vmem:[%s1187 + $0x840] sm:$0xff]
        %v1477 = vld [vmem:[%s1187 + $0x848] sm:$0xff]
        %v1478 = vld [vmem:[%s1187 + $0x850] sm:$0xff]
        %v1479 = vld [vmem:[%s1187 + $0x858] sm:$0xff]
        %v1480 = vld [vmem:[%s1187 + $0x860] sm:$0xff]
        %v1481 = vld [vmem:[%s1187 + $0x868] sm:$0xff]
        %v1482 = vld [vmem:[%s1187 + $0x870] sm:$0xff]
        %v1483 = vld [vmem:[%s1187 + $0x878] sm:$0xff]
        %v1484 = vld [vmem:[%s1187 + $0x880] sm:$0xff]
        %v1485 = vld [vmem:[%s1187 + $0x888] sm:$0xff]
        %v1486 = vld [vmem:[%s1187 + $0x890] sm:$0xff]
        %v1487 = vld [vmem:[%s1187 + $0x898] sm:$0xff]
        %v1488 = vld [vmem:[%s1187 + $0x8a0] sm:$0xff]
        %v1489 = vld [vmem:[%s1187 + $0x8a8] sm:$0xff]
        %v1490 = vld [vmem:[%s1187 + $0x8b0] sm:$0xff]
        %v1491 = vld [vmem:[%s1187 + $0x8b8] sm:$0xff]
        %v1492 = vld [vmem:[%s1187 + $0x8c0] sm:$0xff]
        %v1493 = vld [vmem:[%s1187 + $0x8c8] sm:$0xff]
        %v1494 = vld [vmem:[%s1187 + $0x8d0] sm:$0xff]
        %v1495 = vld [vmem:[%s1187 + $0x8d8] sm:$0xff]
        %v1496 = vld [vmem:[%s1187 + $0x8e0] sm:$0xff]
        %v1497 = vld [vmem:[%s1187 + $0x8e8] sm:$0xff]
        %v1498 = vld [vmem:[%s1187 + $0x8f0] sm:$0xff]
        %v1499 = vld [vmem:[%s1187 + $0x8f8] sm:$0xff]
        %v1500 = vld [vmem:[%s1187 + $0x900] sm:$0xff]
        %v1501 = vld [vmem:[%s1187 + $0x908] sm:$0xff]
        %v1502 = vld [vmem:[%s1187 + $0x910] sm:$0xff]
        %v1503 = vld [vmem:[%s1187 + $0x918] sm:$0xff]
        %v1504 = vld [vmem:[%s1187 + $0x920] sm:$0xff]
        %v1505 = vld [vmem:[%s1187 + $0x928] sm:$0xff]
        %v1506 = vld [vmem:[%s1187 + $0x930] sm:$0xff]
        %v1507 = vld [vmem:[%s1187 + $0x938] sm:$0xff]
        %v1508 = vld [vmem:[%s1187 + $0x940] sm:$0xff]
        %v1509 = vld [vmem:[%s1187 + $0x948] sm:$0xff]
        %v1510 = vld [vmem:[%s1187 + $0x950] sm:$0xff]
        %v1511 = vld [vmem:[%s1187 + $0x958] sm:$0xff]
        %v1512 = vld [vmem:[%s1187 + $0x960] sm:$0xff]
        %v1513 = vld [vmem:[%s1187 + $0x968] sm:$0xff]
        %v1514 = vld [vmem:[%s1187 + $0x970] sm:$0xff]
        %v1515 = vld [vmem:[%s1187 + $0x978] sm:$0xff]
        %v1516 = vld [vmem:[%s1187 + $0x980] sm:$0xff]
        %v1517 = vld [vmem:[%s1187 + $0x988] sm:$0xff]
        %v1518 = vld [vmem:[%s1187 + $0x990] sm:$0xff]
        %v1519 = vld [vmem:[%s1187 + $0x998] sm:$0xff]
        %v1520 = vld [vmem:[%s1187 + $0x9a0] sm:$0xff]
        %v1521 = vld [vmem:[%s1187 + $0x9a8] sm:$0xff]
        %v1522 = vld [vmem:[%s1187 + $0x9b0] sm:$0xff]
        %v1523 = vld [vmem:[%s1187 + $0x9b8] sm:$0xff]
        %v1524 = vld [vmem:[%s1187 + $0x9c0] sm:$0xff]
        %v1525 = vld [vmem:[%s1187 + $0x9c8] sm:$0xff]
        %v1526 = vld [vmem:[%s1187 + $0x9d0] sm:$0xff]
        %v1527 = vld [vmem:[%s1187 + $0x9d8] sm:$0xff]
        %v1528 = vld [vmem:[%s1187 + $0x9e0] sm:$0xff]
        %v1529 = vld [vmem:[%s1187 + $0x9e8] sm:$0xff]
        %v1530 = vld [vmem:[%s1187 + $0x9f0] sm:$0xff]
        %v1531 = vld [vmem:[%s1187 + $0x9f8] sm:$0xff]
        %v1532 = vld [vmem:[%s1187 + $0xa00] sm:$0xff]
        %v1533 = vld [vmem:[%s1187 + $0xa08] sm:$0xff]
        %v1534 = vld [vmem:[%s1187 + $0xa10] sm:$0xff]
        %v1535 = vld [vmem:[%s1187 + $0xa18] sm:$0xff]
        %v1536 = vld [vmem:[%s1187 + $0xa20] sm:$0xff]
        %v1537 = vld [vmem:[%s1187 + $0xa28] sm:$0xff]
        %v1538 = vld [vmem:[%s1187 + $0xa30] sm:$0xff]
        %v1539 = vld [vmem:[%s1187 + $0xa38] sm:$0xff]
        %v1540 = vld [vmem:[%s1187 + $0xa40] sm:$0xff]
        %v1541 = vld [vmem:[%s1187 + $0xa48] sm:$0xff]
        %v1542 = vld [vmem:[%s1187 + $0xa50] sm:$0xff]
        %v1543 = vld [vmem:[%s1187 + $0xa58] sm:$0xff]
        %v1544 = vld [vmem:[%s1187 + $0xa60] sm:$0xff]
        %v1545 = vld [vmem:[%s1187 + $0xa68] sm:$0xff]
        %v1546 = vld [vmem:[%s1187 + $0xa70] sm:$0xff]
        %v1547 = vld [vmem:[%s1187 + $0xa78] sm:$0xff]
        %v1548 = vld [vmem:[%s1187 + $0xa80] sm:$0xff]
        %v1549 = vld [vmem:[%s1187 + $0xa88] sm:$0xff]
        %v1550 = vld [vmem:[%s1187 + $0xa90] sm:$0xff]
        %v1551 = vld [vmem:[%s1187 + $0xa98] sm:$0xff]
        %v1552 = vld [vmem:[%s1187 + $0xaa0] sm:$0xff]
        %v1553 = vld [vmem:[%s1187 + $0xaa8] sm:$0xff]
        %v1554 = vld [vmem:[%s1187 + $0xab0] sm:$0xff]
        %v1555 = vld [vmem:[%s1187 + $0xab8] sm:$0xff]
        %v1556 = vld [vmem:[%s1187 + $0xac0] sm:$0xff]
        %v1557 = vld [vmem:[%s1187 + $0xac8] sm:$0xff]
        %v1558 = vld [vmem:[%s1187 + $0xad0] sm:$0xff]
        %v1559 = vld [vmem:[%s1187 + $0xad8] sm:$0xff]
        %v1560 = vld [vmem:[%s1187 + $0xae0] sm:$0xff]
        %v1561 = vld [vmem:[%s1187 + $0xae8] sm:$0xff]
        %v1562 = vld [vmem:[%s1187 + $0xaf0] sm:$0xff]
        %v1563 = vld [vmem:[%s1187 + $0xaf8] sm:$0xff]
        %v1564 = vld [vmem:[%s1187 + $0xb00] sm:$0xff]
        %v1565 = vld [vmem:[%s1187 + $0xb08] sm:$0xff]
        %v1566 = vld [vmem:[%s1187 + $0xb10] sm:$0xff]
        %v1567 = vld [vmem:[%s1187 + $0xb18] sm:$0xff]
        %v1568 = vld [vmem:[%s1187 + $0xb20] sm:$0xff]
        %v1569 = vld [vmem:[%s1187 + $0xb28] sm:$0xff]
        %v1570 = vld [vmem:[%s1187 + $0xb30] sm:$0xff]
        %v1571 = vld [vmem:[%s1187 + $0xb38] sm:$0xff]
        %v1572 = vld [vmem:[%s1187 + $0xb40] sm:$0xff]
        %v1573 = vld [vmem:[%s1187 + $0xb48] sm:$0xff]
        %v1574 = vld [vmem:[%s1187 + $0xb50] sm:$0xff]
        %v1575 = vld [vmem:[%s1187 + $0xb58] sm:$0xff]
        %v1576 = vld [vmem:[%s1187 + $0xb60] sm:$0xff]
        %v1577 = vld [vmem:[%s1187 + $0xb68] sm:$0xff]
        %v1578 = vld [vmem:[%s1187 + $0xb70] sm:$0xff]
        %v1579 = vld [vmem:[%s1187 + $0xb78] sm:$0xff]
        %v1580 = vld [vmem:[%s1187 + $0xb80] sm:$0xff]
        %v1581 = vld [vmem:[%s1187 + $0xb88] sm:$0xff]
        %v1582 = vld [vmem:[%s1187 + $0xb90] sm:$0xff]
        %v1583 = vld [vmem:[%s1187 + $0xb98] sm:$0xff]
        %v1584 = vld [vmem:[%s1187 + $0xba0] sm:$0xff]
        %v1585 = vld [vmem:[%s1187 + $0xba8] sm:$0xff]
        %v1586 = vld [vmem:[%s1187 + $0xbb0] sm:$0xff]
        %v1587 = vld [vmem:[%s1187 + $0xbb8] sm:$0xff]
        %v1588 = vld [vmem:[%s1187 + $0xbc0] sm:$0xff]
        %v1589 = vld [vmem:[%s1187 + $0xbc8] sm:$0xff]
        %v1590 = vld [vmem:[%s1187 + $0xbd0] sm:$0xff]
        %v1591 = vld [vmem:[%s1187 + $0xbd8] sm:$0xff]
        %v1592 = vld [vmem:[%s1187 + $0xbe0] sm:$0xff]
        %v1593 = vld [vmem:[%s1187 + $0xbe8] sm:$0xff]
        %v1594 = vld [vmem:[%s1187 + $0xbf0] sm:$0xff]
        %v1595 = vld [vmem:[%s1187 + $0xbf8] sm:$0xff]
        %v1596 = vld [vmem:[%s1187 + $0xc00] sm:$0xff]
        %v1597 = vld [vmem:[%s1187 + $0xc08] sm:$0xff]
        %v1598 = vld [vmem:[%s1187 + $0xc10] sm:$0xff]
        %v1599 = vld [vmem:[%s1187 + $0xc18] sm:$0xff]
        %v1600 = vld [vmem:[%s1187 + $0xc20] sm:$0xff]
        %v1601 = vld [vmem:[%s1187 + $0xc28] sm:$0xff]
        %v1602 = vld [vmem:[%s1187 + $0xc30] sm:$0xff]
        %v1603 = vld [vmem:[%s1187 + $0xc38] sm:$0xff]
        %v1604 = vld [vmem:[%s1187 + $0xc40] sm:$0xff]
        %v1605 = vld [vmem:[%s1187 + $0xc48] sm:$0xff]
        %v1606 = vld [vmem:[%s1187 + $0xc50] sm:$0xff]
        %v1607 = vld [vmem:[%s1187 + $0xc58] sm:$0xff]
        %v1608 = vld [vmem:[%s1187 + $0xc60] sm:$0xff]
        %v1609 = vld [vmem:[%s1187 + $0xc68] sm:$0xff]
        %v1610 = vld [vmem:[%s1187 + $0xc70] sm:$0xff]
        %v1611 = vld [vmem:[%s1187 + $0xc78] sm:$0xff]
        %v1612 = vld [vmem:[%s1187 + $0xc80] sm:$0xff]
        %v1613 = vld [vmem:[%s1187 + $0xc88] sm:$0xff]
        %v1614 = vld [vmem:[%s1187 + $0xc90] sm:$0xff]
        %v1615 = vld [vmem:[%s1187 + $0xc98] sm:$0xff]
        %v1616 = vld [vmem:[%s1187 + $0xca0] sm:$0xff]
        %v1617 = vld [vmem:[%s1187 + $0xca8] sm:$0xff]
        %v1618 = vld [vmem:[%s1187 + $0xcb0] sm:$0xff]
        %v1619 = vld [vmem:[%s1187 + $0xcb8] sm:$0xff]
        %v1620 = vld [vmem:[%s1187 + $0xcc0] sm:$0xff]
        %v1621 = vld [vmem:[%s1187 + $0xcc8] sm:$0xff]
        %v1622 = vld [vmem:[%s1187 + $0xcd0] sm:$0xff]
        %v1623 = vld [vmem:[%s1187 + $0xcd8] sm:$0xff]
        %v1624 = vld [vmem:[%s1187 + $0xce0] sm:$0xff]
        %v1625 = vld [vmem:[%s1187 + $0xce8] sm:$0xff]
        %v1626 = vld [vmem:[%s1187 + $0xcf0] sm:$0xff]
        %v1627 = vld [vmem:[%s1187 + $0xcf8] sm:$0xff]
        %v1628 = vld [vmem:[%s1187 + $0xd00] sm:$0xff]
        %v1629 = vld [vmem:[%s1187 + $0xd08] sm:$0xff]
        %v1630 = vld [vmem:[%s1187 + $0xd10] sm:$0xff]
        %v1631 = vld [vmem:[%s1187 + $0xd18] sm:$0xff]
        %v1632 = vld [vmem:[%s1187 + $0xd20] sm:$0xff]
        %v1633 = vld [vmem:[%s1187 + $0xd28] sm:$0xff]
        %v1634 = vld [vmem:[%s1187 + $0xd30] sm:$0xff]
        %v1635 = vld [vmem:[%s1187 + $0xd38] sm:$0xff]
        %v1636 = vld [vmem:[%s1187 + $0xd40] sm:$0xff]
        %v1637 = vld [vmem:[%s1187 + $0xd48] sm:$0xff]
        %v1638 = vld [vmem:[%s1187 + $0xd50] sm:$0xff]
        %v1639 = vld [vmem:[%s1187 + $0xd58] sm:$0xff]
        %v1640 = vld [vmem:[%s1187 + $0xd60] sm:$0xff]
        %v1641 = vld [vmem:[%s1187 + $0xd68] sm:$0xff]
        %v1642 = vld [vmem:[%s1187 + $0xd70] sm:$0xff]
        %v1643 = vld [vmem:[%s1187 + $0xd78] sm:$0xff]
        %v1644 = vld [vmem:[%s1187 + $0xd80] sm:$0xff]
        %v1645 = vld [vmem:[%s1187 + $0xd88] sm:$0xff]
        %v1646 = vld [vmem:[%s1187 + $0xd90] sm:$0xff]
        %v1647 = vld [vmem:[%s1187 + $0xd98] sm:$0xff]
        %v1648 = vld [vmem:[%s1187 + $0xda0] sm:$0xff]
        %v1649 = vld [vmem:[%s1187 + $0xda8] sm:$0xff]
        %v1650 = vld [vmem:[%s1187 + $0xdb0] sm:$0xff]
        %v1651 = vld [vmem:[%s1187 + $0xdb8] sm:$0xff]
        %v1652 = vld [vmem:[%s1187 + $0xdc0] sm:$0xff]
        %v1653 = vld [vmem:[%s1187 + $0xdc8] sm:$0xff]
        %v1654 = vld [vmem:[%s1187 + $0xdd0] sm:$0xff]
        %v1655 = vld [vmem:[%s1187 + $0xdd8] sm:$0xff]
        %v1656 = vld [vmem:[%s1187 + $0xde0] sm:$0xff]
        %v1657 = vld [vmem:[%s1187 + $0xde8] sm:$0xff]
        %v1658 = vld [vmem:[%s1187 + $0xdf0] sm:$0xff]
        %v1659 = vld [vmem:[%s1187 + $0xdf8] sm:$0xff]
        %v1660 = vld [vmem:[%s1187 + $0xe00] sm:$0xff]
        %v1661 = vld [vmem:[%s1187 + $0xe08] sm:$0xff]
        %v1662 = vld [vmem:[%s1187 + $0xe10] sm:$0xff]
        %v1663 = vld [vmem:[%s1187 + $0xe18] sm:$0xff]
        %v1664 = vld [vmem:[%s1187 + $0xe20] sm:$0xff]
        %v1665 = vld [vmem:[%s1187 + $0xe28] sm:$0xff]
        %v1666 = vld [vmem:[%s1187 + $0xe30] sm:$0xff]
        %v1667 = vld [vmem:[%s1187 + $0xe38] sm:$0xff]
        %v1668 = vld [vmem:[%s1187 + $0xe40] sm:$0xff]
        %v1669 = vld [vmem:[%s1187 + $0xe48] sm:$0xff]
        %v1670 = vld [vmem:[%s1187 + $0xe50] sm:$0xff]
        %v1671 = vld [vmem:[%s1187 + $0xe58] sm:$0xff]
        %v1672 = vld [vmem:[%s1187 + $0xe60] sm:$0xff]
        %v1673 = vld [vmem:[%s1187 + $0xe68] sm:$0xff]
        %v1674 = vld [vmem:[%s1187 + $0xe70] sm:$0xff]
        %v1675 = vld [vmem:[%s1187 + $0xe78] sm:$0xff]
        %v1676 = vld [vmem:[%s1187 + $0xe80] sm:$0xff]
        %v1677 = vld [vmem:[%s1187 + $0xe88] sm:$0xff]
        %v1678 = vld [vmem:[%s1187 + $0xe90] sm:$0xff]
        %v1679 = vld [vmem:[%s1187 + $0xe98] sm:$0xff]
        %v1680 = vld [vmem:[%s1187 + $0xea0] sm:$0xff]
        %v1681 = vld [vmem:[%s1187 + $0xea8] sm:$0xff]
        %v1682 = vld [vmem:[%s1187 + $0xeb0] sm:$0xff]
        %v1683 = vld [vmem:[%s1187 + $0xeb8] sm:$0xff]
        %v1684 = vld [vmem:[%s1187 + $0xec0] sm:$0xff]
        %v1685 = vld [vmem:[%s1187 + $0xec8] sm:$0xff]
        %v1686 = vld [vmem:[%s1187 + $0xed0] sm:$0xff]
        %v1687 = vld [vmem:[%s1187 + $0xed8] sm:$0xff]
        %v1688 = vld [vmem:[%s1187 + $0xee0] sm:$0xff]
        %v1689 = vld [vmem:[%s1187 + $0xee8] sm:$0xff]
        %v1690 = vld [vmem:[%s1187 + $0xef0] sm:$0xff]
        %v1691 = vld [vmem:[%s1187 + $0xef8] sm:$0xff]
        %v1692 = vld [vmem:[%s1187 + $0xf00] sm:$0xff]
        %v1693 = vld [vmem:[%s1187 + $0xf08] sm:$0xff]
        %v1694 = vld [vmem:[%s1187 + $0xf10] sm:$0xff]
        %v1695 = vld [vmem:[%s1187 + $0xf18] sm:$0xff]
        %v1696 = vld [vmem:[%s1187 + $0xf20] sm:$0xff]
        %v1697 = vld [vmem:[%s1187 + $0xf28] sm:$0xff]
        %v1698 = vld [vmem:[%s1187 + $0xf30] sm:$0xff]
        %v1699 = vld [vmem:[%s1187 + $0xf38] sm:$0xff]
        %v1700 = vld [vmem:[%s1187 + $0xf40] sm:$0xff]
        %v1701 = vld [vmem:[%s1187 + $0xf48] sm:$0xff]
        %v1702 = vld [vmem:[%s1187 + $0xf50] sm:$0xff]
        %v1703 = vld [vmem:[%s1187 + $0xf58] sm:$0xff]
        %v1704 = vld [vmem:[%s1187 + $0xf60] sm:$0xff]
        %v1705 = vld [vmem:[%s1187 + $0xf68] sm:$0xff]
        %v1706 = vld [vmem:[%s1187 + $0xf70] sm:$0xff]
        %v1707 = vld [vmem:[%s1187 + $0xf78] sm:$0xff]
        %v1708 = vld [vmem:[%s1187 + $0xf80] sm:$0xff]
        %v1709 = vld [vmem:[%s1187 + $0xf88] sm:$0xff]
        %v1710 = vld [vmem:[%s1187 + $0xf90] sm:$0xff]
        %v1711 = vld [vmem:[%s1187 + $0xf98] sm:$0xff]
        %v1712 = vld [vmem:[%s1187 + $0xfa0] sm:$0xff]
        %v1713 = vld [vmem:[%s1187 + $0xfa8] sm:$0xff]
        %v1714 = vld [vmem:[%s1187 + $0xfb0] sm:$0xff]
        %v1715 = vld [vmem:[%s1187 + $0xfb8] sm:$0xff]
        %v1716 = vld [vmem:[%s1187 + $0xfc0] sm:$0xff]
        %v1717 = vld [vmem:[%s1187 + $0xfc8] sm:$0xff]
        %v1718 = vld [vmem:[%s1187 + $0xfd0] sm:$0xff]
        %v1719 = vld [vmem:[%s1187 + $0xfd8] sm:$0xff]
        %v1720 = vld [vmem:[%s1187 + $0xfe0] sm:$0xff]
        %v1721 = vld [vmem:[%s1187 + $0xfe8] sm:$0xff]
        %v1722 = vld [vmem:[%s1187 + $0xff0] sm:$0xff]
        %v1723 = vld [vmem:[%s1187 + $0xff8] sm:$0xff]
        %v1724 = vld [vmem:[%s2] sm:$0xff]
        %v1725 = vld [vmem:[%s2 + $0x8] sm:$0xff]
        %1727 = vset.pattern.permute.xlu0 0
        %1728 = vperm.xlu0 %1727, %v1724
        %v1729 = vpop.permute.xlu0 %1728
        %1732 = vset.pattern.permute.xlu0 0
        %1733 = vperm.xlu0 %1732, %v1725
        %v1734 = vpop.permute.xlu0 %1733
        %v1738 = vunpack.c.l.b16 %v1210
        %v1739 = vunpack.c.l.b16 %v1211
        %v1740 = vpack.c.b16 %v1739, %v1738
        %v2254 = vunpack.c.l.b16 %v1212
        %v2255 = vunpack.c.h.b16 %v1212
        %v2256 = vunpack.c.l.b16 %v1213
        %v2257 = vunpack.c.h.b16 %v1213
        %v2258 = vunpack.c.l.b16 %v1214
        %v2259 = vunpack.c.h.b16 %v1214
        %v2260 = vunpack.c.l.b16 %v1215
        %v2261 = vunpack.c.h.b16 %v1215
        %v2262 = vunpack.c.l.b16 %v1216
        %v2263 = vunpack.c.h.b16 %v1216
        %v2264 = vunpack.c.l.b16 %v1217
        %v2265 = vunpack.c.h.b16 %v1217
        %v2266 = vunpack.c.l.b16 %v1218
        %v2267 = vunpack.c.h.b16 %v1218
        %v2268 = vunpack.c.l.b16 %v1219
        %v2269 = vunpack.c.h.b16 %v1219
        %v2270 = vunpack.c.l.b16 %v1220
        %v2271 = vunpack.c.h.b16 %v1220
        %v2272 = vunpack.c.l.b16 %v1221
        %v2273 = vunpack.c.h.b16 %v1221
        %v2274 = vunpack.c.l.b16 %v1222
        %v2275 = vunpack.c.h.b16 %v1222
        %v2276 = vunpack.c.l.b16 %v1223
        %v2277 = vunpack.c.h.b16 %v1223
        %v2278 = vunpack.c.l.b16 %v1224
        %v2279 = vunpack.c.h.b16 %v1224
        %v2280 = vunpack.c.l.b16 %v1225
        %v2281 = vunpack.c.h.b16 %v1225
        %v2282 = vunpack.c.l.b16 %v1226
        %v2283 = vunpack.c.h.b16 %v1226
        %v2284 = vunpack.c.l.b16 %v1227
        %v2285 = vunpack.c.h.b16 %v1227
        %v2286 = vunpack.c.l.b16 %v1228
        %v2287 = vunpack.c.h.b16 %v1228
        %v2288 = vunpack.c.l.b16 %v1229
        %v2289 = vunpack.c.h.b16 %v1229
        %v2290 = vunpack.c.l.b16 %v1230
        %v2291 = vunpack.c.h.b16 %v1230
        %v2292 = vunpack.c.l.b16 %v1231
        %v2293 = vunpack.c.h.b16 %v1231
        %v2294 = vunpack.c.l.b16 %v1232
        %v2295 = vunpack.c.h.b16 %v1232
        %v2296 = vunpack.c.l.b16 %v1233
        %v2297 = vunpack.c.h.b16 %v1233
        %v2298 = vunpack.c.l.b16 %v1234
        %v2299 = vunpack.c.h.b16 %v1234
        %v2300 = vunpack.c.l.b16 %v1235
        %v2301 = vunpack.c.h.b16 %v1235
        %v2302 = vunpack.c.l.b16 %v1236
        %v2303 = vunpack.c.h.b16 %v1236
        %v2304 = vunpack.c.l.b16 %v1237
        %v2305 = vunpack.c.h.b16 %v1237
        %v2306 = vunpack.c.l.b16 %v1238
        %v2307 = vunpack.c.h.b16 %v1238
        %v2308 = vunpack.c.l.b16 %v1239
        %v2309 = vunpack.c.h.b16 %v1239
        %v2310 = vunpack.c.l.b16 %v1240
        %v2311 = vunpack.c.h.b16 %v1240
        %v2312 = vunpack.c.l.b16 %v1241
        %v2313 = vunpack.c.h.b16 %v1241
        %v2314 = vunpack.c.l.b16 %v1242
        %v2315 = vunpack.c.h.b16 %v1242
        %v2316 = vunpack.c.l.b16 %v1243
        %v2317 = vunpack.c.h.b16 %v1243
        %v2318 = vunpack.c.l.b16 %v1244
        %v2319 = vunpack.c.h.b16 %v1244
        %v2320 = vunpack.c.l.b16 %v1245
        %v2321 = vunpack.c.h.b16 %v1245
        %v2322 = vunpack.c.l.b16 %v1246
        %v2323 = vunpack.c.h.b16 %v1246
        %v2324 = vunpack.c.l.b16 %v1247
        %v2325 = vunpack.c.h.b16 %v1247
        %v2326 = vunpack.c.l.b16 %v1248
        %v2327 = vunpack.c.h.b16 %v1248
        %v2328 = vunpack.c.l.b16 %v1249
        %v2329 = vunpack.c.h.b16 %v1249
        %v2330 = vunpack.c.l.b16 %v1250
        %v2331 = vunpack.c.h.b16 %v1250
        %v2332 = vunpack.c.l.b16 %v1251
        %v2333 = vunpack.c.h.b16 %v1251
        %v2334 = vunpack.c.l.b16 %v1252
        %v2335 = vunpack.c.h.b16 %v1252
        %v2336 = vunpack.c.l.b16 %v1253
        %v2337 = vunpack.c.h.b16 %v1253
        %v2338 = vunpack.c.l.b16 %v1254
        %v2339 = vunpack.c.h.b16 %v1254
        %v2340 = vunpack.c.l.b16 %v1255
        %v2341 = vunpack.c.h.b16 %v1255
        %v2342 = vunpack.c.l.b16 %v1256
        %v2343 = vunpack.c.h.b16 %v1256
        %v2344 = vunpack.c.l.b16 %v1257
        %v2345 = vunpack.c.h.b16 %v1257
        %v2346 = vunpack.c.l.b16 %v1258
        %v2347 = vunpack.c.h.b16 %v1258
        %v2348 = vunpack.c.l.b16 %v1259
        %v2349 = vunpack.c.h.b16 %v1259
        %v2350 = vunpack.c.l.b16 %v1260
        %v2351 = vunpack.c.h.b16 %v1260
        %v2352 = vunpack.c.l.b16 %v1261
        %v2353 = vunpack.c.h.b16 %v1261
        %v2354 = vunpack.c.l.b16 %v1262
        %v2355 = vunpack.c.h.b16 %v1262
        %v2356 = vunpack.c.l.b16 %v1263
        %v2357 = vunpack.c.h.b16 %v1263
        %v2358 = vunpack.c.l.b16 %v1264
        %v2359 = vunpack.c.h.b16 %v1264
        %v2360 = vunpack.c.l.b16 %v1265
        %v2361 = vunpack.c.h.b16 %v1265
        %v2362 = vunpack.c.l.b16 %v1266
        %v2363 = vunpack.c.h.b16 %v1266
        %v2364 = vunpack.c.l.b16 %v1267
        %v2365 = vunpack.c.h.b16 %v1267
        %v2366 = vunpack.c.l.b16 %v1268
        %v2367 = vunpack.c.h.b16 %v1268
        %v2368 = vunpack.c.l.b16 %v1269
        %v2369 = vunpack.c.h.b16 %v1269
        %v2370 = vunpack.c.l.b16 %v1270
        %v2371 = vunpack.c.h.b16 %v1270
        %v2372 = vunpack.c.l.b16 %v1271
        %v2373 = vunpack.c.h.b16 %v1271
        %v2374 = vunpack.c.l.b16 %v1272
        %v2375 = vunpack.c.h.b16 %v1272
        %v2376 = vunpack.c.l.b16 %v1273
        %v2377 = vunpack.c.h.b16 %v1273
        %v2378 = vunpack.c.l.b16 %v1274
        %v2379 = vunpack.c.h.b16 %v1274
        %v2380 = vunpack.c.l.b16 %v1275
        %v2381 = vunpack.c.h.b16 %v1275
        %v2382 = vunpack.c.l.b16 %v1276
        %v2383 = vunpack.c.h.b16 %v1276
        %v2384 = vunpack.c.l.b16 %v1277
        %v2385 = vunpack.c.h.b16 %v1277
        %v2386 = vunpack.c.l.b16 %v1278
        %v2387 = vunpack.c.h.b16 %v1278
        %v2388 = vunpack.c.l.b16 %v1279
        %v2389 = vunpack.c.h.b16 %v1279
        %v2390 = vunpack.c.l.b16 %v1280
        %v2391 = vunpack.c.h.b16 %v1280
        %v2392 = vunpack.c.l.b16 %v1281
        %v2393 = vunpack.c.h.b16 %v1281
        %v2394 = vunpack.c.l.b16 %v1282
        %v2395 = vunpack.c.h.b16 %v1282
        %v2396 = vunpack.c.l.b16 %v1283
        %v2397 = vunpack.c.h.b16 %v1283
        %v2398 = vunpack.c.l.b16 %v1284
        %v2399 = vunpack.c.h.b16 %v1284
        %v2400 = vunpack.c.l.b16 %v1285
        %v2401 = vunpack.c.h.b16 %v1285
        %v2402 = vunpack.c.l.b16 %v1286
        %v2403 = vunpack.c.h.b16 %v1286
        %v2404 = vunpack.c.l.b16 %v1287
        %v2405 = vunpack.c.h.b16 %v1287
        %v2406 = vunpack.c.l.b16 %v1288
        %v2407 = vunpack.c.h.b16 %v1288
        %v2408 = vunpack.c.l.b16 %v1289
        %v2409 = vunpack.c.h.b16 %v1289
        %v2410 = vunpack.c.l.b16 %v1290
        %v2411 = vunpack.c.h.b16 %v1290
        %v2412 = vunpack.c.l.b16 %v1291
        %v2413 = vunpack.c.h.b16 %v1291
        %v2414 = vunpack.c.l.b16 %v1292
        %v2415 = vunpack.c.h.b16 %v1292
        %v2416 = vunpack.c.l.b16 %v1293
        %v2417 = vunpack.c.h.b16 %v1293
        %v2418 = vunpack.c.l.b16 %v1294
        %v2419 = vunpack.c.h.b16 %v1294
        %v2420 = vunpack.c.l.b16 %v1295
        %v2421 = vunpack.c.h.b16 %v1295
        %v2422 = vunpack.c.l.b16 %v1296
        %v2423 = vunpack.c.h.b16 %v1296
        %v2424 = vunpack.c.l.b16 %v1297
        %v2425 = vunpack.c.h.b16 %v1297
        %v2426 = vunpack.c.l.b16 %v1298
        %v2427 = vunpack.c.h.b16 %v1298
        %v2428 = vunpack.c.l.b16 %v1299
        %v2429 = vunpack.c.h.b16 %v1299
        %v2430 = vunpack.c.l.b16 %v1300
        %v2431 = vunpack.c.h.b16 %v1300
        %v2432 = vunpack.c.l.b16 %v1301
        %v2433 = vunpack.c.h.b16 %v1301
        %v2434 = vunpack.c.l.b16 %v1302
        %v2435 = vunpack.c.h.b16 %v1302
        %v2436 = vunpack.c.l.b16 %v1303
        %v2437 = vunpack.c.h.b16 %v1303
        %v2438 = vunpack.c.l.b16 %v1304
        %v2439 = vunpack.c.h.b16 %v1304
        %v2440 = vunpack.c.l.b16 %v1305
        %v2441 = vunpack.c.h.b16 %v1305
        %v2442 = vunpack.c.l.b16 %v1306
        %v2443 = vunpack.c.h.b16 %v1306
        %v2444 = vunpack.c.l.b16 %v1307
        %v2445 = vunpack.c.h.b16 %v1307
        %v2446 = vunpack.c.l.b16 %v1308
        %v2447 = vunpack.c.h.b16 %v1308
        %v2448 = vunpack.c.l.b16 %v1309
        %v2449 = vunpack.c.h.b16 %v1309
        %v2450 = vunpack.c.l.b16 %v1310
        %v2451 = vunpack.c.h.b16 %v1310
        %v2452 = vunpack.c.l.b16 %v1311
        %v2453 = vunpack.c.h.b16 %v1311
        %v2454 = vunpack.c.l.b16 %v1312
        %v2455 = vunpack.c.h.b16 %v1312
        %v2456 = vunpack.c.l.b16 %v1313
        %v2457 = vunpack.c.h.b16 %v1313
        %v2458 = vunpack.c.l.b16 %v1314
        %v2459 = vunpack.c.h.b16 %v1314
        %v2460 = vunpack.c.l.b16 %v1315
        %v2461 = vunpack.c.h.b16 %v1315
        %v2462 = vunpack.c.l.b16 %v1316
        %v2463 = vunpack.c.h.b16 %v1316
        %v2464 = vunpack.c.l.b16 %v1317
        %v2465 = vunpack.c.h.b16 %v1317
        %v2466 = vunpack.c.l.b16 %v1318
        %v2467 = vunpack.c.h.b16 %v1318
        %v2468 = vunpack.c.l.b16 %v1319
        %v2469 = vunpack.c.h.b16 %v1319
        %v2470 = vunpack.c.l.b16 %v1320
        %v2471 = vunpack.c.h.b16 %v1320
        %v2472 = vunpack.c.l.b16 %v1321
        %v2473 = vunpack.c.h.b16 %v1321
        %v2474 = vunpack.c.l.b16 %v1322
        %v2475 = vunpack.c.h.b16 %v1322
        %v2476 = vunpack.c.l.b16 %v1323
        %v2477 = vunpack.c.h.b16 %v1323
        %v2478 = vunpack.c.l.b16 %v1324
        %v2479 = vunpack.c.h.b16 %v1324
        %v2480 = vunpack.c.l.b16 %v1325
        %v2481 = vunpack.c.h.b16 %v1325
        %v2482 = vunpack.c.l.b16 %v1326
        %v2483 = vunpack.c.h.b16 %v1326
        %v2484 = vunpack.c.l.b16 %v1327
        %v2485 = vunpack.c.h.b16 %v1327
        %v2486 = vunpack.c.l.b16 %v1328
        %v2487 = vunpack.c.h.b16 %v1328
        %v2488 = vunpack.c.l.b16 %v1329
        %v2489 = vunpack.c.h.b16 %v1329
        %v2490 = vunpack.c.l.b16 %v1330
        %v2491 = vunpack.c.h.b16 %v1330
        %v2492 = vunpack.c.l.b16 %v1331
        %v2493 = vunpack.c.h.b16 %v1331
        %v2494 = vunpack.c.l.b16 %v1332
        %v2495 = vunpack.c.h.b16 %v1332
        %v2496 = vunpack.c.l.b16 %v1333
        %v2497 = vunpack.c.h.b16 %v1333
        %v2498 = vunpack.c.l.b16 %v1334
        %v2499 = vunpack.c.h.b16 %v1334
        %v2500 = vunpack.c.l.b16 %v1335
        %v2501 = vunpack.c.h.b16 %v1335
        %v2502 = vunpack.c.l.b16 %v1336
        %v2503 = vunpack.c.h.b16 %v1336
        %v2504 = vunpack.c.l.b16 %v1337
        %v2505 = vunpack.c.h.b16 %v1337
        %v2506 = vunpack.c.l.b16 %v1338
        %v2507 = vunpack.c.h.b16 %v1338
        %v2508 = vunpack.c.l.b16 %v1339
        %v2509 = vunpack.c.h.b16 %v1339
        %v2510 = vunpack.c.l.b16 %v1340
        %v2511 = vunpack.c.h.b16 %v1340
        %v2512 = vunpack.c.l.b16 %v1341
        %v2513 = vunpack.c.h.b16 %v1341
        %v2514 = vunpack.c.l.b16 %v1342
        %v2515 = vunpack.c.h.b16 %v1342
        %v2516 = vunpack.c.l.b16 %v1343
        %v2517 = vunpack.c.h.b16 %v1343
        %v2518 = vunpack.c.l.b16 %v1344
        %v2519 = vunpack.c.h.b16 %v1344
        %v2520 = vunpack.c.l.b16 %v1345
        %v2521 = vunpack.c.h.b16 %v1345
        %v2522 = vunpack.c.l.b16 %v1346
        %v2523 = vunpack.c.h.b16 %v1346
        %v2524 = vunpack.c.l.b16 %v1347
        %v2525 = vunpack.c.h.b16 %v1347
        %v2526 = vunpack.c.l.b16 %v1348
        %v2527 = vunpack.c.h.b16 %v1348
        %v2528 = vunpack.c.l.b16 %v1349
        %v2529 = vunpack.c.h.b16 %v1349
        %v2530 = vunpack.c.l.b16 %v1350
        %v2531 = vunpack.c.h.b16 %v1350
        %v2532 = vunpack.c.l.b16 %v1351
        %v2533 = vunpack.c.h.b16 %v1351
        %v2534 = vunpack.c.l.b16 %v1352
        %v2535 = vunpack.c.h.b16 %v1352
        %v2536 = vunpack.c.l.b16 %v1353
        %v2537 = vunpack.c.h.b16 %v1353
        %v2538 = vunpack.c.l.b16 %v1354
        %v2539 = vunpack.c.h.b16 %v1354
        %v2540 = vunpack.c.l.b16 %v1355
        %v2541 = vunpack.c.h.b16 %v1355
        %v2542 = vunpack.c.l.b16 %v1356
        %v2543 = vunpack.c.h.b16 %v1356
        %v2544 = vunpack.c.l.b16 %v1357
        %v2545 = vunpack.c.h.b16 %v1357
        %v2546 = vunpack.c.l.b16 %v1358
        %v2547 = vunpack.c.h.b16 %v1358
        %v2548 = vunpack.c.l.b16 %v1359
        %v2549 = vunpack.c.h.b16 %v1359
        %v2550 = vunpack.c.l.b16 %v1360
        %v2551 = vunpack.c.h.b16 %v1360
        %v2552 = vunpack.c.l.b16 %v1361
        %v2553 = vunpack.c.h.b16 %v1361
        %v2554 = vunpack.c.l.b16 %v1362
        %v2555 = vunpack.c.h.b16 %v1362
        %v2556 = vunpack.c.l.b16 %v1363
        %v2557 = vunpack.c.h.b16 %v1363
        %v2558 = vunpack.c.l.b16 %v1364
        %v2559 = vunpack.c.h.b16 %v1364
        %v2560 = vunpack.c.l.b16 %v1365
        %v2561 = vunpack.c.h.b16 %v1365
        %v2562 = vunpack.c.l.b16 %v1366
        %v2563 = vunpack.c.h.b16 %v1366
        %v2564 = vunpack.c.l.b16 %v1367
        %v2565 = vunpack.c.h.b16 %v1367
        %v2566 = vunpack.c.l.b16 %v1368
        %v2567 = vunpack.c.h.b16 %v1368
        %v2568 = vunpack.c.l.b16 %v1369
        %v2569 = vunpack.c.h.b16 %v1369
        %v2570 = vunpack.c.l.b16 %v1370
        %v2571 = vunpack.c.h.b16 %v1370
        %v2572 = vunpack.c.l.b16 %v1371
        %v2573 = vunpack.c.h.b16 %v1371
        %v2574 = vunpack.c.l.b16 %v1372
        %v2575 = vunpack.c.h.b16 %v1372
        %v2576 = vunpack.c.l.b16 %v1373
        %v2577 = vunpack.c.h.b16 %v1373
        %v2578 = vunpack.c.l.b16 %v1374
        %v2579 = vunpack.c.h.b16 %v1374
        %v2580 = vunpack.c.l.b16 %v1375
        %v2581 = vunpack.c.h.b16 %v1375
        %v2582 = vunpack.c.l.b16 %v1376
        %v2583 = vunpack.c.h.b16 %v1376
        %v2584 = vunpack.c.l.b16 %v1377
        %v2585 = vunpack.c.h.b16 %v1377
        %v2586 = vunpack.c.l.b16 %v1378
        %v2587 = vunpack.c.h.b16 %v1378
        %v2588 = vunpack.c.l.b16 %v1379
        %v2589 = vunpack.c.h.b16 %v1379
        %v2590 = vunpack.c.l.b16 %v1380
        %v2591 = vunpack.c.h.b16 %v1380
        %v2592 = vunpack.c.l.b16 %v1381
        %v2593 = vunpack.c.h.b16 %v1381
        %v2594 = vunpack.c.l.b16 %v1382
        %v2595 = vunpack.c.h.b16 %v1382
        %v2596 = vunpack.c.l.b16 %v1383
        %v2597 = vunpack.c.h.b16 %v1383
        %v2598 = vunpack.c.l.b16 %v1384
        %v2599 = vunpack.c.h.b16 %v1384
        %v2600 = vunpack.c.l.b16 %v1385
        %v2601 = vunpack.c.h.b16 %v1385
        %v2602 = vunpack.c.l.b16 %v1386
        %v2603 = vunpack.c.h.b16 %v1386
        %v2604 = vunpack.c.l.b16 %v1387
        %v2605 = vunpack.c.h.b16 %v1387
        %v2606 = vunpack.c.l.b16 %v1388
        %v2607 = vunpack.c.h.b16 %v1388
        %v2608 = vunpack.c.l.b16 %v1389
        %v2609 = vunpack.c.h.b16 %v1389
        %v2610 = vunpack.c.l.b16 %v1390
        %v2611 = vunpack.c.h.b16 %v1390
        %v2612 = vunpack.c.l.b16 %v1391
        %v2613 = vunpack.c.h.b16 %v1391
        %v2614 = vunpack.c.l.b16 %v1392
        %v2615 = vunpack.c.h.b16 %v1392
        %v2616 = vunpack.c.l.b16 %v1393
        %v2617 = vunpack.c.h.b16 %v1393
        %v2618 = vunpack.c.l.b16 %v1394
        %v2619 = vunpack.c.h.b16 %v1394
        %v2620 = vunpack.c.l.b16 %v1395
        %v2621 = vunpack.c.h.b16 %v1395
        %v2622 = vunpack.c.l.b16 %v1396
        %v2623 = vunpack.c.h.b16 %v1396
        %v2624 = vunpack.c.l.b16 %v1397
        %v2625 = vunpack.c.h.b16 %v1397
        %v2626 = vunpack.c.l.b16 %v1398
        %v2627 = vunpack.c.h.b16 %v1398
        %v2628 = vunpack.c.l.b16 %v1399
        %v2629 = vunpack.c.h.b16 %v1399
        %v2630 = vunpack.c.l.b16 %v1400
        %v2631 = vunpack.c.h.b16 %v1400
        %v2632 = vunpack.c.l.b16 %v1401
        %v2633 = vunpack.c.h.b16 %v1401
        %v2634 = vunpack.c.l.b16 %v1402
        %v2635 = vunpack.c.h.b16 %v1402
        %v2636 = vunpack.c.l.b16 %v1403
        %v2637 = vunpack.c.h.b16 %v1403
        %v2638 = vunpack.c.l.b16 %v1404
        %v2639 = vunpack.c.h.b16 %v1404
        %v2640 = vunpack.c.l.b16 %v1405
        %v2641 = vunpack.c.h.b16 %v1405
        %v2642 = vunpack.c.l.b16 %v1406
        %v2643 = vunpack.c.h.b16 %v1406
        %v2644 = vunpack.c.l.b16 %v1407
        %v2645 = vunpack.c.h.b16 %v1407
        %v2646 = vunpack.c.l.b16 %v1408
        %v2647 = vunpack.c.h.b16 %v1408
        %v2648 = vunpack.c.l.b16 %v1409
        %v2649 = vunpack.c.h.b16 %v1409
        %v2650 = vunpack.c.l.b16 %v1410
        %v2651 = vunpack.c.h.b16 %v1410
        %v2652 = vunpack.c.l.b16 %v1411
        %v2653 = vunpack.c.h.b16 %v1411
        %v2654 = vunpack.c.l.b16 %v1412
        %v2655 = vunpack.c.h.b16 %v1412
        %v2656 = vunpack.c.l.b16 %v1413
        %v2657 = vunpack.c.h.b16 %v1413
        %v2658 = vunpack.c.l.b16 %v1414
        %v2659 = vunpack.c.h.b16 %v1414
        %v2660 = vunpack.c.l.b16 %v1415
        %v2661 = vunpack.c.h.b16 %v1415
        %v2662 = vunpack.c.l.b16 %v1416
        %v2663 = vunpack.c.h.b16 %v1416
        %v2664 = vunpack.c.l.b16 %v1417
        %v2665 = vunpack.c.h.b16 %v1417
        %v2666 = vunpack.c.l.b16 %v1418
        %v2667 = vunpack.c.h.b16 %v1418
        %v2668 = vunpack.c.l.b16 %v1419
        %v2669 = vunpack.c.h.b16 %v1419
        %v2670 = vunpack.c.l.b16 %v1420
        %v2671 = vunpack.c.h.b16 %v1420
        %v2672 = vunpack.c.l.b16 %v1421
        %v2673 = vunpack.c.h.b16 %v1421
        %v2674 = vunpack.c.l.b16 %v1422
        %v2675 = vunpack.c.h.b16 %v1422
        %v2676 = vunpack.c.l.b16 %v1423
        %v2677 = vunpack.c.h.b16 %v1423
        %v2678 = vunpack.c.l.b16 %v1424
        %v2679 = vunpack.c.h.b16 %v1424
        %v2680 = vunpack.c.l.b16 %v1425
        %v2681 = vunpack.c.h.b16 %v1425
        %v2682 = vunpack.c.l.b16 %v1426
        %v2683 = vunpack.c.h.b16 %v1426
        %v2684 = vunpack.c.l.b16 %v1427
        %v2685 = vunpack.c.h.b16 %v1427
        %v2686 = vunpack.c.l.b16 %v1428
        %v2687 = vunpack.c.h.b16 %v1428
        %v2688 = vunpack.c.l.b16 %v1429
        %v2689 = vunpack.c.h.b16 %v1429
        %v2690 = vunpack.c.l.b16 %v1430
        %v2691 = vunpack.c.h.b16 %v1430
        %v2692 = vunpack.c.l.b16 %v1431
        %v2693 = vunpack.c.h.b16 %v1431
        %v2694 = vunpack.c.l.b16 %v1432
        %v2695 = vunpack.c.h.b16 %v1432
        %v2696 = vunpack.c.l.b16 %v1433
        %v2697 = vunpack.c.h.b16 %v1433
        %v2698 = vunpack.c.l.b16 %v1434
        %v2699 = vunpack.c.h.b16 %v1434
        %v2700 = vunpack.c.l.b16 %v1435
        %v2701 = vunpack.c.h.b16 %v1435
        %v2702 = vunpack.c.l.b16 %v1436
        %v2703 = vunpack.c.h.b16 %v1436
        %v2704 = vunpack.c.l.b16 %v1437
        %v2705 = vunpack.c.h.b16 %v1437
        %v2706 = vunpack.c.l.b16 %v1438
        %v2707 = vunpack.c.h.b16 %v1438
        %v2708 = vunpack.c.l.b16 %v1439
        %v2709 = vunpack.c.h.b16 %v1439
        %v2710 = vunpack.c.l.b16 %v1440
        %v2711 = vunpack.c.h.b16 %v1440
        %v2712 = vunpack.c.l.b16 %v1441
        %v2713 = vunpack.c.h.b16 %v1441
        %v2714 = vunpack.c.l.b16 %v1442
        %v2715 = vunpack.c.h.b16 %v1442
        %v2716 = vunpack.c.l.b16 %v1443
        %v2717 = vunpack.c.h.b16 %v1443
        %v2718 = vunpack.c.l.b16 %v1444
        %v2719 = vunpack.c.h.b16 %v1444
        %v2720 = vunpack.c.l.b16 %v1445
        %v2721 = vunpack.c.h.b16 %v1445
        %v2722 = vunpack.c.l.b16 %v1446
        %v2723 = vunpack.c.h.b16 %v1446
        %v2724 = vunpack.c.l.b16 %v1447
        %v2725 = vunpack.c.h.b16 %v1447
        %v2726 = vunpack.c.l.b16 %v1448
        %v2727 = vunpack.c.h.b16 %v1448
        %v2728 = vunpack.c.l.b16 %v1449
        %v2729 = vunpack.c.h.b16 %v1449
        %v2730 = vunpack.c.l.b16 %v1450
        %v2731 = vunpack.c.h.b16 %v1450
        %v2732 = vunpack.c.l.b16 %v1451
        %v2733 = vunpack.c.h.b16 %v1451
        %v2734 = vunpack.c.l.b16 %v1452
        %v2735 = vunpack.c.h.b16 %v1452
        %v2736 = vunpack.c.l.b16 %v1453
        %v2737 = vunpack.c.h.b16 %v1453
        %v2738 = vunpack.c.l.b16 %v1454
        %v2739 = vunpack.c.h.b16 %v1454
        %v2740 = vunpack.c.l.b16 %v1455
        %v2741 = vunpack.c.h.b16 %v1455
        %v2742 = vunpack.c.l.b16 %v1456
        %v2743 = vunpack.c.h.b16 %v1456
        %v2744 = vunpack.c.l.b16 %v1457
        %v2745 = vunpack.c.h.b16 %v1457
        %v2746 = vunpack.c.l.b16 %v1458
        %v2747 = vunpack.c.h.b16 %v1458
        %v2748 = vunpack.c.l.b16 %v1459
        %v2749 = vunpack.c.h.b16 %v1459
        %v2750 = vunpack.c.l.b16 %v1460
        %v2751 = vunpack.c.h.b16 %v1460
        %v2752 = vunpack.c.l.b16 %v1461
        %v2753 = vunpack.c.h.b16 %v1461
        %v2754 = vunpack.c.l.b16 %v1462
        %v2755 = vunpack.c.h.b16 %v1462
        %v2756 = vunpack.c.l.b16 %v1463
        %v2757 = vunpack.c.h.b16 %v1463
        %v2758 = vunpack.c.l.b16 %v1464
        %v2759 = vunpack.c.h.b16 %v1464
        %v2760 = vunpack.c.l.b16 %v1465
        %v2761 = vunpack.c.h.b16 %v1465
        %v2762 = vunpack.c.l.b16 %v1466
        %v2763 = vunpack.c.h.b16 %v1466
        %v2764 = vunpack.c.l.b16 %v1467
        %v2765 = vunpack.c.h.b16 %v1467
        %v2766 = vunpack.c.l.b16 %v1468
        %v2767 = vunpack.c.h.b16 %v1468
        %v2768 = vunpack.c.l.b16 %v1469
        %v2769 = vunpack.c.h.b16 %v1469
        %v2770 = vunpack.c.l.b16 %v1470
        %v2771 = vunpack.c.h.b16 %v1470
        %v2772 = vunpack.c.l.b16 %v1471
        %v2773 = vunpack.c.h.b16 %v1471
        %v2774 = vunpack.c.l.b16 %v1472
        %v2775 = vunpack.c.h.b16 %v1472
        %v2776 = vunpack.c.l.b16 %v1473
        %v2777 = vunpack.c.h.b16 %v1473
        %v2778 = vunpack.c.l.b16 %v1474
        %v2779 = vunpack.c.h.b16 %v1474
        %v2780 = vunpack.c.l.b16 %v1475
        %v2781 = vunpack.c.h.b16 %v1475
        %v2782 = vunpack.c.l.b16 %v1476
        %v2783 = vunpack.c.h.b16 %v1476
        %v2784 = vunpack.c.l.b16 %v1477
        %v2785 = vunpack.c.h.b16 %v1477
        %v2786 = vunpack.c.l.b16 %v1478
        %v2787 = vunpack.c.h.b16 %v1478
        %v2788 = vunpack.c.l.b16 %v1479
        %v2789 = vunpack.c.h.b16 %v1479
        %v2790 = vunpack.c.l.b16 %v1480
        %v2791 = vunpack.c.h.b16 %v1480
        %v2792 = vunpack.c.l.b16 %v1481
        %v2793 = vunpack.c.h.b16 %v1481
        %v2794 = vunpack.c.l.b16 %v1482
        %v2795 = vunpack.c.h.b16 %v1482
        %v2796 = vunpack.c.l.b16 %v1483
        %v2797 = vunpack.c.h.b16 %v1483
        %v2798 = vunpack.c.l.b16 %v1484
        %v2799 = vunpack.c.h.b16 %v1484
        %v2800 = vunpack.c.l.b16 %v1485
        %v2801 = vunpack.c.h.b16 %v1485
        %v2802 = vunpack.c.l.b16 %v1486
        %v2803 = vunpack.c.h.b16 %v1486
        %v2804 = vunpack.c.l.b16 %v1487
        %v2805 = vunpack.c.h.b16 %v1487
        %v2806 = vunpack.c.l.b16 %v1488
        %v2807 = vunpack.c.h.b16 %v1488
        %v2808 = vunpack.c.l.b16 %v1489
        %v2809 = vunpack.c.h.b16 %v1489
        %v2810 = vunpack.c.l.b16 %v1490
        %v2811 = vunpack.c.h.b16 %v1490
        %v2812 = vunpack.c.l.b16 %v1491
        %v2813 = vunpack.c.h.b16 %v1491
        %v2814 = vunpack.c.l.b16 %v1492
        %v2815 = vunpack.c.h.b16 %v1492
        %v2816 = vunpack.c.l.b16 %v1493
        %v2817 = vunpack.c.h.b16 %v1493
        %v2818 = vunpack.c.l.b16 %v1494
        %v2819 = vunpack.c.h.b16 %v1494
        %v2820 = vunpack.c.l.b16 %v1495
        %v2821 = vunpack.c.h.b16 %v1495
        %v2822 = vunpack.c.l.b16 %v1496
        %v2823 = vunpack.c.h.b16 %v1496
        %v2824 = vunpack.c.l.b16 %v1497
        %v2825 = vunpack.c.h.b16 %v1497
        %v2826 = vunpack.c.l.b16 %v1498
        %v2827 = vunpack.c.h.b16 %v1498
        %v2828 = vunpack.c.l.b16 %v1499
        %v2829 = vunpack.c.h.b16 %v1499
        %v2830 = vunpack.c.l.b16 %v1500
        %v2831 = vunpack.c.h.b16 %v1500
        %v2832 = vunpack.c.l.b16 %v1501
        %v2833 = vunpack.c.h.b16 %v1501
        %v2834 = vunpack.c.l.b16 %v1502
        %v2835 = vunpack.c.h.b16 %v1502
        %v2836 = vunpack.c.l.b16 %v1503
        %v2837 = vunpack.c.h.b16 %v1503
        %v2838 = vunpack.c.l.b16 %v1504
        %v2839 = vunpack.c.h.b16 %v1504
        %v2840 = vunpack.c.l.b16 %v1505
        %v2841 = vunpack.c.h.b16 %v1505
        %v2842 = vunpack.c.l.b16 %v1506
        %v2843 = vunpack.c.h.b16 %v1506
        %v2844 = vunpack.c.l.b16 %v1507
        %v2845 = vunpack.c.h.b16 %v1507
        %v2846 = vunpack.c.l.b16 %v1508
        %v2847 = vunpack.c.h.b16 %v1508
        %v2848 = vunpack.c.l.b16 %v1509
        %v2849 = vunpack.c.h.b16 %v1509
        %v2850 = vunpack.c.l.b16 %v1510
        %v2851 = vunpack.c.h.b16 %v1510
        %v2852 = vunpack.c.l.b16 %v1511
        %v2853 = vunpack.c.h.b16 %v1511
        %v2854 = vunpack.c.l.b16 %v1512
        %v2855 = vunpack.c.h.b16 %v1512
        %v2856 = vunpack.c.l.b16 %v1513
        %v2857 = vunpack.c.h.b16 %v1513
        %v2858 = vunpack.c.l.b16 %v1514
        %v2859 = vunpack.c.h.b16 %v1514
        %v2860 = vunpack.c.l.b16 %v1515
        %v2861 = vunpack.c.h.b16 %v1515
        %v2862 = vunpack.c.l.b16 %v1516
        %v2863 = vunpack.c.h.b16 %v1516
        %v2864 = vunpack.c.l.b16 %v1517
        %v2865 = vunpack.c.h.b16 %v1517
        %v2866 = vunpack.c.l.b16 %v1518
        %v2867 = vunpack.c.h.b16 %v1518
        %v2868 = vunpack.c.l.b16 %v1519
        %v2869 = vunpack.c.h.b16 %v1519
        %v2870 = vunpack.c.l.b16 %v1520
        %v2871 = vunpack.c.h.b16 %v1520
        %v2872 = vunpack.c.l.b16 %v1521
        %v2873 = vunpack.c.h.b16 %v1521
        %v2874 = vunpack.c.l.b16 %v1522
        %v2875 = vunpack.c.h.b16 %v1522
        %v2876 = vunpack.c.l.b16 %v1523
        %v2877 = vunpack.c.h.b16 %v1523
        %v2878 = vunpack.c.l.b16 %v1524
        %v2879 = vunpack.c.h.b16 %v1524
        %v2880 = vunpack.c.l.b16 %v1525
        %v2881 = vunpack.c.h.b16 %v1525
        %v2882 = vunpack.c.l.b16 %v1526
        %v2883 = vunpack.c.h.b16 %v1526
        %v2884 = vunpack.c.l.b16 %v1527
        %v2885 = vunpack.c.h.b16 %v1527
        %v2886 = vunpack.c.l.b16 %v1528
        %v2887 = vunpack.c.h.b16 %v1528
        %v2888 = vunpack.c.l.b16 %v1529
        %v2889 = vunpack.c.h.b16 %v1529
        %v2890 = vunpack.c.l.b16 %v1530
        %v2891 = vunpack.c.h.b16 %v1530
        %v2892 = vunpack.c.l.b16 %v1531
        %v2893 = vunpack.c.h.b16 %v1531
        %v2894 = vunpack.c.l.b16 %v1532
        %v2895 = vunpack.c.h.b16 %v1532
        %v2896 = vunpack.c.l.b16 %v1533
        %v2897 = vunpack.c.h.b16 %v1533
        %v2898 = vunpack.c.l.b16 %v1534
        %v2899 = vunpack.c.h.b16 %v1534
        %v2900 = vunpack.c.l.b16 %v1535
        %v2901 = vunpack.c.h.b16 %v1535
        %v2902 = vunpack.c.l.b16 %v1536
        %v2903 = vunpack.c.h.b16 %v1536
        %v2904 = vunpack.c.l.b16 %v1537
        %v2905 = vunpack.c.h.b16 %v1537
        %v2906 = vunpack.c.l.b16 %v1538
        %v2907 = vunpack.c.h.b16 %v1538
        %v2908 = vunpack.c.l.b16 %v1539
        %v2909 = vunpack.c.h.b16 %v1539
        %v2910 = vunpack.c.l.b16 %v1540
        %v2911 = vunpack.c.h.b16 %v1540
        %v2912 = vunpack.c.l.b16 %v1541
        %v2913 = vunpack.c.h.b16 %v1541
        %v2914 = vunpack.c.l.b16 %v1542
        %v2915 = vunpack.c.h.b16 %v1542
        %v2916 = vunpack.c.l.b16 %v1543
        %v2917 = vunpack.c.h.b16 %v1543
        %v2918 = vunpack.c.l.b16 %v1544
        %v2919 = vunpack.c.h.b16 %v1544
        %v2920 = vunpack.c.l.b16 %v1545
        %v2921 = vunpack.c.h.b16 %v1545
        %v2922 = vunpack.c.l.b16 %v1546
        %v2923 = vunpack.c.h.b16 %v1546
        %v2924 = vunpack.c.l.b16 %v1547
        %v2925 = vunpack.c.h.b16 %v1547
        %v2926 = vunpack.c.l.b16 %v1548
        %v2927 = vunpack.c.h.b16 %v1548
        %v2928 = vunpack.c.l.b16 %v1549
        %v2929 = vunpack.c.h.b16 %v1549
        %v2930 = vunpack.c.l.b16 %v1550
        %v2931 = vunpack.c.h.b16 %v1550
        %v2932 = vunpack.c.l.b16 %v1551
        %v2933 = vunpack.c.h.b16 %v1551
        %v2934 = vunpack.c.l.b16 %v1552
        %v2935 = vunpack.c.h.b16 %v1552
        %v2936 = vunpack.c.l.b16 %v1553
        %v2937 = vunpack.c.h.b16 %v1553
        %v2938 = vunpack.c.l.b16 %v1554
        %v2939 = vunpack.c.h.b16 %v1554
        %v2940 = vunpack.c.l.b16 %v1555
        %v2941 = vunpack.c.h.b16 %v1555
        %v2942 = vunpack.c.l.b16 %v1556
        %v2943 = vunpack.c.h.b16 %v1556
        %v2944 = vunpack.c.l.b16 %v1557
        %v2945 = vunpack.c.h.b16 %v1557
        %v2946 = vunpack.c.l.b16 %v1558
        %v2947 = vunpack.c.h.b16 %v1558
        %v2948 = vunpack.c.l.b16 %v1559
        %v2949 = vunpack.c.h.b16 %v1559
        %v2950 = vunpack.c.l.b16 %v1560
        %v2951 = vunpack.c.h.b16 %v1560
        %v2952 = vunpack.c.l.b16 %v1561
        %v2953 = vunpack.c.h.b16 %v1561
        %v2954 = vunpack.c.l.b16 %v1562
        %v2955 = vunpack.c.h.b16 %v1562
        %v2956 = vunpack.c.l.b16 %v1563
        %v2957 = vunpack.c.h.b16 %v1563
        %v2958 = vunpack.c.l.b16 %v1564
        %v2959 = vunpack.c.h.b16 %v1564
        %v2960 = vunpack.c.l.b16 %v1565
        %v2961 = vunpack.c.h.b16 %v1565
        %v2962 = vunpack.c.l.b16 %v1566
        %v2963 = vunpack.c.h.b16 %v1566
        %v2964 = vunpack.c.l.b16 %v1567
        %v2965 = vunpack.c.h.b16 %v1567
        %v2966 = vunpack.c.l.b16 %v1568
        %v2967 = vunpack.c.h.b16 %v1568
        %v2968 = vunpack.c.l.b16 %v1569
        %v2969 = vunpack.c.h.b16 %v1569
        %v2970 = vunpack.c.l.b16 %v1570
        %v2971 = vunpack.c.h.b16 %v1570
        %v2972 = vunpack.c.l.b16 %v1571
        %v2973 = vunpack.c.h.b16 %v1571
        %v2974 = vunpack.c.l.b16 %v1572
        %v2975 = vunpack.c.h.b16 %v1572
        %v2976 = vunpack.c.l.b16 %v1573
        %v2977 = vunpack.c.h.b16 %v1573
        %v2978 = vunpack.c.l.b16 %v1574
        %v2979 = vunpack.c.h.b16 %v1574
        %v2980 = vunpack.c.l.b16 %v1575
        %v2981 = vunpack.c.h.b16 %v1575
        %v2982 = vunpack.c.l.b16 %v1576
        %v2983 = vunpack.c.h.b16 %v1576
        %v2984 = vunpack.c.l.b16 %v1577
        %v2985 = vunpack.c.h.b16 %v1577
        %v2986 = vunpack.c.l.b16 %v1578
        %v2987 = vunpack.c.h.b16 %v1578
        %v2988 = vunpack.c.l.b16 %v1579
        %v2989 = vunpack.c.h.b16 %v1579
        %v2990 = vunpack.c.l.b16 %v1580
        %v2991 = vunpack.c.h.b16 %v1580
        %v2992 = vunpack.c.l.b16 %v1581
        %v2993 = vunpack.c.h.b16 %v1581
        %v2994 = vunpack.c.l.b16 %v1582
        %v2995 = vunpack.c.h.b16 %v1582
        %v2996 = vunpack.c.l.b16 %v1583
        %v2997 = vunpack.c.h.b16 %v1583
        %v2998 = vunpack.c.l.b16 %v1584
        %v2999 = vunpack.c.h.b16 %v1584
        %v3000 = vunpack.c.l.b16 %v1585
        %v3001 = vunpack.c.h.b16 %v1585
        %v3002 = vunpack.c.l.b16 %v1586
        %v3003 = vunpack.c.h.b16 %v1586
        %v3004 = vunpack.c.l.b16 %v1587
        %v3005 = vunpack.c.h.b16 %v1587
        %v3006 = vunpack.c.l.b16 %v1588
        %v3007 = vunpack.c.h.b16 %v1588
        %v3008 = vunpack.c.l.b16 %v1589
        %v3009 = vunpack.c.h.b16 %v1589
        %v3010 = vunpack.c.l.b16 %v1590
        %v3011 = vunpack.c.h.b16 %v1590
        %v3012 = vunpack.c.l.b16 %v1591
        %v3013 = vunpack.c.h.b16 %v1591
        %v3014 = vunpack.c.l.b16 %v1592
        %v3015 = vunpack.c.h.b16 %v1592
        %v3016 = vunpack.c.l.b16 %v1593
        %v3017 = vunpack.c.h.b16 %v1593
        %v3018 = vunpack.c.l.b16 %v1594
        %v3019 = vunpack.c.h.b16 %v1594
        %v3020 = vunpack.c.l.b16 %v1595
        %v3021 = vunpack.c.h.b16 %v1595
        %v3022 = vunpack.c.l.b16 %v1596
        %v3023 = vunpack.c.h.b16 %v1596
        %v3024 = vunpack.c.l.b16 %v1597
        %v3025 = vunpack.c.h.b16 %v1597
        %v3026 = vunpack.c.l.b16 %v1598
        %v3027 = vunpack.c.h.b16 %v1598
        %v3028 = vunpack.c.l.b16 %v1599
        %v3029 = vunpack.c.h.b16 %v1599
        %v3030 = vunpack.c.l.b16 %v1600
        %v3031 = vunpack.c.h.b16 %v1600
        %v3032 = vunpack.c.l.b16 %v1601
        %v3033 = vunpack.c.h.b16 %v1601
        %v3034 = vunpack.c.l.b16 %v1602
        %v3035 = vunpack.c.h.b16 %v1602
        %v3036 = vunpack.c.l.b16 %v1603
        %v3037 = vunpack.c.h.b16 %v1603
        %v3038 = vunpack.c.l.b16 %v1604
        %v3039 = vunpack.c.h.b16 %v1604
        %v3040 = vunpack.c.l.b16 %v1605
        %v3041 = vunpack.c.h.b16 %v1605
        %v3042 = vunpack.c.l.b16 %v1606
        %v3043 = vunpack.c.h.b16 %v1606
        %v3044 = vunpack.c.l.b16 %v1607
        %v3045 = vunpack.c.h.b16 %v1607
        %v3046 = vunpack.c.l.b16 %v1608
        %v3047 = vunpack.c.h.b16 %v1608
        %v3048 = vunpack.c.l.b16 %v1609
        %v3049 = vunpack.c.h.b16 %v1609
        %v3050 = vunpack.c.l.b16 %v1610
        %v3051 = vunpack.c.h.b16 %v1610
        %v3052 = vunpack.c.l.b16 %v1611
        %v3053 = vunpack.c.h.b16 %v1611
        %v3054 = vunpack.c.l.b16 %v1612
        %v3055 = vunpack.c.h.b16 %v1612
        %v3056 = vunpack.c.l.b16 %v1613
        %v3057 = vunpack.c.h.b16 %v1613
        %v3058 = vunpack.c.l.b16 %v1614
        %v3059 = vunpack.c.h.b16 %v1614
        %v3060 = vunpack.c.l.b16 %v1615
        %v3061 = vunpack.c.h.b16 %v1615
        %v3062 = vunpack.c.l.b16 %v1616
        %v3063 = vunpack.c.h.b16 %v1616
        %v3064 = vunpack.c.l.b16 %v1617
        %v3065 = vunpack.c.h.b16 %v1617
        %v3066 = vunpack.c.l.b16 %v1618
        %v3067 = vunpack.c.h.b16 %v1618
        %v3068 = vunpack.c.l.b16 %v1619
        %v3069 = vunpack.c.h.b16 %v1619
        %v3070 = vunpack.c.l.b16 %v1620
        %v3071 = vunpack.c.h.b16 %v1620
        %v3072 = vunpack.c.l.b16 %v1621
        %v3073 = vunpack.c.h.b16 %v1621
        %v3074 = vunpack.c.l.b16 %v1622
        %v3075 = vunpack.c.h.b16 %v1622
        %v3076 = vunpack.c.l.b16 %v1623
        %v3077 = vunpack.c.h.b16 %v1623
        %v3078 = vunpack.c.l.b16 %v1624
        %v3079 = vunpack.c.h.b16 %v1624
        %v3080 = vunpack.c.l.b16 %v1625
        %v3081 = vunpack.c.h.b16 %v1625
        %v3082 = vunpack.c.l.b16 %v1626
        %v3083 = vunpack.c.h.b16 %v1626
        %v3084 = vunpack.c.l.b16 %v1627
        %v3085 = vunpack.c.h.b16 %v1627
        %v3086 = vunpack.c.l.b16 %v1628
        %v3087 = vunpack.c.h.b16 %v1628
        %v3088 = vunpack.c.l.b16 %v1629
        %v3089 = vunpack.c.h.b16 %v1629
        %v3090 = vunpack.c.l.b16 %v1630
        %v3091 = vunpack.c.h.b16 %v1630
        %v3092 = vunpack.c.l.b16 %v1631
        %v3093 = vunpack.c.h.b16 %v1631
        %v3094 = vunpack.c.l.b16 %v1632
        %v3095 = vunpack.c.h.b16 %v1632
        %v3096 = vunpack.c.l.b16 %v1633
        %v3097 = vunpack.c.h.b16 %v1633
        %v3098 = vunpack.c.l.b16 %v1634
        %v3099 = vunpack.c.h.b16 %v1634
        %v3100 = vunpack.c.l.b16 %v1635
        %v3101 = vunpack.c.h.b16 %v1635
        %v3102 = vunpack.c.l.b16 %v1636
        %v3103 = vunpack.c.h.b16 %v1636
        %v3104 = vunpack.c.l.b16 %v1637
        %v3105 = vunpack.c.h.b16 %v1637
        %v3106 = vunpack.c.l.b16 %v1638
        %v3107 = vunpack.c.h.b16 %v1638
        %v3108 = vunpack.c.l.b16 %v1639
        %v3109 = vunpack.c.h.b16 %v1639
        %v3110 = vunpack.c.l.b16 %v1640
        %v3111 = vunpack.c.h.b16 %v1640
        %v3112 = vunpack.c.l.b16 %v1641
        %v3113 = vunpack.c.h.b16 %v1641
        %v3114 = vunpack.c.l.b16 %v1642
        %v3115 = vunpack.c.h.b16 %v1642
        %v3116 = vunpack.c.l.b16 %v1643
        %v3117 = vunpack.c.h.b16 %v1643
        %v3118 = vunpack.c.l.b16 %v1644
        %v3119 = vunpack.c.h.b16 %v1644
        %v3120 = vunpack.c.l.b16 %v1645
        %v3121 = vunpack.c.h.b16 %v1645
        %v3122 = vunpack.c.l.b16 %v1646
        %v3123 = vunpack.c.h.b16 %v1646
        %v3124 = vunpack.c.l.b16 %v1647
        %v3125 = vunpack.c.h.b16 %v1647
        %v3126 = vunpack.c.l.b16 %v1648
        %v3127 = vunpack.c.h.b16 %v1648
        %v3128 = vunpack.c.l.b16 %v1649
        %v3129 = vunpack.c.h.b16 %v1649
        %v3130 = vunpack.c.l.b16 %v1650
        %v3131 = vunpack.c.h.b16 %v1650
        %v3132 = vunpack.c.l.b16 %v1651
        %v3133 = vunpack.c.h.b16 %v1651
        %v3134 = vunpack.c.l.b16 %v1652
        %v3135 = vunpack.c.h.b16 %v1652
        %v3136 = vunpack.c.l.b16 %v1653
        %v3137 = vunpack.c.h.b16 %v1653
        %v3138 = vunpack.c.l.b16 %v1654
        %v3139 = vunpack.c.h.b16 %v1654
        %v3140 = vunpack.c.l.b16 %v1655
        %v3141 = vunpack.c.h.b16 %v1655
        %v3142 = vunpack.c.l.b16 %v1656
        %v3143 = vunpack.c.h.b16 %v1656
        %v3144 = vunpack.c.l.b16 %v1657
        %v3145 = vunpack.c.h.b16 %v1657
        %v3146 = vunpack.c.l.b16 %v1658
        %v3147 = vunpack.c.h.b16 %v1658
        %v3148 = vunpack.c.l.b16 %v1659
        %v3149 = vunpack.c.h.b16 %v1659
        %v3150 = vunpack.c.l.b16 %v1660
        %v3151 = vunpack.c.h.b16 %v1660
        %v3152 = vunpack.c.l.b16 %v1661
        %v3153 = vunpack.c.h.b16 %v1661
        %v3154 = vunpack.c.l.b16 %v1662
        %v3155 = vunpack.c.h.b16 %v1662
        %v3156 = vunpack.c.l.b16 %v1663
        %v3157 = vunpack.c.h.b16 %v1663
        %v3158 = vunpack.c.l.b16 %v1664
        %v3159 = vunpack.c.h.b16 %v1664
        %v3160 = vunpack.c.l.b16 %v1665
        %v3161 = vunpack.c.h.b16 %v1665
        %v3162 = vunpack.c.l.b16 %v1666
        %v3163 = vunpack.c.h.b16 %v1666
        %v3164 = vunpack.c.l.b16 %v1667
        %v3165 = vunpack.c.h.b16 %v1667
        %v3166 = vunpack.c.l.b16 %v1668
        %v3167 = vunpack.c.h.b16 %v1668
        %v3168 = vunpack.c.l.b16 %v1669
        %v3169 = vunpack.c.h.b16 %v1669
        %v3170 = vunpack.c.l.b16 %v1670
        %v3171 = vunpack.c.h.b16 %v1670
        %v3172 = vunpack.c.l.b16 %v1671
        %v3173 = vunpack.c.h.b16 %v1671
        %v3174 = vunpack.c.l.b16 %v1672
        %v3175 = vunpack.c.h.b16 %v1672
        %v3176 = vunpack.c.l.b16 %v1673
        %v3177 = vunpack.c.h.b16 %v1673
        %v3178 = vunpack.c.l.b16 %v1674
        %v3179 = vunpack.c.h.b16 %v1674
        %v3180 = vunpack.c.l.b16 %v1675
        %v3181 = vunpack.c.h.b16 %v1675
        %v3182 = vunpack.c.l.b16 %v1676
        %v3183 = vunpack.c.h.b16 %v1676
        %v3184 = vunpack.c.l.b16 %v1677
        %v3185 = vunpack.c.h.b16 %v1677
        %v3186 = vunpack.c.l.b16 %v1678
        %v3187 = vunpack.c.h.b16 %v1678
        %v3188 = vunpack.c.l.b16 %v1679
        %v3189 = vunpack.c.h.b16 %v1679
        %v3190 = vunpack.c.l.b16 %v1680
        %v3191 = vunpack.c.h.b16 %v1680
        %v3192 = vunpack.c.l.b16 %v1681
        %v3193 = vunpack.c.h.b16 %v1681
        %v3194 = vunpack.c.l.b16 %v1682
        %v3195 = vunpack.c.h.b16 %v1682
        %v3196 = vunpack.c.l.b16 %v1683
        %v3197 = vunpack.c.h.b16 %v1683
        %v3198 = vunpack.c.l.b16 %v1684
        %v3199 = vunpack.c.h.b16 %v1684
        %v3200 = vunpack.c.l.b16 %v1685
        %v3201 = vunpack.c.h.b16 %v1685
        %v3202 = vunpack.c.l.b16 %v1686
        %v3203 = vunpack.c.h.b16 %v1686
        %v3204 = vunpack.c.l.b16 %v1687
        %v3205 = vunpack.c.h.b16 %v1687
        %v3206 = vunpack.c.l.b16 %v1688
        %v3207 = vunpack.c.h.b16 %v1688
        %v3208 = vunpack.c.l.b16 %v1689
        %v3209 = vunpack.c.h.b16 %v1689
        %v3210 = vunpack.c.l.b16 %v1690
        %v3211 = vunpack.c.h.b16 %v1690
        %v3212 = vunpack.c.l.b16 %v1691
        %v3213 = vunpack.c.h.b16 %v1691
        %v3214 = vunpack.c.l.b16 %v1692
        %v3215 = vunpack.c.h.b16 %v1692
        %v3216 = vunpack.c.l.b16 %v1693
        %v3217 = vunpack.c.h.b16 %v1693
        %v3218 = vunpack.c.l.b16 %v1694
        %v3219 = vunpack.c.h.b16 %v1694
        %v3220 = vunpack.c.l.b16 %v1695
        %v3221 = vunpack.c.h.b16 %v1695
        %v3222 = vunpack.c.l.b16 %v1696
        %v3223 = vunpack.c.h.b16 %v1696
        %v3224 = vunpack.c.l.b16 %v1697
        %v3225 = vunpack.c.h.b16 %v1697
        %v3226 = vunpack.c.l.b16 %v1698
        %v3227 = vunpack.c.h.b16 %v1698
        %v3228 = vunpack.c.l.b16 %v1699
        %v3229 = vunpack.c.h.b16 %v1699
        %v3230 = vunpack.c.l.b16 %v1700
        %v3231 = vunpack.c.h.b16 %v1700
        %v3232 = vunpack.c.l.b16 %v1701
        %v3233 = vunpack.c.h.b16 %v1701
        %v3234 = vunpack.c.l.b16 %v1702
        %v3235 = vunpack.c.h.b16 %v1702
        %v3236 = vunpack.c.l.b16 %v1703
        %v3237 = vunpack.c.h.b16 %v1703
        %v3238 = vunpack.c.l.b16 %v1704
        %v3239 = vunpack.c.h.b16 %v1704
        %v3240 = vunpack.c.l.b16 %v1705
        %v3241 = vunpack.c.h.b16 %v1705
        %v3242 = vunpack.c.l.b16 %v1706
        %v3243 = vunpack.c.h.b16 %v1706
        %v3244 = vunpack.c.l.b16 %v1707
        %v3245 = vunpack.c.h.b16 %v1707
        %v3246 = vunpack.c.l.b16 %v1708
        %v3247 = vunpack.c.h.b16 %v1708
        %v3248 = vunpack.c.l.b16 %v1709
        %v3249 = vunpack.c.h.b16 %v1709
        %v3250 = vunpack.c.l.b16 %v1710
        %v3251 = vunpack.c.h.b16 %v1710
        %v3252 = vunpack.c.l.b16 %v1711
        %v3253 = vunpack.c.h.b16 %v1711
        %v3254 = vunpack.c.l.b16 %v1712
        %v3255 = vunpack.c.h.b16 %v1712
        %v3256 = vunpack.c.l.b16 %v1713
        %v3257 = vunpack.c.h.b16 %v1713
        %v3258 = vunpack.c.l.b16 %v1714
        %v3259 = vunpack.c.h.b16 %v1714
        %v3260 = vunpack.c.l.b16 %v1715
        %v3261 = vunpack.c.h.b16 %v1715
        %v3262 = vunpack.c.l.b16 %v1716
        %v3263 = vunpack.c.h.b16 %v1716
        %v3264 = vunpack.c.l.b16 %v1717
        %v3265 = vunpack.c.h.b16 %v1717
        %v3266 = vunpack.c.l.b16 %v1718
        %v3267 = vunpack.c.h.b16 %v1718
        %v3268 = vunpack.c.l.b16 %v1719
        %v3269 = vunpack.c.h.b16 %v1719
        %v3270 = vunpack.c.l.b16 %v1720
        %v3271 = vunpack.c.h.b16 %v1720
        %v3272 = vunpack.c.l.b16 %v1721
        %v3273 = vunpack.c.h.b16 %v1721
        %v3274 = vunpack.c.l.b16 %v1722
        %v3275 = vunpack.c.h.b16 %v1722
        %v3276 = vunpack.c.l.b16 %v1723
        %v3277 = vunpack.c.h.b16 %v1723
        %v3278 = vpack.c.b16 %v2318, %v2254
        %v3279 = vpack.c.b16 %v2319, %v2255
        %v3280 = vpack.c.b16 %v2320, %v2256
        %v3281 = vpack.c.b16 %v2321, %v2257
        %v3282 = vpack.c.b16 %v2322, %v2258
        %v3283 = vpack.c.b16 %v2323, %v2259
        %v3284 = vpack.c.b16 %v2324, %v2260
        %v3285 = vpack.c.b16 %v2325, %v2261
        %v3286 = vpack.c.b16 %v2326, %v2262
        %v3287 = vpack.c.b16 %v2327, %v2263
        %v3288 = vpack.c.b16 %v2328, %v2264
        %v3289 = vpack.c.b16 %v2329, %v2265
        %v3290 = vpack.c.b16 %v2330, %v2266
        %v3291 = vpack.c.b16 %v2331, %v2267
        %v3292 = vpack.c.b16 %v2332, %v2268
        %v3293 = vpack.c.b16 %v2333, %v2269
        %v3294 = vpack.c.b16 %v2334, %v2270
        %v3295 = vpack.c.b16 %v2335, %v2271
        %v3296 = vpack.c.b16 %v2336, %v2272
        %v3297 = vpack.c.b16 %v2337, %v2273
        %v3298 = vpack.c.b16 %v2338, %v2274
        %v3299 = vpack.c.b16 %v2339, %v2275
        %v3300 = vpack.c.b16 %v2340, %v2276
        %v3301 = vpack.c.b16 %v2341, %v2277
        %v3302 = vpack.c.b16 %v2342, %v2278
        %v3303 = vpack.c.b16 %v2343, %v2279
        %v3304 = vpack.c.b16 %v2344, %v2280
        %v3305 = vpack.c.b16 %v2345, %v2281
        %v3306 = vpack.c.b16 %v2346, %v2282
        %v3307 = vpack.c.b16 %v2347, %v2283
        %v3308 = vpack.c.b16 %v2348, %v2284
        %v3309 = vpack.c.b16 %v2349, %v2285
        %v3310 = vpack.c.b16 %v2350, %v2286
        %v3311 = vpack.c.b16 %v2351, %v2287
        %v3312 = vpack.c.b16 %v2352, %v2288
        %v3313 = vpack.c.b16 %v2353, %v2289
        %v3314 = vpack.c.b16 %v2354, %v2290
        %v3315 = vpack.c.b16 %v2355, %v2291
        %v3316 = vpack.c.b16 %v2356, %v2292
        %v3317 = vpack.c.b16 %v2357, %v2293
        %v3318 = vpack.c.b16 %v2358, %v2294
        %v3319 = vpack.c.b16 %v2359, %v2295
        %v3320 = vpack.c.b16 %v2360, %v2296
        %v3321 = vpack.c.b16 %v2361, %v2297
        %v3322 = vpack.c.b16 %v2362, %v2298
        %v3323 = vpack.c.b16 %v2363, %v2299
        %v3324 = vpack.c.b16 %v2364, %v2300
        %v3325 = vpack.c.b16 %v2365, %v2301
        %v3326 = vpack.c.b16 %v2366, %v2302
        %v3327 = vpack.c.b16 %v2367, %v2303
        %v3328 = vpack.c.b16 %v2368, %v2304
        %v3329 = vpack.c.b16 %v2369, %v2305
        %v3330 = vpack.c.b16 %v2370, %v2306
        %v3331 = vpack.c.b16 %v2371, %v2307
        %v3332 = vpack.c.b16 %v2372, %v2308
        %v3333 = vpack.c.b16 %v2373, %v2309
        %v3334 = vpack.c.b16 %v2374, %v2310
        %v3335 = vpack.c.b16 %v2375, %v2311
        %v3336 = vpack.c.b16 %v2376, %v2312
        %v3337 = vpack.c.b16 %v2377, %v2313
        %v3338 = vpack.c.b16 %v2378, %v2314
        %v3339 = vpack.c.b16 %v2379, %v2315
        %v3340 = vpack.c.b16 %v2380, %v2316
        %v3341 = vpack.c.b16 %v2381, %v2317
        %v3342 = vpack.c.b16 %v2446, %v2382
        %v3343 = vpack.c.b16 %v2447, %v2383
        %v3344 = vpack.c.b16 %v2448, %v2384
        %v3345 = vpack.c.b16 %v2449, %v2385
        %v3346 = vpack.c.b16 %v2450, %v2386
        %v3347 = vpack.c.b16 %v2451, %v2387
        %v3348 = vpack.c.b16 %v2452, %v2388
        %v3349 = vpack.c.b16 %v2453, %v2389
        %v3350 = vpack.c.b16 %v2454, %v2390
        %v3351 = vpack.c.b16 %v2455, %v2391
        %v3352 = vpack.c.b16 %v2456, %v2392
        %v3353 = vpack.c.b16 %v2457, %v2393
        %v3354 = vpack.c.b16 %v2458, %v2394
        %v3355 = vpack.c.b16 %v2459, %v2395
        %v3356 = vpack.c.b16 %v2460, %v2396
        %v3357 = vpack.c.b16 %v2461, %v2397
        %v3358 = vpack.c.b16 %v2462, %v2398
        %v3359 = vpack.c.b16 %v2463, %v2399
        %v3360 = vpack.c.b16 %v2464, %v2400
        %v3361 = vpack.c.b16 %v2465, %v2401
        %v3362 = vpack.c.b16 %v2466, %v2402
        %v3363 = vpack.c.b16 %v2467, %v2403
        %v3364 = vpack.c.b16 %v2468, %v2404
        %v3365 = vpack.c.b16 %v2469, %v2405
        %v3366 = vpack.c.b16 %v2470, %v2406
        %v3367 = vpack.c.b16 %v2471, %v2407
        %v3368 = vpack.c.b16 %v2472, %v2408
        %v3369 = vpack.c.b16 %v2473, %v2409
        %v3370 = vpack.c.b16 %v2474, %v2410
        %v3371 = vpack.c.b16 %v2475, %v2411
        %v3372 = vpack.c.b16 %v2476, %v2412
        %v3373 = vpack.c.b16 %v2477, %v2413
        %v3374 = vpack.c.b16 %v2478, %v2414
        %v3375 = vpack.c.b16 %v2479, %v2415
        %v3376 = vpack.c.b16 %v2480, %v2416
        %v3377 = vpack.c.b16 %v2481, %v2417
        %v3378 = vpack.c.b16 %v2482, %v2418
        %v3379 = vpack.c.b16 %v2483, %v2419
        %v3380 = vpack.c.b16 %v2484, %v2420
        %v3381 = vpack.c.b16 %v2485, %v2421
        %v3382 = vpack.c.b16 %v2486, %v2422
        %v3383 = vpack.c.b16 %v2487, %v2423
        %v3384 = vpack.c.b16 %v2488, %v2424
        %v3385 = vpack.c.b16 %v2489, %v2425
        %v3386 = vpack.c.b16 %v2490, %v2426
        %v3387 = vpack.c.b16 %v2491, %v2427
        %v3388 = vpack.c.b16 %v2492, %v2428
        %v3389 = vpack.c.b16 %v2493, %v2429
        %v3390 = vpack.c.b16 %v2494, %v2430
        %v3391 = vpack.c.b16 %v2495, %v2431
        %v3392 = vpack.c.b16 %v2496, %v2432
        %v3393 = vpack.c.b16 %v2497, %v2433
        %v3394 = vpack.c.b16 %v2498, %v2434
        %v3395 = vpack.c.b16 %v2499, %v2435
        %v3396 = vpack.c.b16 %v2500, %v2436
        %v3397 = vpack.c.b16 %v2501, %v2437
        %v3398 = vpack.c.b16 %v2502, %v2438
        %v3399 = vpack.c.b16 %v2503, %v2439
        %v3400 = vpack.c.b16 %v2504, %v2440
        %v3401 = vpack.c.b16 %v2505, %v2441
        %v3402 = vpack.c.b16 %v2506, %v2442
        %v3403 = vpack.c.b16 %v2507, %v2443
        %v3404 = vpack.c.b16 %v2508, %v2444
        %v3405 = vpack.c.b16 %v2509, %v2445
        %v3406 = vpack.c.b16 %v2574, %v2510
        %v3407 = vpack.c.b16 %v2575, %v2511
        %v3408 = vpack.c.b16 %v2576, %v2512
        %v3409 = vpack.c.b16 %v2577, %v2513
        %v3410 = vpack.c.b16 %v2578, %v2514
        %v3411 = vpack.c.b16 %v2579, %v2515
        %v3412 = vpack.c.b16 %v2580, %v2516
        %v3413 = vpack.c.b16 %v2581, %v2517
        %v3414 = vpack.c.b16 %v2582, %v2518
        %v3415 = vpack.c.b16 %v2583, %v2519
        %v3416 = vpack.c.b16 %v2584, %v2520
        %v3417 = vpack.c.b16 %v2585, %v2521
        %v3418 = vpack.c.b16 %v2586, %v2522
        %v3419 = vpack.c.b16 %v2587, %v2523
        %v3420 = vpack.c.b16 %v2588, %v2524
        %v3421 = vpack.c.b16 %v2589, %v2525
        %v3422 = vpack.c.b16 %v2590, %v2526
        %v3423 = vpack.c.b16 %v2591, %v2527
        %v3424 = vpack.c.b16 %v2592, %v2528
        %v3425 = vpack.c.b16 %v2593, %v2529
        %v3426 = vpack.c.b16 %v2594, %v2530
        %v3427 = vpack.c.b16 %v2595, %v2531
        %v3428 = vpack.c.b16 %v2596, %v2532
        %v3429 = vpack.c.b16 %v2597, %v2533
        %v3430 = vpack.c.b16 %v2598, %v2534
        %v3431 = vpack.c.b16 %v2599, %v2535
        %v3432 = vpack.c.b16 %v2600, %v2536
        %v3433 = vpack.c.b16 %v2601, %v2537
        %v3434 = vpack.c.b16 %v2602, %v2538
        %v3435 = vpack.c.b16 %v2603, %v2539
        %v3436 = vpack.c.b16 %v2604, %v2540
        %v3437 = vpack.c.b16 %v2605, %v2541
        %v3438 = vpack.c.b16 %v2606, %v2542
        %v3439 = vpack.c.b16 %v2607, %v2543
        %v3440 = vpack.c.b16 %v2608, %v2544
        %v3441 = vpack.c.b16 %v2609, %v2545
        %v3442 = vpack.c.b16 %v2610, %v2546
        %v3443 = vpack.c.b16 %v2611, %v2547
        %v3444 = vpack.c.b16 %v2612, %v2548
        %v3445 = vpack.c.b16 %v2613, %v2549
        %v3446 = vpack.c.b16 %v2614, %v2550
        %v3447 = vpack.c.b16 %v2615, %v2551
        %v3448 = vpack.c.b16 %v2616, %v2552
        %v3449 = vpack.c.b16 %v2617, %v2553
        %v3450 = vpack.c.b16 %v2618, %v2554
        %v3451 = vpack.c.b16 %v2619, %v2555
        %v3452 = vpack.c.b16 %v2620, %v2556
        %v3453 = vpack.c.b16 %v2621, %v2557
        %v3454 = vpack.c.b16 %v2622, %v2558
        %v3455 = vpack.c.b16 %v2623, %v2559
        %v3456 = vpack.c.b16 %v2624, %v2560
        %v3457 = vpack.c.b16 %v2625, %v2561
        %v3458 = vpack.c.b16 %v2626, %v2562
        %v3459 = vpack.c.b16 %v2627, %v2563
        %v3460 = vpack.c.b16 %v2628, %v2564
        %v3461 = vpack.c.b16 %v2629, %v2565
        %v3462 = vpack.c.b16 %v2630, %v2566
        %v3463 = vpack.c.b16 %v2631, %v2567
        %v3464 = vpack.c.b16 %v2632, %v2568
        %v3465 = vpack.c.b16 %v2633, %v2569
        %v3466 = vpack.c.b16 %v2634, %v2570
        %v3467 = vpack.c.b16 %v2635, %v2571
        %v3468 = vpack.c.b16 %v2636, %v2572
        %v3469 = vpack.c.b16 %v2637, %v2573
        %v3470 = vpack.c.b16 %v2702, %v2638
        %v3471 = vpack.c.b16 %v2703, %v2639
        %v3472 = vpack.c.b16 %v2704, %v2640
        %v3473 = vpack.c.b16 %v2705, %v2641
        %v3474 = vpack.c.b16 %v2706, %v2642
        %v3475 = vpack.c.b16 %v2707, %v2643
        %v3476 = vpack.c.b16 %v2708, %v2644
        %v3477 = vpack.c.b16 %v2709, %v2645
        %v3478 = vpack.c.b16 %v2710, %v2646
        %v3479 = vpack.c.b16 %v2711, %v2647
        %v3480 = vpack.c.b16 %v2712, %v2648
        %v3481 = vpack.c.b16 %v2713, %v2649
        %v3482 = vpack.c.b16 %v2714, %v2650
        %v3483 = vpack.c.b16 %v2715, %v2651
        %v3484 = vpack.c.b16 %v2716, %v2652
        %v3485 = vpack.c.b16 %v2717, %v2653
        %v3486 = vpack.c.b16 %v2718, %v2654
        %v3487 = vpack.c.b16 %v2719, %v2655
        %v3488 = vpack.c.b16 %v2720, %v2656
        %v3489 = vpack.c.b16 %v2721, %v2657
        %v3490 = vpack.c.b16 %v2722, %v2658
        %v3491 = vpack.c.b16 %v2723, %v2659
        %v3492 = vpack.c.b16 %v2724, %v2660
        %v3493 = vpack.c.b16 %v2725, %v2661
        %v3494 = vpack.c.b16 %v2726, %v2662
        %v3495 = vpack.c.b16 %v2727, %v2663
        %v3496 = vpack.c.b16 %v2728, %v2664
        %v3497 = vpack.c.b16 %v2729, %v2665
        %v3498 = vpack.c.b16 %v2730, %v2666
        %v3499 = vpack.c.b16 %v2731, %v2667
        %v3500 = vpack.c.b16 %v2732, %v2668
        %v3501 = vpack.c.b16 %v2733, %v2669
        %v3502 = vpack.c.b16 %v2734, %v2670
        %v3503 = vpack.c.b16 %v2735, %v2671
        %v3504 = vpack.c.b16 %v2736, %v2672
        %v3505 = vpack.c.b16 %v2737, %v2673
        %v3506 = vpack.c.b16 %v2738, %v2674
        %v3507 = vpack.c.b16 %v2739, %v2675
        %v3508 = vpack.c.b16 %v2740, %v2676
        %v3509 = vpack.c.b16 %v2741, %v2677
        %v3510 = vpack.c.b16 %v2742, %v2678
        %v3511 = vpack.c.b16 %v2743, %v2679
        %v3512 = vpack.c.b16 %v2744, %v2680
        %v3513 = vpack.c.b16 %v2745, %v2681
        %v3514 = vpack.c.b16 %v2746, %v2682
        %v3515 = vpack.c.b16 %v2747, %v2683
        %v3516 = vpack.c.b16 %v2748, %v2684
        %v3517 = vpack.c.b16 %v2749, %v2685
        %v3518 = vpack.c.b16 %v2750, %v2686
        %v3519 = vpack.c.b16 %v2751, %v2687
        %v3520 = vpack.c.b16 %v2752, %v2688
        %v3521 = vpack.c.b16 %v2753, %v2689
        %v3522 = vpack.c.b16 %v2754, %v2690
        %v3523 = vpack.c.b16 %v2755, %v2691
        %v3524 = vpack.c.b16 %v2756, %v2692
        %v3525 = vpack.c.b16 %v2757, %v2693
        %v3526 = vpack.c.b16 %v2758, %v2694
        %v3527 = vpack.c.b16 %v2759, %v2695
        %v3528 = vpack.c.b16 %v2760, %v2696
        %v3529 = vpack.c.b16 %v2761, %v2697
        %v3530 = vpack.c.b16 %v2762, %v2698
        %v3531 = vpack.c.b16 %v2763, %v2699
        %v3532 = vpack.c.b16 %v2764, %v2700
        %v3533 = vpack.c.b16 %v2765, %v2701
        %v3534 = vpack.c.b16 %v2830, %v2766
        %v3535 = vpack.c.b16 %v2831, %v2767
        %v3536 = vpack.c.b16 %v2832, %v2768
        %v3537 = vpack.c.b16 %v2833, %v2769
        %v3538 = vpack.c.b16 %v2834, %v2770
        %v3539 = vpack.c.b16 %v2835, %v2771
        %v3540 = vpack.c.b16 %v2836, %v2772
        %v3541 = vpack.c.b16 %v2837, %v2773
        %v3542 = vpack.c.b16 %v2838, %v2774
        %v3543 = vpack.c.b16 %v2839, %v2775
        %v3544 = vpack.c.b16 %v2840, %v2776
        %v3545 = vpack.c.b16 %v2841, %v2777
        %v3546 = vpack.c.b16 %v2842, %v2778
        %v3547 = vpack.c.b16 %v2843, %v2779
        %v3548 = vpack.c.b16 %v2844, %v2780
        %v3549 = vpack.c.b16 %v2845, %v2781
        %v3550 = vpack.c.b16 %v2846, %v2782
        %v3551 = vpack.c.b16 %v2847, %v2783
        %v3552 = vpack.c.b16 %v2848, %v2784
        %v3553 = vpack.c.b16 %v2849, %v2785
        %v3554 = vpack.c.b16 %v2850, %v2786
        %v3555 = vpack.c.b16 %v2851, %v2787
        %v3556 = vpack.c.b16 %v2852, %v2788
        %v3557 = vpack.c.b16 %v2853, %v2789
        %v3558 = vpack.c.b16 %v2854, %v2790
        %v3559 = vpack.c.b16 %v2855, %v2791
        %v3560 = vpack.c.b16 %v2856, %v2792
        %v3561 = vpack.c.b16 %v2857, %v2793
        %v3562 = vpack.c.b16 %v2858, %v2794
        %v3563 = vpack.c.b16 %v2859, %v2795
        %v3564 = vpack.c.b16 %v2860, %v2796
        %v3565 = vpack.c.b16 %v2861, %v2797
        %v3566 = vpack.c.b16 %v2862, %v2798
        %v3567 = vpack.c.b16 %v2863, %v2799
        %v3568 = vpack.c.b16 %v2864, %v2800
        %v3569 = vpack.c.b16 %v2865, %v2801
        %v3570 = vpack.c.b16 %v2866, %v2802
        %v3571 = vpack.c.b16 %v2867, %v2803
        %v3572 = vpack.c.b16 %v2868, %v2804
        %v3573 = vpack.c.b16 %v2869, %v2805
        %v3574 = vpack.c.b16 %v2870, %v2806
        %v3575 = vpack.c.b16 %v2871, %v2807
        %v3576 = vpack.c.b16 %v2872, %v2808
        %v3577 = vpack.c.b16 %v2873, %v2809
        %v3578 = vpack.c.b16 %v2874, %v2810
        %v3579 = vpack.c.b16 %v2875, %v2811
        %v3580 = vpack.c.b16 %v2876, %v2812
        %v3581 = vpack.c.b16 %v2877, %v2813
        %v3582 = vpack.c.b16 %v2878, %v2814
        %v3583 = vpack.c.b16 %v2879, %v2815
        %v3584 = vpack.c.b16 %v2880, %v2816
        %v3585 = vpack.c.b16 %v2881, %v2817
        %v3586 = vpack.c.b16 %v2882, %v2818
        %v3587 = vpack.c.b16 %v2883, %v2819
        %v3588 = vpack.c.b16 %v2884, %v2820
        %v3589 = vpack.c.b16 %v2885, %v2821
        %v3590 = vpack.c.b16 %v2886, %v2822
        %v3591 = vpack.c.b16 %v2887, %v2823
        %v3592 = vpack.c.b16 %v2888, %v2824
        %v3593 = vpack.c.b16 %v2889, %v2825
        %v3594 = vpack.c.b16 %v2890, %v2826
        %v3595 = vpack.c.b16 %v2891, %v2827
        %v3596 = vpack.c.b16 %v2892, %v2828
        %v3597 = vpack.c.b16 %v2893, %v2829
        %v3598 = vpack.c.b16 %v2958, %v2894
        %v3599 = vpack.c.b16 %v2959, %v2895
        %v3600 = vpack.c.b16 %v2960, %v2896
        %v3601 = vpack.c.b16 %v2961, %v2897
        %v3602 = vpack.c.b16 %v2962, %v2898
        %v3603 = vpack.c.b16 %v2963, %v2899
        %v3604 = vpack.c.b16 %v2964, %v2900
        %v3605 = vpack.c.b16 %v2965, %v2901
        %v3606 = vpack.c.b16 %v2966, %v2902
        %v3607 = vpack.c.b16 %v2967, %v2903
        %v3608 = vpack.c.b16 %v2968, %v2904
        %v3609 = vpack.c.b16 %v2969, %v2905
        %v3610 = vpack.c.b16 %v2970, %v2906
        %v3611 = vpack.c.b16 %v2971, %v2907
        %v3612 = vpack.c.b16 %v2972, %v2908
        %v3613 = vpack.c.b16 %v2973, %v2909
        %v3614 = vpack.c.b16 %v2974, %v2910
        %v3615 = vpack.c.b16 %v2975, %v2911
        %v3616 = vpack.c.b16 %v2976, %v2912
        %v3617 = vpack.c.b16 %v2977, %v2913
        %v3618 = vpack.c.b16 %v2978, %v2914
        %v3619 = vpack.c.b16 %v2979, %v2915
        %v3620 = vpack.c.b16 %v2980, %v2916
        %v3621 = vpack.c.b16 %v2981, %v2917
        %v3622 = vpack.c.b16 %v2982, %v2918
        %v3623 = vpack.c.b16 %v2983, %v2919
        %v3624 = vpack.c.b16 %v2984, %v2920
        %v3625 = vpack.c.b16 %v2985, %v2921
        %v3626 = vpack.c.b16 %v2986, %v2922
        %v3627 = vpack.c.b16 %v2987, %v2923
        %v3628 = vpack.c.b16 %v2988, %v2924
        %v3629 = vpack.c.b16 %v2989, %v2925
        %v3630 = vpack.c.b16 %v2990, %v2926
        %v3631 = vpack.c.b16 %v2991, %v2927
        %v3632 = vpack.c.b16 %v2992, %v2928
        %v3633 = vpack.c.b16 %v2993, %v2929
        %v3634 = vpack.c.b16 %v2994, %v2930
        %v3635 = vpack.c.b16 %v2995, %v2931
        %v3636 = vpack.c.b16 %v2996, %v2932
        %v3637 = vpack.c.b16 %v2997, %v2933
        %v3638 = vpack.c.b16 %v2998, %v2934
        %v3639 = vpack.c.b16 %v2999, %v2935
        %v3640 = vpack.c.b16 %v3000, %v2936
        %v3641 = vpack.c.b16 %v3001, %v2937
        %v3642 = vpack.c.b16 %v3002, %v2938
        %v3643 = vpack.c.b16 %v3003, %v2939
        %v3644 = vpack.c.b16 %v3004, %v2940
        %v3645 = vpack.c.b16 %v3005, %v2941
        %v3646 = vpack.c.b16 %v3006, %v2942
        %v3647 = vpack.c.b16 %v3007, %v2943
        %v3648 = vpack.c.b16 %v3008, %v2944
        %v3649 = vpack.c.b16 %v3009, %v2945
        %v3650 = vpack.c.b16 %v3010, %v2946
        %v3651 = vpack.c.b16 %v3011, %v2947
        %v3652 = vpack.c.b16 %v3012, %v2948
        %v3653 = vpack.c.b16 %v3013, %v2949
        %v3654 = vpack.c.b16 %v3014, %v2950
        %v3655 = vpack.c.b16 %v3015, %v2951
        %v3656 = vpack.c.b16 %v3016, %v2952
        %v3657 = vpack.c.b16 %v3017, %v2953
        %v3658 = vpack.c.b16 %v3018, %v2954
        %v3659 = vpack.c.b16 %v3019, %v2955
        %v3660 = vpack.c.b16 %v3020, %v2956
        %v3661 = vpack.c.b16 %v3021, %v2957
        %v3662 = vpack.c.b16 %v3086, %v3022
        %v3663 = vpack.c.b16 %v3087, %v3023
        %v3664 = vpack.c.b16 %v3088, %v3024
        %v3665 = vpack.c.b16 %v3089, %v3025
        %v3666 = vpack.c.b16 %v3090, %v3026
        %v3667 = vpack.c.b16 %v3091, %v3027
        %v3668 = vpack.c.b16 %v3092, %v3028
        %v3669 = vpack.c.b16 %v3093, %v3029
        %v3670 = vpack.c.b16 %v3094, %v3030
        %v3671 = vpack.c.b16 %v3095, %v3031
        %v3672 = vpack.c.b16 %v3096, %v3032
        %v3673 = vpack.c.b16 %v3097, %v3033
        %v3674 = vpack.c.b16 %v3098, %v3034
        %v3675 = vpack.c.b16 %v3099, %v3035
        %v3676 = vpack.c.b16 %v3100, %v3036
        %v3677 = vpack.c.b16 %v3101, %v3037
        %v3678 = vpack.c.b16 %v3102, %v3038
        %v3679 = vpack.c.b16 %v3103, %v3039
        %v3680 = vpack.c.b16 %v3104, %v3040
        %v3681 = vpack.c.b16 %v3105, %v3041
        %v3682 = vpack.c.b16 %v3106, %v3042
        %v3683 = vpack.c.b16 %v3107, %v3043
        %v3684 = vpack.c.b16 %v3108, %v3044
        %v3685 = vpack.c.b16 %v3109, %v3045
        %v3686 = vpack.c.b16 %v3110, %v3046
        %v3687 = vpack.c.b16 %v3111, %v3047
        %v3688 = vpack.c.b16 %v3112, %v3048
        %v3689 = vpack.c.b16 %v3113, %v3049
        %v3690 = vpack.c.b16 %v3114, %v3050
        %v3691 = vpack.c.b16 %v3115, %v3051
        %v3692 = vpack.c.b16 %v3116, %v3052
        %v3693 = vpack.c.b16 %v3117, %v3053
        %v3694 = vpack.c.b16 %v3118, %v3054
        %v3695 = vpack.c.b16 %v3119, %v3055
        %v3696 = vpack.c.b16 %v3120, %v3056
        %v3697 = vpack.c.b16 %v3121, %v3057
        %v3698 = vpack.c.b16 %v3122, %v3058
        %v3699 = vpack.c.b16 %v3123, %v3059
        %v3700 = vpack.c.b16 %v3124, %v3060
        %v3701 = vpack.c.b16 %v3125, %v3061
        %v3702 = vpack.c.b16 %v3126, %v3062
        %v3703 = vpack.c.b16 %v3127, %v3063
        %v3704 = vpack.c.b16 %v3128, %v3064
        %v3705 = vpack.c.b16 %v3129, %v3065
        %v3706 = vpack.c.b16 %v3130, %v3066
        %v3707 = vpack.c.b16 %v3131, %v3067
        %v3708 = vpack.c.b16 %v3132, %v3068
        %v3709 = vpack.c.b16 %v3133, %v3069
        %v3710 = vpack.c.b16 %v3134, %v3070
        %v3711 = vpack.c.b16 %v3135, %v3071
        %v3712 = vpack.c.b16 %v3136, %v3072
        %v3713 = vpack.c.b16 %v3137, %v3073
        %v3714 = vpack.c.b16 %v3138, %v3074
        %v3715 = vpack.c.b16 %v3139, %v3075
        %v3716 = vpack.c.b16 %v3140, %v3076
        %v3717 = vpack.c.b16 %v3141, %v3077
        %v3718 = vpack.c.b16 %v3142, %v3078
        %v3719 = vpack.c.b16 %v3143, %v3079
        %v3720 = vpack.c.b16 %v3144, %v3080
        %v3721 = vpack.c.b16 %v3145, %v3081
        %v3722 = vpack.c.b16 %v3146, %v3082
        %v3723 = vpack.c.b16 %v3147, %v3083
        %v3724 = vpack.c.b16 %v3148, %v3084
        %v3725 = vpack.c.b16 %v3149, %v3085
        %v3726 = vpack.c.b16 %v3214, %v3150
        %v3727 = vpack.c.b16 %v3215, %v3151
        %v3728 = vpack.c.b16 %v3216, %v3152
        %v3729 = vpack.c.b16 %v3217, %v3153
        %v3730 = vpack.c.b16 %v3218, %v3154
        %v3731 = vpack.c.b16 %v3219, %v3155
        %v3732 = vpack.c.b16 %v3220, %v3156
        %v3733 = vpack.c.b16 %v3221, %v3157
        %v3734 = vpack.c.b16 %v3222, %v3158
        %v3735 = vpack.c.b16 %v3223, %v3159
        %v3736 = vpack.c.b16 %v3224, %v3160
        %v3737 = vpack.c.b16 %v3225, %v3161
        %v3738 = vpack.c.b16 %v3226, %v3162
        %v3739 = vpack.c.b16 %v3227, %v3163
        %v3740 = vpack.c.b16 %v3228, %v3164
        %v3741 = vpack.c.b16 %v3229, %v3165
        %v3742 = vpack.c.b16 %v3230, %v3166
        %v3743 = vpack.c.b16 %v3231, %v3167
        %v3744 = vpack.c.b16 %v3232, %v3168
        %v3745 = vpack.c.b16 %v3233, %v3169
        %v3746 = vpack.c.b16 %v3234, %v3170
        %v3747 = vpack.c.b16 %v3235, %v3171
        %v3748 = vpack.c.b16 %v3236, %v3172
        %v3749 = vpack.c.b16 %v3237, %v3173
        %v3750 = vpack.c.b16 %v3238, %v3174
        %v3751 = vpack.c.b16 %v3239, %v3175
        %v3752 = vpack.c.b16 %v3240, %v3176
        %v3753 = vpack.c.b16 %v3241, %v3177
        %v3754 = vpack.c.b16 %v3242, %v3178
        %v3755 = vpack.c.b16 %v3243, %v3179
        %v3756 = vpack.c.b16 %v3244, %v3180
        %v3757 = vpack.c.b16 %v3245, %v3181
        %v3758 = vpack.c.b16 %v3246, %v3182
        %v3759 = vpack.c.b16 %v3247, %v3183
        %v3760 = vpack.c.b16 %v3248, %v3184
        %v3761 = vpack.c.b16 %v3249, %v3185
        %v3762 = vpack.c.b16 %v3250, %v3186
        %v3763 = vpack.c.b16 %v3251, %v3187
        %v3764 = vpack.c.b16 %v3252, %v3188
        %v3765 = vpack.c.b16 %v3253, %v3189
        %v3766 = vpack.c.b16 %v3254, %v3190
        %v3767 = vpack.c.b16 %v3255, %v3191
        %v3768 = vpack.c.b16 %v3256, %v3192
        %v3769 = vpack.c.b16 %v3257, %v3193
        %v3770 = vpack.c.b16 %v3258, %v3194
        %v3771 = vpack.c.b16 %v3259, %v3195
        %v3772 = vpack.c.b16 %v3260, %v3196
        %v3773 = vpack.c.b16 %v3261, %v3197
        %v3774 = vpack.c.b16 %v3262, %v3198
        %v3775 = vpack.c.b16 %v3263, %v3199
        %v3776 = vpack.c.b16 %v3264, %v3200
        %v3777 = vpack.c.b16 %v3265, %v3201
        %v3778 = vpack.c.b16 %v3266, %v3202
        %v3779 = vpack.c.b16 %v3267, %v3203
        %v3780 = vpack.c.b16 %v3268, %v3204
        %v3781 = vpack.c.b16 %v3269, %v3205
        %v3782 = vpack.c.b16 %v3270, %v3206
        %v3783 = vpack.c.b16 %v3271, %v3207
        %v3784 = vpack.c.b16 %v3272, %v3208
        %v3785 = vpack.c.b16 %v3273, %v3209
        %v3786 = vpack.c.b16 %v3274, %v3210
        %v3787 = vpack.c.b16 %v3275, %v3211
        %v3788 = vpack.c.b16 %v3276, %v3212
        %v3789 = vpack.c.b16 %v3277, %v3213
        %4302 = vmatprep.subr.bf16.mxu0 %v3279
        %4303 = vmatpush1.bf16.msra.mxu0 %v3278
        %4304 = vmatprep.subr.bf16.mxu0 %v3343
        %4305 = vmatpush1.bf16.msra.mxu0 %v3342
        %4306 = vmatprep.subr.bf16.mxu0 %v3407
        %4307 = vmatpush1.bf16.msra.mxu0 %v3406
        %4308 = vmatprep.subr.bf16.mxu0 %v3471
        %4309 = vmatpush1.bf16.msra.mxu0 %v3470
        %4310 = vmatprep.subr.bf16.mxu0 %v3535
        %4311 = vmatpush1.bf16.msra.mxu0 %v3534
        %4312 = vmatprep.subr.bf16.mxu0 %v3599
        %4313 = vmatpush1.bf16.msra.mxu0 %v3598
        %4314 = vmatprep.subr.bf16.mxu0 %v3663
        %4315 = vmatpush1.bf16.msra.mxu0 %v3662
        %4316 = vmatprep.subr.bf16.mxu0 %v3727
        %4317 = vmatpush1.bf16.msra.mxu0 %v3726
        %4318 = vmatprep.subr.bf16.mxu0 0
        %4319 = vmatpush1.bf16.msra.mxu0 0
        %4320 = vmatprep.subr.bf16.mxu0 0
        %4321 = vmatpush1.bf16.msra.mxu0 0
        %4322 = vmatprep.subr.bf16.mxu0 0
        %4323 = vmatpush1.bf16.msra.mxu0 0
        %4324 = vmatprep.subr.bf16.mxu0 0
        %4325 = vmatpush1.bf16.msra.mxu0 0
        %4326 = vmatprep.subr.bf16.mxu0 0
        %4327 = vmatpush1.bf16.msra.mxu0 0
        %4328 = vmatprep.subr.bf16.mxu0 0
        %4329 = vmatpush1.bf16.msra.mxu0 0
        %4330 = vmatprep.subr.bf16.mxu0 0
        %4331 = vmatpush1.bf16.msra.mxu0 0
        %4332 = vmatprep.subr.bf16.mxu0 0
        %4333 = vmatpush1.bf16.msra.mxu0 0
        %4334 = vmatprep.mubr.bf16.mxu0 0
        %4335 = vmatmul.mubr.bf16.gmra.mrb[0].mxu0 %v1740
        %v4336 = vpop.f32.mrb[0].mxu0
        %v4337 = vadd.f32 %v1729, %v4336
        %v4338 = vpop.f32.mrb[0].mxu0
        %v4339 = vadd.f32 %v1729, %v4338
        %v4340 = vpop.f32.mrb[0].mxu0
        %v4341 = vadd.f32 %v1734, %v4340
        %v4342 = vpop.f32.mrb[0].mxu0
        %v4343 = vadd.f32 %v1734, %v4342
        %4344 = vdwg.mxu0
        %4345 = vmatprep.subr.bf16.mxu0 %v3281
        %4346 = vmatpush1.bf16.msra.mxu0 %v3280
        %4347 = vmatprep.subr.bf16.mxu0 %v3345
        %4348 = vmatpush1.bf16.msra.mxu0 %v3344
        %4349 = vmatprep.subr.bf16.mxu0 %v3409
        %4350 = vmatpush1.bf16.msra.mxu0 %v3408
        %4351 = vmatprep.subr.bf16.mxu0 %v3473
        %4352 = vmatpush1.bf16.msra.mxu0 %v3472
        %4353 = vmatprep.subr.bf16.mxu0 %v3537
        %4354 = vmatpush1.bf16.msra.mxu0 %v3536
        %4355 = vmatprep.subr.bf16.mxu0 %v3601
        %4356 = vmatpush1.bf16.msra.mxu0 %v3600
        %4357 = vmatprep.subr.bf16.mxu0 %v3665
        %4358 = vmatpush1.bf16.msra.mxu0 %v3664
        %4359 = vmatprep.subr.bf16.mxu0 %v3729
        %4360 = vmatpush1.bf16.msra.mxu0 %v3728
        %4361 = vmatprep.subr.bf16.mxu0 0
        %4362 = vmatpush1.bf16.msra.mxu0 0
        %4363 = vmatprep.subr.bf16.mxu0 0
        %4364 = vmatpush1.bf16.msra.mxu0 0
        %4365 = vmatprep.subr.bf16.mxu0 0
        %4366 = vmatpush1.bf16.msra.mxu0 0
        %4367 = vmatprep.subr.bf16.mxu0 0
        %4368 = vmatpush1.bf16.msra.mxu0 0
        %4369 = vmatprep.subr.bf16.mxu0 0
        %4370 = vmatpush1.bf16.msra.mxu0 0
        %4371 = vmatprep.subr.bf16.mxu0 0
        %4372 = vmatpush1.bf16.msra.mxu0 0
        %4373 = vmatprep.subr.bf16.mxu0 0
        %4374 = vmatpush1.bf16.msra.mxu0 0
        %4375 = vmatprep.subr.bf16.mxu0 0
        %4376 = vmatpush1.bf16.msra.mxu0 0
        %4377 = vmatprep.mubr.bf16.mxu0 0
        %4378 = vmatmul.mubr.bf16.gmra.mrb[0].mxu0 %v1740
        %v4379 = vpop.f32.mrb[0].mxu0
        %v4380 = vadd.f32 %v1729, %v4379
        %v4381 = vpop.f32.mrb[0].mxu0
        %v4382 = vadd.f32 %v1729, %v4381
        %v4383 = vpop.f32.mrb[0].mxu0
        %v4384 = vadd.f32 %v1734, %v4383
        %v4385 = vpop.f32.mrb[0].mxu0
        %v4386 = vadd.f32 %v1734, %v4385
        %4387 = vdwg.mxu0
        %4388 = vmatprep.subr.bf16.mxu0 %v3283
        %4389 = vmatpush1.bf16.msra.mxu0 %v3282
        %4390 = vmatprep.subr.bf16.mxu0 %v3347
        %4391 = vmatpush1.bf16.msra.mxu0 %v3346
        %4392 = vmatprep.subr.bf16.mxu0 %v3411
        %4393 = vmatpush1.bf16.msra.mxu0 %v3410
        %4394 = vmatprep.subr.bf16.mxu0 %v3475
        %4395 = vmatpush1.bf16.msra.mxu0 %v3474
        %4396 = vmatprep.subr.bf16.mxu0 %v3539
        %4397 = vmatpush1.bf16.msra.mxu0 %v3538
        %4398 = vmatprep.subr.bf16.mxu0 %v3603
        %4399 = vmatpush1.bf16.msra.mxu0 %v3602
        %4400 = vmatprep.subr.bf16.mxu0 %v3667
        %4401 = vmatpush1.bf16.msra.mxu0 %v3666
        %4402 = vmatprep.subr.bf16.mxu0 %v3731
        %4403 = vmatpush1.bf16.msra.mxu0 %v3730
        %4404 = vmatprep.subr.bf16.mxu0 0
        %4405 = vmatpush1.bf16.msra.mxu0 0
        %4406 = vmatprep.subr.bf16.mxu0 0
        %4407 = vmatpush1.bf16.msra.mxu0 0
        %4408 = vmatprep.subr.bf16.mxu0 0
        %4409 = vmatpush1.bf16.msra.mxu0 0
        %4410 = vmatprep.subr.bf16.mxu0 0
        %4411 = vmatpush1.bf16.msra.mxu0 0
        %4412 = vmatprep.subr.bf16.mxu0 0
        %4413 = vmatpush1.bf16.msra.mxu0 0
        %4414 = vmatprep.subr.bf16.mxu0 0
        %4415 = vmatpush1.bf16.msra.mxu0 0
        %4416 = vmatprep.subr.bf16.mxu0 0
        %4417 = vmatpush1.bf16.msra.mxu0 0
        %4418 = vmatprep.subr.bf16.mxu0 0
        %4419 = vmatpush1.bf16.msra.mxu0 0
        %4420 = vmatprep.mubr.bf16.mxu0 0
        %4421 = vmatmul.mubr.bf16.gmra.mrb[0].mxu0 %v1740
        %v4422 = vpop.f32.mrb[0].mxu0
        %v4423 = vadd.f32 %v1729, %v4422
        %v4424 = vpop.f32.mrb[0].mxu0
        %v4425 = vadd.f32 %v1729, %v4424
        %v4426 = vpop.f32.mrb[0].mxu0
        %v4427 = vadd.f32 %v1734, %v4426
        %v4428 = vpop.f32.mrb[0].mxu0
        %v4429 = vadd.f32 %v1734, %v4428
        %4430 = vdwg.mxu0
        %4431 = vmatprep.subr.bf16.mxu0 %v3285
        %4432 = vmatpush1.bf16.msra.mxu0 %v3284
        %4433 = vmatprep.subr.bf16.mxu0 %v3349
        %4434 = vmatpush1.bf16.msra.mxu0 %v3348
        %4435 = vmatprep.subr.bf16.mxu0 %v3413
        %4436 = vmatpush1.bf16.msra.mxu0 %v3412
        %4437 = vmatprep.subr.bf16.mxu0 %v3477
        %4438 = vmatpush1.bf16.msra.mxu0 %v3476
        %4439 = vmatprep.subr.bf16.mxu0 %v3541
        %4440 = vmatpush1.bf16.msra.mxu0 %v3540
        %4441 = vmatprep.subr.bf16.mxu0 %v3605
        %4442 = vmatpush1.bf16.msra.mxu0 %v3604
        %4443 = vmatprep.subr.bf16.mxu0 %v3669
        %4444 = vmatpush1.bf16.msra.mxu0 %v3668
        %4445 = vmatprep.subr.bf16.mxu0 %v3733
        %4446 = vmatpush1.bf16.msra.mxu0 %v3732
        %4447 = vmatprep.subr.bf16.mxu0 0
        %4448 = vmatpush1.bf16.msra.mxu0 0
        %4449 = vmatprep.subr.bf16.mxu0 0
        %4450 = vmatpush1.bf16.msra.mxu0 0
        %4451 = vmatprep.subr.bf16.mxu0 0
        %4452 = vmatpush1.bf16.msra.mxu0 0
        %4453 = vmatprep.subr.bf16.mxu0 0
        %4454 = vmatpush1.bf16.msra.mxu0 0
        %4455 = vmatprep.subr.bf16.mxu0 0
        %4456 = vmatpush1.bf16.msra.mxu0 0
        %4457 = vmatprep.subr.bf16.mxu0 0
        %4458 = vmatpush1.bf16.msra.mxu0 0
        %4459 = vmatprep.subr.bf16.mxu0 0
        %4460 = vmatpush1.bf16.msra.mxu0 0
        %4461 = vmatprep.subr.bf16.mxu0 0
        %4462 = vmatpush1.bf16.msra.mxu0 0
        %4463 = vmatprep.mubr.bf16.mxu0 0
        %4464 = vmatmul.mubr.bf16.gmra.mrb[0].mxu0 %v1740
        %v4465 = vpop.f32.mrb[0].mxu0
        %v4466 = vadd.f32 %v1729, %v4465
        %v4467 = vpop.f32.mrb[0].mxu0
        %v4468 = vadd.f32 %v1729, %v4467
        %v4469 = vpop.f32.mrb[0].mxu0
        %v4470 = vadd.f32 %v1734, %v4469
        %v4471 = vpop.f32.mrb[0].mxu0
        %v4472 = vadd.f32 %v1734, %v4471
        %4473 = vdwg.mxu0
        %4474 = vmatprep.subr.bf16.mxu0 %v3287
        %4475 = vmatpush1.bf16.msra.mxu0 %v3286
        %4476 = vmatprep.subr.bf16.mxu0 %v3351
        %4477 = vmatpush1.bf16.msra.mxu0 %v3350
        %4478 = vmatprep.subr.bf16.mxu0 %v3415
        %4479 = vmatpush1.bf16.msra.mxu0 %v3414
        %4480 = vmatprep.subr.bf16.mxu0 %v3479
        %4481 = vmatpush1.bf16.msra.mxu0 %v3478
        %4482 = vmatprep.subr.bf16.mxu0 %v3543
        %4483 = vmatpush1.bf16.msra.mxu0 %v3542
        %4484 = vmatprep.subr.bf16.mxu0 %v3607
        %4485 = vmatpush1.bf16.msra.mxu0 %v3606
        %4486 = vmatprep.subr.bf16.mxu0 %v3671
        %4487 = vmatpush1.bf16.msra.mxu0 %v3670
        %4488 = vmatprep.subr.bf16.mxu0 %v3735
        %4489 = vmatpush1.bf16.msra.mxu0 %v3734
        %4490 = vmatprep.subr.bf16.mxu0 0
        %4491 = vmatpush1.bf16.msra.mxu0 0
        %4492 = vmatprep.subr.bf16.mxu0 0
        %4493 = vmatpush1.bf16.msra.mxu0 0
        %4494 = vmatprep.subr.bf16.mxu0 0
        %4495 = vmatpush1.bf16.msra.mxu0 0
        %4496 = vmatprep.subr.bf16.mxu0 0
        %4497 = vmatpush1.bf16.msra.mxu0 0
        %4498 = vmatprep.subr.bf16.mxu0 0
        %4499 = vmatpush1.bf16.msra.mxu0 0
        %4500 = vmatprep.subr.bf16.mxu0 0
        %4501 = vmatpush1.bf16.msra.mxu0 0
        %4502 = vmatprep.subr.bf16.mxu0 0
        %4503 = vmatpush1.bf16.msra.mxu0 0
        %4504 = vmatprep.subr.bf16.mxu0 0
        %4505 = vmatpush1.bf16.msra.mxu0 0
        %4506 = vmatprep.mubr.bf16.mxu0 0
        %4507 = vmatmul.mubr.bf16.gmra.mrb[0].mxu0 %v1740
        %v4508 = vpop.f32.mrb[0].mxu0
        %v4509 = vadd.f32 %v1729, %v4508
        %v4510 = vpop.f32.mrb[0].mxu0
        %v4511 = vadd.f32 %v1729, %v4510
        %v4512 = vpop.f32.mrb[0].mxu0
        %v4513 = vadd.f32 %v1734, %v4512
        %v4514 = vpop.f32.mrb[0].mxu0
        %v4515 = vadd.f32 %v1734, %v4514
        %4516 = vdwg.mxu0
        %4517 = vmatprep.subr.bf16.mxu0 %v3289
        %4518 = vmatpush1.bf16.msra.mxu0 %v3288
        %4519 = vmatprep.subr.bf16.mxu0 %v3353
        %4520 = vmatpush1.bf16.msra.mxu0 %v3352
        %4521 = vmatprep.subr.bf16.mxu0 %v3417
        %4522 = vmatpush1.bf16.msra.mxu0 %v3416
        %4523 = vmatprep.subr.bf16.mxu0 %v3481
        %4524 = vmatpush1.bf16.msra.mxu0 %v3480
        %4525 = vmatprep.subr.bf16.mxu0 %v3545
        %4526 = vmatpush1.bf16.msra.mxu0 %v3544
        %4527 = vmatprep.subr.bf16.mxu0 %v3609
        %4528 = vmatpush1.bf16.msra.mxu0 %v3608
        %4529 = vmatprep.subr.bf16.mxu0 %v3673
        %4530 = vmatpush1.bf16.msra.mxu0 %v3672
        %4531 = vmatprep.subr.bf16.mxu0 %v3737
        %4532 = vmatpush1.bf16.msra.mxu0 %v3736
        %4533 = vmatprep.subr.bf16.mxu0 0
        %4534 = vmatpush1.bf16.msra.mxu0 0
        %4535 = vmatprep.subr.bf16.mxu0 0
        %4536 = vmatpush1.bf16.msra.mxu0 0
        %4537 = vmatprep.subr.bf16.mxu0 0
        %4538 = vmatpush1.bf16.msra.mxu0 0
        %4539 = vmatprep.subr.bf16.mxu0 0
        %4540 = vmatpush1.bf16.msra.mxu0 0
        %4541 = vmatprep.subr.bf16.mxu0 0
        %4542 = vmatpush1.bf16.msra.mxu0 0
        %4543 = vmatprep.subr.bf16.mxu0 0
        %4544 = vmatpush1.bf16.msra.mxu0 0
        %4545 = vmatprep.subr.bf16.mxu0 0
        %4546 = vmatpush1.bf16.msra.mxu0 0
        %4547 = vmatprep.subr.bf16.mxu0 0
        %4548 = vmatpush1.bf16.msra.mxu0 0
        %4549 = vmatprep.mubr.bf16.mxu0 0
        %4550 = vmatmul.mubr.bf16.gmra.mrb[0].mxu0 %v1740
        %v4551 = vpop.f32.mrb[0].mxu0
        %v4552 = vadd.f32 %v1729, %v4551
        %v4553 = vpop.f32.mrb[0].mxu0
        %v4554 = vadd.f32 %v1729, %v4553
        %v4555 = vpop.f32.mrb[0].mxu0
        %v4556 = vadd.f32 %v1734, %v4555
        %v4557 = vpop.f32.mrb[0].mxu0
        %v4558 = vadd.f32 %v1734, %v4557
        %4559 = vdwg.mxu0
        %4560 = vmatprep.subr.bf16.mxu0 %v3291
        %4561 = vmatpush1.bf16.msra.mxu0 %v3290
        %4562 = vmatprep.subr.bf16.mxu0 %v3355
        %4563 = vmatpush1.bf16.msra.mxu0 %v3354
        %4564 = vmatprep.subr.bf16.mxu0 %v3419
        %4565 = vmatpush1.bf16.msra.mxu0 %v3418
        %4566 = vmatprep.subr.bf16.mxu0 %v3483
        %4567 = vmatpush1.bf16.msra.mxu0 %v3482
        %4568 = vmatprep.subr.bf16.mxu0 %v3547
        %4569 = vmatpush1.bf16.msra.mxu0 %v3546
        %4570 = vmatprep.subr.bf16.mxu0 %v3611
        %4571 = vmatpush1.bf16.msra.mxu0 %v3610
        %4572 = vmatprep.subr.bf16.mxu0 %v3675
        %4573 = vmatpush1.bf16.msra.mxu0 %v3674
        %4574 = vmatprep.subr.bf16.mxu0 %v3739
        %4575 = vmatpush1.bf16.msra.mxu0 %v3738
        %4576 = vmatprep.subr.bf16.mxu0 0
        %4577 = vmatpush1.bf16.msra.mxu0 0
        %4578 = vmatprep.subr.bf16.mxu0 0
        %4579 = vmatpush1.bf16.msra.mxu0 0
        %4580 = vmatprep.subr.bf16.mxu0 0
        %4581 = vmatpush1.bf16.msra.mxu0 0
        %4582 = vmatprep.subr.bf16.mxu0 0
        %4583 = vmatpush1.bf16.msra.mxu0 0
        %4584 = vmatprep.subr.bf16.mxu0 0
        %4585 = vmatpush1.bf16.msra.mxu0 0
        %4586 = vmatprep.subr.bf16.mxu0 0
        %4587 = vmatpush1.bf16.msra.mxu0 0
        %4588 = vmatprep.subr.bf16.mxu0 0
        %4589 = vmatpush1.bf16.msra.mxu0 0
        %4590 = vmatprep.subr.bf16.mxu0 0
        %4591 = vmatpush1.bf16.msra.mxu0 0
        %4592 = vmatprep.mubr.bf16.mxu0 0
        %4593 = vmatmul.mubr.bf16.gmra.mrb[0].mxu0 %v1740
        %v4594 = vpop.f32.mrb[0].mxu0
        %v4595 = vadd.f32 %v1729, %v4594
        %v4596 = vpop.f32.mrb[0].mxu0
        %v4597 = vadd.f32 %v1729, %v4596
        %v4598 = vpop.f32.mrb[0].mxu0
        %v4599 = vadd.f32 %v1734, %v4598
        %v4600 = vpop.f32.mrb[0].mxu0
        %v4601 = vadd.f32 %v1734, %v4600
        %4602 = vdwg.mxu0
        %4603 = vmatprep.subr.bf16.mxu0 %v3293
        %4604 = vmatpush1.bf16.msra.mxu0 %v3292
        %4605 = vmatprep.subr.bf16.mxu0 %v3357
        %4606 = vmatpush1.bf16.msra.mxu0 %v3356
        %4607 = vmatprep.subr.bf16.mxu0 %v3421
        %4608 = vmatpush1.bf16.msra.mxu0 %v3420
        %4609 = vmatprep.subr.bf16.mxu0 %v3485
        %4610 = vmatpush1.bf16.msra.mxu0 %v3484
        %4611 = vmatprep.subr.bf16.mxu0 %v3549
        %4612 = vmatpush1.bf16.msra.mxu0 %v3548
        %4613 = vmatprep.subr.bf16.mxu0 %v3613
        %4614 = vmatpush1.bf16.msra.mxu0 %v3612
        %4615 = vmatprep.subr.bf16.mxu0 %v3677
        %4616 = vmatpush1.bf16.msra.mxu0 %v3676
        %4617 = vmatprep.subr.bf16.mxu0 %v3741
        %4618 = vmatpush1.bf16.msra.mxu0 %v3740
        %4619 = vmatprep.subr.bf16.mxu0 0
        %4620 = vmatpush1.bf16.msra.mxu0 0
        %4621 = vmatprep.subr.bf16.mxu0 0
        %4622 = vmatpush1.bf16.msra.mxu0 0
        %4623 = vmatprep.subr.bf16.mxu0 0
        %4624 = vmatpush1.bf16.msra.mxu0 0
        %4625 = vmatprep.subr.bf16.mxu0 0
        %4626 = vmatpush1.bf16.msra.mxu0 0
        %4627 = vmatprep.subr.bf16.mxu0 0
        %4628 = vmatpush1.bf16.msra.mxu0 0
        %4629 = vmatprep.subr.bf16.mxu0 0
        %4630 = vmatpush1.bf16.msra.mxu0 0
        %4631 = vmatprep.subr.bf16.mxu0 0
        %4632 = vmatpush1.bf16.msra.mxu0 0
        %4633 = vmatprep.subr.bf16.mxu0 0
        %4634 = vmatpush1.bf16.msra.mxu0 0
        %4635 = vmatprep.mubr.bf16.mxu0 0
        %4636 = vmatmul.mubr.bf16.gmra.mrb[0].mxu0 %v1740
        %v4637 = vpop.f32.mrb[0].mxu0
        %v4638 = vadd.f32 %v1729, %v4637
        %v4639 = vpop.f32.mrb[0].mxu0
        %v4640 = vadd.f32 %v1729, %v4639
        %v4641 = vpop.f32.mrb[0].mxu0
        %v4642 = vadd.f32 %v1734, %v4641
        %v4643 = vpop.f32.mrb[0].mxu0
        %v4644 = vadd.f32 %v1734, %v4643
        %4645 = vdwg.mxu0
        %4646 = vmatprep.subr.bf16.mxu0 %v3295
        %4647 = vmatpush1.bf16.msra.mxu0 %v3294
        %4648 = vmatprep.subr.bf16.mxu0 %v3359
        %4649 = vmatpush1.bf16.msra.mxu0 %v3358
        %4650 = vmatprep.subr.bf16.mxu0 %v3423
        %4651 = vmatpush1.bf16.msra.mxu0 %v3422
        %4652 = vmatprep.subr.bf16.mxu0 %v3487
        %4653 = vmatpush1.bf16.msra.mxu0 %v3486
        %4654 = vmatprep.subr.bf16.mxu0 %v3551
        %4655 = vmatpush1.bf16.msra.mxu0 %v3550
        %4656 = vmatprep.subr.bf16.mxu0 %v3615
        %4657 = vmatpush1.bf16.msra.mxu0 %v3614
        %4658 = vmatprep.subr.bf16.mxu0 %v3679
        %4659 = vmatpush1.bf16.msra.mxu0 %v3678
        %4660 = vmatprep.subr.bf16.mxu0 %v3743
        %4661 = vmatpush1.bf16.msra.mxu0 %v3742
        %4662 = vmatprep.subr.bf16.mxu0 0
        %4663 = vmatpush1.bf16.msra.mxu0 0
        %4664 = vmatprep.subr.bf16.mxu0 0
        %4665 = vmatpush1.bf16.msra.mxu0 0
        %4666 = vmatprep.subr.bf16.mxu0 0
        %4667 = vmatpush1.bf16.msra.mxu0 0
        %4668 = vmatprep.subr.bf16.mxu0 0
        %4669 = vmatpush1.bf16.msra.mxu0 0
        %4670 = vmatprep.subr.bf16.mxu0 0
        %4671 = vmatpush1.bf16.msra.mxu0 0
        %4672 = vmatprep.subr.bf16.mxu0 0
        %4673 = vmatpush1.bf16.msra.mxu0 0
        %4674 = vmatprep.subr.bf16.mxu0 0
        %4675 = vmatpush1.bf16.msra.mxu0 0
        %4676 = vmatprep.subr.bf16.mxu0 0
        %4677 = vmatpush1.bf16.msra.mxu0 0
        %4678 = vmatprep.mubr.bf16.mxu0 0
        %4679 = vmatmul.mubr.bf16.gmra.mrb[0].mxu0 %v1740
        %v4680 = vpop.f32.mrb[0].mxu0
        %v4681 = vadd.f32 %v1729, %v4680
        %v4682 = vpop.f32.mrb[0].mxu0
        %v4683 = vadd.f32 %v1729, %v4682
        %v4684 = vpop.f32.mrb[0].mxu0
        %v4685 = vadd.f32 %v1734, %v4684
        %v4686 = vpop.f32.mrb[0].mxu0
        %v4687 = vadd.f32 %v1734, %v4686
        %4688 = vdwg.mxu0
        %4689 = vmatprep.subr.bf16.mxu0 %v3297
        %4690 = vmatpush1.bf16.msra.mxu0 %v3296
        %4691 = vmatprep.subr.bf16.mxu0 %v3361
        %4692 = vmatpush1.bf16.msra.mxu0 %v3360
        %4693 = vmatprep.subr.bf16.mxu0 %v3425
        %4694 = vmatpush1.bf16.msra.mxu0 %v3424
        %4695 = vmatprep.subr.bf16.mxu0 %v3489
        %4696 = vmatpush1.bf16.msra.mxu0 %v3488
        %4697 = vmatprep.subr.bf16.mxu0 %v3553
        %4698 = vmatpush1.bf16.msra.mxu0 %v3552
        %4699 = vmatprep.subr.bf16.mxu0 %v3617
        %4700 = vmatpush1.bf16.msra.mxu0 %v3616
        %4701 = vmatprep.subr.bf16.mxu0 %v3681
        %4702 = vmatpush1.bf16.msra.mxu0 %v3680
        %4703 = vmatprep.subr.bf16.mxu0 %v3745
        %4704 = vmatpush1.bf16.msra.mxu0 %v3744
        %4705 = vmatprep.subr.bf16.mxu0 0
        %4706 = vmatpush1.bf16.msra.mxu0 0
        %4707 = vmatprep.subr.bf16.mxu0 0
        %4708 = vmatpush1.bf16.msra.mxu0 0
        %4709 = vmatprep.subr.bf16.mxu0 0
        %4710 = vmatpush1.bf16.msra.mxu0 0
        %4711 = vmatprep.subr.bf16.mxu0 0
        %4712 = vmatpush1.bf16.msra.mxu0 0
        %4713 = vmatprep.subr.bf16.mxu0 0
        %4714 = vmatpush1.bf16.msra.mxu0 0
        %4715 = vmatprep.subr.bf16.mxu0 0
        %4716 = vmatpush1.bf16.msra.mxu0 0
        %4717 = vmatprep.subr.bf16.mxu0 0
        %4718 = vmatpush1.bf16.msra.mxu0 0
        %4719 = vmatprep.subr.bf16.mxu0 0
        %4720 = vmatpush1.bf16.msra.mxu0 0
        %4721 = vmatprep.mubr.bf16.mxu0 0
        %4722 = vmatmul.mubr.bf16.gmra.mrb[0].mxu0 %v1740
        %v4723 = vpop.f32.mrb[0].mxu0
        %v4724 = vadd.f32 %v1729, %v4723
        %v4725 = vpop.f32.mrb[0].mxu0
        %v4726 = vadd.f32 %v1729, %v4725
        %v4727 = vpop.f32.mrb[0].mxu0
        %v4728 = vadd.f32 %v1734, %v4727
        %v4729 = vpop.f32.mrb[0].mxu0
        %v4730 = vadd.f32 %v1734, %v4729
        %4731 = vdwg.mxu0
        %4732 = vmatprep.subr.bf16.mxu0 %v3299
        %4733 = vmatpush1.bf16.msra.mxu0 %v3298
        %4734 = vmatprep.subr.bf16.mxu0 %v3363
        %4735 = vmatpush1.bf16.msra.mxu0 %v3362
        %4736 = vmatprep.subr.bf16.mxu0 %v3427
        %4737 = vmatpush1.bf16.msra.mxu0 %v3426
        %4738 = vmatprep.subr.bf16.mxu0 %v3491
        %4739 = vmatpush1.bf16.msra.mxu0 %v3490
        %4740 = vmatprep.subr.bf16.mxu0 %v3555
        %4741 = vmatpush1.bf16.msra.mxu0 %v3554
        %4742 = vmatprep.subr.bf16.mxu0 %v3619
        %4743 = vmatpush1.bf16.msra.mxu0 %v3618
        %4744 = vmatprep.subr.bf16.mxu0 %v3683
        %4745 = vmatpush1.bf16.msra.mxu0 %v3682
        %4746 = vmatprep.subr.bf16.mxu0 %v3747
        %4747 = vmatpush1.bf16.msra.mxu0 %v3746
        %4748 = vmatprep.subr.bf16.mxu0 0
        %4749 = vmatpush1.bf16.msra.mxu0 0
        %4750 = vmatprep.subr.bf16.mxu0 0
        %4751 = vmatpush1.bf16.msra.mxu0 0
        %4752 = vmatprep.subr.bf16.mxu0 0
        %4753 = vmatpush1.bf16.msra.mxu0 0
        %4754 = vmatprep.subr.bf16.mxu0 0
        %4755 = vmatpush1.bf16.msra.mxu0 0
        %4756 = vmatprep.subr.bf16.mxu0 0
        %4757 = vmatpush1.bf16.msra.mxu0 0
        %4758 = vmatprep.subr.bf16.mxu0 0
        %4759 = vmatpush1.bf16.msra.mxu0 0
        %4760 = vmatprep.subr.bf16.mxu0 0
        %4761 = vmatpush1.bf16.msra.mxu0 0
        %4762 = vmatprep.subr.bf16.mxu0 0
        %4763 = vmatpush1.bf16.msra.mxu0 0
        %4764 = vmatprep.mubr.bf16.mxu0 0
        %4765 = vmatmul.mubr.bf16.gmra.mrb[0].mxu0 %v1740
        %v4766 = vpop.f32.mrb[0].mxu0
        %v4767 = vadd.f32 %v1729, %v4766
        %v4768 = vpop.f32.mrb[0].mxu0
        %v4769 = vadd.f32 %v1729, %v4768
        %v4770 = vpop.f32.mrb[0].mxu0
        %v4771 = vadd.f32 %v1734, %v4770
        %v4772 = vpop.f32.mrb[0].mxu0
        %v4773 = vadd.f32 %v1734, %v4772
        %4774 = vdwg.mxu0
        %4775 = vmatprep.subr.bf16.mxu0 %v3301
        %4776 = vmatpush1.bf16.msra.mxu0 %v3300
        %4777 = vmatprep.subr.bf16.mxu0 %v3365
        %4778 = vmatpush1.bf16.msra.mxu0 %v3364
        %4779 = vmatprep.subr.bf16.mxu0 %v3429
        %4780 = vmatpush1.bf16.msra.mxu0 %v3428
        %4781 = vmatprep.subr.bf16.mxu0 %v3493
        %4782 = vmatpush1.bf16.msra.mxu0 %v3492
        %4783 = vmatprep.subr.bf16.mxu0 %v3557
        %4784 = vmatpush1.bf16.msra.mxu0 %v3556
        %4785 = vmatprep.subr.bf16.mxu0 %v3621
        %4786 = vmatpush1.bf16.msra.mxu0 %v3620
        %4787 = vmatprep.subr.bf16.mxu0 %v3685
        %4788 = vmatpush1.bf16.msra.mxu0 %v3684
        %4789 = vmatprep.subr.bf16.mxu0 %v3749
        %4790 = vmatpush1.bf16.msra.mxu0 %v3748
        %4791 = vmatprep.subr.bf16.mxu0 0
        %4792 = vmatpush1.bf16.msra.mxu0 0
        %4793 = vmatprep.subr.bf16.mxu0 0
        %4794 = vmatpush1.bf16.msra.mxu0 0
        %4795 = vmatprep.subr.bf16.mxu0 0
        %4796 = vmatpush1.bf16.msra.mxu0 0
        %4797 = vmatprep.subr.bf16.mxu0 0
        %4798 = vmatpush1.bf16.msra.mxu0 0
        %4799 = vmatprep.subr.bf16.mxu0 0
        %4800 = vmatpush1.bf16.msra.mxu0 0
        %4801 = vmatprep.subr.bf16.mxu0 0
        %4802 = vmatpush1.bf16.msra.mxu0 0
        %4803 = vmatprep.subr.bf16.mxu0 0
        %4804 = vmatpush1.bf16.msra.mxu0 0
        %4805 = vmatprep.subr.bf16.mxu0 0
        %4806 = vmatpush1.bf16.msra.mxu0 0
        %4807 = vmatprep.mubr.bf16.mxu0 0
        %4808 = vmatmul.mubr.bf16.gmra.mrb[0].mxu0 %v1740
        %v4809 = vpop.f32.mrb[0].mxu0
        %v4810 = vadd.f32 %v1729, %v4809
        %v4811 = vpop.f32.mrb[0].mxu0
        %v4812 = vadd.f32 %v1729, %v4811
        %v4813 = vpop.f32.mrb[0].mxu0
        %v4814 = vadd.f32 %v1734, %v4813
        %v4815 = vpop.f32.mrb[0].mxu0
        %v4816 = vadd.f32 %v1734, %v4815
        %4817 = vdwg.mxu0
        %4818 = vmatprep.subr.bf16.mxu0 %v3303
        %4819 = vmatpush1.bf16.msra.mxu0 %v3302
        %4820 = vmatprep.subr.bf16.mxu0 %v3367
        %4821 = vmatpush1.bf16.msra.mxu0 %v3366
        %4822 = vmatprep.subr.bf16.mxu0 %v3431
        %4823 = vmatpush1.bf16.msra.mxu0 %v3430
        %4824 = vmatprep.subr.bf16.mxu0 %v3495
        %4825 = vmatpush1.bf16.msra.mxu0 %v3494
        %4826 = vmatprep.subr.bf16.mxu0 %v3559
        %4827 = vmatpush1.bf16.msra.mxu0 %v3558
        %4828 = vmatprep.subr.bf16.mxu0 %v3623
        %4829 = vmatpush1.bf16.msra.mxu0 %v3622
        %4830 = vmatprep.subr.bf16.mxu0 %v3687
        %4831 = vmatpush1.bf16.msra.mxu0 %v3686
        %4832 = vmatprep.subr.bf16.mxu0 %v3751
        %4833 = vmatpush1.bf16.msra.mxu0 %v3750
        %4834 = vmatprep.subr.bf16.mxu0 0
        %4835 = vmatpush1.bf16.msra.mxu0 0
        %4836 = vmatprep.subr.bf16.mxu0 0
        %4837 = vmatpush1.bf16.msra.mxu0 0
        %4838 = vmatprep.subr.bf16.mxu0 0
        %4839 = vmatpush1.bf16.msra.mxu0 0
        %4840 = vmatprep.subr.bf16.mxu0 0
        %4841 = vmatpush1.bf16.msra.mxu0 0
        %4842 = vmatprep.subr.bf16.mxu0 0
        %4843 = vmatpush1.bf16.msra.mxu0 0
        %4844 = vmatprep.subr.bf16.mxu0 0
        %4845 = vmatpush1.bf16.msra.mxu0 0
        %4846 = vmatprep.subr.bf16.mxu0 0
        %4847 = vmatpush1.bf16.msra.mxu0 0
        %4848 = vmatprep.subr.bf16.mxu0 0
        %4849 = vmatpush1.bf16.msra.mxu0 0
        %4850 = vmatprep.mubr.bf16.mxu0 0
        %4851 = vmatmul.mubr.bf16.gmra.mrb[0].mxu0 %v1740
        %v4852 = vpop.f32.mrb[0].mxu0
        %v4853 = vadd.f32 %v1729, %v4852
        %v4854 = vpop.f32.mrb[0].mxu0
        %v4855 = vadd.f32 %v1729, %v4854
        %v4856 = vpop.f32.mrb[0].mxu0
        %v4857 = vadd.f32 %v1734, %v4856
        %v4858 = vpop.f32.mrb[0].mxu0
        %v4859 = vadd.f32 %v1734, %v4858
        %4860 = vdwg.mxu0
        %4861 = vmatprep.subr.bf16.mxu0 %v3305
        %4862 = vmatpush1.bf16.msra.mxu0 %v3304
        %4863 = vmatprep.subr.bf16.mxu0 %v3369
        %4864 = vmatpush1.bf16.msra.mxu0 %v3368
        %4865 = vmatprep.subr.bf16.mxu0 %v3433
        %4866 = vmatpush1.bf16.msra.mxu0 %v3432
        %4867 = vmatprep.subr.bf16.mxu0 %v3497
        %4868 = vmatpush1.bf16.msra.mxu0 %v3496
        %4869 = vmatprep.subr.bf16.mxu0 %v3561
        %4870 = vmatpush1.bf16.msra.mxu0 %v3560
        %4871 = vmatprep.subr.bf16.mxu0 %v3625
        %4872 = vmatpush1.bf16.msra.mxu0 %v3624
        %4873 = vmatprep.subr.bf16.mxu0 %v3689
        %4874 = vmatpush1.bf16.msra.mxu0 %v3688
        %4875 = vmatprep.subr.bf16.mxu0 %v3753
        %4876 = vmatpush1.bf16.msra.mxu0 %v3752
        %4877 = vmatprep.subr.bf16.mxu0 0
        %4878 = vmatpush1.bf16.msra.mxu0 0
        %4879 = vmatprep.subr.bf16.mxu0 0
        %4880 = vmatpush1.bf16.msra.mxu0 0
        %4881 = vmatprep.subr.bf16.mxu0 0
        %4882 = vmatpush1.bf16.msra.mxu0 0
        %4883 = vmatprep.subr.bf16.mxu0 0
        %4884 = vmatpush1.bf16.msra.mxu0 0
        %4885 = vmatprep.subr.bf16.mxu0 0
        %4886 = vmatpush1.bf16.msra.mxu0 0
        %4887 = vmatprep.subr.bf16.mxu0 0
        %4888 = vmatpush1.bf16.msra.mxu0 0
        %4889 = vmatprep.subr.bf16.mxu0 0
        %4890 = vmatpush1.bf16.msra.mxu0 0
        %4891 = vmatprep.subr.bf16.mxu0 0
        %4892 = vmatpush1.bf16.msra.mxu0 0
        %4893 = vmatprep.mubr.bf16.mxu0 0
        %4894 = vmatmul.mubr.bf16.gmra.mrb[0].mxu0 %v1740
        %v4895 = vpop.f32.mrb[0].mxu0
        %v4896 = vadd.f32 %v1729, %v4895
        %v4897 = vpop.f32.mrb[0].mxu0
        %v4898 = vadd.f32 %v1729, %v4897
        %v4899 = vpop.f32.mrb[0].mxu0
        %v4900 = vadd.f32 %v1734, %v4899
        %v4901 = vpop.f32.mrb[0].mxu0
        %v4902 = vadd.f32 %v1734, %v4901
        %4903 = vdwg.mxu0
        %4904 = vmatprep.subr.bf16.mxu0 %v3307
        %4905 = vmatpush1.bf16.msra.mxu0 %v3306
        %4906 = vmatprep.subr.bf16.mxu0 %v3371
        %4907 = vmatpush1.bf16.msra.mxu0 %v3370
        %4908 = vmatprep.subr.bf16.mxu0 %v3435
        %4909 = vmatpush1.bf16.msra.mxu0 %v3434
        %4910 = vmatprep.subr.bf16.mxu0 %v3499
        %4911 = vmatpush1.bf16.msra.mxu0 %v3498
        %4912 = vmatprep.subr.bf16.mxu0 %v3563
        %4913 = vmatpush1.bf16.msra.mxu0 %v3562
        %4914 = vmatprep.subr.bf16.mxu0 %v3627
        %4915 = vmatpush1.bf16.msra.mxu0 %v3626
        %4916 = vmatprep.subr.bf16.mxu0 %v3691
        %4917 = vmatpush1.bf16.msra.mxu0 %v3690
        %4918 = vmatprep.subr.bf16.mxu0 %v3755
        %4919 = vmatpush1.bf16.msra.mxu0 %v3754
        %4920 = vmatprep.subr.bf16.mxu0 0
        %4921 = vmatpush1.bf16.msra.mxu0 0
        %4922 = vmatprep.subr.bf16.mxu0 0
        %4923 = vmatpush1.bf16.msra.mxu0 0
        %4924 = vmatprep.subr.bf16.mxu0 0
        %4925 = vmatpush1.bf16.msra.mxu0 0
        %4926 = vmatprep.subr.bf16.mxu0 0
        %4927 = vmatpush1.bf16.msra.mxu0 0
        %4928 = vmatprep.subr.bf16.mxu0 0
        %4929 = vmatpush1.bf16.msra.mxu0 0
        %4930 = vmatprep.subr.bf16.mxu0 0
        %4931 = vmatpush1.bf16.msra.mxu0 0
        %4932 = vmatprep.subr.bf16.mxu0 0
        %4933 = vmatpush1.bf16.msra.mxu0 0
        %4934 = vmatprep.subr.bf16.mxu0 0
        %4935 = vmatpush1.bf16.msra.mxu0 0
        %4936 = vmatprep.mubr.bf16.mxu0 0
        %4937 = vmatmul.mubr.bf16.gmra.mrb[0].mxu0 %v1740
        %v4938 = vpop.f32.mrb[0].mxu0
        %v4939 = vadd.f32 %v1729, %v4938
        %v4940 = vpop.f32.mrb[0].mxu0
        %v4941 = vadd.f32 %v1729, %v4940
        %v4942 = vpop.f32.mrb[0].mxu0
        %v4943 = vadd.f32 %v1734, %v4942
        %v4944 = vpop.f32.mrb[0].mxu0
        %v4945 = vadd.f32 %v1734, %v4944
        %4946 = vdwg.mxu0
        %4947 = vmatprep.subr.bf16.mxu0 %v3309
        %4948 = vmatpush1.bf16.msra.mxu0 %v3308
        %4949 = vmatprep.subr.bf16.mxu0 %v3373
        %4950 = vmatpush1.bf16.msra.mxu0 %v3372
        %4951 = vmatprep.subr.bf16.mxu0 %v3437
        %4952 = vmatpush1.bf16.msra.mxu0 %v3436
        %4953 = vmatprep.subr.bf16.mxu0 %v3501
        %4954 = vmatpush1.bf16.msra.mxu0 %v3500
        %4955 = vmatprep.subr.bf16.mxu0 %v3565
        %4956 = vmatpush1.bf16.msra.mxu0 %v3564
        %4957 = vmatprep.subr.bf16.mxu0 %v3629
        %4958 = vmatpush1.bf16.msra.mxu0 %v3628
        %4959 = vmatprep.subr.bf16.mxu0 %v3693
        %4960 = vmatpush1.bf16.msra.mxu0 %v3692
        %4961 = vmatprep.subr.bf16.mxu0 %v3757
        %4962 = vmatpush1.bf16.msra.mxu0 %v3756
        %4963 = vmatprep.subr.bf16.mxu0 0
        %4964 = vmatpush1.bf16.msra.mxu0 0
        %4965 = vmatprep.subr.bf16.mxu0 0
        %4966 = vmatpush1.bf16.msra.mxu0 0
        %4967 = vmatprep.subr.bf16.mxu0 0
        %4968 = vmatpush1.bf16.msra.mxu0 0
        %4969 = vmatprep.subr.bf16.mxu0 0
        %4970 = vmatpush1.bf16.msra.mxu0 0
        %4971 = vmatprep.subr.bf16.mxu0 0
        %4972 = vmatpush1.bf16.msra.mxu0 0
        %4973 = vmatprep.subr.bf16.mxu0 0
        %4974 = vmatpush1.bf16.msra.mxu0 0
        %4975 = vmatprep.subr.bf16.mxu0 0
        %4976 = vmatpush1.bf16.msra.mxu0 0
        %4977 = vmatprep.subr.bf16.mxu0 0
        %4978 = vmatpush1.bf16.msra.mxu0 0
        %4979 = vmatprep.mubr.bf16.mxu0 0
        %4980 = vmatmul.mubr.bf16.gmra.mrb[0].mxu0 %v1740
        %v4981 = vpop.f32.mrb[0].mxu0
        %v4982 = vadd.f32 %v1729, %v4981
        %v4983 = vpop.f32.mrb[0].mxu0
        %v4984 = vadd.f32 %v1729, %v4983
        %v4985 = vpop.f32.mrb[0].mxu0
        %v4986 = vadd.f32 %v1734, %v4985
        %v4987 = vpop.f32.mrb[0].mxu0
        %v4988 = vadd.f32 %v1734, %v4987
        %4989 = vdwg.mxu0
        %4990 = vmatprep.subr.bf16.mxu0 %v3311
        %4991 = vmatpush1.bf16.msra.mxu0 %v3310
        %4992 = vmatprep.subr.bf16.mxu0 %v3375
        %4993 = vmatpush1.bf16.msra.mxu0 %v3374
        %4994 = vmatprep.subr.bf16.mxu0 %v3439
        %4995 = vmatpush1.bf16.msra.mxu0 %v3438
        %4996 = vmatprep.subr.bf16.mxu0 %v3503
        %4997 = vmatpush1.bf16.msra.mxu0 %v3502
        %4998 = vmatprep.subr.bf16.mxu0 %v3567
        %4999 = vmatpush1.bf16.msra.mxu0 %v3566
        %5000 = vmatprep.subr.bf16.mxu0 %v3631
        %5001 = vmatpush1.bf16.msra.mxu0 %v3630
        %5002 = vmatprep.subr.bf16.mxu0 %v3695
        %5003 = vmatpush1.bf16.msra.mxu0 %v3694
        %5004 = vmatprep.subr.bf16.mxu0 %v3759
        %5005 = vmatpush1.bf16.msra.mxu0 %v3758
        %5006 = vmatprep.subr.bf16.mxu0 0
        %5007 = vmatpush1.bf16.msra.mxu0 0
        %5008 = vmatprep.subr.bf16.mxu0 0
        %5009 = vmatpush1.bf16.msra.mxu0 0
        %5010 = vmatprep.subr.bf16.mxu0 0
        %5011 = vmatpush1.bf16.msra.mxu0 0
        %5012 = vmatprep.subr.bf16.mxu0 0
        %5013 = vmatpush1.bf16.msra.mxu0 0
        %5014 = vmatprep.subr.bf16.mxu0 0
        %5015 = vmatpush1.bf16.msra.mxu0 0
        %5016 = vmatprep.subr.bf16.mxu0 0
        %5017 = vmatpush1.bf16.msra.mxu0 0
        %5018 = vmatprep.subr.bf16.mxu0 0
        %5019 = vmatpush1.bf16.msra.mxu0 0
        %5020 = vmatprep.subr.bf16.mxu0 0
        %5021 = vmatpush1.bf16.msra.mxu0 0
        %5022 = vmatprep.mubr.bf16.mxu0 0
        %5023 = vmatmul.mubr.bf16.gmra.mrb[0].mxu0 %v1740
        %v5024 = vpop.f32.mrb[0].mxu0
        %v5025 = vadd.f32 %v1729, %v5024
        %v5026 = vpop.f32.mrb[0].mxu0
        %v5027 = vadd.f32 %v1729, %v5026
        %v5028 = vpop.f32.mrb[0].mxu0
        %v5029 = vadd.f32 %v1734, %v5028
        %v5030 = vpop.f32.mrb[0].mxu0
        %v5031 = vadd.f32 %v1734, %v5030
        %5032 = vdwg.mxu0
        %5033 = vmatprep.subr.bf16.mxu0 %v3313
        %5034 = vmatpush1.bf16.msra.mxu0 %v3312
        %5035 = vmatprep.subr.bf16.mxu0 %v3377
        %5036 = vmatpush1.bf16.msra.mxu0 %v3376
        %5037 = vmatprep.subr.bf16.mxu0 %v3441
        %5038 = vmatpush1.bf16.msra.mxu0 %v3440
        %5039 = vmatprep.subr.bf16.mxu0 %v3505
        %5040 = vmatpush1.bf16.msra.mxu0 %v3504
        %5041 = vmatprep.subr.bf16.mxu0 %v3569
        %5042 = vmatpush1.bf16.msra.mxu0 %v3568
        %5043 = vmatprep.subr.bf16.mxu0 %v3633
        %5044 = vmatpush1.bf16.msra.mxu0 %v3632
        %5045 = vmatprep.subr.bf16.mxu0 %v3697
        %5046 = vmatpush1.bf16.msra.mxu0 %v3696
        %5047 = vmatprep.subr.bf16.mxu0 %v3761
        %5048 = vmatpush1.bf16.msra.mxu0 %v3760
        %5049 = vmatprep.subr.bf16.mxu0 0
        %5050 = vmatpush1.bf16.msra.mxu0 0
        %5051 = vmatprep.subr.bf16.mxu0 0
        %5052 = vmatpush1.bf16.msra.mxu0 0
        %5053 = vmatprep.subr.bf16.mxu0 0
        %5054 = vmatpush1.bf16.msra.mxu0 0
        %5055 = vmatprep.subr.bf16.mxu0 0
        %5056 = vmatpush1.bf16.msra.mxu0 0
        %5057 = vmatprep.subr.bf16.mxu0 0
        %5058 = vmatpush1.bf16.msra.mxu0 0
        %5059 = vmatprep.subr.bf16.mxu0 0
        %5060 = vmatpush1.bf16.msra.mxu0 0
        %5061 = vmatprep.subr.bf16.mxu0 0
        %5062 = vmatpush1.bf16.msra.mxu0 0
        %5063 = vmatprep.subr.bf16.mxu0 0
        %5064 = vmatpush1.bf16.msra.mxu0 0
        %5065 = vmatprep.mubr.bf16.mxu0 0
        %5066 = vmatmul.mubr.bf16.gmra.mrb[0].mxu0 %v1740
        %v5067 = vpop.f32.mrb[0].mxu0
        %v5068 = vadd.f32 %v1729, %v5067
        %v5069 = vpop.f32.mrb[0].mxu0
        %v5070 = vadd.f32 %v1729, %v5069
        %v5071 = vpop.f32.mrb[0].mxu0
        %v5072 = vadd.f32 %v1734, %v5071
        %v5073 = vpop.f32.mrb[0].mxu0
        %v5074 = vadd.f32 %v1734, %v5073
        %5075 = vdwg.mxu0
        %5076 = vmatprep.subr.bf16.mxu0 %v3315
        %5077 = vmatpush1.bf16.msra.mxu0 %v3314
        %5078 = vmatprep.subr.bf16.mxu0 %v3379
        %5079 = vmatpush1.bf16.msra.mxu0 %v3378
        %5080 = vmatprep.subr.bf16.mxu0 %v3443
        %5081 = vmatpush1.bf16.msra.mxu0 %v3442
        %5082 = vmatprep.subr.bf16.mxu0 %v3507
        %5083 = vmatpush1.bf16.msra.mxu0 %v3506
        %5084 = vmatprep.subr.bf16.mxu0 %v3571
        %5085 = vmatpush1.bf16.msra.mxu0 %v3570
        %5086 = vmatprep.subr.bf16.mxu0 %v3635
        %5087 = vmatpush1.bf16.msra.mxu0 %v3634
        %5088 = vmatprep.subr.bf16.mxu0 %v3699
        %5089 = vmatpush1.bf16.msra.mxu0 %v3698
        %5090 = vmatprep.subr.bf16.mxu0 %v3763
        %5091 = vmatpush1.bf16.msra.mxu0 %v3762
        %5092 = vmatprep.subr.bf16.mxu0 0
        %5093 = vmatpush1.bf16.msra.mxu0 0
        %5094 = vmatprep.subr.bf16.mxu0 0
        %5095 = vmatpush1.bf16.msra.mxu0 0
        %5096 = vmatprep.subr.bf16.mxu0 0
        %5097 = vmatpush1.bf16.msra.mxu0 0
        %5098 = vmatprep.subr.bf16.mxu0 0
        %5099 = vmatpush1.bf16.msra.mxu0 0
        %5100 = vmatprep.subr.bf16.mxu0 0
        %5101 = vmatpush1.bf16.msra.mxu0 0
        %5102 = vmatprep.subr.bf16.mxu0 0
        %5103 = vmatpush1.bf16.msra.mxu0 0
        %5104 = vmatprep.subr.bf16.mxu0 0
        %5105 = vmatpush1.bf16.msra.mxu0 0
        %5106 = vmatprep.subr.bf16.mxu0 0
        %5107 = vmatpush1.bf16.msra.mxu0 0
        %5108 = vmatprep.mubr.bf16.mxu0 0
        %5109 = vmatmul.mubr.bf16.gmra.mrb[0].mxu0 %v1740
        %v5110 = vpop.f32.mrb[0].mxu0
        %v5111 = vadd.f32 %v1729, %v5110
        %v5112 = vpop.f32.mrb[0].mxu0
        %v5113 = vadd.f32 %v1729, %v5112
        %v5114 = vpop.f32.mrb[0].mxu0
        %v5115 = vadd.f32 %v1734, %v5114
        %v5116 = vpop.f32.mrb[0].mxu0
        %v5117 = vadd.f32 %v1734, %v5116
        %5118 = vdwg.mxu0
        %5119 = vmatprep.subr.bf16.mxu0 %v3317
        %5120 = vmatpush1.bf16.msra.mxu0 %v3316
        %5121 = vmatprep.subr.bf16.mxu0 %v3381
        %5122 = vmatpush1.bf16.msra.mxu0 %v3380
        %5123 = vmatprep.subr.bf16.mxu0 %v3445
        %5124 = vmatpush1.bf16.msra.mxu0 %v3444
        %5125 = vmatprep.subr.bf16.mxu0 %v3509
        %5126 = vmatpush1.bf16.msra.mxu0 %v3508
        %5127 = vmatprep.subr.bf16.mxu0 %v3573
        %5128 = vmatpush1.bf16.msra.mxu0 %v3572
        %5129 = vmatprep.subr.bf16.mxu0 %v3637
        %5130 = vmatpush1.bf16.msra.mxu0 %v3636
        %5131 = vmatprep.subr.bf16.mxu0 %v3701
        %5132 = vmatpush1.bf16.msra.mxu0 %v3700
        %5133 = vmatprep.subr.bf16.mxu0 %v3765
        %5134 = vmatpush1.bf16.msra.mxu0 %v3764
        %5135 = vmatprep.subr.bf16.mxu0 0
        %5136 = vmatpush1.bf16.msra.mxu0 0
        %5137 = vmatprep.subr.bf16.mxu0 0
        %5138 = vmatpush1.bf16.msra.mxu0 0
        %5139 = vmatprep.subr.bf16.mxu0 0
        %5140 = vmatpush1.bf16.msra.mxu0 0
        %5141 = vmatprep.subr.bf16.mxu0 0
        %5142 = vmatpush1.bf16.msra.mxu0 0
        %5143 = vmatprep.subr.bf16.mxu0 0
        %5144 = vmatpush1.bf16.msra.mxu0 0
        %5145 = vmatprep.subr.bf16.mxu0 0
        %5146 = vmatpush1.bf16.msra.mxu0 0
        %5147 = vmatprep.subr.bf16.mxu0 0
        %5148 = vmatpush1.bf16.msra.mxu0 0
        %5149 = vmatprep.subr.bf16.mxu0 0
        %5150 = vmatpush1.bf16.msra.mxu0 0
        %5151 = vmatprep.mubr.bf16.mxu0 0
        %5152 = vmatmul.mubr.bf16.gmra.mrb[0].mxu0 %v1740
        %v5153 = vpop.f32.mrb[0].mxu0
        %v5154 = vadd.f32 %v1729, %v5153
        %v5155 = vpop.f32.mrb[0].mxu0
        %v5156 = vadd.f32 %v1729, %v5155
        %v5157 = vpop.f32.mrb[0].mxu0
        %v5158 = vadd.f32 %v1734, %v5157
        %v5159 = vpop.f32.mrb[0].mxu0
        %v5160 = vadd.f32 %v1734, %v5159
        %5161 = vdwg.mxu0
        %5162 = vmatprep.subr.bf16.mxu0 %v3319
        %5163 = vmatpush1.bf16.msra.mxu0 %v3318
        %5164 = vmatprep.subr.bf16.mxu0 %v3383
        %5165 = vmatpush1.bf16.msra.mxu0 %v3382
        %5166 = vmatprep.subr.bf16.mxu0 %v3447
        %5167 = vmatpush1.bf16.msra.mxu0 %v3446
        %5168 = vmatprep.subr.bf16.mxu0 %v3511
        %5169 = vmatpush1.bf16.msra.mxu0 %v3510
        %5170 = vmatprep.subr.bf16.mxu0 %v3575
        %5171 = vmatpush1.bf16.msra.mxu0 %v3574
        %5172 = vmatprep.subr.bf16.mxu0 %v3639
        %5173 = vmatpush1.bf16.msra.mxu0 %v3638
        %5174 = vmatprep.subr.bf16.mxu0 %v3703
        %5175 = vmatpush1.bf16.msra.mxu0 %v3702
        %5176 = vmatprep.subr.bf16.mxu0 %v3767
        %5177 = vmatpush1.bf16.msra.mxu0 %v3766
        %5178 = vmatprep.subr.bf16.mxu0 0
        %5179 = vmatpush1.bf16.msra.mxu0 0
        %5180 = vmatprep.subr.bf16.mxu0 0
        %5181 = vmatpush1.bf16.msra.mxu0 0
        %5182 = vmatprep.subr.bf16.mxu0 0
        %5183 = vmatpush1.bf16.msra.mxu0 0
        %5184 = vmatprep.subr.bf16.mxu0 0
        %5185 = vmatpush1.bf16.msra.mxu0 0
        %5186 = vmatprep.subr.bf16.mxu0 0
        %5187 = vmatpush1.bf16.msra.mxu0 0
        %5188 = vmatprep.subr.bf16.mxu0 0
        %5189 = vmatpush1.bf16.msra.mxu0 0
        %5190 = vmatprep.subr.bf16.mxu0 0
        %5191 = vmatpush1.bf16.msra.mxu0 0
        %5192 = vmatprep.subr.bf16.mxu0 0
        %5193 = vmatpush1.bf16.msra.mxu0 0
        %5194 = vmatprep.mubr.bf16.mxu0 0
        %5195 = vmatmul.mubr.bf16.gmra.mrb[0].mxu0 %v1740
        %v5196 = vpop.f32.mrb[0].mxu0
        %v5197 = vadd.f32 %v1729, %v5196
        %v5198 = vpop.f32.mrb[0].mxu0
        %v5199 = vadd.f32 %v1729, %v5198
        %v5200 = vpop.f32.mrb[0].mxu0
        %v5201 = vadd.f32 %v1734, %v5200
        %v5202 = vpop.f32.mrb[0].mxu0
        %v5203 = vadd.f32 %v1734, %v5202
        %5204 = vdwg.mxu0
        %5205 = vmatprep.subr.bf16.mxu0 %v3321
        %5206 = vmatpush1.bf16.msra.mxu0 %v3320
        %5207 = vmatprep.subr.bf16.mxu0 %v3385
        %5208 = vmatpush1.bf16.msra.mxu0 %v3384
        %5209 = vmatprep.subr.bf16.mxu0 %v3449
        %5210 = vmatpush1.bf16.msra.mxu0 %v3448
        %5211 = vmatprep.subr.bf16.mxu0 %v3513
        %5212 = vmatpush1.bf16.msra.mxu0 %v3512
        %5213 = vmatprep.subr.bf16.mxu0 %v3577
        %5214 = vmatpush1.bf16.msra.mxu0 %v3576
        %5215 = vmatprep.subr.bf16.mxu0 %v3641
        %5216 = vmatpush1.bf16.msra.mxu0 %v3640
        %5217 = vmatprep.subr.bf16.mxu0 %v3705
        %5218 = vmatpush1.bf16.msra.mxu0 %v3704
        %5219 = vmatprep.subr.bf16.mxu0 %v3769
        %5220 = vmatpush1.bf16.msra.mxu0 %v3768
        %5221 = vmatprep.subr.bf16.mxu0 0
        %5222 = vmatpush1.bf16.msra.mxu0 0
        %5223 = vmatprep.subr.bf16.mxu0 0
        %5224 = vmatpush1.bf16.msra.mxu0 0
        %5225 = vmatprep.subr.bf16.mxu0 0
        %5226 = vmatpush1.bf16.msra.mxu0 0
        %5227 = vmatprep.subr.bf16.mxu0 0
        %5228 = vmatpush1.bf16.msra.mxu0 0
        %5229 = vmatprep.subr.bf16.mxu0 0
        %5230 = vmatpush1.bf16.msra.mxu0 0
        %5231 = vmatprep.subr.bf16.mxu0 0
        %5232 = vmatpush1.bf16.msra.mxu0 0
        %5233 = vmatprep.subr.bf16.mxu0 0
        %5234 = vmatpush1.bf16.msra.mxu0 0
        %5235 = vmatprep.subr.bf16.mxu0 0
        %5236 = vmatpush1.bf16.msra.mxu0 0
        %5237 = vmatprep.mubr.bf16.mxu0 0
        %5238 = vmatmul.mubr.bf16.gmra.mrb[0].mxu0 %v1740
        %v5239 = vpop.f32.mrb[0].mxu0
        %v5240 = vadd.f32 %v1729, %v5239
        %v5241 = vpop.f32.mrb[0].mxu0
        %v5242 = vadd.f32 %v1729, %v5241
        %v5243 = vpop.f32.mrb[0].mxu0
        %v5244 = vadd.f32 %v1734, %v5243
        %v5245 = vpop.f32.mrb[0].mxu0
        %v5246 = vadd.f32 %v1734, %v5245
        %5247 = vdwg.mxu0
        %5248 = vmatprep.subr.bf16.mxu0 %v3323
        %5249 = vmatpush1.bf16.msra.mxu0 %v3322
        %5250 = vmatprep.subr.bf16.mxu0 %v3387
        %5251 = vmatpush1.bf16.msra.mxu0 %v3386
        %5252 = vmatprep.subr.bf16.mxu0 %v3451
        %5253 = vmatpush1.bf16.msra.mxu0 %v3450
        %5254 = vmatprep.subr.bf16.mxu0 %v3515
        %5255 = vmatpush1.bf16.msra.mxu0 %v3514
        %5256 = vmatprep.subr.bf16.mxu0 %v3579
        %5257 = vmatpush1.bf16.msra.mxu0 %v3578
        %5258 = vmatprep.subr.bf16.mxu0 %v3643
        %5259 = vmatpush1.bf16.msra.mxu0 %v3642
        %5260 = vmatprep.subr.bf16.mxu0 %v3707
        %5261 = vmatpush1.bf16.msra.mxu0 %v3706
        %5262 = vmatprep.subr.bf16.mxu0 %v3771
        %5263 = vmatpush1.bf16.msra.mxu0 %v3770
        %5264 = vmatprep.subr.bf16.mxu0 0
        %5265 = vmatpush1.bf16.msra.mxu0 0
        %5266 = vmatprep.subr.bf16.mxu0 0
        %5267 = vmatpush1.bf16.msra.mxu0 0
        %5268 = vmatprep.subr.bf16.mxu0 0
        %5269 = vmatpush1.bf16.msra.mxu0 0
        %5270 = vmatprep.subr.bf16.mxu0 0
        %5271 = vmatpush1.bf16.msra.mxu0 0
        %5272 = vmatprep.subr.bf16.mxu0 0
        %5273 = vmatpush1.bf16.msra.mxu0 0
        %5274 = vmatprep.subr.bf16.mxu0 0
        %5275 = vmatpush1.bf16.msra.mxu0 0
        %5276 = vmatprep.subr.bf16.mxu0 0
        %5277 = vmatpush1.bf16.msra.mxu0 0
        %5278 = vmatprep.subr.bf16.mxu0 0
        %5279 = vmatpush1.bf16.msra.mxu0 0
        %5280 = vmatprep.mubr.bf16.mxu0 0
        %5281 = vmatmul.mubr.bf16.gmra.mrb[0].mxu0 %v1740
        %v5282 = vpop.f32.mrb[0].mxu0
        %v5283 = vadd.f32 %v1729, %v5282
        %v5284 = vpop.f32.mrb[0].mxu0
        %v5285 = vadd.f32 %v1729, %v5284
        %v5286 = vpop.f32.mrb[0].mxu0
        %v5287 = vadd.f32 %v1734, %v5286
        %v5288 = vpop.f32.mrb[0].mxu0
        %v5289 = vadd.f32 %v1734, %v5288
        %5290 = vdwg.mxu0
        %5291 = vmatprep.subr.bf16.mxu0 %v3325
        %5292 = vmatpush1.bf16.msra.mxu0 %v3324
        %5293 = vmatprep.subr.bf16.mxu0 %v3389
        %5294 = vmatpush1.bf16.msra.mxu0 %v3388
        %5295 = vmatprep.subr.bf16.mxu0 %v3453
        %5296 = vmatpush1.bf16.msra.mxu0 %v3452
        %5297 = vmatprep.subr.bf16.mxu0 %v3517
        %5298 = vmatpush1.bf16.msra.mxu0 %v3516
        %5299 = vmatprep.subr.bf16.mxu0 %v3581
        %5300 = vmatpush1.bf16.msra.mxu0 %v3580
        %5301 = vmatprep.subr.bf16.mxu0 %v3645
        %5302 = vmatpush1.bf16.msra.mxu0 %v3644
        %5303 = vmatprep.subr.bf16.mxu0 %v3709
        %5304 = vmatpush1.bf16.msra.mxu0 %v3708
        %5305 = vmatprep.subr.bf16.mxu0 %v3773
        %5306 = vmatpush1.bf16.msra.mxu0 %v3772
        %5307 = vmatprep.subr.bf16.mxu0 0
        %5308 = vmatpush1.bf16.msra.mxu0 0
        %5309 = vmatprep.subr.bf16.mxu0 0
        %5310 = vmatpush1.bf16.msra.mxu0 0
        %5311 = vmatprep.subr.bf16.mxu0 0
        %5312 = vmatpush1.bf16.msra.mxu0 0
        %5313 = vmatprep.subr.bf16.mxu0 0
        %5314 = vmatpush1.bf16.msra.mxu0 0
        %5315 = vmatprep.subr.bf16.mxu0 0
        %5316 = vmatpush1.bf16.msra.mxu0 0
        %5317 = vmatprep.subr.bf16.mxu0 0
        %5318 = vmatpush1.bf16.msra.mxu0 0
        %5319 = vmatprep.subr.bf16.mxu0 0
        %5320 = vmatpush1.bf16.msra.mxu0 0
        %5321 = vmatprep.subr.bf16.mxu0 0
        %5322 = vmatpush1.bf16.msra.mxu0 0
        %5323 = vmatprep.mubr.bf16.mxu0 0
        %5324 = vmatmul.mubr.bf16.gmra.mrb[0].mxu0 %v1740
        %v5325 = vpop.f32.mrb[0].mxu0
        %v5326 = vadd.f32 %v1729, %v5325
        %v5327 = vpop.f32.mrb[0].mxu0
        %v5328 = vadd.f32 %v1729, %v5327
        %v5329 = vpop.f32.mrb[0].mxu0
        %v5330 = vadd.f32 %v1734, %v5329
        %v5331 = vpop.f32.mrb[0].mxu0
        %v5332 = vadd.f32 %v1734, %v5331
        %5333 = vdwg.mxu0
        %5334 = vmatprep.subr.bf16.mxu0 %v3327
        %5335 = vmatpush1.bf16.msra.mxu0 %v3326
        %5336 = vmatprep.subr.bf16.mxu0 %v3391
        %5337 = vmatpush1.bf16.msra.mxu0 %v3390
        %5338 = vmatprep.subr.bf16.mxu0 %v3455
        %5339 = vmatpush1.bf16.msra.mxu0 %v3454
        %5340 = vmatprep.subr.bf16.mxu0 %v3519
        %5341 = vmatpush1.bf16.msra.mxu0 %v3518
        %5342 = vmatprep.subr.bf16.mxu0 %v3583
        %5343 = vmatpush1.bf16.msra.mxu0 %v3582
        %5344 = vmatprep.subr.bf16.mxu0 %v3647
        %5345 = vmatpush1.bf16.msra.mxu0 %v3646
        %5346 = vmatprep.subr.bf16.mxu0 %v3711
        %5347 = vmatpush1.bf16.msra.mxu0 %v3710
        %5348 = vmatprep.subr.bf16.mxu0 %v3775
        %5349 = vmatpush1.bf16.msra.mxu0 %v3774
        %5350 = vmatprep.subr.bf16.mxu0 0
        %5351 = vmatpush1.bf16.msra.mxu0 0
        %5352 = vmatprep.subr.bf16.mxu0 0
        %5353 = vmatpush1.bf16.msra.mxu0 0
        %5354 = vmatprep.subr.bf16.mxu0 0
        %5355 = vmatpush1.bf16.msra.mxu0 0
        %5356 = vmatprep.subr.bf16.mxu0 0
        %5357 = vmatpush1.bf16.msra.mxu0 0
        %5358 = vmatprep.subr.bf16.mxu0 0
        %5359 = vmatpush1.bf16.msra.mxu0 0
        %5360 = vmatprep.subr.bf16.mxu0 0
        %5361 = vmatpush1.bf16.msra.mxu0 0
        %5362 = vmatprep.subr.bf16.mxu0 0
        %5363 = vmatpush1.bf16.msra.mxu0 0
        %5364 = vmatprep.subr.bf16.mxu0 0
        %5365 = vmatpush1.bf16.msra.mxu0 0
        %5366 = vmatprep.mubr.bf16.mxu0 0
        %5367 = vmatmul.mubr.bf16.gmra.mrb[0].mxu0 %v1740
        %v5368 = vpop.f32.mrb[0].mxu0
        %v5369 = vadd.f32 %v1729, %v5368
        %v5370 = vpop.f32.mrb[0].mxu0
        %v5371 = vadd.f32 %v1729, %v5370
        %v5372 = vpop.f32.mrb[0].mxu0
        %v5373 = vadd.f32 %v1734, %v5372
        %v5374 = vpop.f32.mrb[0].mxu0
        %v5375 = vadd.f32 %v1734, %v5374
        %5376 = vdwg.mxu0
        %5377 = vmatprep.subr.bf16.mxu0 %v3329
        %5378 = vmatpush1.bf16.msra.mxu0 %v3328
        %5379 = vmatprep.subr.bf16.mxu0 %v3393
        %5380 = vmatpush1.bf16.msra.mxu0 %v3392
        %5381 = vmatprep.subr.bf16.mxu0 %v3457
        %5382 = vmatpush1.bf16.msra.mxu0 %v3456
        %5383 = vmatprep.subr.bf16.mxu0 %v3521
        %5384 = vmatpush1.bf16.msra.mxu0 %v3520
        %5385 = vmatprep.subr.bf16.mxu0 %v3585
        %5386 = vmatpush1.bf16.msra.mxu0 %v3584
        %5387 = vmatprep.subr.bf16.mxu0 %v3649
        %5388 = vmatpush1.bf16.msra.mxu0 %v3648
        %5389 = vmatprep.subr.bf16.mxu0 %v3713
        %5390 = vmatpush1.bf16.msra.mxu0 %v3712
        %5391 = vmatprep.subr.bf16.mxu0 %v3777
        %5392 = vmatpush1.bf16.msra.mxu0 %v3776
        %5393 = vmatprep.subr.bf16.mxu0 0
        %5394 = vmatpush1.bf16.msra.mxu0 0
        %5395 = vmatprep.subr.bf16.mxu0 0
        %5396 = vmatpush1.bf16.msra.mxu0 0
        %5397 = vmatprep.subr.bf16.mxu0 0
        %5398 = vmatpush1.bf16.msra.mxu0 0
        %5399 = vmatprep.subr.bf16.mxu0 0
        %5400 = vmatpush1.bf16.msra.mxu0 0
        %5401 = vmatprep.subr.bf16.mxu0 0
        %5402 = vmatpush1.bf16.msra.mxu0 0
        %5403 = vmatprep.subr.bf16.mxu0 0
        %5404 = vmatpush1.bf16.msra.mxu0 0
        %5405 = vmatprep.subr.bf16.mxu0 0
        %5406 = vmatpush1.bf16.msra.mxu0 0
        %5407 = vmatprep.subr.bf16.mxu0 0
        %5408 = vmatpush1.bf16.msra.mxu0 0
        %5409 = vmatprep.mubr.bf16.mxu0 0
        %5410 = vmatmul.mubr.bf16.gmra.mrb[0].mxu0 %v1740
        %v5411 = vpop.f32.mrb[0].mxu0
        %v5412 = vadd.f32 %v1729, %v5411
        %v5413 = vpop.f32.mrb[0].mxu0
        %v5414 = vadd.f32 %v1729, %v5413
        %v5415 = vpop.f32.mrb[0].mxu0
        %v5416 = vadd.f32 %v1734, %v5415
        %v5417 = vpop.f32.mrb[0].mxu0
        %v5418 = vadd.f32 %v1734, %v5417
        %5419 = vdwg.mxu0
        %5420 = vmatprep.subr.bf16.mxu0 %v3331
        %5421 = vmatpush1.bf16.msra.mxu0 %v3330
        %5422 = vmatprep.subr.bf16.mxu0 %v3395
        %5423 = vmatpush1.bf16.msra.mxu0 %v3394
        %5424 = vmatprep.subr.bf16.mxu0 %v3459
        %5425 = vmatpush1.bf16.msra.mxu0 %v3458
        %5426 = vmatprep.subr.bf16.mxu0 %v3523
        %5427 = vmatpush1.bf16.msra.mxu0 %v3522
        %5428 = vmatprep.subr.bf16.mxu0 %v3587
        %5429 = vmatpush1.bf16.msra.mxu0 %v3586
        %5430 = vmatprep.subr.bf16.mxu0 %v3651
        %5431 = vmatpush1.bf16.msra.mxu0 %v3650
        %5432 = vmatprep.subr.bf16.mxu0 %v3715
        %5433 = vmatpush1.bf16.msra.mxu0 %v3714
        %5434 = vmatprep.subr.bf16.mxu0 %v3779
        %5435 = vmatpush1.bf16.msra.mxu0 %v3778
        %5436 = vmatprep.subr.bf16.mxu0 0
        %5437 = vmatpush1.bf16.msra.mxu0 0
        %5438 = vmatprep.subr.bf16.mxu0 0
        %5439 = vmatpush1.bf16.msra.mxu0 0
        %5440 = vmatprep.subr.bf16.mxu0 0
        %5441 = vmatpush1.bf16.msra.mxu0 0
        %5442 = vmatprep.subr.bf16.mxu0 0
        %5443 = vmatpush1.bf16.msra.mxu0 0
        %5444 = vmatprep.subr.bf16.mxu0 0
        %5445 = vmatpush1.bf16.msra.mxu0 0
        %5446 = vmatprep.subr.bf16.mxu0 0
        %5447 = vmatpush1.bf16.msra.mxu0 0
        %5448 = vmatprep.subr.bf16.mxu0 0
        %5449 = vmatpush1.bf16.msra.mxu0 0
        %5450 = vmatprep.subr.bf16.mxu0 0
        %5451 = vmatpush1.bf16.msra.mxu0 0
        %5452 = vmatprep.mubr.bf16.mxu0 0
        %5453 = vmatmul.mubr.bf16.gmra.mrb[0].mxu0 %v1740
        %v5454 = vpop.f32.mrb[0].mxu0
        %v5455 = vadd.f32 %v1729, %v5454
        %v5456 = vpop.f32.mrb[0].mxu0
        %v5457 = vadd.f32 %v1729, %v5456
        %v5458 = vpop.f32.mrb[0].mxu0
        %v5459 = vadd.f32 %v1734, %v5458
        %v5460 = vpop.f32.mrb[0].mxu0
        %v5461 = vadd.f32 %v1734, %v5460
        %5462 = vdwg.mxu0
        %5463 = vmatprep.subr.bf16.mxu0 %v3333
        %5464 = vmatpush1.bf16.msra.mxu0 %v3332
        %5465 = vmatprep.subr.bf16.mxu0 %v3397
        %5466 = vmatpush1.bf16.msra.mxu0 %v3396
        %5467 = vmatprep.subr.bf16.mxu0 %v3461
        %5468 = vmatpush1.bf16.msra.mxu0 %v3460
        %5469 = vmatprep.subr.bf16.mxu0 %v3525
        %5470 = vmatpush1.bf16.msra.mxu0 %v3524
        %5471 = vmatprep.subr.bf16.mxu0 %v3589
        %5472 = vmatpush1.bf16.msra.mxu0 %v3588
        %5473 = vmatprep.subr.bf16.mxu0 %v3653
        %5474 = vmatpush1.bf16.msra.mxu0 %v3652
        %5475 = vmatprep.subr.bf16.mxu0 %v3717
        %5476 = vmatpush1.bf16.msra.mxu0 %v3716
        %5477 = vmatprep.subr.bf16.mxu0 %v3781
        %5478 = vmatpush1.bf16.msra.mxu0 %v3780
        %5479 = vmatprep.subr.bf16.mxu0 0
        %5480 = vmatpush1.bf16.msra.mxu0 0
        %5481 = vmatprep.subr.bf16.mxu0 0
        %5482 = vmatpush1.bf16.msra.mxu0 0
        %5483 = vmatprep.subr.bf16.mxu0 0
        %5484 = vmatpush1.bf16.msra.mxu0 0
        %5485 = vmatprep.subr.bf16.mxu0 0
        %5486 = vmatpush1.bf16.msra.mxu0 0
        %5487 = vmatprep.subr.bf16.mxu0 0
        %5488 = vmatpush1.bf16.msra.mxu0 0
        %5489 = vmatprep.subr.bf16.mxu0 0
        %5490 = vmatpush1.bf16.msra.mxu0 0
        %5491 = vmatprep.subr.bf16.mxu0 0
        %5492 = vmatpush1.bf16.msra.mxu0 0
        %5493 = vmatprep.subr.bf16.mxu0 0
        %5494 = vmatpush1.bf16.msra.mxu0 0
        %5495 = vmatprep.mubr.bf16.mxu0 0
        %5496 = vmatmul.mubr.bf16.gmra.mrb[0].mxu0 %v1740
        %v5497 = vpop.f32.mrb[0].mxu0
        %v5498 = vadd.f32 %v1729, %v5497
        %v5499 = vpop.f32.mrb[0].mxu0
        %v5500 = vadd.f32 %v1729, %v5499
        %v5501 = vpop.f32.mrb[0].mxu0
        %v5502 = vadd.f32 %v1734, %v5501
        %v5503 = vpop.f32.mrb[0].mxu0
        %v5504 = vadd.f32 %v1734, %v5503
        %5505 = vdwg.mxu0
        %5506 = vmatprep.subr.bf16.mxu0 %v3335
        %5507 = vmatpush1.bf16.msra.mxu0 %v3334
        %5508 = vmatprep.subr.bf16.mxu0 %v3399
        %5509 = vmatpush1.bf16.msra.mxu0 %v3398
        %5510 = vmatprep.subr.bf16.mxu0 %v3463
        %5511 = vmatpush1.bf16.msra.mxu0 %v3462
        %5512 = vmatprep.subr.bf16.mxu0 %v3527
        %5513 = vmatpush1.bf16.msra.mxu0 %v3526
        %5514 = vmatprep.subr.bf16.mxu0 %v3591
        %5515 = vmatpush1.bf16.msra.mxu0 %v3590
        %5516 = vmatprep.subr.bf16.mxu0 %v3655
        %5517 = vmatpush1.bf16.msra.mxu0 %v3654
        %5518 = vmatprep.subr.bf16.mxu0 %v3719
        %5519 = vmatpush1.bf16.msra.mxu0 %v3718
        %5520 = vmatprep.subr.bf16.mxu0 %v3783
        %5521 = vmatpush1.bf16.msra.mxu0 %v3782
        %5522 = vmatprep.subr.bf16.mxu0 0
        %5523 = vmatpush1.bf16.msra.mxu0 0
        %5524 = vmatprep.subr.bf16.mxu0 0
        %5525 = vmatpush1.bf16.msra.mxu0 0
        %5526 = vmatprep.subr.bf16.mxu0 0
        %5527 = vmatpush1.bf16.msra.mxu0 0
        %5528 = vmatprep.subr.bf16.mxu0 0
        %5529 = vmatpush1.bf16.msra.mxu0 0
        %5530 = vmatprep.subr.bf16.mxu0 0
        %5531 = vmatpush1.bf16.msra.mxu0 0
        %5532 = vmatprep.subr.bf16.mxu0 0
        %5533 = vmatpush1.bf16.msra.mxu0 0
        %5534 = vmatprep.subr.bf16.mxu0 0
        %5535 = vmatpush1.bf16.msra.mxu0 0
        %5536 = vmatprep.subr.bf16.mxu0 0
        %5537 = vmatpush1.bf16.msra.mxu0 0
        %5538 = vmatprep.mubr.bf16.mxu0 0
        %5539 = vmatmul.mubr.bf16.gmra.mrb[0].mxu0 %v1740
        %v5540 = vpop.f32.mrb[0].mxu0
        %v5541 = vadd.f32 %v1729, %v5540
        %v5542 = vpop.f32.mrb[0].mxu0
        %v5543 = vadd.f32 %v1729, %v5542
        %v5544 = vpop.f32.mrb[0].mxu0
        %v5545 = vadd.f32 %v1734, %v5544
        %v5546 = vpop.f32.mrb[0].mxu0
        %v5547 = vadd.f32 %v1734, %v5546
        %5548 = vdwg.mxu0
        %5549 = vmatprep.subr.bf16.mxu0 %v3337
        %5550 = vmatpush1.bf16.msra.mxu0 %v3336
        %5551 = vmatprep.subr.bf16.mxu0 %v3401
        %5552 = vmatpush1.bf16.msra.mxu0 %v3400
        %5553 = vmatprep.subr.bf16.mxu0 %v3465
        %5554 = vmatpush1.bf16.msra.mxu0 %v3464
        %5555 = vmatprep.subr.bf16.mxu0 %v3529
        %5556 = vmatpush1.bf16.msra.mxu0 %v3528
        %5557 = vmatprep.subr.bf16.mxu0 %v3593
        %5558 = vmatpush1.bf16.msra.mxu0 %v3592
        %5559 = vmatprep.subr.bf16.mxu0 %v3657
        %5560 = vmatpush1.bf16.msra.mxu0 %v3656
        %5561 = vmatprep.subr.bf16.mxu0 %v3721
        %5562 = vmatpush1.bf16.msra.mxu0 %v3720
        %5563 = vmatprep.subr.bf16.mxu0 %v3785
        %5564 = vmatpush1.bf16.msra.mxu0 %v3784
        %5565 = vmatprep.subr.bf16.mxu0 0
        %5566 = vmatpush1.bf16.msra.mxu0 0
        %5567 = vmatprep.subr.bf16.mxu0 0
        %5568 = vmatpush1.bf16.msra.mxu0 0
        %5569 = vmatprep.subr.bf16.mxu0 0
        %5570 = vmatpush1.bf16.msra.mxu0 0
        %5571 = vmatprep.subr.bf16.mxu0 0
        %5572 = vmatpush1.bf16.msra.mxu0 0
        %5573 = vmatprep.subr.bf16.mxu0 0
        %5574 = vmatpush1.bf16.msra.mxu0 0
        %5575 = vmatprep.subr.bf16.mxu0 0
        %5576 = vmatpush1.bf16.msra.mxu0 0
        %5577 = vmatprep.subr.bf16.mxu0 0
        %5578 = vmatpush1.bf16.msra.mxu0 0
        %5579 = vmatprep.subr.bf16.mxu0 0
        %5580 = vmatpush1.bf16.msra.mxu0 0
        %5581 = vmatprep.mubr.bf16.mxu0 0
        %5582 = vmatmul.mubr.bf16.gmra.mrb[0].mxu0 %v1740
        %v5583 = vpop.f32.mrb[0].mxu0
        %v5584 = vadd.f32 %v1729, %v5583
        %v5585 = vpop.f32.mrb[0].mxu0
        %v5586 = vadd.f32 %v1729, %v5585
        %v5587 = vpop.f32.mrb[0].mxu0
        %v5588 = vadd.f32 %v1734, %v5587
        %v5589 = vpop.f32.mrb[0].mxu0
        %v5590 = vadd.f32 %v1734, %v5589
        %5591 = vdwg.mxu0
        %5592 = vmatprep.subr.bf16.mxu0 %v3339
        %5593 = vmatpush1.bf16.msra.mxu0 %v3338
        %5594 = vmatprep.subr.bf16.mxu0 %v3403
        %5595 = vmatpush1.bf16.msra.mxu0 %v3402
        %5596 = vmatprep.subr.bf16.mxu0 %v3467
        %5597 = vmatpush1.bf16.msra.mxu0 %v3466
        %5598 = vmatprep.subr.bf16.mxu0 %v3531
        %5599 = vmatpush1.bf16.msra.mxu0 %v3530
        %5600 = vmatprep.subr.bf16.mxu0 %v3595
        %5601 = vmatpush1.bf16.msra.mxu0 %v3594
        %5602 = vmatprep.subr.bf16.mxu0 %v3659
        %5603 = vmatpush1.bf16.msra.mxu0 %v3658
        %5604 = vmatprep.subr.bf16.mxu0 %v3723
        %5605 = vmatpush1.bf16.msra.mxu0 %v3722
        %5606 = vmatprep.subr.bf16.mxu0 %v3787
        %5607 = vmatpush1.bf16.msra.mxu0 %v3786
        %5608 = vmatprep.subr.bf16.mxu0 0
        %5609 = vmatpush1.bf16.msra.mxu0 0
        %5610 = vmatprep.subr.bf16.mxu0 0
        %5611 = vmatpush1.bf16.msra.mxu0 0
        %5612 = vmatprep.subr.bf16.mxu0 0
        %5613 = vmatpush1.bf16.msra.mxu0 0
        %5614 = vmatprep.subr.bf16.mxu0 0
        %5615 = vmatpush1.bf16.msra.mxu0 0
        %5616 = vmatprep.subr.bf16.mxu0 0
        %5617 = vmatpush1.bf16.msra.mxu0 0
        %5618 = vmatprep.subr.bf16.mxu0 0
        %5619 = vmatpush1.bf16.msra.mxu0 0
        %5620 = vmatprep.subr.bf16.mxu0 0
        %5621 = vmatpush1.bf16.msra.mxu0 0
        %5622 = vmatprep.subr.bf16.mxu0 0
        %5623 = vmatpush1.bf16.msra.mxu0 0
        %5624 = vmatprep.mubr.bf16.mxu0 0
        %5625 = vmatmul.mubr.bf16.gmra.mrb[0].mxu0 %v1740
        %v5626 = vpop.f32.mrb[0].mxu0
        %v5627 = vadd.f32 %v1729, %v5626
        %v5628 = vpop.f32.mrb[0].mxu0
        %v5629 = vadd.f32 %v1729, %v5628
        %v5630 = vpop.f32.mrb[0].mxu0
        %v5631 = vadd.f32 %v1734, %v5630
        %v5632 = vpop.f32.mrb[0].mxu0
        %v5633 = vadd.f32 %v1734, %v5632
        %5634 = vdwg.mxu0
        %5635 = vmatprep.subr.bf16.mxu0 %v3341
        %5636 = vmatpush1.bf16.msra.mxu0 %v3340
        %5637 = vmatprep.subr.bf16.mxu0 %v3405
        %5638 = vmatpush1.bf16.msra.mxu0 %v3404
        %5639 = vmatprep.subr.bf16.mxu0 %v3469
        %5640 = vmatpush1.bf16.msra.mxu0 %v3468
        %5641 = vmatprep.subr.bf16.mxu0 %v3533
        %5642 = vmatpush1.bf16.msra.mxu0 %v3532
        %5643 = vmatprep.subr.bf16.mxu0 %v3597
        %5644 = vmatpush1.bf16.msra.mxu0 %v3596
        %5645 = vmatprep.subr.bf16.mxu0 %v3661
        %5646 = vmatpush1.bf16.msra.mxu0 %v3660
        %5647 = vmatprep.subr.bf16.mxu0 %v3725
        %5648 = vmatpush1.bf16.msra.mxu0 %v3724
        %5649 = vmatprep.subr.bf16.mxu0 %v3789
        %5650 = vmatpush1.bf16.msra.mxu0 %v3788
        %5651 = vmatprep.subr.bf16.mxu0 0
        %5652 = vmatpush1.bf16.msra.mxu0 0
        %5653 = vmatprep.subr.bf16.mxu0 0
        %5654 = vmatpush1.bf16.msra.mxu0 0
        %5655 = vmatprep.subr.bf16.mxu0 0
        %5656 = vmatpush1.bf16.msra.mxu0 0
        %5657 = vmatprep.subr.bf16.mxu0 0
        %5658 = vmatpush1.bf16.msra.mxu0 0
        %5659 = vmatprep.subr.bf16.mxu0 0
        %5660 = vmatpush1.bf16.msra.mxu0 0
        %5661 = vmatprep.subr.bf16.mxu0 0
        %5662 = vmatpush1.bf16.msra.mxu0 0
        %5663 = vmatprep.subr.bf16.mxu0 0
        %5664 = vmatpush1.bf16.msra.mxu0 0
        %5665 = vmatprep.subr.bf16.mxu0 0
        %5666 = vmatpush1.bf16.msra.mxu0 0
        %5667 = vmatprep.mubr.bf16.mxu0 0
        %5668 = vmatmul.mubr.bf16.gmra.mrb[0].mxu0 %v1740
        %v5669 = vpop.f32.mrb[0].mxu0
        %v5670 = vadd.f32 %v1729, %v5669
        %v5671 = vpop.f32.mrb[0].mxu0
        %v5672 = vadd.f32 %v1729, %v5671
        %v5673 = vpop.f32.mrb[0].mxu0
        %v5674 = vadd.f32 %v1734, %v5673
        %v5675 = vpop.f32.mrb[0].mxu0
        %v5676 = vadd.f32 %v1734, %v5675
        %5677 = vdwg.mxu0
        %v5678 = vmax.f32 %v4337, 0.0
        %v5679 = vmax.f32 %v4339, 0.0
        %v5680 = vmax.f32 %v4380, 0.0
        %v5681 = vmax.f32 %v4382, 0.0
        %v5682 = vmax.f32 %v4423, 0.0
        %v5683 = vmax.f32 %v4425, 0.0
        %v5684 = vmax.f32 %v4466, 0.0
        %v5685 = vmax.f32 %v4468, 0.0
        %v5686 = vmax.f32 %v4509, 0.0
        %v5687 = vmax.f32 %v4511, 0.0
        %v5688 = vmax.f32 %v4552, 0.0
        %v5689 = vmax.f32 %v4554, 0.0
        %v5690 = vmax.f32 %v4595, 0.0
        %v5691 = vmax.f32 %v4597, 0.0
        %v5692 = vmax.f32 %v4638, 0.0
        %v5693 = vmax.f32 %v4640, 0.0
        %v5694 = vmax.f32 %v4681, 0.0
        %v5695 = vmax.f32 %v4683, 0.0
        %v5696 = vmax.f32 %v4724, 0.0
        %v5697 = vmax.f32 %v4726, 0.0
        %v5698 = vmax.f32 %v4767, 0.0
        %v5699 = vmax.f32 %v4769, 0.0
        %v5700 = vmax.f32 %v4810, 0.0
        %v5701 = vmax.f32 %v4812, 0.0
        %v5702 = vmax.f32 %v4853, 0.0
        %v5703 = vmax.f32 %v4855, 0.0
        %v5704 = vmax.f32 %v4896, 0.0
        %v5705 = vmax.f32 %v4898, 0.0
        %v5706 = vmax.f32 %v4939, 0.0
        %v5707 = vmax.f32 %v4941, 0.0
        %v5708 = vmax.f32 %v4982, 0.0
        %v5709 = vmax.f32 %v4984, 0.0
        %v5710 = vmax.f32 %v5025, 0.0
        %v5711 = vmax.f32 %v5027, 0.0
        %v5712 = vmax.f32 %v5068, 0.0
        %v5713 = vmax.f32 %v5070, 0.0
        %v5714 = vmax.f32 %v5111, 0.0
        %v5715 = vmax.f32 %v5113, 0.0
        %v5716 = vmax.f32 %v5154, 0.0
        %v5717 = vmax.f32 %v5156, 0.0
        %v5718 = vmax.f32 %v5197, 0.0
        %v5719 = vmax.f32 %v5199, 0.0
        %v5720 = vmax.f32 %v5240, 0.0
        %v5721 = vmax.f32 %v5242, 0.0
        %v5722 = vmax.f32 %v5283, 0.0
        %v5723 = vmax.f32 %v5285, 0.0
        %v5724 = vmax.f32 %v5326, 0.0
        %v5725 = vmax.f32 %v5328, 0.0
        %v5726 = vmax.f32 %v5369, 0.0
        %v5727 = vmax.f32 %v5371, 0.0
        %v5728 = vmax.f32 %v5412, 0.0
        %v5729 = vmax.f32 %v5414, 0.0
        %v5730 = vmax.f32 %v5455, 0.0
        %v5731 = vmax.f32 %v5457, 0.0
        %v5732 = vmax.f32 %v5498, 0.0
        %v5733 = vmax.f32 %v5500, 0.0
        %v5734 = vmax.f32 %v5541, 0.0
        %v5735 = vmax.f32 %v5543, 0.0
        %v5736 = vmax.f32 %v5584, 0.0
        %v5737 = vmax.f32 %v5586, 0.0
        %v5738 = vmax.f32 %v5627, 0.0
        %v5739 = vmax.f32 %v5629, 0.0
        %v5740 = vmax.f32 %v5670, 0.0
        %v5741 = vmax.f32 %v5672, 0.0
        %v5742 = vmax.f32 %v4341, 0.0
        %v5743 = vmax.f32 %v4343, 0.0
        %v5744 = vmax.f32 %v4384, 0.0
        %v5745 = vmax.f32 %v4386, 0.0
        %v5746 = vmax.f32 %v4427, 0.0
        %v5747 = vmax.f32 %v4429, 0.0
        %v5748 = vmax.f32 %v4470, 0.0
        %v5749 = vmax.f32 %v4472, 0.0
        %v5750 = vmax.f32 %v4513, 0.0
        %v5751 = vmax.f32 %v4515, 0.0
        %v5752 = vmax.f32 %v4556, 0.0
        %v5753 = vmax.f32 %v4558, 0.0
        %v5754 = vmax.f32 %v4599, 0.0
        %v5755 = vmax.f32 %v4601, 0.0
        %v5756 = vmax.f32 %v4642, 0.0
        %v5757 = vmax.f32 %v4644, 0.0
        %v5758 = vmax.f32 %v4685, 0.0
        %v5759 = vmax.f32 %v4687, 0.0
        %v5760 = vmax.f32 %v4728, 0.0
        %v5761 = vmax.f32 %v4730, 0.0
        %v5762 = vmax.f32 %v4771, 0.0
        %v5763 = vmax.f32 %v4773, 0.0
        %v5764 = vmax.f32 %v4814, 0.0
        %v5765 = vmax.f32 %v4816, 0.0
        %v5766 = vmax.f32 %v4857, 0.0
        %v5767 = vmax.f32 %v4859, 0.0
        %v5768 = vmax.f32 %v4900, 0.0
        %v5769 = vmax.f32 %v4902, 0.0
        %v5770 = vmax.f32 %v4943, 0.0
        %v5771 = vmax.f32 %v4945, 0.0
        %v5772 = vmax.f32 %v4986, 0.0
        %v5773 = vmax.f32 %v4988, 0.0
        %v5774 = vmax.f32 %v5029, 0.0
        %v5775 = vmax.f32 %v5031, 0.0
        %v5776 = vmax.f32 %v5072, 0.0
        %v5777 = vmax.f32 %v5074, 0.0
        %v5778 = vmax.f32 %v5115, 0.0
        %v5779 = vmax.f32 %v5117, 0.0
        %v5780 = vmax.f32 %v5158, 0.0
        %v5781 = vmax.f32 %v5160, 0.0
        %v5782 = vmax.f32 %v5201, 0.0
        %v5783 = vmax.f32 %v5203, 0.0
        %v5784 = vmax.f32 %v5244, 0.0
        %v5785 = vmax.f32 %v5246, 0.0
        %v5786 = vmax.f32 %v5287, 0.0
        %v5787 = vmax.f32 %v5289, 0.0
        %v5788 = vmax.f32 %v5330, 0.0
        %v5789 = vmax.f32 %v5332, 0.0
        %v5790 = vmax.f32 %v5373, 0.0
        %v5791 = vmax.f32 %v5375, 0.0
        %v5792 = vmax.f32 %v5416, 0.0
        %v5793 = vmax.f32 %v5418, 0.0
        %v5794 = vmax.f32 %v5459, 0.0
        %v5795 = vmax.f32 %v5461, 0.0
        %v5796 = vmax.f32 %v5502, 0.0
        %v5797 = vmax.f32 %v5504, 0.0
        %v5798 = vmax.f32 %v5545, 0.0
        %v5799 = vmax.f32 %v5547, 0.0
        %v5800 = vmax.f32 %v5588, 0.0
        %v5801 = vmax.f32 %v5590, 0.0
        %v5802 = vmax.f32 %v5631, 0.0
        %v5803 = vmax.f32 %v5633, 0.0
        %v5804 = vmax.f32 %v5674, 0.0
        %v5805 = vmax.f32 %v5676, 0.0
        %v5806 = vpack.c.bf16 %v5742, %v5678
        %v5807 = vpack.c.bf16 %v5743, %v5679
        %v5808 = vpack.c.bf16 %v5744, %v5680
        %v5809 = vpack.c.bf16 %v5745, %v5681
        %v5810 = vpack.c.bf16 %v5746, %v5682
        %v5811 = vpack.c.bf16 %v5747, %v5683
        %v5812 = vpack.c.bf16 %v5748, %v5684
        %v5813 = vpack.c.bf16 %v5749, %v5685
        %v5814 = vpack.c.bf16 %v5750, %v5686
        %v5815 = vpack.c.bf16 %v5751, %v5687
        %v5816 = vpack.c.bf16 %v5752, %v5688
        %v5817 = vpack.c.bf16 %v5753, %v5689
        %v5818 = vpack.c.bf16 %v5754, %v5690
        %v5819 = vpack.c.bf16 %v5755, %v5691
        %v5820 = vpack.c.bf16 %v5756, %v5692
        %v5821 = vpack.c.bf16 %v5757, %v5693
        %v5822 = vpack.c.bf16 %v5758, %v5694
        %v5823 = vpack.c.bf16 %v5759, %v5695
        %v5824 = vpack.c.bf16 %v5760, %v5696
        %v5825 = vpack.c.bf16 %v5761, %v5697
        %v5826 = vpack.c.bf16 %v5762, %v5698
        %v5827 = vpack.c.bf16 %v5763, %v5699
        %v5828 = vpack.c.bf16 %v5764, %v5700
        %v5829 = vpack.c.bf16 %v5765, %v5701
        %v5830 = vpack.c.bf16 %v5766, %v5702
        %v5831 = vpack.c.bf16 %v5767, %v5703
        %v5832 = vpack.c.bf16 %v5768, %v5704
        %v5833 = vpack.c.bf16 %v5769, %v5705
        %v5834 = vpack.c.bf16 %v5770, %v5706
        %v5835 = vpack.c.bf16 %v5771, %v5707
        %v5836 = vpack.c.bf16 %v5772, %v5708
        %v5837 = vpack.c.bf16 %v5773, %v5709
        %v5838 = vpack.c.bf16 %v5774, %v5710
        %v5839 = vpack.c.bf16 %v5775, %v5711
        %v5840 = vpack.c.bf16 %v5776, %v5712
        %v5841 = vpack.c.bf16 %v5777, %v5713
        %v5842 = vpack.c.bf16 %v5778, %v5714
        %v5843 = vpack.c.bf16 %v5779, %v5715
        %v5844 = vpack.c.bf16 %v5780, %v5716
        %v5845 = vpack.c.bf16 %v5781, %v5717
        %v5846 = vpack.c.bf16 %v5782, %v5718
        %v5847 = vpack.c.bf16 %v5783, %v5719
        %v5848 = vpack.c.bf16 %v5784, %v5720
        %v5849 = vpack.c.bf16 %v5785, %v5721
        %v5850 = vpack.c.bf16 %v5786, %v5722
        %v5851 = vpack.c.bf16 %v5787, %v5723
        %v5852 = vpack.c.bf16 %v5788, %v5724
        %v5853 = vpack.c.bf16 %v5789, %v5725
        %v5854 = vpack.c.bf16 %v5790, %v5726
        %v5855 = vpack.c.bf16 %v5791, %v5727
        %v5856 = vpack.c.bf16 %v5792, %v5728
        %v5857 = vpack.c.bf16 %v5793, %v5729
        %v5858 = vpack.c.bf16 %v5794, %v5730
        %v5859 = vpack.c.bf16 %v5795, %v5731
        %v5860 = vpack.c.bf16 %v5796, %v5732
        %v5861 = vpack.c.bf16 %v5797, %v5733
        %v5862 = vpack.c.bf16 %v5798, %v5734
        %v5863 = vpack.c.bf16 %v5799, %v5735
        %v5864 = vpack.c.bf16 %v5800, %v5736
        %v5865 = vpack.c.bf16 %v5801, %v5737
        %v5866 = vpack.c.bf16 %v5802, %v5738
        %v5867 = vpack.c.bf16 %v5803, %v5739
        %v5868 = vpack.c.bf16 %v5804, %v5740
        %v5869 = vpack.c.bf16 %v5805, %v5741
        %v5934 = vunpack.c.l.b16 %v5806
        %v5935 = vunpack.c.l.b16 %v5807
        %v5936 = vunpack.c.l.b16 %v5808
        %v5937 = vunpack.c.l.b16 %v5809
        %v5938 = vunpack.c.l.b16 %v5810
        %v5939 = vunpack.c.l.b16 %v5811
        %v5940 = vunpack.c.l.b16 %v5812
        %v5941 = vunpack.c.l.b16 %v5813
        %v5942 = vunpack.c.l.b16 %v5814
        %v5943 = vunpack.c.l.b16 %v5815
        %v5944 = vunpack.c.l.b16 %v5816
        %v5945 = vunpack.c.l.b16 %v5817
        %v5946 = vunpack.c.l.b16 %v5818
        %v5947 = vunpack.c.l.b16 %v5819
        %v5948 = vunpack.c.l.b16 %v5820
        %v5949 = vunpack.c.l.b16 %v5821
        %v5950 = vunpack.c.l.b16 %v5822
        %v5951 = vunpack.c.l.b16 %v5823
        %v5952 = vunpack.c.l.b16 %v5824
        %v5953 = vunpack.c.l.b16 %v5825
        %v5954 = vunpack.c.l.b16 %v5826
        %v5955 = vunpack.c.l.b16 %v5827
        %v5956 = vunpack.c.l.b16 %v5828
        %v5957 = vunpack.c.l.b16 %v5829
        %v5958 = vunpack.c.l.b16 %v5830
        %v5959 = vunpack.c.l.b16 %v5831
        %v5960 = vunpack.c.l.b16 %v5832
        %v5961 = vunpack.c.l.b16 %v5833
        %v5962 = vunpack.c.l.b16 %v5834
        %v5963 = vunpack.c.l.b16 %v5835
        %v5964 = vunpack.c.l.b16 %v5836
        %v5965 = vunpack.c.l.b16 %v5837
        %v5966 = vunpack.c.l.b16 %v5838
        %v5967 = vunpack.c.l.b16 %v5839
        %v5968 = vunpack.c.l.b16 %v5840
        %v5969 = vunpack.c.l.b16 %v5841
        %v5970 = vunpack.c.l.b16 %v5842
        %v5971 = vunpack.c.l.b16 %v5843
        %v5972 = vunpack.c.l.b16 %v5844
        %v5973 = vunpack.c.l.b16 %v5845
        %v5974 = vunpack.c.l.b16 %v5846
        %v5975 = vunpack.c.l.b16 %v5847
        %v5976 = vunpack.c.l.b16 %v5848
        %v5977 = vunpack.c.l.b16 %v5849
        %v5978 = vunpack.c.l.b16 %v5850
        %v5979 = vunpack.c.l.b16 %v5851
        %v5980 = vunpack.c.l.b16 %v5852
        %v5981 = vunpack.c.l.b16 %v5853
        %v5982 = vunpack.c.l.b16 %v5854
        %v5983 = vunpack.c.l.b16 %v5855
        %v5984 = vunpack.c.l.b16 %v5856
        %v5985 = vunpack.c.l.b16 %v5857
        %v5986 = vunpack.c.l.b16 %v5858
        %v5987 = vunpack.c.l.b16 %v5859
        %v5988 = vunpack.c.l.b16 %v5860
        %v5989 = vunpack.c.l.b16 %v5861
        %v5990 = vunpack.c.l.b16 %v5862
        %v5991 = vunpack.c.l.b16 %v5863
        %v5992 = vunpack.c.l.b16 %v5864
        %v5993 = vunpack.c.l.b16 %v5865
        %v5994 = vunpack.c.l.b16 %v5866
        %v5995 = vunpack.c.l.b16 %v5867
        %v5996 = vunpack.c.l.b16 %v5868
        %v5997 = vunpack.c.l.b16 %v5869
        %v5998 = vunpack.c.h.b16 %v5806
        %v5999 = vunpack.c.h.b16 %v5807
        %v6000 = vunpack.c.h.b16 %v5808
        %v6001 = vunpack.c.h.b16 %v5809
        %v6002 = vunpack.c.h.b16 %v5810
        %v6003 = vunpack.c.h.b16 %v5811
        %v6004 = vunpack.c.h.b16 %v5812
        %v6005 = vunpack.c.h.b16 %v5813
        %v6006 = vunpack.c.h.b16 %v5814
        %v6007 = vunpack.c.h.b16 %v5815
        %v6008 = vunpack.c.h.b16 %v5816
        %v6009 = vunpack.c.h.b16 %v5817
        %v6010 = vunpack.c.h.b16 %v5818
        %v6011 = vunpack.c.h.b16 %v5819
        %v6012 = vunpack.c.h.b16 %v5820
        %v6013 = vunpack.c.h.b16 %v5821
        %v6014 = vunpack.c.h.b16 %v5822
        %v6015 = vunpack.c.h.b16 %v5823
        %v6016 = vunpack.c.h.b16 %v5824
        %v6017 = vunpack.c.h.b16 %v5825
        %v6018 = vunpack.c.h.b16 %v5826
        %v6019 = vunpack.c.h.b16 %v5827
        %v6020 = vunpack.c.h.b16 %v5828
        %v6021 = vunpack.c.h.b16 %v5829
        %v6022 = vunpack.c.h.b16 %v5830
        %v6023 = vunpack.c.h.b16 %v5831
        %v6024 = vunpack.c.h.b16 %v5832
        %v6025 = vunpack.c.h.b16 %v5833
        %v6026 = vunpack.c.h.b16 %v5834
        %v6027 = vunpack.c.h.b16 %v5835
        %v6028 = vunpack.c.h.b16 %v5836
        %v6029 = vunpack.c.h.b16 %v5837
        %v6030 = vunpack.c.h.b16 %v5838
        %v6031 = vunpack.c.h.b16 %v5839
        %v6032 = vunpack.c.h.b16 %v5840
        %v6033 = vunpack.c.h.b16 %v5841
        %v6034 = vunpack.c.h.b16 %v5842
        %v6035 = vunpack.c.h.b16 %v5843
        %v6036 = vunpack.c.h.b16 %v5844
        %v6037 = vunpack.c.h.b16 %v5845
        %v6038 = vunpack.c.h.b16 %v5846
        %v6039 = vunpack.c.h.b16 %v5847
        %v6040 = vunpack.c.h.b16 %v5848
        %v6041 = vunpack.c.h.b16 %v5849
        %v6042 = vunpack.c.h.b16 %v5850
        %v6043 = vunpack.c.h.b16 %v5851
        %v6044 = vunpack.c.h.b16 %v5852
        %v6045 = vunpack.c.h.b16 %v5853
        %v6046 = vunpack.c.h.b16 %v5854
        %v6047 = vunpack.c.h.b16 %v5855
        %v6048 = vunpack.c.h.b16 %v5856
        %v6049 = vunpack.c.h.b16 %v5857
        %v6050 = vunpack.c.h.b16 %v5858
        %v6051 = vunpack.c.h.b16 %v5859
        %v6052 = vunpack.c.h.b16 %v5860
        %v6053 = vunpack.c.h.b16 %v5861
        %v6054 = vunpack.c.h.b16 %v5862
        %v6055 = vunpack.c.h.b16 %v5863
        %v6056 = vunpack.c.h.b16 %v5864
        %v6057 = vunpack.c.h.b16 %v5865
        %v6058 = vunpack.c.h.b16 %v5866
        %v6059 = vunpack.c.h.b16 %v5867
        %v6060 = vunpack.c.h.b16 %v5868
        %v6061 = vunpack.c.h.b16 %v5869
        %v6062 = vpack.c.b16 %v5935, %v5934
        %v6063 = vpack.c.b16 %v5937, %v5936
        %v6064 = vpack.c.b16 %v5939, %v5938
        %v6065 = vpack.c.b16 %v5941, %v5940
        %v6066 = vpack.c.b16 %v5943, %v5942
        %v6067 = vpack.c.b16 %v5945, %v5944
        %v6068 = vpack.c.b16 %v5947, %v5946
        %v6069 = vpack.c.b16 %v5949, %v5948
        %v6070 = vpack.c.b16 %v5951, %v5950
        %v6071 = vpack.c.b16 %v5953, %v5952
        %v6072 = vpack.c.b16 %v5955, %v5954
        %v6073 = vpack.c.b16 %v5957, %v5956
        %v6074 = vpack.c.b16 %v5959, %v5958
        %v6075 = vpack.c.b16 %v5961, %v5960
        %v6076 = vpack.c.b16 %v5963, %v5962
        %v6077 = vpack.c.b16 %v5965, %v5964
        %v6078 = vpack.c.b16 %v5967, %v5966
        %v6079 = vpack.c.b16 %v5969, %v5968
        %v6080 = vpack.c.b16 %v5971, %v5970
        %v6081 = vpack.c.b16 %v5973, %v5972
        %v6082 = vpack.c.b16 %v5975, %v5974
        %v6083 = vpack.c.b16 %v5977, %v5976
        %v6084 = vpack.c.b16 %v5979, %v5978
        %v6085 = vpack.c.b16 %v5981, %v5980
        %v6086 = vpack.c.b16 %v5983, %v5982
        %v6087 = vpack.c.b16 %v5985, %v5984
        %v6088 = vpack.c.b16 %v5987, %v5986
        %v6089 = vpack.c.b16 %v5989, %v5988
        %v6090 = vpack.c.b16 %v5991, %v5990
        %v6091 = vpack.c.b16 %v5993, %v5992
        %v6092 = vpack.c.b16 %v5995, %v5994
        %v6093 = vpack.c.b16 %v5997, %v5996
        %v6094 = vpack.c.b16 %v5999, %v5998
        %v6095 = vpack.c.b16 %v6001, %v6000
        %v6096 = vpack.c.b16 %v6003, %v6002
        %v6097 = vpack.c.b16 %v6005, %v6004
        %v6098 = vpack.c.b16 %v6007, %v6006
        %v6099 = vpack.c.b16 %v6009, %v6008
        %v6100 = vpack.c.b16 %v6011, %v6010
        %v6101 = vpack.c.b16 %v6013, %v6012
        %v6102 = vpack.c.b16 %v6015, %v6014
        %v6103 = vpack.c.b16 %v6017, %v6016
        %v6104 = vpack.c.b16 %v6019, %v6018
        %v6105 = vpack.c.b16 %v6021, %v6020
        %v6106 = vpack.c.b16 %v6023, %v6022
        %v6107 = vpack.c.b16 %v6025, %v6024
        %v6108 = vpack.c.b16 %v6027, %v6026
        %v6109 = vpack.c.b16 %v6029, %v6028
        %v6110 = vpack.c.b16 %v6031, %v6030
        %v6111 = vpack.c.b16 %v6033, %v6032
        %v6112 = vpack.c.b16 %v6035, %v6034
        %v6113 = vpack.c.b16 %v6037, %v6036
        %v6114 = vpack.c.b16 %v6039, %v6038
        %v6115 = vpack.c.b16 %v6041, %v6040
        %v6116 = vpack.c.b16 %v6043, %v6042
        %v6117 = vpack.c.b16 %v6045, %v6044
        %v6118 = vpack.c.b16 %v6047, %v6046
        %v6119 = vpack.c.b16 %v6049, %v6048
        %v6120 = vpack.c.b16 %v6051, %v6050
        %v6121 = vpack.c.b16 %v6053, %v6052
        %v6122 = vpack.c.b16 %v6055, %v6054
        %v6123 = vpack.c.b16 %v6057, %v6056
        %v6124 = vpack.c.b16 %v6059, %v6058
        %v6125 = vpack.c.b16 %v6061, %v6060
        %6190 = vst [vmem:[%s1206] sm:$0xff] %v6062
        %6191 = vst [vmem:[%s1206 + $0x8] sm:$0xff] %v6063
        %6192 = vst [vmem:[%s1206 + $0x10] sm:$0xff] %v6064
        %6193 = vst [vmem:[%s1206 + $0x18] sm:$0xff] %v6065
        %6194 = vst [vmem:[%s1206 + $0x20] sm:$0xff] %v6066
        %6195 = vst [vmem:[%s1206 + $0x28] sm:$0xff] %v6067
        %6196 = vst [vmem:[%s1206 + $0x30] sm:$0xff] %v6068
        %6197 = vst [vmem:[%s1206 + $0x38] sm:$0xff] %v6069
        %6198 = vst [vmem:[%s1206 + $0x40] sm:$0xff] %v6070
        %6199 = vst [vmem:[%s1206 + $0x48] sm:$0xff] %v6071
        %6200 = vst [vmem:[%s1206 + $0x50] sm:$0xff] %v6072
        %6201 = vst [vmem:[%s1206 + $0x58] sm:$0xff] %v6073
        %6202 = vst [vmem:[%s1206 + $0x60] sm:$0xff] %v6074
        %6203 = vst [vmem:[%s1206 + $0x68] sm:$0xff] %v6075
        %6204 = vst [vmem:[%s1206 + $0x70] sm:$0xff] %v6076
        %6205 = vst [vmem:[%s1206 + $0x78] sm:$0xff] %v6077
        %6206 = vst [vmem:[%s1206 + $0x80] sm:$0xff] %v6078
        %6207 = vst [vmem:[%s1206 + $0x88] sm:$0xff] %v6079
        %6208 = vst [vmem:[%s1206 + $0x90] sm:$0xff] %v6080
        %6209 = vst [vmem:[%s1206 + $0x98] sm:$0xff] %v6081
        %6210 = vst [vmem:[%s1206 + $0xa0] sm:$0xff] %v6082
        %6211 = vst [vmem:[%s1206 + $0xa8] sm:$0xff] %v6083
        %6212 = vst [vmem:[%s1206 + $0xb0] sm:$0xff] %v6084
        %6213 = vst [vmem:[%s1206 + $0xb8] sm:$0xff] %v6085
        %6214 = vst [vmem:[%s1206 + $0xc0] sm:$0xff] %v6086
        %6215 = vst [vmem:[%s1206 + $0xc8] sm:$0xff] %v6087
        %6216 = vst [vmem:[%s1206 + $0xd0] sm:$0xff] %v6088
        %6217 = vst [vmem:[%s1206 + $0xd8] sm:$0xff] %v6089
        %6218 = vst [vmem:[%s1206 + $0xe0] sm:$0xff] %v6090
        %6219 = vst [vmem:[%s1206 + $0xe8] sm:$0xff] %v6091
        %6220 = vst [vmem:[%s1206 + $0xf0] sm:$0xff] %v6092
        %6221 = vst [vmem:[%s1206 + $0xf8] sm:$0xff] %v6093
        %6222 = vst [vmem:[%s1206 + $0x100] sm:$0xff] %v6094
        %6223 = vst [vmem:[%s1206 + $0x108] sm:$0xff] %v6095
        %6224 = vst [vmem:[%s1206 + $0x110] sm:$0xff] %v6096
        %6225 = vst [vmem:[%s1206 + $0x118] sm:$0xff] %v6097
        %6226 = vst [vmem:[%s1206 + $0x120] sm:$0xff] %v6098
        %6227 = vst [vmem:[%s1206 + $0x128] sm:$0xff] %v6099
        %6228 = vst [vmem:[%s1206 + $0x130] sm:$0xff] %v6100
        %6229 = vst [vmem:[%s1206 + $0x138] sm:$0xff] %v6101
        %6230 = vst [vmem:[%s1206 + $0x140] sm:$0xff] %v6102
        %6231 = vst [vmem:[%s1206 + $0x148] sm:$0xff] %v6103
        %6232 = vst [vmem:[%s1206 + $0x150] sm:$0xff] %v6104
        %6233 = vst [vmem:[%s1206 + $0x158] sm:$0xff] %v6105
        %6234 = vst [vmem:[%s1206 + $0x160] sm:$0xff] %v6106
        %6235 = vst [vmem:[%s1206 + $0x168] sm:$0xff] %v6107
        %6236 = vst [vmem:[%s1206 + $0x170] sm:$0xff] %v6108
        %6237 = vst [vmem:[%s1206 + $0x178] sm:$0xff] %v6109
        %6238 = vst [vmem:[%s1206 + $0x180] sm:$0xff] %v6110
        %6239 = vst [vmem:[%s1206 + $0x188] sm:$0xff] %v6111
        %6240 = vst [vmem:[%s1206 + $0x190] sm:$0xff] %v6112
        %6241 = vst [vmem:[%s1206 + $0x198] sm:$0xff] %v6113
        %6242 = vst [vmem:[%s1206 + $0x1a0] sm:$0xff] %v6114
        %6243 = vst [vmem:[%s1206 + $0x1a8] sm:$0xff] %v6115
        %6244 = vst [vmem:[%s1206 + $0x1b0] sm:$0xff] %v6116
        %6245 = vst [vmem:[%s1206 + $0x1b8] sm:$0xff] %v6117
        %6246 = vst [vmem:[%s1206 + $0x1c0] sm:$0xff] %v6118
        %6247 = vst [vmem:[%s1206 + $0x1c8] sm:$0xff] %v6119
        %6248 = vst [vmem:[%s1206 + $0x1d0] sm:$0xff] %v6120
        %6249 = vst [vmem:[%s1206 + $0x1d8] sm:$0xff] %v6121
        %6250 = vst [vmem:[%s1206 + $0x1e0] sm:$0xff] %v6122
        %6251 = vst [vmem:[%s1206 + $0x1e8] sm:$0xff] %v6123
        %6252 = vst [vmem:[%s1206 + $0x1f0] sm:$0xff] %v6124
        %6253 = vst [vmem:[%s1206 + $0x1f8] sm:$0xff] %v6125
        %s6254 = sand.u32 %s90, 1
        %s6255 = sand.u32 %s90, 1
        %s6256 = smul.addr %s6255, 512
        %s6257 = scalar_lea.vmem [#allocation3], %s6256
        // Predicated region
        $region56: #{convnet_forward.5} parent=50 // pred_check
          %p6258 = pneg %p100
        $region57: #{convnet_forward.5} parent=50 // pred_check_branch
          %6260 = sbr.rel (%p6258) target = $region59
        $region58: #{convnet_forward.5} parent=50 // pred_region
          %s6261 = smul.u32 64, %s14
          %s6262 = smul.addr %s6261, 4
          %s6263 = scalar_lea.vmem %s3, %s6262
          // Predicated region
          $region60: #{convnet_forward.5} parent=58 // pred_check
            _
          $region61: #{convnet_forward.5} parent=58 // pred_check_branch
            %6265 = sbr.rel (0) target = $region63
          $region62: #{convnet_forward.5} parent=58 // pred_region
            // Predicated region
            $region64: #{convnet_forward.5} parent=62 // pred_check
              _
            $region65: #{convnet_forward.5} parent=62 // pred_check_branch
              %6267 = sbr.rel (0) target = $region67
            $region66: #{convnet_forward.5} parent=62 // pred_region
              loop: start=0, step=1, limit=1
              $region68: #{convnet_forward.5} parent=66 // loop_pre_header
                _
              $region69: #{convnet_forward.5} parent=66 // loop_header
                %s6269 = sphi 0, %s6273
                %p6270 = scmp.ge.s32.totalorder %s6269, 1
                %s6274 = sphi %s6257, %s6257
                %s6275 = sphi %s6263, %s6263
              $region70: #{convnet_forward.5} parent=66 // loop_header_branch
                %6272 = sbr.rel (%p6270) target = $region74
              $region71: #{convnet_forward.5} parent=66 // loop_body
                %v6276 = vld [vmem:[%s6274] sm:$0xff]
                %6277 = vst [vmem:[%s6275] sm:$0xff] %v6276
                %v6278 = vld [vmem:[%s6274 + $0x8] sm:$0xff]
                %6279 = vst [vmem:[%s6275 + $0x8] sm:$0xff] %v6278
                %v6280 = vld [vmem:[%s6274 + $0x10] sm:$0xff]
                %6281 = vst [vmem:[%s6275 + $0x10] sm:$0xff] %v6280
                %v6282 = vld [vmem:[%s6274 + $0x18] sm:$0xff]
                %6283 = vst [vmem:[%s6275 + $0x18] sm:$0xff] %v6282
                %v6284 = vld [vmem:[%s6274 + $0x20] sm:$0xff]
                %6285 = vst [vmem:[%s6275 + $0x20] sm:$0xff] %v6284
                %v6286 = vld [vmem:[%s6274 + $0x28] sm:$0xff]
                %6287 = vst [vmem:[%s6275 + $0x28] sm:$0xff] %v6286
                %v6288 = vld [vmem:[%s6274 + $0x30] sm:$0xff]
                %6289 = vst [vmem:[%s6275 + $0x30] sm:$0xff] %v6288
                %v6290 = vld [vmem:[%s6274 + $0x38] sm:$0xff]
                %6291 = vst [vmem:[%s6275 + $0x38] sm:$0xff] %v6290
                %v6292 = vld [vmem:[%s6274 + $0x40] sm:$0xff]
                %6293 = vst [vmem:[%s6275 + $0x40] sm:$0xff] %v6292
                %v6294 = vld [vmem:[%s6274 + $0x48] sm:$0xff]
                %6295 = vst [vmem:[%s6275 + $0x48] sm:$0xff] %v6294
                %v6296 = vld [vmem:[%s6274 + $0x50] sm:$0xff]
                %6297 = vst [vmem:[%s6275 + $0x50] sm:$0xff] %v6296
                %v6298 = vld [vmem:[%s6274 + $0x58] sm:$0xff]
                %6299 = vst [vmem:[%s6275 + $0x58] sm:$0xff] %v6298
                %v6300 = vld [vmem:[%s6274 + $0x60] sm:$0xff]
                %6301 = vst [vmem:[%s6275 + $0x60] sm:$0xff] %v6300
                %v6302 = vld [vmem:[%s6274 + $0x68] sm:$0xff]
                %6303 = vst [vmem:[%s6275 + $0x68] sm:$0xff] %v6302
                %v6304 = vld [vmem:[%s6274 + $0x70] sm:$0xff]
                %6305 = vst [vmem:[%s6275 + $0x70] sm:$0xff] %v6304
                %v6306 = vld [vmem:[%s6274 + $0x78] sm:$0xff]
                %6307 = vst [vmem:[%s6275 + $0x78] sm:$0xff] %v6306
                %v6308 = vld [vmem:[%s6274 + $0x80] sm:$0xff]
                %6309 = vst [vmem:[%s6275 + $0x80] sm:$0xff] %v6308
                %v6310 = vld [vmem:[%s6274 + $0x88] sm:$0xff]
                %6311 = vst [vmem:[%s6275 + $0x88] sm:$0xff] %v6310
                %v6312 = vld [vmem:[%s6274 + $0x90] sm:$0xff]
                %6313 = vst [vmem:[%s6275 + $0x90] sm:$0xff] %v6312
                %v6314 = vld [vmem:[%s6274 + $0x98] sm:$0xff]
                %6315 = vst [vmem:[%s6275 + $0x98] sm:$0xff] %v6314
                %v6316 = vld [vmem:[%s6274 + $0xa0] sm:$0xff]
                %6317 = vst [vmem:[%s6275 + $0xa0] sm:$0xff] %v6316
                %v6318 = vld [vmem:[%s6274 + $0xa8] sm:$0xff]
                %6319 = vst [vmem:[%s6275 + $0xa8] sm:$0xff] %v6318
                %v6320 = vld [vmem:[%s6274 + $0xb0] sm:$0xff]
                %6321 = vst [vmem:[%s6275 + $0xb0] sm:$0xff] %v6320
                %v6322 = vld [vmem:[%s6274 + $0xb8] sm:$0xff]
                %6323 = vst [vmem:[%s6275 + $0xb8] sm:$0xff] %v6322
                %v6324 = vld [vmem:[%s6274 + $0xc0] sm:$0xff]
                %6325 = vst [vmem:[%s6275 + $0xc0] sm:$0xff] %v6324
                %v6326 = vld [vmem:[%s6274 + $0xc8] sm:$0xff]
                %6327 = vst [vmem:[%s6275 + $0xc8] sm:$0xff] %v6326
                %v6328 = vld [vmem:[%s6274 + $0xd0] sm:$0xff]
                %6329 = vst [vmem:[%s6275 + $0xd0] sm:$0xff] %v6328
                %v6330 = vld [vmem:[%s6274 + $0xd8] sm:$0xff]
                %6331 = vst [vmem:[%s6275 + $0xd8] sm:$0xff] %v6330
                %v6332 = vld [vmem:[%s6274 + $0xe0] sm:$0xff]
                %6333 = vst [vmem:[%s6275 + $0xe0] sm:$0xff] %v6332
                %v6334 = vld [vmem:[%s6274 + $0xe8] sm:$0xff]
                %6335 = vst [vmem:[%s6275 + $0xe8] sm:$0xff] %v6334
                %v6336 = vld [vmem:[%s6274 + $0xf0] sm:$0xff]
                %6337 = vst [vmem:[%s6275 + $0xf0] sm:$0xff] %v6336
                %v6338 = vld [vmem:[%s6274 + $0xf8] sm:$0xff]
                %6339 = vst [vmem:[%s6275 + $0xf8] sm:$0xff] %v6338
                %v6340 = vld [vmem:[%s6274 + $0x100] sm:$0xff]
                %6341 = vst [vmem:[%s6275 + $0x400] sm:$0xff] %v6340
                %v6342 = vld [vmem:[%s6274 + $0x108] sm:$0xff]
                %6343 = vst [vmem:[%s6275 + $0x408] sm:$0xff] %v6342
                %v6344 = vld [vmem:[%s6274 + $0x110] sm:$0xff]
                %6345 = vst [vmem:[%s6275 + $0x410] sm:$0xff] %v6344
                %v6346 = vld [vmem:[%s6274 + $0x118] sm:$0xff]
                %6347 = vst [vmem:[%s6275 + $0x418] sm:$0xff] %v6346
                %v6348 = vld [vmem:[%s6274 + $0x120] sm:$0xff]
                %6349 = vst [vmem:[%s6275 + $0x420] sm:$0xff] %v6348
                %v6350 = vld [vmem:[%s6274 + $0x128] sm:$0xff]
                %6351 = vst [vmem:[%s6275 + $0x428] sm:$0xff] %v6350
                %v6352 = vld [vmem:[%s6274 + $0x130] sm:$0xff]
                %6353 = vst [vmem:[%s6275 + $0x430] sm:$0xff] %v6352
                %v6354 = vld [vmem:[%s6274 + $0x138] sm:$0xff]
                %6355 = vst [vmem:[%s6275 + $0x438] sm:$0xff] %v6354
                %v6356 = vld [vmem:[%s6274 + $0x140] sm:$0xff]
                %6357 = vst [vmem:[%s6275 + $0x440] sm:$0xff] %v6356
                %v6358 = vld [vmem:[%s6274 + $0x148] sm:$0xff]
                %6359 = vst [vmem:[%s6275 + $0x448] sm:$0xff] %v6358
                %v6360 = vld [vmem:[%s6274 + $0x150] sm:$0xff]
                %6361 = vst [vmem:[%s6275 + $0x450] sm:$0xff] %v6360
                %v6362 = vld [vmem:[%s6274 + $0x158] sm:$0xff]
                %6363 = vst [vmem:[%s6275 + $0x458] sm:$0xff] %v6362
                %v6364 = vld [vmem:[%s6274 + $0x160] sm:$0xff]
                %6365 = vst [vmem:[%s6275 + $0x460] sm:$0xff] %v6364
                %v6366 = vld [vmem:[%s6274 + $0x168] sm:$0xff]
                %6367 = vst [vmem:[%s6275 + $0x468] sm:$0xff] %v6366
                %v6368 = vld [vmem:[%s6274 + $0x170] sm:$0xff]
                %6369 = vst [vmem:[%s6275 + $0x470] sm:$0xff] %v6368
                %v6370 = vld [vmem:[%s6274 + $0x178] sm:$0xff]
                %6371 = vst [vmem:[%s6275 + $0x478] sm:$0xff] %v6370
                %v6372 = vld [vmem:[%s6274 + $0x180] sm:$0xff]
                %6373 = vst [vmem:[%s6275 + $0x480] sm:$0xff] %v6372
                %v6374 = vld [vmem:[%s6274 + $0x188] sm:$0xff]
                %6375 = vst [vmem:[%s6275 + $0x488] sm:$0xff] %v6374
                %v6376 = vld [vmem:[%s6274 + $0x190] sm:$0xff]
                %6377 = vst [vmem:[%s6275 + $0x490] sm:$0xff] %v6376
                %v6378 = vld [vmem:[%s6274 + $0x198] sm:$0xff]
                %6379 = vst [vmem:[%s6275 + $0x498] sm:$0xff] %v6378
                %v6380 = vld [vmem:[%s6274 + $0x1a0] sm:$0xff]
                %6381 = vst [vmem:[%s6275 + $0x4a0] sm:$0xff] %v6380
                %v6382 = vld [vmem:[%s6274 + $0x1a8] sm:$0xff]
                %6383 = vst [vmem:[%s6275 + $0x4a8] sm:$0xff] %v6382
                %v6384 = vld [vmem:[%s6274 + $0x1b0] sm:$0xff]
                %6385 = vst [vmem:[%s6275 + $0x4b0] sm:$0xff] %v6384
                %v6386 = vld [vmem:[%s6274 + $0x1b8] sm:$0xff]
                %6387 = vst [vmem:[%s6275 + $0x4b8] sm:$0xff] %v6386
                %v6388 = vld [vmem:[%s6274 + $0x1c0] sm:$0xff]
                %6389 = vst [vmem:[%s6275 + $0x4c0] sm:$0xff] %v6388
                %v6390 = vld [vmem:[%s6274 + $0x1c8] sm:$0xff]
                %6391 = vst [vmem:[%s6275 + $0x4c8] sm:$0xff] %v6390
                %v6392 = vld [vmem:[%s6274 + $0x1d0] sm:$0xff]
                %6393 = vst [vmem:[%s6275 + $0x4d0] sm:$0xff] %v6392
                %v6394 = vld [vmem:[%s6274 + $0x1d8] sm:$0xff]
                %6395 = vst [vmem:[%s6275 + $0x4d8] sm:$0xff] %v6394
                %v6396 = vld [vmem:[%s6274 + $0x1e0] sm:$0xff]
                %6397 = vst [vmem:[%s6275 + $0x4e0] sm:$0xff] %v6396
                %v6398 = vld [vmem:[%s6274 + $0x1e8] sm:$0xff]
                %6399 = vst [vmem:[%s6275 + $0x4e8] sm:$0xff] %v6398
                %v6400 = vld [vmem:[%s6274 + $0x1f0] sm:$0xff]
                %6401 = vst [vmem:[%s6275 + $0x4f0] sm:$0xff] %v6400
                %v6402 = vld [vmem:[%s6274 + $0x1f8] sm:$0xff]
                %6403 = vst [vmem:[%s6275 + $0x4f8] sm:$0xff] %v6402
              $region72: #{convnet_forward.5} parent=66 // loop_footer
                %s6273 = sadd.s32 1, %s6269
              $region73: #{convnet_forward.5} parent=66 // loop_footer_branch
                %6268 = sbr.rel target = $region69
              $region74: #{convnet_forward.5} parent=66 // loop_exit
                _
            $region67: #{convnet_forward.5} parent=62 // pred_fallthru
              _
            // Predicated region
            $region75: #{convnet_forward.5} parent=62 // pred_check
              _
            $region76: #{convnet_forward.5} parent=62 // pred_check_branch
              %6405 = sbr.rel target = $region78
            $region77: #{convnet_forward.5} parent=62 // pred_region
              _
            $region78: #{convnet_forward.5} parent=62 // pred_fallthru
              _
          $region63: #{convnet_forward.5} parent=58 // pred_fallthru
            _
          %6406 = vnop
        $region59: #{convnet_forward.5} parent=50 // pred_fallthru
          _
      $region51: #{convnet_forward.5} parent=5 // pred_fallthru
        _
      %p6407 = scmp.le.s32.totalorder 2, %s9
      // Predicated region
      $region79: #{convnet_forward.5} parent=5 // pred_check
        %p6408 = pneg %p6407
      $region80: #{convnet_forward.5} parent=5 // pred_check_branch
        %6410 = sbr.rel (%p6408) target = $region82
      $region81: #{convnet_forward.5} parent=5 // pred_region
        %s6411 = ssub.s32 %s9, 2
        // Predicated region
        $region83: #{convnet_forward.5} parent=81 // pred_check
          %p6412 = pneg %p106
        $region84: #{convnet_forward.5} parent=81 // pred_check_branch
          %6414 = sbr.rel (%p6412) target = $region86
        $region85: #{convnet_forward.5} parent=81 // pred_region
          %s6415 = sand.u32 %s91, 1
          %s6416 = sand.u32 %s91, 1
          %s6417 = smul.addr %s6416, 512
          %s6418 = scalar_lea.vmem [#allocation3], %s6417
        $region86: #{convnet_forward.5} parent=81 // pred_fallthru
          _
      $region82: #{convnet_forward.5} parent=5 // pred_fallthru
        _
    $region6: #{convnet_forward.5} parent=1 // loop_footer
      %s13 = sadd.s32 1, %s9
    $region7: #{convnet_forward.5} parent=1 // loop_footer_branch
      %8 = sbr.rel target = $region3
    $region8: #{convnet_forward.5} parent=1 // loop_exit
      _

// kernel: convnet_forward.6
$region0: #{convnet_forward.6}
  #allocation0 [shape = 'u32[]', space=smem, size = 0x4, offset = 0x4, fixed_abs, tag = 'smem constant byte address 0x4 - core index']
  #allocation1 [shape = 'u32[144,128]{1,0:T(1,128)}', space=vmem, size = 0x12000, scoped, tag = 'internal scratch']
  %s0 = inlined_call_operand.vmem [shape: bf16[32,256], index: 0, kind: input, shape index: {}]
  %s1 = inlined_call_operand.vmem [shape: bf16[256,2048], index: 1, kind: input, shape index: {}]
  %s2 = inlined_call_operand.vmem [shape: f32[32,1], index: 2, kind: input, shape index: {}]
  %s3 = inlined_call_operand.vmem [shape: bf16[32,2048], index: 3, kind: output, shape index: {}]
  %s4 = sld [smem:[#allocation0]]
  $region87: #{convnet_forward.6} parent=0
    _
  %s6 = ssub.s32 1, %s4
  %s7 = scalar_select 0, %s6, %s4
  $region1: #{convnet_forward.6} parent=0
    #allocation2 [shape = 'u8[1048576]{0}', space=vmem, size = 0x100000, scoped, tag = 'input window, operand 1']
    #allocation3 [shape = 'u8[131072]{0}', space=vmem, size = 0x20000, scoped, tag = 'output window, operand 0']
    loop: start=0, step=1, limit=4
    $region2: #{convnet_forward.6} parent=1 // loop_pre_header
      _
    $region3: #{convnet_forward.6} parent=1 // loop_header
      %s9 = sphi 0, %s13
      %p10 = scmp.ge.s32.totalorder %s9, 4
      %s17 = sphi 0, %s17
      %s19 = sphi 0, %s17
      %s20 = sphi 0, %s19
      %s34 = sphi 0, %s20
      %s40 = sphi 0, %s42
      %s43 = sphi 0, %s40
      %s44 = sphi 0, %s43
      %s60 = sphi 0, %s44
      %s64 = sphi 0, %s64
      %s66 = sphi 0, %s64
      %s67 = sphi 0, %s66
      %s81 = sphi 0, %s67
      %s87 = sphi 0, %s89
      %s90 = sphi 0, %s87
      %s91 = sphi 0, %s90
      %s107 = sphi 0, %s91
    $region4: #{convnet_forward.6} parent=1 // loop_header_branch
      %12 = sbr.rel (%p10) target = $region8
    $region5: #{convnet_forward.6} parent=1 // loop_body
      %s14 = ssub.s32 %s9, 1
      %s15 = ssub.s32 %s9, 2
      %s16 = sadd.s32 %s9, 1
      %s18 = sadd.s32 %s17, 1
      %p21 = scmp.eq.s32.totalorder %s9, 1
      %p22 = scmp.ne.s32.totalorder %s17, %s19
      %p23 = scmp.eq.s32.totalorder %s9, 0
      %p24 = por %p22, %p23
      %p25 = scmp.ne.s32.totalorder %s17, %s19
      %p26 = scmp.eq.s32.totalorder %s14, 1
      %p27 = por %p25, %p26
      %p28 = scmp.ne.s32.totalorder %s19, %s20
      %p29 = scmp.eq.s32.totalorder %s14, 0
      %p30 = por %p28, %p29
      %p31 = scmp.ne.s32.totalorder %s19, %s20
      %p32 = scmp.eq.s32.totalorder %s15, 1
      %p33 = por %p31, %p32
      %p35 = scmp.ne.s32.totalorder %s20, %s34
      %p36 = scmp.eq.s32.totalorder %s15, 0
      %p37 = por %p35, %p36
      %s38 = ssub.s32 %s9, %s16
      %p39 = scmp.eq.s32.totalorder %s38, 0
      %s41 = sadd.s32 %s40, 1
      %s42 = scalar_select %p39, %s40, %s41
      %p45 = pneg %p39
      %p46 = scmp.eq.s32.totalorder %s9, 1
      %p47 = por %p45, %p46
      %p48 = scmp.ne.s32.totalorder %s40, %s43
      %p49 = scmp.eq.s32.totalorder %s9, 0
      %p50 = por %p48, %p49
      %p51 = scmp.ne.s32.totalorder %s40, %s43
      %p52 = scmp.eq.s32.totalorder %s14, 1
      %p53 = por %p51, %p52
      %p54 = scmp.ne.s32.totalorder %s43, %s44
      %p55 = scmp.eq.s32.totalorder %s14, 0
      %p56 = por %p54, %p55
      %p57 = scmp.ne.s32.totalorder %s43, %s44
      %p58 = scmp.eq.s32.totalorder %s15, 1
      %p59 = por %p57, %p58
      %p61 = scmp.ne.s32.totalorder %s44, %s60
      %p62 = scmp.eq.s32.totalorder %s15, 0
      %p63 = por %p61, %p62
      %s65 = sadd.s32 %s64, 1
      %p68 = scmp.eq.s32.totalorder %s9, 1
      %p69 = scmp.ne.s32.totalorder %s64, %s66
      %p70 = scmp.eq.s32.totalorder %s9, 0
      %p71 = por %p69, %p70
      %p72 = scmp.ne.s32.totalorder %s64, %s66
      %p73 = scmp.eq.s32.totalorder %s14, 1
      %p74 = por %p72, %p73
      %p75 = scmp.ne.s32.totalorder %s66, %s67
      %p76 = scmp.eq.s32.totalorder %s14, 0
      %p77 = por %p75, %p76
      %p78 = scmp.ne.s32.totalorder %s66, %s67
      %p79 = scmp.eq.s32.totalorder %s15, 1
      %p80 = por %p78, %p79
      %p82 = scmp.ne.s32.totalorder %s67, %s81
      %p83 = scmp.eq.s32.totalorder %s15, 0
      %p84 = por %p82, %p83
      %s85 = ssub.s32 %s9, %s16
      %p86 = scmp.eq.s32.totalorder %s85, 0
      %s88 = sadd.s32 %s87, 1
      %s89 = scalar_select %p86, %s87, %s88
      %p92 = pneg %p86
      %p93 = scmp.eq.s32.totalorder %s9, 1
      %p94 = por %p92, %p93
      %p95 = scmp.ne.s32.totalorder %s87, %s90
      %p96 = scmp.eq.s32.totalorder %s9, 0
      %p97 = por %p95, %p96
      %p98 = scmp.ne.s32.totalorder %s87, %s90
      %p99 = scmp.eq.s32.totalorder %s14, 1
      %p100 = por %p98, %p99
      %p101 = scmp.ne.s32.totalorder %s90, %s91
      %p102 = scmp.eq.s32.totalorder %s14, 0
      %p103 = por %p101, %p102
      %p104 = scmp.ne.s32.totalorder %s90, %s91
      %p105 = scmp.eq.s32.totalorder %s15, 1
      %p106 = por %p104, %p105
      %p108 = scmp.ne.s32.totalorder %s91, %s107
      %p109 = scmp.eq.s32.totalorder %s15, 0
      %p110 = por %p108, %p109
      %p111 = scmp.le.s32.totalorder 1, %s9
      %p112 = scmp.lt.s32.totalorder %s9, 3
      %p113 = pnand %p111, %p112
      %p114 = pneg %p113
      // Predicated region
      $region9: #{convnet_forward.6} parent=5 // pred_check
        _
      $region10: #{convnet_forward.6} parent=5 // pred_check_branch
        %116 = sbr.rel (%p113) target = $region12
      $region11: #{convnet_forward.6} parent=5 // pred_region
        %s117 = ssub.s32 %s9, 1
        // Predicated region
        $region13: #{convnet_forward.6} parent=11 // pred_check
          %p118 = pneg %p30
        $region14: #{convnet_forward.6} parent=11 // pred_check_branch
          %120 = sbr.rel (%p118) target = $region16
        $region15: #{convnet_forward.6} parent=11 // pred_region
          _
        $region16: #{convnet_forward.6} parent=11 // pred_fallthru
          _
        // Predicated region
        $region17: #{convnet_forward.6} parent=11 // pred_check
          %p121 = pneg %p77
        $region18: #{convnet_forward.6} parent=11 // pred_check_branch
          %123 = sbr.rel (%p121) target = $region20
        $region19: #{convnet_forward.6} parent=11 // pred_region
          _
        $region20: #{convnet_forward.6} parent=11 // pred_fallthru
          _
      $region12: #{convnet_forward.6} parent=5 // pred_fallthru
        _
      %p124 = scmp.lt.s32.totalorder %s9, 2
      // Predicated region
      $region21: #{convnet_forward.6} parent=5 // pred_check
        %p125 = pneg %p124
      $region22: #{convnet_forward.6} parent=5 // pred_check_branch
        %127 = sbr.rel (%p125) target = $region24
      $region23: #{convnet_forward.6} parent=5 // pred_region
        // Predicated region
        $region25: #{convnet_forward.6} parent=23 // pred_check
          %p128 = pneg %p50
        $region26: #{convnet_forward.6} parent=23 // pred_check_branch
          %130 = sbr.rel (%p128) target = $region28
        $region27: #{convnet_forward.6} parent=23 // pred_region
          %s131 = sand.u32 %s40, 1
          %s132 = sand.u32 %s40, 1
          %s133 = smul.addr %s132, 1024
          %s134 = scalar_lea.vmem [#allocation2], %s133
          %s135 = smul.u32 8, %s9
          %s136 = smul.addr %s135, 4
          %s137 = scalar_lea.vmem %s1, %s136
          // Predicated region
          $region29: #{convnet_forward.6} parent=27 // pred_check
            _
          $region30: #{convnet_forward.6} parent=27 // pred_check_branch
            %139 = sbr.rel (0) target = $region32
          $region31: #{convnet_forward.6} parent=27 // pred_region
            // Predicated region
            $region33: #{convnet_forward.6} parent=31 // pred_check
              _
            $region34: #{convnet_forward.6} parent=31 // pred_check_branch
              %141 = sbr.rel (0) target = $region36
            $region35: #{convnet_forward.6} parent=31 // pred_region
              loop: start=0, step=1, limit=1
              $region37: #{convnet_forward.6} parent=35 // loop_pre_header
                _
              $region38: #{convnet_forward.6} parent=35 // loop_header
                %s143 = sphi 0, %s147
                %p144 = scmp.ge.s32.totalorder %s143, 1
                %s148 = sphi %s137, %s137
                %s149 = sphi %s134, %s134
              $region39: #{convnet_forward.6} parent=35 // loop_header_branch
                %146 = sbr.rel (%p144) target = $region43
              $region40: #{convnet_forward.6} parent=35 // loop_body
                %v150 = vld [vmem:[%s148] sm:$0xff]
                %151 = vst [vmem:[%s149] sm:$0xff] %v150
                %v152 = vld [vmem:[%s148 + $0x8] sm:$0xff]
                %153 = vst [vmem:[%s149 + $0x8] sm:$0xff] %v152
                %v154 = vld [vmem:[%s148 + $0x10] sm:$0xff]
                %155 = vst [vmem:[%s149 + $0x10] sm:$0xff] %v154
                %v156 = vld [vmem:[%s148 + $0x18] sm:$0xff]
                %157 = vst [vmem:[%s149 + $0x18] sm:$0xff] %v156
                %v158 = vld [vmem:[%s148 + $0x40] sm:$0xff]
                %159 = vst [vmem:[%s149 + $0x20] sm:$0xff] %v158
                %v160 = vld [vmem:[%s148 + $0x48] sm:$0xff]
                %161 = vst [vmem:[%s149 + $0x28] sm:$0xff] %v160
                %v162 = vld [vmem:[%s148 + $0x50] sm:$0xff]
                %163 = vst [vmem:[%s149 + $0x30] sm:$0xff] %v162
                %v164 = vld [vmem:[%s148 + $0x58] sm:$0xff]
                %165 = vst [vmem:[%s149 + $0x38] sm:$0xff] %v164
                %v166 = vld [vmem:[%s148 + $0x80] sm:$0xff]
                %167 = vst [vmem:[%s149 + $0x40] sm:$0xff] %v166
                %v168 = vld [vmem:[%s148 + $0x88] sm:$0xff]
                %169 = vst [vmem:[%s149 + $0x48] sm:$0xff] %v168
                %v170 = vld [vmem:[%s148 + $0x90] sm:$0xff]
                %171 = vst [vmem:[%s149 + $0x50] sm:$0xff] %v170
                %v172 = vld [vmem:[%s148 + $0x98] sm:$0xff]
                %173 = vst [vmem:[%s149 + $0x58] sm:$0xff] %v172
                %v174 = vld [vmem:[%s148 + $0xc0] sm:$0xff]
                %175 = vst [vmem:[%s149 + $0x60] sm:$0xff] %v174
                %v176 = vld [vmem:[%s148 + $0xc8] sm:$0xff]
                %177 = vst [vmem:[%s149 + $0x68] sm:$0xff] %v176
                %v178 = vld [vmem:[%s148 + $0xd0] sm:$0xff]
                %179 = vst [vmem:[%s149 + $0x70] sm:$0xff] %v178
                %v180 = vld [vmem:[%s148 + $0xd8] sm:$0xff]
                %181 = vst [vmem:[%s149 + $0x78] sm:$0xff] %v180
                %v182 = vld [vmem:[%s148 + $0x100] sm:$0xff]
                %183 = vst [vmem:[%s149 + $0x80] sm:$0xff] %v182
                %v184 = vld [vmem:[%s148 + $0x108] sm:$0xff]
                %185 = vst [vmem:[%s149 + $0x88] sm:$0xff] %v184
                %v186 = vld [vmem:[%s148 + $0x110] sm:$0xff]
                %187 = vst [vmem:[%s149 + $0x90] sm:$0xff] %v186
                %v188 = vld [vmem:[%s148 + $0x118] sm:$0xff]
                %189 = vst [vmem:[%s149 + $0x98] sm:$0xff] %v188
                %v190 = vld [vmem:[%s148 + $0x140] sm:$0xff]
                %191 = vst [vmem:[%s149 + $0xa0] sm:$0xff] %v190
                %v192 = vld [vmem:[%s148 + $0x148] sm:$0xff]
                %193 = vst [vmem:[%s149 + $0xa8] sm:$0xff] %v192
                %v194 = vld [vmem:[%s148 + $0x150] sm:$0xff]
                %195 = vst [vmem:[%s149 + $0xb0] sm:$0xff] %v194
                %v196 = vld [vmem:[%s148 + $0x158] sm:$0xff]
                %197 = vst [vmem:[%s149 + $0xb8] sm:$0xff] %v196
                %v198 = vld [vmem:[%s148 + $0x180] sm:$0xff]
                %199 = vst [vmem:[%s149 + $0xc0] sm:$0xff] %v198
                %v200 = vld [vmem:[%s148 + $0x188] sm:$0xff]
                %201 = vst [vmem:[%s149 + $0xc8] sm:$0xff] %v200
                %v202 = vld [vmem:[%s148 + $0x190] sm:$0xff]
                %203 = vst [vmem:[%s149 + $0xd0] sm:$0xff] %v202
                %v204 = vld [vmem:[%s148 + $0x198] sm:$0xff]
                %205 = vst [vmem:[%s149 + $0xd8] sm:$0xff] %v204
                %v206 = vld [vmem:[%s148 + $0x1c0] sm:$0xff]
                %207 = vst [vmem:[%s149 + $0xe0] sm:$0xff] %v206
                %v208 = vld [vmem:[%s148 + $0x1c8] sm:$0xff]
                %209 = vst [vmem:[%s149 + $0xe8] sm:$0xff] %v208
                %v210 = vld [vmem:[%s148 + $0x1d0] sm:$0xff]
                %211 = vst [vmem:[%s149 + $0xf0] sm:$0xff] %v210
                %v212 = vld [vmem:[%s148 + $0x1d8] sm:$0xff]
                %213 = vst [vmem:[%s149 + $0xf8] sm:$0xff] %v212
                %v214 = vld [vmem:[%s148 + $0x200] sm:$0xff]
                %215 = vst [vmem:[%s149 + $0x100] sm:$0xff] %v214
                %v216 = vld [vmem:[%s148 + $0x208] sm:$0xff]
                %217 = vst [vmem:[%s149 + $0x108] sm:$0xff] %v216
                %v218 = vld [vmem:[%s148 + $0x210] sm:$0xff]
                %219 = vst [vmem:[%s149 + $0x110] sm:$0xff] %v218
                %v220 = vld [vmem:[%s148 + $0x218] sm:$0xff]
                %221 = vst [vmem:[%s149 + $0x118] sm:$0xff] %v220
                %v222 = vld [vmem:[%s148 + $0x240] sm:$0xff]
                %223 = vst [vmem:[%s149 + $0x120] sm:$0xff] %v222
                %v224 = vld [vmem:[%s148 + $0x248] sm:$0xff]
                %225 = vst [vmem:[%s149 + $0x128] sm:$0xff] %v224
                %v226 = vld [vmem:[%s148 + $0x250] sm:$0xff]
                %227 = vst [vmem:[%s149 + $0x130] sm:$0xff] %v226
                %v228 = vld [vmem:[%s148 + $0x258] sm:$0xff]
                %229 = vst [vmem:[%s149 + $0x138] sm:$0xff] %v228
                %v230 = vld [vmem:[%s148 + $0x280] sm:$0xff]
                %231 = vst [vmem:[%s149 + $0x140] sm:$0xff] %v230
                %v232 = vld [vmem:[%s148 + $0x288] sm:$0xff]
                %233 = vst [vmem:[%s149 + $0x148] sm:$0xff] %v232
                %v234 = vld [vmem:[%s148 + $0x290] sm:$0xff]
                %235 = vst [vmem:[%s149 + $0x150] sm:$0xff] %v234
                %v236 = vld [vmem:[%s148 + $0x298] sm:$0xff]
                %237 = vst [vmem:[%s149 + $0x158] sm:$0xff] %v236
                %v238 = vld [vmem:[%s148 + $0x2c0] sm:$0xff]
                %239 = vst [vmem:[%s149 + $0x160] sm:$0xff] %v238
                %v240 = vld [vmem:[%s148 + $0x2c8] sm:$0xff]
                %241 = vst [vmem:[%s149 + $0x168] sm:$0xff] %v240
                %v242 = vld [vmem:[%s148 + $0x2d0] sm:$0xff]
                %243 = vst [vmem:[%s149 + $0x170] sm:$0xff] %v242
                %v244 = vld [vmem:[%s148 + $0x2d8] sm:$0xff]
                %245 = vst [vmem:[%s149 + $0x178] sm:$0xff] %v244
                %v246 = vld [vmem:[%s148 + $0x300] sm:$0xff]
                %247 = vst [vmem:[%s149 + $0x180] sm:$0xff] %v246
                %v248 = vld [vmem:[%s148 + $0x308] sm:$0xff]
                %249 = vst [vmem:[%s149 + $0x188] sm:$0xff] %v248
                %v250 = vld [vmem:[%s148 + $0x310] sm:$0xff]
                %251 = vst [vmem:[%s149 + $0x190] sm:$0xff] %v250
                %v252 = vld [vmem:[%s148 + $0x318] sm:$0xff]
                %253 = vst [vmem:[%s149 + $0x198] sm:$0xff] %v252
                %v254 = vld [vmem:[%s148 + $0x340] sm:$0xff]
                %255 = vst [vmem:[%s149 + $0x1a0] sm:$0xff] %v254
                %v256 = vld [vmem:[%s148 + $0x348] sm:$0xff]
                %257 = vst [vmem:[%s149 + $0x1a8] sm:$0xff] %v256
                %v258 = vld [vmem:[%s148 + $0x350] sm:$0xff]
                %259 = vst [vmem:[%s149 + $0x1b0] sm:$0xff] %v258
                %v260 = vld [vmem:[%s148 + $0x358] sm:$0xff]
                %261 = vst [vmem:[%s149 + $0x1b8] sm:$0xff] %v260
                %v262 = vld [vmem:[%s148 + $0x380] sm:$0xff]
                %263 = vst [vmem:[%s149 + $0x1c0] sm:$0xff] %v262
                %v264 = vld [vmem:[%s148 + $0x388] sm:$0xff]
                %265 = vst [vmem:[%s149 + $0x1c8] sm:$0xff] %v264
                %v266 = vld [vmem:[%s148 + $0x390] sm:$0xff]
                %267 = vst [vmem:[%s149 + $0x1d0] sm:$0xff] %v266
                %v268 = vld [vmem:[%s148 + $0x398] sm:$0xff]
                %269 = vst [vmem:[%s149 + $0x1d8] sm:$0xff] %v268
                %v270 = vld [vmem:[%s148 + $0x3c0] sm:$0xff]
                %271 = vst [vmem:[%s149 + $0x1e0] sm:$0xff] %v270
                %v272 = vld [vmem:[%s148 + $0x3c8] sm:$0xff]
                %273 = vst [vmem:[%s149 + $0x1e8] sm:$0xff] %v272
                %v274 = vld [vmem:[%s148 + $0x3d0] sm:$0xff]
                %275 = vst [vmem:[%s149 + $0x1f0] sm:$0xff] %v274
                %v276 = vld [vmem:[%s148 + $0x3d8] sm:$0xff]
                %277 = vst [vmem:[%s149 + $0x1f8] sm:$0xff] %v276
                %v278 = vld [vmem:[%s148 + $0x400] sm:$0xff]
                %279 = vst [vmem:[%s149 + $0x200] sm:$0xff] %v278
                %v280 = vld [vmem:[%s148 + $0x408] sm:$0xff]
                %281 = vst [vmem:[%s149 + $0x208] sm:$0xff] %v280
                %v282 = vld [vmem:[%s148 + $0x410] sm:$0xff]
                %283 = vst [vmem:[%s149 + $0x210] sm:$0xff] %v282
                %v284 = vld [vmem:[%s148 + $0x418] sm:$0xff]
                %285 = vst [vmem:[%s149 + $0x218] sm:$0xff] %v284
                %v286 = vld [vmem:[%s148 + $0x440] sm:$0xff]
                %287 = vst [vmem:[%s149 + $0x220] sm:$0xff] %v286
                %v288 = vld [vmem:[%s148 + $0x448] sm:$0xff]
                %289 = vst [vmem:[%s149 + $0x228] sm:$0xff] %v288
                %v290 = vld [vmem:[%s148 + $0x450] sm:$0xff]
                %291 = vst [vmem:[%s149 + $0x230] sm:$0xff] %v290
                %v292 = vld [vmem:[%s148 + $0x458] sm:$0xff]
                %293 = vst [vmem:[%s149 + $0x238] sm:$0xff] %v292
                %v294 = vld [vmem:[%s148 + $0x480] sm:$0xff]
                %295 = vst [vmem:[%s149 + $0x240] sm:$0xff] %v294
                %v296 = vld [vmem:[%s148 + $0x488] sm:$0xff]
                %297 = vst [vmem:[%s149 + $0x248] sm:$0xff] %v296
                %v298 = vld [vmem:[%s148 + $0x490] sm:$0xff]
                %299 = vst [vmem:[%s149 + $0x250] sm:$0xff] %v298
                %v300 = vld [vmem:[%s148 + $0x498] sm:$0xff]
                %301 = vst [vmem:[%s149 + $0x258] sm:$0xff] %v300
                %v302 = vld [vmem:[%s148 + $0x4c0] sm:$0xff]
                %303 = vst [vmem:[%s149 + $0x260] sm:$0xff] %v302
                %v304 = vld [vmem:[%s148 + $0x4c8] sm:$0xff]
                %305 = vst [vmem:[%s149 + $0x268] sm:$0xff] %v304
                %v306 = vld [vmem:[%s148 + $0x4d0] sm:$0xff]
                %307 = vst [vmem:[%s149 + $0x270] sm:$0xff] %v306
                %v308 = vld [vmem:[%s148 + $0x4d8] sm:$0xff]
                %309 = vst [vmem:[%s149 + $0x278] sm:$0xff] %v308
                %v310 = vld [vmem:[%s148 + $0x500] sm:$0xff]
                %311 = vst [vmem:[%s149 + $0x280] sm:$0xff] %v310
                %v312 = vld [vmem:[%s148 + $0x508] sm:$0xff]
                %313 = vst [vmem:[%s149 + $0x288] sm:$0xff] %v312
                %v314 = vld [vmem:[%s148 + $0x510] sm:$0xff]
                %315 = vst [vmem:[%s149 + $0x290] sm:$0xff] %v314
                %v316 = vld [vmem:[%s148 + $0x518] sm:$0xff]
                %317 = vst [vmem:[%s149 + $0x298] sm:$0xff] %v316
                %v318 = vld [vmem:[%s148 + $0x540] sm:$0xff]
                %319 = vst [vmem:[%s149 + $0x2a0] sm:$0xff] %v318
                %v320 = vld [vmem:[%s148 + $0x548] sm:$0xff]
                %321 = vst [vmem:[%s149 + $0x2a8] sm:$0xff] %v320
                %v322 = vld [vmem:[%s148 + $0x550] sm:$0xff]
                %323 = vst [vmem:[%s149 + $0x2b0] sm:$0xff] %v322
                %v324 = vld [vmem:[%s148 + $0x558] sm:$0xff]
                %325 = vst [vmem:[%s149 + $0x2b8] sm:$0xff] %v324
                %v326 = vld [vmem:[%s148 + $0x580] sm:$0xff]
                %327 = vst [vmem:[%s149 + $0x2c0] sm:$0xff] %v326
                %v328 = vld [vmem:[%s148 + $0x588] sm:$0xff]
                %329 = vst [vmem:[%s149 + $0x2c8] sm:$0xff] %v328
                %v330 = vld [vmem:[%s148 + $0x590] sm:$0xff]
                %331 = vst [vmem:[%s149 + $0x2d0] sm:$0xff] %v330
                %v332 = vld [vmem:[%s148 + $0x598] sm:$0xff]
                %333 = vst [vmem:[%s149 + $0x2d8] sm:$0xff] %v332
                %v334 = vld [vmem:[%s148 + $0x5c0] sm:$0xff]
                %335 = vst [vmem:[%s149 + $0x2e0] sm:$0xff] %v334
                %v336 = vld [vmem:[%s148 + $0x5c8] sm:$0xff]
                %337 = vst [vmem:[%s149 + $0x2e8] sm:$0xff] %v336
                %v338 = vld [vmem:[%s148 + $0x5d0] sm:$0xff]
                %339 = vst [vmem:[%s149 + $0x2f0] sm:$0xff] %v338
                %v340 = vld [vmem:[%s148 + $0x5d8] sm:$0xff]
                %341 = vst [vmem:[%s149 + $0x2f8] sm:$0xff] %v340
                %v342 = vld [vmem:[%s148 + $0x600] sm:$0xff]
                %343 = vst [vmem:[%s149 + $0x300] sm:$0xff] %v342
                %v344 = vld [vmem:[%s148 + $0x608] sm:$0xff]
                %345 = vst [vmem:[%s149 + $0x308] sm:$0xff] %v344
                %v346 = vld [vmem:[%s148 + $0x610] sm:$0xff]
                %347 = vst [vmem:[%s149 + $0x310] sm:$0xff] %v346
                %v348 = vld [vmem:[%s148 + $0x618] sm:$0xff]
                %349 = vst [vmem:[%s149 + $0x318] sm:$0xff] %v348
                %v350 = vld [vmem:[%s148 + $0x640] sm:$0xff]
                %351 = vst [vmem:[%s149 + $0x320] sm:$0xff] %v350
                %v352 = vld [vmem:[%s148 + $0x648] sm:$0xff]
                %353 = vst [vmem:[%s149 + $0x328] sm:$0xff] %v352
                %v354 = vld [vmem:[%s148 + $0x650] sm:$0xff]
                %355 = vst [vmem:[%s149 + $0x330] sm:$0xff] %v354
                %v356 = vld [vmem:[%s148 + $0x658] sm:$0xff]
                %357 = vst [vmem:[%s149 + $0x338] sm:$0xff] %v356
                %v358 = vld [vmem:[%s148 + $0x680] sm:$0xff]
                %359 = vst [vmem:[%s149 + $0x340] sm:$0xff] %v358
                %v360 = vld [vmem:[%s148 + $0x688] sm:$0xff]
                %361 = vst [vmem:[%s149 + $0x348] sm:$0xff] %v360
                %v362 = vld [vmem:[%s148 + $0x690] sm:$0xff]
                %363 = vst [vmem:[%s149 + $0x350] sm:$0xff] %v362
                %v364 = vld [vmem:[%s148 + $0x698] sm:$0xff]
                %365 = vst [vmem:[%s149 + $0x358] sm:$0xff] %v364
                %v366 = vld [vmem:[%s148 + $0x6c0] sm:$0xff]
                %367 = vst [vmem:[%s149 + $0x360] sm:$0xff] %v366
                %v368 = vld [vmem:[%s148 + $0x6c8] sm:$0xff]
                %369 = vst [vmem:[%s149 + $0x368] sm:$0xff] %v368
                %v370 = vld [vmem:[%s148 + $0x6d0] sm:$0xff]
                %371 = vst [vmem:[%s149 + $0x370] sm:$0xff] %v370
                %v372 = vld [vmem:[%s148 + $0x6d8] sm:$0xff]
                %373 = vst [vmem:[%s149 + $0x378] sm:$0xff] %v372
                %v374 = vld [vmem:[%s148 + $0x700] sm:$0xff]
                %375 = vst [vmem:[%s149 + $0x380] sm:$0xff] %v374
                %v376 = vld [vmem:[%s148 + $0x708] sm:$0xff]
                %377 = vst [vmem:[%s149 + $0x388] sm:$0xff] %v376
                %v378 = vld [vmem:[%s148 + $0x710] sm:$0xff]
                %379 = vst [vmem:[%s149 + $0x390] sm:$0xff] %v378
                %v380 = vld [vmem:[%s148 + $0x718] sm:$0xff]
                %381 = vst [vmem:[%s149 + $0x398] sm:$0xff] %v380
                %v382 = vld [vmem:[%s148 + $0x740] sm:$0xff]
                %383 = vst [vmem:[%s149 + $0x3a0] sm:$0xff] %v382
                %v384 = vld [vmem:[%s148 + $0x748] sm:$0xff]
                %385 = vst [vmem:[%s149 + $0x3a8] sm:$0xff] %v384
                %v386 = vld [vmem:[%s148 + $0x750] sm:$0xff]
                %387 = vst [vmem:[%s149 + $0x3b0] sm:$0xff] %v386
                %v388 = vld [vmem:[%s148 + $0x758] sm:$0xff]
                %389 = vst [vmem:[%s149 + $0x3b8] sm:$0xff] %v388
                %v390 = vld [vmem:[%s148 + $0x780] sm:$0xff]
                %391 = vst [vmem:[%s149 + $0x3c0] sm:$0xff] %v390
                %v392 = vld [vmem:[%s148 + $0x788] sm:$0xff]
                %393 = vst [vmem:[%s149 + $0x3c8] sm:$0xff] %v392
                %v394 = vld [vmem:[%s148 + $0x790] sm:$0xff]
                %395 = vst [vmem:[%s149 + $0x3d0] sm:$0xff] %v394
                %v396 = vld [vmem:[%s148 + $0x798] sm:$0xff]
                %397 = vst [vmem:[%s149 + $0x3d8] sm:$0xff] %v396
                %v398 = vld [vmem:[%s148 + $0x7c0] sm:$0xff]
                %399 = vst [vmem:[%s149 + $0x3e0] sm:$0xff] %v398
                %v400 = vld [vmem:[%s148 + $0x7c8] sm:$0xff]
                %401 = vst [vmem:[%s149 + $0x3e8] sm:$0xff] %v400
                %v402 = vld [vmem:[%s148 + $0x7d0] sm:$0xff]
                %403 = vst [vmem:[%s149 + $0x3f0] sm:$0xff] %v402
                %v404 = vld [vmem:[%s148 + $0x7d8] sm:$0xff]
                %405 = vst [vmem:[%s149 + $0x3f8] sm:$0xff] %v404
              $region41: #{convnet_forward.6} parent=35 // loop_footer
                %s147 = sadd.s32 1, %s143
              $region42: #{convnet_forward.6} parent=35 // loop_footer_branch
                %142 = sbr.rel target = $region38
              $region43: #{convnet_forward.6} parent=35 // loop_exit
                _
            $region36: #{convnet_forward.6} parent=31 // pred_fallthru
              _
            // Predicated region
            $region44: #{convnet_forward.6} parent=31 // pred_check
              _
            $region45: #{convnet_forward.6} parent=31 // pred_check_branch
              %407 = sbr.rel target = $region47
            $region46: #{convnet_forward.6} parent=31 // pred_region
              _
            $region47: #{convnet_forward.6} parent=31 // pred_fallthru
              _
          $region32: #{convnet_forward.6} parent=27 // pred_fallthru
            _
          %408 = vnop
        $region28: #{convnet_forward.6} parent=23 // pred_fallthru
          _
      $region24: #{convnet_forward.6} parent=5 // pred_fallthru
        _
      %p409 = scmp.le.s32.totalorder 1, %s9
      %p410 = scmp.lt.s32.totalorder %s9, 3
      %p411 = pnand %p409, %p410
      %p412 = pneg %p411
      // Predicated region
      $region48: #{convnet_forward.6} parent=5 // pred_check
        _
      $region49: #{convnet_forward.6} parent=5 // pred_check_branch
        %414 = sbr.rel (%p411) target = $region51
      $region50: #{convnet_forward.6} parent=5 // pred_region
        %s415 = ssub.s32 %s9, 1
        %s416 = sand.u32 %s43, 1
        %s417 = sand.u32 %s43, 1
        %s418 = smul.addr %s417, 1024
        %s419 = scalar_lea.vmem [#allocation2], %s418
        // Predicated region
        $region52: #{convnet_forward.6} parent=50 // pred_check
          %p420 = pneg %p56
        $region53: #{convnet_forward.6} parent=50 // pred_check_branch
          %422 = sbr.rel (%p420) target = $region55
        $region54: #{convnet_forward.6} parent=50 // pred_region
          _
        $region55: #{convnet_forward.6} parent=50 // pred_fallthru
          _
        %p423 = pneg %p30
        %p424 = pneg %p27
        %s425 = sand.u32 %s43, 1
        %s426 = sand.u32 %s43, 1
        %s427 = smul.addr %s426, 1024
        %s428 = scalar_lea.vmem [#allocation2], %s427
        %p429 = pneg %p56
        %p430 = pneg %p53
        %p431 = pneg %p77
        %p432 = pneg %p74
        %p433 = pneg %p103
        %p434 = pneg %p100
        %s435 = sand.u32 %s90, 1
        %s436 = sand.u32 %s90, 1
        %s437 = smul.addr %s436, 128
        %s438 = scalar_lea.vmem [#allocation3], %s437
        %s439 = smul.u32 8, %s14
        %s440 = smul.u32 8, %s14
        %v441 = vld [vmem:[%s0] sm:$0xff]
        %v442 = vld [vmem:[%s0 + $0x8] sm:$0xff]
        %v443 = vld [vmem:[%s0 + $0x10] sm:$0xff]
        %v444 = vld [vmem:[%s0 + $0x18] sm:$0xff]
        %v445 = vld [vmem:[%s419] sm:$0xff]
        %v446 = vld [vmem:[%s419 + $0x8] sm:$0xff]
        %v447 = vld [vmem:[%s419 + $0x10] sm:$0xff]
        %v448 = vld [vmem:[%s419 + $0x18] sm:$0xff]
        %v449 = vld [vmem:[%s419 + $0x20] sm:$0xff]
        %v450 = vld [vmem:[%s419 + $0x28] sm:$0xff]
        %v451 = vld [vmem:[%s419 + $0x30] sm:$0xff]
        %v452 = vld [vmem:[%s419 + $0x38] sm:$0xff]
        %v453 = vld [vmem:[%s419 + $0x40] sm:$0xff]
        %v454 = vld [vmem:[%s419 + $0x48] sm:$0xff]
        %v455 = vld [vmem:[%s419 + $0x50] sm:$0xff]
        %v456 = vld [vmem:[%s419 + $0x58] sm:$0xff]
        %v457 = vld [vmem:[%s419 + $0x60] sm:$0xff]
        %v458 = vld [vmem:[%s419 + $0x68] sm:$0xff]
        %v459 = vld [vmem:[%s419 + $0x70] sm:$0xff]
        %v460 = vld [vmem:[%s419 + $0x78] sm:$0xff]
        %v461 = vld [vmem:[%s419 + $0x80] sm:$0xff]
        %v462 = vld [vmem:[%s419 + $0x88] sm:$0xff]
        %v463 = vld [vmem:[%s419 + $0x90] sm:$0xff]
        %v464 = vld [vmem:[%s419 + $0x98] sm:$0xff]
        %v465 = vld [vmem:[%s419 + $0xa0] sm:$0xff]
        %v466 = vld [vmem:[%s419 + $0xa8] sm:$0xff]
        %v467 = vld [vmem:[%s419 + $0xb0] sm:$0xff]
        %v468 = vld [vmem:[%s419 + $0xb8] sm:$0xff]
        %v469 = vld [vmem:[%s419 + $0xc0] sm:$0xff]
        %v470 = vld [vmem:[%s419 + $0xc8] sm:$0xff]
        %v471 = vld [vmem:[%s419 + $0xd0] sm:$0xff]
        %v472 = vld [vmem:[%s419 + $0xd8] sm:$0xff]
        %v473 = vld [vmem:[%s419 + $0xe0] sm:$0xff]
        %v474 = vld [vmem:[%s419 + $0xe8] sm:$0xff]
        %v475 = vld [vmem:[%s419 + $0xf0] sm:$0xff]
        %v476 = vld [vmem:[%s419 + $0xf8] sm:$0xff]
        %v477 = vld [vmem:[%s419 + $0x100] sm:$0xff]
        %v478 = vld [vmem:[%s419 + $0x108] sm:$0xff]
        %v479 = vld [vmem:[%s419 + $0x110] sm:$0xff]
        %v480 = vld [vmem:[%s419 + $0x118] sm:$0xff]
        %v481 = vld [vmem:[%s419 + $0x120] sm:$0xff]
        %v482 = vld [vmem:[%s419 + $0x128] sm:$0xff]
        %v483 = vld [vmem:[%s419 + $0x130] sm:$0xff]
        %v484 = vld [vmem:[%s419 + $0x138] sm:$0xff]
        %v485 = vld [vmem:[%s419 + $0x140] sm:$0xff]
        %v486 = vld [vmem:[%s419 + $0x148] sm:$0xff]
        %v487 = vld [vmem:[%s419 + $0x150] sm:$0xff]
        %v488 = vld [vmem:[%s419 + $0x158] sm:$0xff]
        %v489 = vld [vmem:[%s419 + $0x160] sm:$0xff]
        %v490 = vld [vmem:[%s419 + $0x168] sm:$0xff]
        %v491 = vld [vmem:[%s419 + $0x170] sm:$0xff]
        %v492 = vld [vmem:[%s419 + $0x178] sm:$0xff]
        %v493 = vld [vmem:[%s419 + $0x180] sm:$0xff]
        %v494 = vld [vmem:[%s419 + $0x188] sm:$0xff]
        %v495 = vld [vmem:[%s419 + $0x190] sm:$0xff]
        %v496 = vld [vmem:[%s419 + $0x198] sm:$0xff]
        %v497 = vld [vmem:[%s419 + $0x1a0] sm:$0xff]
        %v498 = vld [vmem:[%s419 + $0x1a8] sm:$0xff]
        %v499 = vld [vmem:[%s419 + $0x1b0] sm:$0xff]
        %v500 = vld [vmem:[%s419 + $0x1b8] sm:$0xff]
        %v501 = vld [vmem:[%s419 + $0x1c0] sm:$0xff]
        %v502 = vld [vmem:[%s419 + $0x1c8] sm:$0xff]
        %v503 = vld [vmem:[%s419 + $0x1d0] sm:$0xff]
        %v504 = vld [vmem:[%s419 + $0x1d8] sm:$0xff]
        %v505 = vld [vmem:[%s419 + $0x1e0] sm:$0xff]
        %v506 = vld [vmem:[%s419 + $0x1e8] sm:$0xff]
        %v507 = vld [vmem:[%s419 + $0x1f0] sm:$0xff]
        %v508 = vld [vmem:[%s419 + $0x1f8] sm:$0xff]
        %v509 = vld [vmem:[%s419 + $0x200] sm:$0xff]
        %v510 = vld [vmem:[%s419 + $0x208] sm:$0xff]
        %v511 = vld [vmem:[%s419 + $0x210] sm:$0xff]
        %v512 = vld [vmem:[%s419 + $0x218] sm:$0xff]
        %v513 = vld [vmem:[%s419 + $0x220] sm:$0xff]
        %v514 = vld [vmem:[%s419 + $0x228] sm:$0xff]
        %v515 = vld [vmem:[%s419 + $0x230] sm:$0xff]
        %v516 = vld [vmem:[%s419 + $0x238] sm:$0xff]
        %v517 = vld [vmem:[%s419 + $0x240] sm:$0xff]
        %v518 = vld [vmem:[%s419 + $0x248] sm:$0xff]
        %v519 = vld [vmem:[%s419 + $0x250] sm:$0xff]
        %v520 = vld [vmem:[%s419 + $0x258] sm:$0xff]
        %v521 = vld [vmem:[%s419 + $0x260] sm:$0xff]
        %v522 = vld [vmem:[%s419 + $0x268] sm:$0xff]
        %v523 = vld [vmem:[%s419 + $0x270] sm:$0xff]
        %v524 = vld [vmem:[%s419 + $0x278] sm:$0xff]
        %v525 = vld [vmem:[%s419 + $0x280] sm:$0xff]
        %v526 = vld [vmem:[%s419 + $0x288] sm:$0xff]
        %v527 = vld [vmem:[%s419 + $0x290] sm:$0xff]
        %v528 = vld [vmem:[%s419 + $0x298] sm:$0xff]
        %v529 = vld [vmem:[%s419 + $0x2a0] sm:$0xff]
        %v530 = vld [vmem:[%s419 + $0x2a8] sm:$0xff]
        %v531 = vld [vmem:[%s419 + $0x2b0] sm:$0xff]
        %v532 = vld [vmem:[%s419 + $0x2b8] sm:$0xff]
        %v533 = vld [vmem:[%s419 + $0x2c0] sm:$0xff]
        %v534 = vld [vmem:[%s419 + $0x2c8] sm:$0xff]
        %v535 = vld [vmem:[%s419 + $0x2d0] sm:$0xff]
        %v536 = vld [vmem:[%s419 + $0x2d8] sm:$0xff]
        %v537 = vld [vmem:[%s419 + $0x2e0] sm:$0xff]
        %v538 = vld [vmem:[%s419 + $0x2e8] sm:$0xff]
        %v539 = vld [vmem:[%s419 + $0x2f0] sm:$0xff]
        %v540 = vld [vmem:[%s419 + $0x2f8] sm:$0xff]
        %v541 = vld [vmem:[%s419 + $0x300] sm:$0xff]
        %v542 = vld [vmem:[%s419 + $0x308] sm:$0xff]
        %v543 = vld [vmem:[%s419 + $0x310] sm:$0xff]
        %v544 = vld [vmem:[%s419 + $0x318] sm:$0xff]
        %v545 = vld [vmem:[%s419 + $0x320] sm:$0xff]
        %v546 = vld [vmem:[%s419 + $0x328] sm:$0xff]
        %v547 = vld [vmem:[%s419 + $0x330] sm:$0xff]
        %v548 = vld [vmem:[%s419 + $0x338] sm:$0xff]
        %v549 = vld [vmem:[%s419 + $0x340] sm:$0xff]
        %v550 = vld [vmem:[%s419 + $0x348] sm:$0xff]
        %v551 = vld [vmem:[%s419 + $0x350] sm:$0xff]
        %v552 = vld [vmem:[%s419 + $0x358] sm:$0xff]
        %v553 = vld [vmem:[%s419 + $0x360] sm:$0xff]
        %v554 = vld [vmem:[%s419 + $0x368] sm:$0xff]
        %v555 = vld [vmem:[%s419 + $0x370] sm:$0xff]
        %v556 = vld [vmem:[%s419 + $0x378] sm:$0xff]
        %v557 = vld [vmem:[%s419 + $0x380] sm:$0xff]
        %v558 = vld [vmem:[%s419 + $0x388] sm:$0xff]
        %v559 = vld [vmem:[%s419 + $0x390] sm:$0xff]
        %v560 = vld [vmem:[%s419 + $0x398] sm:$0xff]
        %v561 = vld [vmem:[%s419 + $0x3a0] sm:$0xff]
        %v562 = vld [vmem:[%s419 + $0x3a8] sm:$0xff]
        %v563 = vld [vmem:[%s419 + $0x3b0] sm:$0xff]
        %v564 = vld [vmem:[%s419 + $0x3b8] sm:$0xff]
        %v565 = vld [vmem:[%s419 + $0x3c0] sm:$0xff]
        %v566 = vld [vmem:[%s419 + $0x3c8] sm:$0xff]
        %v567 = vld [vmem:[%s419 + $0x3d0] sm:$0xff]
        %v568 = vld [vmem:[%s419 + $0x3d8] sm:$0xff]
        %v569 = vld [vmem:[%s419 + $0x3e0] sm:$0xff]
        %v570 = vld [vmem:[%s419 + $0x3e8] sm:$0xff]
        %v571 = vld [vmem:[%s419 + $0x3f0] sm:$0xff]
        %v572 = vld [vmem:[%s419 + $0x3f8] sm:$0xff]
        %v573 = vld [vmem:[%s2] sm:$0xff]
        %v574 = vld [vmem:[%s2 + $0x8] sm:$0xff]
        %v575 = vld [vmem:[%s2 + $0x10] sm:$0xff]
        %v576 = vld [vmem:[%s2 + $0x18] sm:$0xff]
        %578 = vset.pattern.permute.xlu0 0
        %579 = vperm.xlu0 %578, %v573
        %v580 = vpop.permute.xlu0 %579
        %583 = vset.pattern.permute.xlu0 0
        %584 = vperm.xlu0 %583, %v574
        %v585 = vpop.permute.xlu0 %584
        %588 = vset.pattern.permute.xlu0 0
        %589 = vperm.xlu0 %588, %v575
        %v590 = vpop.permute.xlu0 %589
        %593 = vset.pattern.permute.xlu0 0
        %594 = vperm.xlu0 %593, %v576
        %v595 = vpop.permute.xlu0 %594
        %v601 = vunpack.c.l.b16 %v441
        %v602 = vunpack.c.h.b16 %v441
        %v603 = vunpack.c.l.b16 %v442
        %v604 = vunpack.c.h.b16 %v442
        %v605 = vunpack.c.l.b16 %v443
        %v606 = vunpack.c.h.b16 %v443
        %v607 = vunpack.c.l.b16 %v444
        %v608 = vunpack.c.h.b16 %v444
        %v609 = vpack.c.b16 %v603, %v601
        %v610 = vpack.c.b16 %v604, %v602
        %v611 = vpack.c.b16 %v607, %v605
        %v612 = vpack.c.b16 %v608, %v606
        %v745 = vunpack.c.l.b16 %v445
        %v746 = vunpack.c.h.b16 %v445
        %v747 = vunpack.c.l.b16 %v446
        %v748 = vunpack.c.h.b16 %v446
        %v749 = vunpack.c.l.b16 %v447
        %v750 = vunpack.c.h.b16 %v447
        %v751 = vunpack.c.l.b16 %v448
        %v752 = vunpack.c.h.b16 %v448
        %v753 = vunpack.c.l.b16 %v449
        %v754 = vunpack.c.h.b16 %v449
        %v755 = vunpack.c.l.b16 %v450
        %v756 = vunpack.c.h.b16 %v450
        %v757 = vunpack.c.l.b16 %v451
        %v758 = vunpack.c.h.b16 %v451
        %v759 = vunpack.c.l.b16 %v452
        %v760 = vunpack.c.h.b16 %v452
        %v761 = vunpack.c.l.b16 %v453
        %v762 = vunpack.c.h.b16 %v453
        %v763 = vunpack.c.l.b16 %v454
        %v764 = vunpack.c.h.b16 %v454
        %v765 = vunpack.c.l.b16 %v455
        %v766 = vunpack.c.h.b16 %v455
        %v767 = vunpack.c.l.b16 %v456
        %v768 = vunpack.c.h.b16 %v456
        %v769 = vunpack.c.l.b16 %v457
        %v770 = vunpack.c.h.b16 %v457
        %v771 = vunpack.c.l.b16 %v458
        %v772 = vunpack.c.h.b16 %v458
        %v773 = vunpack.c.l.b16 %v459
        %v774 = vunpack.c.h.b16 %v459
        %v775 = vunpack.c.l.b16 %v460
        %v776 = vunpack.c.h.b16 %v460
        %v777 = vunpack.c.l.b16 %v461
        %v778 = vunpack.c.h.b16 %v461
        %v779 = vunpack.c.l.b16 %v462
        %v780 = vunpack.c.h.b16 %v462
        %v781 = vunpack.c.l.b16 %v463
        %v782 = vunpack.c.h.b16 %v463
        %v783 = vunpack.c.l.b16 %v464
        %v784 = vunpack.c.h.b16 %v464
        %v785 = vunpack.c.l.b16 %v465
        %v786 = vunpack.c.h.b16 %v465
        %v787 = vunpack.c.l.b16 %v466
        %v788 = vunpack.c.h.b16 %v466
        %v789 = vunpack.c.l.b16 %v467
        %v790 = vunpack.c.h.b16 %v467
        %v791 = vunpack.c.l.b16 %v468
        %v792 = vunpack.c.h.b16 %v468
        %v793 = vunpack.c.l.b16 %v469
        %v794 = vunpack.c.h.b16 %v469
        %v795 = vunpack.c.l.b16 %v470
        %v796 = vunpack.c.h.b16 %v470
        %v797 = vunpack.c.l.b16 %v471
        %v798 = vunpack.c.h.b16 %v471
        %v799 = vunpack.c.l.b16 %v472
        %v800 = vunpack.c.h.b16 %v472
        %v801 = vunpack.c.l.b16 %v473
        %v802 = vunpack.c.h.b16 %v473
        %v803 = vunpack.c.l.b16 %v474
        %v804 = vunpack.c.h.b16 %v474
        %v805 = vunpack.c.l.b16 %v475
        %v806 = vunpack.c.h.b16 %v475
        %v807 = vunpack.c.l.b16 %v476
        %v808 = vunpack.c.h.b16 %v476
        %v809 = vunpack.c.l.b16 %v477
        %v810 = vunpack.c.h.b16 %v477
        %v811 = vunpack.c.l.b16 %v478
        %v812 = vunpack.c.h.b16 %v478
        %v813 = vunpack.c.l.b16 %v479
        %v814 = vunpack.c.h.b16 %v479
        %v815 = vunpack.c.l.b16 %v480
        %v816 = vunpack.c.h.b16 %v480
        %v817 = vunpack.c.l.b16 %v481
        %v818 = vunpack.c.h.b16 %v481
        %v819 = vunpack.c.l.b16 %v482
        %v820 = vunpack.c.h.b16 %v482
        %v821 = vunpack.c.l.b16 %v483
        %v822 = vunpack.c.h.b16 %v483
        %v823 = vunpack.c.l.b16 %v484
        %v824 = vunpack.c.h.b16 %v484
        %v825 = vunpack.c.l.b16 %v485
        %v826 = vunpack.c.h.b16 %v485
        %v827 = vunpack.c.l.b16 %v486
        %v828 = vunpack.c.h.b16 %v486
        %v829 = vunpack.c.l.b16 %v487
        %v830 = vunpack.c.h.b16 %v487
        %v831 = vunpack.c.l.b16 %v488
        %v832 = vunpack.c.h.b16 %v488
        %v833 = vunpack.c.l.b16 %v489
        %v834 = vunpack.c.h.b16 %v489
        %v835 = vunpack.c.l.b16 %v490
        %v836 = vunpack.c.h.b16 %v490
        %v837 = vunpack.c.l.b16 %v491
        %v838 = vunpack.c.h.b16 %v491
        %v839 = vunpack.c.l.b16 %v492
        %v840 = vunpack.c.h.b16 %v492
        %v841 = vunpack.c.l.b16 %v493
        %v842 = vunpack.c.h.b16 %v493
        %v843 = vunpack.c.l.b16 %v494
        %v844 = vunpack.c.h.b16 %v494
        %v845 = vunpack.c.l.b16 %v495
        %v846 = vunpack.c.h.b16 %v495
        %v847 = vunpack.c.l.b16 %v496
        %v848 = vunpack.c.h.b16 %v496
        %v849 = vunpack.c.l.b16 %v497
        %v850 = vunpack.c.h.b16 %v497
        %v851 = vunpack.c.l.b16 %v498
        %v852 = vunpack.c.h.b16 %v498
        %v853 = vunpack.c.l.b16 %v499
        %v854 = vunpack.c.h.b16 %v499
        %v855 = vunpack.c.l.b16 %v500
        %v856 = vunpack.c.h.b16 %v500
        %v857 = vunpack.c.l.b16 %v501
        %v858 = vunpack.c.h.b16 %v501
        %v859 = vunpack.c.l.b16 %v502
        %v860 = vunpack.c.h.b16 %v502
        %v861 = vunpack.c.l.b16 %v503
        %v862 = vunpack.c.h.b16 %v503
        %v863 = vunpack.c.l.b16 %v504
        %v864 = vunpack.c.h.b16 %v504
        %v865 = vunpack.c.l.b16 %v505
        %v866 = vunpack.c.h.b16 %v505
        %v867 = vunpack.c.l.b16 %v506
        %v868 = vunpack.c.h.b16 %v506
        %v869 = vunpack.c.l.b16 %v507
        %v870 = vunpack.c.h.b16 %v507
        %v871 = vunpack.c.l.b16 %v508
        %v872 = vunpack.c.h.b16 %v508
        %v873 = vunpack.c.l.b16 %v509
        %v874 = vunpack.c.h.b16 %v509
        %v875 = vunpack.c.l.b16 %v510
        %v876 = vunpack.c.h.b16 %v510
        %v877 = vunpack.c.l.b16 %v511
        %v878 = vunpack.c.h.b16 %v511
        %v879 = vunpack.c.l.b16 %v512
        %v880 = vunpack.c.h.b16 %v512
        %v881 = vunpack.c.l.b16 %v513
        %v882 = vunpack.c.h.b16 %v513
        %v883 = vunpack.c.l.b16 %v514
        %v884 = vunpack.c.h.b16 %v514
        %v885 = vunpack.c.l.b16 %v515
        %v886 = vunpack.c.h.b16 %v515
        %v887 = vunpack.c.l.b16 %v516
        %v888 = vunpack.c.h.b16 %v516
        %v889 = vunpack.c.l.b16 %v517
        %v890 = vunpack.c.h.b16 %v517
        %v891 = vunpack.c.l.b16 %v518
        %v892 = vunpack.c.h.b16 %v518
        %v893 = vunpack.c.l.b16 %v519
        %v894 = vunpack.c.h.b16 %v519
        %v895 = vunpack.c.l.b16 %v520
        %v896 = vunpack.c.h.b16 %v520
        %v897 = vunpack.c.l.b16 %v521
        %v898 = vunpack.c.h.b16 %v521
        %v899 = vunpack.c.l.b16 %v522
        %v900 = vunpack.c.h.b16 %v522
        %v901 = vunpack.c.l.b16 %v523
        %v902 = vunpack.c.h.b16 %v523
        %v903 = vunpack.c.l.b16 %v524
        %v904 = vunpack.c.h.b16 %v524
        %v905 = vunpack.c.l.b16 %v525
        %v906 = vunpack.c.h.b16 %v525
        %v907 = vunpack.c.l.b16 %v526
        %v908 = vunpack.c.h.b16 %v526
        %v909 = vunpack.c.l.b16 %v527
        %v910 = vunpack.c.h.b16 %v527
        %v911 = vunpack.c.l.b16 %v528
        %v912 = vunpack.c.h.b16 %v528
        %v913 = vunpack.c.l.b16 %v529
        %v914 = vunpack.c.h.b16 %v529
        %v915 = vunpack.c.l.b16 %v530
        %v916 = vunpack.c.h.b16 %v530
        %v917 = vunpack.c.l.b16 %v531
        %v918 = vunpack.c.h.b16 %v531
        %v919 = vunpack.c.l.b16 %v532
        %v920 = vunpack.c.h.b16 %v532
        %v921 = vunpack.c.l.b16 %v533
        %v922 = vunpack.c.h.b16 %v533
        %v923 = vunpack.c.l.b16 %v534
        %v924 = vunpack.c.h.b16 %v534
        %v925 = vunpack.c.l.b16 %v535
        %v926 = vunpack.c.h.b16 %v535
        %v927 = vunpack.c.l.b16 %v536
        %v928 = vunpack.c.h.b16 %v536
        %v929 = vunpack.c.l.b16 %v537
        %v930 = vunpack.c.h.b16 %v537
        %v931 = vunpack.c.l.b16 %v538
        %v932 = vunpack.c.h.b16 %v538
        %v933 = vunpack.c.l.b16 %v539
        %v934 = vunpack.c.h.b16 %v539
        %v935 = vunpack.c.l.b16 %v540
        %v936 = vunpack.c.h.b16 %v540
        %v937 = vunpack.c.l.b16 %v541
        %v938 = vunpack.c.h.b16 %v541
        %v939 = vunpack.c.l.b16 %v542
        %v940 = vunpack.c.h.b16 %v542
        %v941 = vunpack.c.l.b16 %v543
        %v942 = vunpack.c.h.b16 %v543
        %v943 = vunpack.c.l.b16 %v544
        %v944 = vunpack.c.h.b16 %v544
        %v945 = vunpack.c.l.b16 %v545
        %v946 = vunpack.c.h.b16 %v545
        %v947 = vunpack.c.l.b16 %v546
        %v948 = vunpack.c.h.b16 %v546
        %v949 = vunpack.c.l.b16 %v547
        %v950 = vunpack.c.h.b16 %v547
        %v951 = vunpack.c.l.b16 %v548
        %v952 = vunpack.c.h.b16 %v548
        %v953 = vunpack.c.l.b16 %v549
        %v954 = vunpack.c.h.b16 %v549
        %v955 = vunpack.c.l.b16 %v550
        %v956 = vunpack.c.h.b16 %v550
        %v957 = vunpack.c.l.b16 %v551
        %v958 = vunpack.c.h.b16 %v551
        %v959 = vunpack.c.l.b16 %v552
        %v960 = vunpack.c.h.b16 %v552
        %v961 = vunpack.c.l.b16 %v553
        %v962 = vunpack.c.h.b16 %v553
        %v963 = vunpack.c.l.b16 %v554
        %v964 = vunpack.c.h.b16 %v554
        %v965 = vunpack.c.l.b16 %v555
        %v966 = vunpack.c.h.b16 %v555
        %v967 = vunpack.c.l.b16 %v556
        %v968 = vunpack.c.h.b16 %v556
        %v969 = vunpack.c.l.b16 %v557
        %v970 = vunpack.c.h.b16 %v557
        %v971 = vunpack.c.l.b16 %v558
        %v972 = vunpack.c.h.b16 %v558
        %v973 = vunpack.c.l.b16 %v559
        %v974 = vunpack.c.h.b16 %v559
        %v975 = vunpack.c.l.b16 %v560
        %v976 = vunpack.c.h.b16 %v560
        %v977 = vunpack.c.l.b16 %v561
        %v978 = vunpack.c.h.b16 %v561
        %v979 = vunpack.c.l.b16 %v562
        %v980 = vunpack.c.h.b16 %v562
        %v981 = vunpack.c.l.b16 %v563
        %v982 = vunpack.c.h.b16 %v563
        %v983 = vunpack.c.l.b16 %v564
        %v984 = vunpack.c.h.b16 %v564
        %v985 = vunpack.c.l.b16 %v565
        %v986 = vunpack.c.h.b16 %v565
        %v987 = vunpack.c.l.b16 %v566
        %v988 = vunpack.c.h.b16 %v566
        %v989 = vunpack.c.l.b16 %v567
        %v990 = vunpack.c.h.b16 %v567
        %v991 = vunpack.c.l.b16 %v568
        %v992 = vunpack.c.h.b16 %v568
        %v993 = vunpack.c.l.b16 %v569
        %v994 = vunpack.c.h.b16 %v569
        %v995 = vunpack.c.l.b16 %v570
        %v996 = vunpack.c.h.b16 %v570
        %v997 = vunpack.c.l.b16 %v571
        %v998 = vunpack.c.h.b16 %v571
        %v999 = vunpack.c.l.b16 %v572
        %v1000 = vunpack.c.h.b16 %v572
        %v1001 = vpack.c.b16 %v753, %v745
        %v1002 = vpack.c.b16 %v754, %v746
        %v1003 = vpack.c.b16 %v755, %v747
        %v1004 = vpack.c.b16 %v756, %v748
        %v1005 = vpack.c.b16 %v757, %v749
        %v1006 = vpack.c.b16 %v758, %v750
        %v1007 = vpack.c.b16 %v759, %v751
        %v1008 = vpack.c.b16 %v760, %v752
        %v1009 = vpack.c.b16 %v769, %v761
        %v1010 = vpack.c.b16 %v770, %v762
        %v1011 = vpack.c.b16 %v771, %v763
        %v1012 = vpack.c.b16 %v772, %v764
        %v1013 = vpack.c.b16 %v773, %v765
        %v1014 = vpack.c.b16 %v774, %v766
        %v1015 = vpack.c.b16 %v775, %v767
        %v1016 = vpack.c.b16 %v776, %v768
        %v1017 = vpack.c.b16 %v785, %v777
        %v1018 = vpack.c.b16 %v786, %v778
        %v1019 = vpack.c.b16 %v787, %v779
        %v1020 = vpack.c.b16 %v788, %v780
        %v1021 = vpack.c.b16 %v789, %v781
        %v1022 = vpack.c.b16 %v790, %v782
        %v1023 = vpack.c.b16 %v791, %v783
        %v1024 = vpack.c.b16 %v792, %v784
        %v1025 = vpack.c.b16 %v801, %v793
        %v1026 = vpack.c.b16 %v802, %v794
        %v1027 = vpack.c.b16 %v803, %v795
        %v1028 = vpack.c.b16 %v804, %v796
        %v1029 = vpack.c.b16 %v805, %v797
        %v1030 = vpack.c.b16 %v806, %v798
        %v1031 = vpack.c.b16 %v807, %v799
        %v1032 = vpack.c.b16 %v808, %v800
        %v1033 = vpack.c.b16 %v817, %v809
        %v1034 = vpack.c.b16 %v818, %v810
        %v1035 = vpack.c.b16 %v819, %v811
        %v1036 = vpack.c.b16 %v820, %v812
        %v1037 = vpack.c.b16 %v821, %v813
        %v1038 = vpack.c.b16 %v822, %v814
        %v1039 = vpack.c.b16 %v823, %v815
        %v1040 = vpack.c.b16 %v824, %v816
        %v1041 = vpack.c.b16 %v833, %v825
        %v1042 = vpack.c.b16 %v834, %v826
        %v1043 = vpack.c.b16 %v835, %v827
        %v1044 = vpack.c.b16 %v836, %v828
        %v1045 = vpack.c.b16 %v837, %v829
        %v1046 = vpack.c.b16 %v838, %v830
        %v1047 = vpack.c.b16 %v839, %v831
        %v1048 = vpack.c.b16 %v840, %v832
        %v1049 = vpack.c.b16 %v849, %v841
        %v1050 = vpack.c.b16 %v850, %v842
        %v1051 = vpack.c.b16 %v851, %v843
        %v1052 = vpack.c.b16 %v852, %v844
        %v1053 = vpack.c.b16 %v853, %v845
        %v1054 = vpack.c.b16 %v854, %v846
        %v1055 = vpack.c.b16 %v855, %v847
        %v1056 = vpack.c.b16 %v856, %v848
        %v1057 = vpack.c.b16 %v865, %v857
        %v1058 = vpack.c.b16 %v866, %v858
        %v1059 = vpack.c.b16 %v867, %v859
        %v1060 = vpack.c.b16 %v868, %v860
        %v1061 = vpack.c.b16 %v869, %v861
        %v1062 = vpack.c.b16 %v870, %v862
        %v1063 = vpack.c.b16 %v871, %v863
        %v1064 = vpack.c.b16 %v872, %v864
        %v1065 = vpack.c.b16 %v881, %v873
        %v1066 = vpack.c.b16 %v882, %v874
        %v1067 = vpack.c.b16 %v883, %v875
        %v1068 = vpack.c.b16 %v884, %v876
        %v1069 = vpack.c.b16 %v885, %v877
        %v1070 = vpack.c.b16 %v886, %v878
        %v1071 = vpack.c.b16 %v887, %v879
        %v1072 = vpack.c.b16 %v888, %v880
        %v1073 = vpack.c.b16 %v897, %v889
        %v1074 = vpack.c.b16 %v898, %v890
        %v1075 = vpack.c.b16 %v899, %v891
        %v1076 = vpack.c.b16 %v900, %v892
        %v1077 = vpack.c.b16 %v901, %v893
        %v1078 = vpack.c.b16 %v902, %v894
        %v1079 = vpack.c.b16 %v903, %v895
        %v1080 = vpack.c.b16 %v904, %v896
        %v1081 = vpack.c.b16 %v913, %v905
        %v1082 = vpack.c.b16 %v914, %v906
        %v1083 = vpack.c.b16 %v915, %v907
        %v1084 = vpack.c.b16 %v916, %v908
        %v1085 = vpack.c.b16 %v917, %v909
        %v1086 = vpack.c.b16 %v918, %v910
        %v1087 = vpack.c.b16 %v919, %v911
        %v1088 = vpack.c.b16 %v920, %v912
        %v1089 = vpack.c.b16 %v929, %v921
        %v1090 = vpack.c.b16 %v930, %v922
        %v1091 = vpack.c.b16 %v931, %v923
        %v1092 = vpack.c.b16 %v932, %v924
        %v1093 = vpack.c.b16 %v933, %v925
        %v1094 = vpack.c.b16 %v934, %v926
        %v1095 = vpack.c.b16 %v935, %v927
        %v1096 = vpack.c.b16 %v936, %v928
        %v1097 = vpack.c.b16 %v945, %v937
        %v1098 = vpack.c.b16 %v946, %v938
        %v1099 = vpack.c.b16 %v947, %v939
        %v1100 = vpack.c.b16 %v948, %v940
        %v1101 = vpack.c.b16 %v949, %v941
        %v1102 = vpack.c.b16 %v950, %v942
        %v1103 = vpack.c.b16 %v951, %v943
        %v1104 = vpack.c.b16 %v952, %v944
        %v1105 = vpack.c.b16 %v961, %v953
        %v1106 = vpack.c.b16 %v962, %v954
        %v1107 = vpack.c.b16 %v963, %v955
        %v1108 = vpack.c.b16 %v964, %v956
        %v1109 = vpack.c.b16 %v965, %v957
        %v1110 = vpack.c.b16 %v966, %v958
        %v1111 = vpack.c.b16 %v967, %v959
        %v1112 = vpack.c.b16 %v968, %v960
        %v1113 = vpack.c.b16 %v977, %v969
        %v1114 = vpack.c.b16 %v978, %v970
        %v1115 = vpack.c.b16 %v979, %v971
        %v1116 = vpack.c.b16 %v980, %v972
        %v1117 = vpack.c.b16 %v981, %v973
        %v1118 = vpack.c.b16 %v982, %v974
        %v1119 = vpack.c.b16 %v983, %v975
        %v1120 = vpack.c.b16 %v984, %v976
        %v1121 = vpack.c.b16 %v993, %v985
        %v1122 = vpack.c.b16 %v994, %v986
        %v1123 = vpack.c.b16 %v995, %v987
        %v1124 = vpack.c.b16 %v996, %v988
        %v1125 = vpack.c.b16 %v997, %v989
        %v1126 = vpack.c.b16 %v998, %v990
        %v1127 = vpack.c.b16 %v999, %v991
        %v1128 = vpack.c.b16 %v1000, %v992
        %1257 = vmatprep.subr.bf16.mxu0 %v1002
        %1258 = vmatpush1.bf16.msra.mxu0 %v1001
        %1259 = vmatprep.subr.bf16.mxu0 %v1010
        %1260 = vmatpush1.bf16.msra.mxu0 %v1009
        %1261 = vmatprep.subr.bf16.mxu0 %v1018
        %1262 = vmatpush1.bf16.msra.mxu0 %v1017
        %1263 = vmatprep.subr.bf16.mxu0 %v1026
        %1264 = vmatpush1.bf16.msra.mxu0 %v1025
        %1265 = vmatprep.subr.bf16.mxu0 %v1034
        %1266 = vmatpush1.bf16.msra.mxu0 %v1033
        %1267 = vmatprep.subr.bf16.mxu0 %v1042
        %1268 = vmatpush1.bf16.msra.mxu0 %v1041
        %1269 = vmatprep.subr.bf16.mxu0 %v1050
        %1270 = vmatpush1.bf16.msra.mxu0 %v1049
        %1271 = vmatprep.subr.bf16.mxu0 %v1058
        %1272 = vmatpush1.bf16.msra.mxu0 %v1057
        %1273 = vmatprep.subr.bf16.mxu0 %v1066
        %1274 = vmatpush1.bf16.msra.mxu0 %v1065
        %1275 = vmatprep.subr.bf16.mxu0 %v1074
        %1276 = vmatpush1.bf16.msra.mxu0 %v1073
        %1277 = vmatprep.subr.bf16.mxu0 %v1082
        %1278 = vmatpush1.bf16.msra.mxu0 %v1081
        %1279 = vmatprep.subr.bf16.mxu0 %v1090
        %1280 = vmatpush1.bf16.msra.mxu0 %v1089
        %1281 = vmatprep.subr.bf16.mxu0 %v1098
        %1282 = vmatpush1.bf16.msra.mxu0 %v1097
        %1283 = vmatprep.subr.bf16.mxu0 %v1106
        %1284 = vmatpush1.bf16.msra.mxu0 %v1105
        %1285 = vmatprep.subr.bf16.mxu0 %v1114
        %1286 = vmatpush1.bf16.msra.mxu0 %v1113
        %1287 = vmatprep.subr.bf16.mxu0 %v1122
        %1288 = vmatpush1.bf16.msra.mxu0 %v1121
        %1289 = vmatprep.mubr.bf16.mxu0 %v610
        %1290 = vmatmul.mubr.bf16.gmra.mrb[0].mxu0 %v609
        %v1291 = vpop.f32.mrb[0].mxu0
        %v1292 = vadd.f32 %v580, %v1291
        %v1293 = vpop.f32.mrb[0].mxu0
        %v1294 = vadd.f32 %v580, %v1293
        %v1295 = vpop.f32.mrb[0].mxu0
        %v1296 = vadd.f32 %v585, %v1295
        %v1297 = vpop.f32.mrb[0].mxu0
        %v1298 = vadd.f32 %v585, %v1297
        %1299 = vmatprep.mubr.bf16.mxu0 %v612
        %1300 = vmatmul.mubr.bf16.gmra.mrb[0].mxu0 %v611
        %v1301 = vpop.f32.mrb[0].mxu0
        %v1302 = vadd.f32 %v590, %v1301
        %v1303 = vpop.f32.mrb[0].mxu0
        %v1304 = vadd.f32 %v590, %v1303
        %v1305 = vpop.f32.mrb[0].mxu0
        %v1306 = vadd.f32 %v595, %v1305
        %v1307 = vpop.f32.mrb[0].mxu0
        %v1308 = vadd.f32 %v595, %v1307
        %1309 = vdwg.mxu0
        %1310 = vmatprep.subr.bf16.mxu0 %v1004
        %1311 = vmatpush1.bf16.msra.mxu0 %v1003
        %1312 = vmatprep.subr.bf16.mxu0 %v1012
        %1313 = vmatpush1.bf16.msra.mxu0 %v1011
        %1314 = vmatprep.subr.bf16.mxu0 %v1020
        %1315 = vmatpush1.bf16.msra.mxu0 %v1019
        %1316 = vmatprep.subr.bf16.mxu0 %v1028
        %1317 = vmatpush1.bf16.msra.mxu0 %v1027
        %1318 = vmatprep.subr.bf16.mxu0 %v1036
        %1319 = vmatpush1.bf16.msra.mxu0 %v1035
        %1320 = vmatprep.subr.bf16.mxu0 %v1044
        %1321 = vmatpush1.bf16.msra.mxu0 %v1043
        %1322 = vmatprep.subr.bf16.mxu0 %v1052
        %1323 = vmatpush1.bf16.msra.mxu0 %v1051
        %1324 = vmatprep.subr.bf16.mxu0 %v1060
        %1325 = vmatpush1.bf16.msra.mxu0 %v1059
        %1326 = vmatprep.subr.bf16.mxu0 %v1068
        %1327 = vmatpush1.bf16.msra.mxu0 %v1067
        %1328 = vmatprep.subr.bf16.mxu0 %v1076
        %1329 = vmatpush1.bf16.msra.mxu0 %v1075
        %1330 = vmatprep.subr.bf16.mxu0 %v1084
        %1331 = vmatpush1.bf16.msra.mxu0 %v1083
        %1332 = vmatprep.subr.bf16.mxu0 %v1092
        %1333 = vmatpush1.bf16.msra.mxu0 %v1091
        %1334 = vmatprep.subr.bf16.mxu0 %v1100
        %1335 = vmatpush1.bf16.msra.mxu0 %v1099
        %1336 = vmatprep.subr.bf16.mxu0 %v1108
        %1337 = vmatpush1.bf16.msra.mxu0 %v1107
        %1338 = vmatprep.subr.bf16.mxu0 %v1116
        %1339 = vmatpush1.bf16.msra.mxu0 %v1115
        %1340 = vmatprep.subr.bf16.mxu0 %v1124
        %1341 = vmatpush1.bf16.msra.mxu0 %v1123
        %1342 = vmatprep.mubr.bf16.mxu0 %v610
        %1343 = vmatmul.mubr.bf16.gmra.mrb[0].mxu0 %v609
        %v1344 = vpop.f32.mrb[0].mxu0
        %v1345 = vadd.f32 %v580, %v1344
        %v1346 = vpop.f32.mrb[0].mxu0
        %v1347 = vadd.f32 %v580, %v1346
        %v1348 = vpop.f32.mrb[0].mxu0
        %v1349 = vadd.f32 %v585, %v1348
        %v1350 = vpop.f32.mrb[0].mxu0
        %v1351 = vadd.f32 %v585, %v1350
        %1352 = vmatprep.mubr.bf16.mxu0 %v612
        %1353 = vmatmul.mubr.bf16.gmra.mrb[0].mxu0 %v611
        %v1354 = vpop.f32.mrb[0].mxu0
        %v1355 = vadd.f32 %v590, %v1354
        %v1356 = vpop.f32.mrb[0].mxu0
        %v1357 = vadd.f32 %v590, %v1356
        %v1358 = vpop.f32.mrb[0].mxu0
        %v1359 = vadd.f32 %v595, %v1358
        %v1360 = vpop.f32.mrb[0].mxu0
        %v1361 = vadd.f32 %v595, %v1360
        %1362 = vdwg.mxu0
        %1363 = vmatprep.subr.bf16.mxu0 %v1006
        %1364 = vmatpush1.bf16.msra.mxu0 %v1005
        %1365 = vmatprep.subr.bf16.mxu0 %v1014
        %1366 = vmatpush1.bf16.msra.mxu0 %v1013
        %1367 = vmatprep.subr.bf16.mxu0 %v1022
        %1368 = vmatpush1.bf16.msra.mxu0 %v1021
        %1369 = vmatprep.subr.bf16.mxu0 %v1030
        %1370 = vmatpush1.bf16.msra.mxu0 %v1029
        %1371 = vmatprep.subr.bf16.mxu0 %v1038
        %1372 = vmatpush1.bf16.msra.mxu0 %v1037
        %1373 = vmatprep.subr.bf16.mxu0 %v1046
        %1374 = vmatpush1.bf16.msra.mxu0 %v1045
        %1375 = vmatprep.subr.bf16.mxu0 %v1054
        %1376 = vmatpush1.bf16.msra.mxu0 %v1053
        %1377 = vmatprep.subr.bf16.mxu0 %v1062
        %1378 = vmatpush1.bf16.msra.mxu0 %v1061
        %1379 = vmatprep.subr.bf16.mxu0 %v1070
        %1380 = vmatpush1.bf16.msra.mxu0 %v1069
        %1381 = vmatprep.subr.bf16.mxu0 %v1078
        %1382 = vmatpush1.bf16.msra.mxu0 %v1077
        %1383 = vmatprep.subr.bf16.mxu0 %v1086
        %1384 = vmatpush1.bf16.msra.mxu0 %v1085
        %1385 = vmatprep.subr.bf16.mxu0 %v1094
        %1386 = vmatpush1.bf16.msra.mxu0 %v1093
        %1387 = vmatprep.subr.bf16.mxu0 %v1102
        %1388 = vmatpush1.bf16.msra.mxu0 %v1101
        %1389 = vmatprep.subr.bf16.mxu0 %v1110
        %1390 = vmatpush1.bf16.msra.mxu0 %v1109
        %1391 = vmatprep.subr.bf16.mxu0 %v1118
        %1392 = vmatpush1.bf16.msra.mxu0 %v1117
        %1393 = vmatprep.subr.bf16.mxu0 %v1126
        %1394 = vmatpush1.bf16.msra.mxu0 %v1125
        %1395 = vmatprep.mubr.bf16.mxu0 %v610
        %1396 = vmatmul.mubr.bf16.gmra.mrb[0].mxu0 %v609
        %v1397 = vpop.f32.mrb[0].mxu0
        %v1398 = vadd.f32 %v580, %v1397
        %v1399 = vpop.f32.mrb[0].mxu0
        %v1400 = vadd.f32 %v580, %v1399
        %v1401 = vpop.f32.mrb[0].mxu0
        %v1402 = vadd.f32 %v585, %v1401
        %v1403 = vpop.f32.mrb[0].mxu0
        %v1404 = vadd.f32 %v585, %v1403
        %1405 = vmatprep.mubr.bf16.mxu0 %v612
        %1406 = vmatmul.mubr.bf16.gmra.mrb[0].mxu0 %v611
        %v1407 = vpop.f32.mrb[0].mxu0
        %v1408 = vadd.f32 %v590, %v1407
        %v1409 = vpop.f32.mrb[0].mxu0
        %v1410 = vadd.f32 %v590, %v1409
        %v1411 = vpop.f32.mrb[0].mxu0
        %v1412 = vadd.f32 %v595, %v1411
        %v1413 = vpop.f32.mrb[0].mxu0
        %v1414 = vadd.f32 %v595, %v1413
        %1415 = vdwg.mxu0
        %1416 = vmatprep.subr.bf16.mxu0 %v1008
        %1417 = vmatpush1.bf16.msra.mxu0 %v1007
        %1418 = vmatprep.subr.bf16.mxu0 %v1016
        %1419 = vmatpush1.bf16.msra.mxu0 %v1015
        %1420 = vmatprep.subr.bf16.mxu0 %v1024
        %1421 = vmatpush1.bf16.msra.mxu0 %v1023
        %1422 = vmatprep.subr.bf16.mxu0 %v1032
        %1423 = vmatpush1.bf16.msra.mxu0 %v1031
        %1424 = vmatprep.subr.bf16.mxu0 %v1040
        %1425 = vmatpush1.bf16.msra.mxu0 %v1039
        %1426 = vmatprep.subr.bf16.mxu0 %v1048
        %1427 = vmatpush1.bf16.msra.mxu0 %v1047
        %1428 = vmatprep.subr.bf16.mxu0 %v1056
        %1429 = vmatpush1.bf16.msra.mxu0 %v1055
        %1430 = vmatprep.subr.bf16.mxu0 %v1064
        %1431 = vmatpush1.bf16.msra.mxu0 %v1063
        %1432 = vmatprep.subr.bf16.mxu0 %v1072
        %1433 = vmatpush1.bf16.msra.mxu0 %v1071
        %1434 = vmatprep.subr.bf16.mxu0 %v1080
        %1435 = vmatpush1.bf16.msra.mxu0 %v1079
        %1436 = vmatprep.subr.bf16.mxu0 %v1088
        %1437 = vmatpush1.bf16.msra.mxu0 %v1087
        %1438 = vmatprep.subr.bf16.mxu0 %v1096
        %1439 = vmatpush1.bf16.msra.mxu0 %v1095
        %1440 = vmatprep.subr.bf16.mxu0 %v1104
        %1441 = vmatpush1.bf16.msra.mxu0 %v1103
        %1442 = vmatprep.subr.bf16.mxu0 %v1112
        %1443 = vmatpush1.bf16.msra.mxu0 %v1111
        %1444 = vmatprep.subr.bf16.mxu0 %v1120
        %1445 = vmatpush1.bf16.msra.mxu0 %v1119
        %1446 = vmatprep.subr.bf16.mxu0 %v1128
        %1447 = vmatpush1.bf16.msra.mxu0 %v1127
        %1448 = vmatprep.mubr.bf16.mxu0 %v610
        %1449 = vmatmul.mubr.bf16.gmra.mrb[0].mxu0 %v609
        %v1450 = vpop.f32.mrb[0].mxu0
        %v1451 = vadd.f32 %v580, %v1450
        %v1452 = vpop.f32.mrb[0].mxu0
        %v1453 = vadd.f32 %v580, %v1452
        %v1454 = vpop.f32.mrb[0].mxu0
        %v1455 = vadd.f32 %v585, %v1454
        %v1456 = vpop.f32.mrb[0].mxu0
        %v1457 = vadd.f32 %v585, %v1456
        %1458 = vmatprep.mubr.bf16.mxu0 %v612
        %1459 = vmatmul.mubr.bf16.gmra.mrb[0].mxu0 %v611
        %v1460 = vpop.f32.mrb[0].mxu0
        %v1461 = vadd.f32 %v590, %v1460
        %v1462 = vpop.f32.mrb[0].mxu0
        %v1463 = vadd.f32 %v590, %v1462
        %v1464 = vpop.f32.mrb[0].mxu0
        %v1465 = vadd.f32 %v595, %v1464
        %v1466 = vpop.f32.mrb[0].mxu0
        %v1467 = vadd.f32 %v595, %v1466
        %1468 = vdwg.mxu0
        %v1469 = vmax.f32 %v1292, 0.0
        %v1470 = vmax.f32 %v1294, 0.0
        %v1471 = vmax.f32 %v1345, 0.0
        %v1472 = vmax.f32 %v1347, 0.0
        %v1473 = vmax.f32 %v1398, 0.0
        %v1474 = vmax.f32 %v1400, 0.0
        %v1475 = vmax.f32 %v1451, 0.0
        %v1476 = vmax.f32 %v1453, 0.0
        %v1477 = vmax.f32 %v1296, 0.0
        %v1478 = vmax.f32 %v1298, 0.0
        %v1479 = vmax.f32 %v1349, 0.0
        %v1480 = vmax.f32 %v1351, 0.0
        %v1481 = vmax.f32 %v1402, 0.0
        %v1482 = vmax.f32 %v1404, 0.0
        %v1483 = vmax.f32 %v1455, 0.0
        %v1484 = vmax.f32 %v1457, 0.0
        %v1485 = vmax.f32 %v1302, 0.0
        %v1486 = vmax.f32 %v1304, 0.0
        %v1487 = vmax.f32 %v1355, 0.0
        %v1488 = vmax.f32 %v1357, 0.0
        %v1489 = vmax.f32 %v1408, 0.0
        %v1490 = vmax.f32 %v1410, 0.0
        %v1491 = vmax.f32 %v1461, 0.0
        %v1492 = vmax.f32 %v1463, 0.0
        %v1493 = vmax.f32 %v1306, 0.0
        %v1494 = vmax.f32 %v1308, 0.0
        %v1495 = vmax.f32 %v1359, 0.0
        %v1496 = vmax.f32 %v1361, 0.0
        %v1497 = vmax.f32 %v1412, 0.0
        %v1498 = vmax.f32 %v1414, 0.0
        %v1499 = vmax.f32 %v1465, 0.0
        %v1500 = vmax.f32 %v1467, 0.0
        %v1501 = vpack.c.bf16 %v1477, %v1469
        %v1502 = vpack.c.bf16 %v1478, %v1470
        %v1503 = vpack.c.bf16 %v1479, %v1471
        %v1504 = vpack.c.bf16 %v1480, %v1472
        %v1505 = vpack.c.bf16 %v1481, %v1473
        %v1506 = vpack.c.bf16 %v1482, %v1474
        %v1507 = vpack.c.bf16 %v1483, %v1475
        %v1508 = vpack.c.bf16 %v1484, %v1476
        %v1509 = vpack.c.bf16 %v1493, %v1485
        %v1510 = vpack.c.bf16 %v1494, %v1486
        %v1511 = vpack.c.bf16 %v1495, %v1487
        %v1512 = vpack.c.bf16 %v1496, %v1488
        %v1513 = vpack.c.bf16 %v1497, %v1489
        %v1514 = vpack.c.bf16 %v1498, %v1490
        %v1515 = vpack.c.bf16 %v1499, %v1491
        %v1516 = vpack.c.bf16 %v1500, %v1492
        %v1533 = vunpack.c.l.b16 %v1501
        %v1534 = vunpack.c.l.b16 %v1502
        %v1535 = vunpack.c.l.b16 %v1503
        %v1536 = vunpack.c.l.b16 %v1504
        %v1537 = vunpack.c.l.b16 %v1505
        %v1538 = vunpack.c.l.b16 %v1506
        %v1539 = vunpack.c.l.b16 %v1507
        %v1540 = vunpack.c.l.b16 %v1508
        %v1541 = vunpack.c.h.b16 %v1501
        %v1542 = vunpack.c.h.b16 %v1502
        %v1543 = vunpack.c.h.b16 %v1503
        %v1544 = vunpack.c.h.b16 %v1504
        %v1545 = vunpack.c.h.b16 %v1505
        %v1546 = vunpack.c.h.b16 %v1506
        %v1547 = vunpack.c.h.b16 %v1507
        %v1548 = vunpack.c.h.b16 %v1508
        %v1549 = vunpack.c.l.b16 %v1509
        %v1550 = vunpack.c.l.b16 %v1510
        %v1551 = vunpack.c.l.b16 %v1511
        %v1552 = vunpack.c.l.b16 %v1512
        %v1553 = vunpack.c.l.b16 %v1513
        %v1554 = vunpack.c.l.b16 %v1514
        %v1555 = vunpack.c.l.b16 %v1515
        %v1556 = vunpack.c.l.b16 %v1516
        %v1557 = vunpack.c.h.b16 %v1509
        %v1558 = vunpack.c.h.b16 %v1510
        %v1559 = vunpack.c.h.b16 %v1511
        %v1560 = vunpack.c.h.b16 %v1512
        %v1561 = vunpack.c.h.b16 %v1513
        %v1562 = vunpack.c.h.b16 %v1514
        %v1563 = vunpack.c.h.b16 %v1515
        %v1564 = vunpack.c.h.b16 %v1516
        %v1565 = vpack.c.b16 %v1534, %v1533
        %v1566 = vpack.c.b16 %v1536, %v1535
        %v1567 = vpack.c.b16 %v1538, %v1537
        %v1568 = vpack.c.b16 %v1540, %v1539
        %v1569 = vpack.c.b16 %v1542, %v1541
        %v1570 = vpack.c.b16 %v1544, %v1543
        %v1571 = vpack.c.b16 %v1546, %v1545
        %v1572 = vpack.c.b16 %v1548, %v1547
        %v1573 = vpack.c.b16 %v1550, %v1549
        %v1574 = vpack.c.b16 %v1552, %v1551
        %v1575 = vpack.c.b16 %v1554, %v1553
        %v1576 = vpack.c.b16 %v1556, %v1555
        %v1577 = vpack.c.b16 %v1558, %v1557
        %v1578 = vpack.c.b16 %v1560, %v1559
        %v1579 = vpack.c.b16 %v1562, %v1561
        %v1580 = vpack.c.b16 %v1564, %v1563
        %1597 = vst [vmem:[%s438] sm:$0xff] %v1565
        %1598 = vst [vmem:[%s438 + $0x8] sm:$0xff] %v1566
        %1599 = vst [vmem:[%s438 + $0x10] sm:$0xff] %v1567
        %1600 = vst [vmem:[%s438 + $0x18] sm:$0xff] %v1568
        %1601 = vst [vmem:[%s438 + $0x20] sm:$0xff] %v1569
        %1602 = vst [vmem:[%s438 + $0x28] sm:$0xff] %v1570
        %1603 = vst [vmem:[%s438 + $0x30] sm:$0xff] %v1571
        %1604 = vst [vmem:[%s438 + $0x38] sm:$0xff] %v1572
        %1605 = vst [vmem:[%s438 + $0x40] sm:$0xff] %v1573
        %1606 = vst [vmem:[%s438 + $0x48] sm:$0xff] %v1574
        %1607 = vst [vmem:[%s438 + $0x50] sm:$0xff] %v1575
        %1608 = vst [vmem:[%s438 + $0x58] sm:$0xff] %v1576
        %1609 = vst [vmem:[%s438 + $0x60] sm:$0xff] %v1577
        %1610 = vst [vmem:[%s438 + $0x68] sm:$0xff] %v1578
        %1611 = vst [vmem:[%s438 + $0x70] sm:$0xff] %v1579
        %1612 = vst [vmem:[%s438 + $0x78] sm:$0xff] %v1580
        %s1613 = sand.u32 %s90, 1
        %s1614 = sand.u32 %s90, 1
        %s1615 = smul.addr %s1614, 128
        %s1616 = scalar_lea.vmem [#allocation3], %s1615
        // Predicated region
        $region56: #{convnet_forward.6} parent=50 // pred_check
          %p1617 = pneg %p100
        $region57: #{convnet_forward.6} parent=50 // pred_check_branch
          %1619 = sbr.rel (%p1617) target = $region59
        $region58: #{convnet_forward.6} parent=50 // pred_region
          %s1620 = smul.u32 8, %s14
          %s1621 = smul.addr %s1620, 4
          %s1622 = scalar_lea.vmem %s3, %s1621
          // Predicated region
          $region60: #{convnet_forward.6} parent=58 // pred_check
            _
          $region61: #{convnet_forward.6} parent=58 // pred_check_branch
            %1624 = sbr.rel (0) target = $region63
          $region62: #{convnet_forward.6} parent=58 // pred_region
            // Predicated region
            $region64: #{convnet_forward.6} parent=62 // pred_check
              _
            $region65: #{convnet_forward.6} parent=62 // pred_check_branch
              %1626 = sbr.rel (0) target = $region67
            $region66: #{convnet_forward.6} parent=62 // pred_region
              loop: start=0, step=1, limit=1
              $region68: #{convnet_forward.6} parent=66 // loop_pre_header
                _
              $region69: #{convnet_forward.6} parent=66 // loop_header
                %s1628 = sphi 0, %s1632
                %p1629 = scmp.ge.s32.totalorder %s1628, 1
                %s1633 = sphi %s1616, %s1616
                %s1634 = sphi %s1622, %s1622
              $region70: #{convnet_forward.6} parent=66 // loop_header_branch
                %1631 = sbr.rel (%p1629) target = $region74
              $region71: #{convnet_forward.6} parent=66 // loop_body
                %v1635 = vld [vmem:[%s1633] sm:$0xff]
                %1636 = vst [vmem:[%s1634] sm:$0xff] %v1635
                %v1637 = vld [vmem:[%s1633 + $0x8] sm:$0xff]
                %1638 = vst [vmem:[%s1634 + $0x8] sm:$0xff] %v1637
                %v1639 = vld [vmem:[%s1633 + $0x10] sm:$0xff]
                %1640 = vst [vmem:[%s1634 + $0x10] sm:$0xff] %v1639
                %v1641 = vld [vmem:[%s1633 + $0x18] sm:$0xff]
                %1642 = vst [vmem:[%s1634 + $0x18] sm:$0xff] %v1641
                %v1643 = vld [vmem:[%s1633 + $0x20] sm:$0xff]
                %1644 = vst [vmem:[%s1634 + $0x40] sm:$0xff] %v1643
                %v1645 = vld [vmem:[%s1633 + $0x28] sm:$0xff]
                %1646 = vst [vmem:[%s1634 + $0x48] sm:$0xff] %v1645
                %v1647 = vld [vmem:[%s1633 + $0x30] sm:$0xff]
                %1648 = vst [vmem:[%s1634 + $0x50] sm:$0xff] %v1647
                %v1649 = vld [vmem:[%s1633 + $0x38] sm:$0xff]
                %1650 = vst [vmem:[%s1634 + $0x58] sm:$0xff] %v1649
                %v1651 = vld [vmem:[%s1633 + $0x40] sm:$0xff]
                %1652 = vst [vmem:[%s1634 + $0x80] sm:$0xff] %v1651
                %v1653 = vld [vmem:[%s1633 + $0x48] sm:$0xff]
                %1654 = vst [vmem:[%s1634 + $0x88] sm:$0xff] %v1653
                %v1655 = vld [vmem:[%s1633 + $0x50] sm:$0xff]
                %1656 = vst [vmem:[%s1634 + $0x90] sm:$0xff] %v1655
                %v1657 = vld [vmem:[%s1633 + $0x58] sm:$0xff]
                %1658 = vst [vmem:[%s1634 + $0x98] sm:$0xff] %v1657
                %v1659 = vld [vmem:[%s1633 + $0x60] sm:$0xff]
                %1660 = vst [vmem:[%s1634 + $0xc0] sm:$0xff] %v1659
                %v1661 = vld [vmem:[%s1633 + $0x68] sm:$0xff]
                %1662 = vst [vmem:[%s1634 + $0xc8] sm:$0xff] %v1661
                %v1663 = vld [vmem:[%s1633 + $0x70] sm:$0xff]
                %1664 = vst [vmem:[%s1634 + $0xd0] sm:$0xff] %v1663
                %v1665 = vld [vmem:[%s1633 + $0x78] sm:$0xff]
                %1666 = vst [vmem:[%s1634 + $0xd8] sm:$0xff] %v1665
              $region72: #{convnet_forward.6} parent=66 // loop_footer
                %s1632 = sadd.s32 1, %s1628
              $region73: #{convnet_forward.6} parent=66 // loop_footer_branch
                %1627 = sbr.rel target = $region69
              $region74: #{convnet_forward.6} parent=66 // loop_exit
                _
            $region67: #{convnet_forward.6} parent=62 // pred_fallthru
              _
            // Predicated region
            $region75: #{convnet_forward.6} parent=62 // pred_check
              _
            $region76: #{convnet_forward.6} parent=62 // pred_check_branch
              %1668 = sbr.rel target = $region78
            $region77: #{convnet_forward.6} parent=62 // pred_region
              _
            $region78: #{convnet_forward.6} parent=62 // pred_fallthru
              _
          $region63: #{convnet_forward.6} parent=58 // pred_fallthru
            _
          %1669 = vnop
        $region59: #{convnet_forward.6} parent=50 // pred_fallthru
          _
      $region51: #{convnet_forward.6} parent=5 // pred_fallthru
        _
      %p1670 = scmp.le.s32.totalorder 2, %s9
      // Predicated region
      $region79: #{convnet_forward.6} parent=5 // pred_check
        %p1671 = pneg %p1670
      $region80: #{convnet_forward.6} parent=5 // pred_check_branch
        %1673 = sbr.rel (%p1671) target = $region82
      $region81: #{convnet_forward.6} parent=5 // pred_region
        %s1674 = ssub.s32 %s9, 2
        // Predicated region
        $region83: #{convnet_forward.6} parent=81 // pred_check
          %p1675 = pneg %p106
        $region84: #{convnet_forward.6} parent=81 // pred_check_branch
          %1677 = sbr.rel (%p1675) target = $region86
        $region85: #{convnet_forward.6} parent=81 // pred_region
          %s1678 = sand.u32 %s91, 1
          %s1679 = sand.u32 %s91, 1
          %s1680 = smul.addr %s1679, 128
          %s1681 = scalar_lea.vmem [#allocation3], %s1680
        $region86: #{convnet_forward.6} parent=81 // pred_fallthru
          _
      $region82: #{convnet_forward.6} parent=5 // pred_fallthru
        _
    $region6: #{convnet_forward.6} parent=1 // loop_footer
      %s13 = sadd.s32 1, %s9
    $region7: #{convnet_forward.6} parent=1 // loop_footer_branch
      %8 = sbr.rel target = $region3
    $region8: #{convnet_forward.6} parent=1 // loop_exit
      _

// kernel: convnet_forward.7
$region0: #{convnet_forward.7}
  #allocation0 [shape = 'u32[]', space=smem, size = 0x4, offset = 0x4, fixed_abs, tag = 'smem constant byte address 0x4 - core index']
  #allocation1 [shape = 'u32[144,128]{1,0:T(1,128)}', space=vmem, size = 0x12000, scoped, tag = 'internal scratch']
  %s0 = inlined_call_operand.vmem [shape: bf16[64,384], index: 0, kind: input, shape index: {}]
  %s1 = inlined_call_operand.vmem [shape: bf16[384,128], index: 1, kind: input, shape index: {}]
  %s2 = inlined_call_operand.vmem [shape: f32[64,1], index: 2, kind: input, shape index: {}]
  %s3 = inlined_call_operand.vmem [shape: bf16[64,128], index: 3, kind: output, shape index: {}]
  %s4 = sld [smem:[#allocation0]]
  $region22: #{convnet_forward.7} parent=0
    _
  %s6 = ssub.s32 1, %s4
  %s7 = scalar_select 0, %s6, %s4
  // Predicated region
  $region2: #{convnet_forward.7} parent=0 // pred_check
    _
  $region3: #{convnet_forward.7} parent=0 // pred_check_branch
    %9 = sbr.rel (0) target = $region5
  $region4: #{convnet_forward.7} parent=0 // pred_region
    _
  $region5: #{convnet_forward.7} parent=0 // pred_fallthru
    _
  // Predicated region
  $region6: #{convnet_forward.7} parent=0 // pred_check
    _
  $region7: #{convnet_forward.7} parent=0 // pred_check_branch
    %11 = sbr.rel (0) target = $region9
  $region8: #{convnet_forward.7} parent=0 // pred_region
    _
  $region9: #{convnet_forward.7} parent=0 // pred_fallthru
    _
  // Predicated region
  $region10: #{convnet_forward.7} parent=0 // pred_check
    _
  $region11: #{convnet_forward.7} parent=0 // pred_check_branch
    %13 = sbr.rel (0) target = $region13
  $region12: #{convnet_forward.7} parent=0 // pred_region
    _
  $region13: #{convnet_forward.7} parent=0 // pred_fallthru
    _
  %v15 = vld [vmem:[%s0] sm:$0xff]
  %v16 = vld [vmem:[%s0 + $0x8] sm:$0xf]
  %v17 = vld [vmem:[%s0 + $0xc] sm:$0xff]
  %v18 = vld [vmem:[%s0 + $0x14] sm:$0xf]
  %v19 = vld [vmem:[%s0 + $0x18] sm:$0xff]
  %v20 = vld [vmem:[%s0 + $0x20] sm:$0xf]
  %v21 = vld [vmem:[%s0 + $0x24] sm:$0xff]
  %v22 = vld [vmem:[%s0 + $0x2c] sm:$0xf]
  %v23 = vld [vmem:[%s0 + $0x30] sm:$0xff]
  %v24 = vld [vmem:[%s0 + $0x38] sm:$0xf]
  %v25 = vld [vmem:[%s0 + $0x3c] sm:$0xff]
  %v26 = vld [vmem:[%s0 + $0x44] sm:$0xf]
  %v27 = vld [vmem:[%s0 + $0x48] sm:$0xff]
  %v28 = vld [vmem:[%s0 + $0x50] sm:$0xf]
  %v29 = vld [vmem:[%s0 + $0x54] sm:$0xff]
  %v30 = vld [vmem:[%s0 + $0x5c] sm:$0xf]
  %v31 = vld [vmem:[%s1] sm:$0xf]
  %v32 = vld [vmem:[%s1 + $0x4] sm:$0xf]
  %v33 = vld [vmem:[%s1 + $0x8] sm:$0xf]
  %v34 = vld [vmem:[%s1 + $0xc] sm:$0xf]
  %v35 = vld [vmem:[%s1 + $0x10] sm:$0xf]
  %v36 = vld [vmem:[%s1 + $0x14] sm:$0xf]
  %v37 = vld [vmem:[%s1 + $0x18] sm:$0xf]
  %v38 = vld [vmem:[%s1 + $0x1c] sm:$0xf]
  %v39 = vld [vmem:[%s1 + $0x20] sm:$0xf]
  %v40 = vld [vmem:[%s1 + $0x24] sm:$0xf]
  %v41 = vld [vmem:[%s1 + $0x28] sm:$0xf]
  %v42 = vld [vmem:[%s1 + $0x2c] sm:$0xf]
  %v43 = vld [vmem:[%s1 + $0x30] sm:$0xf]
  %v44 = vld [vmem:[%s1 + $0x34] sm:$0xf]
  %v45 = vld [vmem:[%s1 + $0x38] sm:$0xf]
  %v46 = vld [vmem:[%s1 + $0x3c] sm:$0xf]
  %v47 = vld [vmem:[%s1 + $0x40] sm:$0xf]
  %v48 = vld [vmem:[%s1 + $0x44] sm:$0xf]
  %v49 = vld [vmem:[%s1 + $0x48] sm:$0xf]
  %v50 = vld [vmem:[%s1 + $0x4c] sm:$0xf]
  %v51 = vld [vmem:[%s1 + $0x50] sm:$0xf]
  %v52 = vld [vmem:[%s1 + $0x54] sm:$0xf]
  %v53 = vld [vmem:[%s1 + $0x58] sm:$0xf]
  %v54 = vld [vmem:[%s1 + $0x5c] sm:$0xf]
  %v55 = vld [vmem:[%s1 + $0x60] sm:$0xf]
  %v56 = vld [vmem:[%s1 + $0x64] sm:$0xf]
  %v57 = vld [vmem:[%s1 + $0x68] sm:$0xf]
  %v58 = vld [vmem:[%s1 + $0x6c] sm:$0xf]
  %v59 = vld [vmem:[%s1 + $0x70] sm:$0xf]
  %v60 = vld [vmem:[%s1 + $0x74] sm:$0xf]
  %v61 = vld [vmem:[%s1 + $0x78] sm:$0xf]
  %v62 = vld [vmem:[%s1 + $0x7c] sm:$0xf]
  %v63 = vld [vmem:[%s1 + $0x80] sm:$0xf]
  %v64 = vld [vmem:[%s1 + $0x84] sm:$0xf]
  %v65 = vld [vmem:[%s1 + $0x88] sm:$0xf]
  %v66 = vld [vmem:[%s1 + $0x8c] sm:$0xf]
  %v67 = vld [vmem:[%s1 + $0x90] sm:$0xf]
  %v68 = vld [vmem:[%s1 + $0x94] sm:$0xf]
  %v69 = vld [vmem:[%s1 + $0x98] sm:$0xf]
  %v70 = vld [vmem:[%s1 + $0x9c] sm:$0xf]
  %v71 = vld [vmem:[%s1 + $0xa0] sm:$0xf]
  %v72 = vld [vmem:[%s1 + $0xa4] sm:$0xf]
  %v73 = vld [vmem:[%s1 + $0xa8] sm:$0xf]
  %v74 = vld [vmem:[%s1 + $0xac] sm:$0xf]
  %v75 = vld [vmem:[%s1 + $0xb0] sm:$0xf]
  %v76 = vld [vmem:[%s1 + $0xb4] sm:$0xf]
  %v77 = vld [vmem:[%s1 + $0xb8] sm:$0xf]
  %v78 = vld [vmem:[%s1 + $0xbc] sm:$0xf]
  %v79 = vld [vmem:[%s2] sm:$0xff]
  %v80 = vld [vmem:[%s2 + $0x8] sm:$0xff]
  %v81 = vld [vmem:[%s2 + $0x10] sm:$0xff]
  %v82 = vld [vmem:[%s2 + $0x18] sm:$0xff]
  %v83 = vld [vmem:[%s2 + $0x20] sm:$0xff]
  %v84 = vld [vmem:[%s2 + $0x28] sm:$0xff]
  %v85 = vld [vmem:[%s2 + $0x30] sm:$0xff]
  %v86 = vld [vmem:[%s2 + $0x38] sm:$0xff]
  %88 = vset.pattern.permute.xlu0 0
  %89 = vperm.xlu0 %88, %v79
  %v90 = vpop.permute.xlu0 %89
  %93 = vset.pattern.permute.xlu0 0
  %94 = vperm.xlu0 %93, %v80
  %v95 = vpop.permute.xlu0 %94
  %98 = vset.pattern.permute.xlu0 0
  %99 = vperm.xlu0 %98, %v81
  %v100 = vpop.permute.xlu0 %99
  %103 = vset.pattern.permute.xlu0 0
  %104 = vperm.xlu0 %103, %v82
  %v105 = vpop.permute.xlu0 %104
  %108 = vset.pattern.permute.xlu0 0
  %109 = vperm.xlu0 %108, %v83
  %v110 = vpop.permute.xlu0 %109
  %113 = vset.pattern.permute.xlu0 0
  %114 = vperm.xlu0 %113, %v84
  %v115 = vpop.permute.xlu0 %114
  %118 = vset.pattern.permute.xlu0 0
  %119 = vperm.xlu0 %118, %v85
  %v120 = vpop.permute.xlu0 %119
  %123 = vset.pattern.permute.xlu0 0
  %124 = vperm.xlu0 %123, %v86
  %v125 = vpop.permute.xlu0 %124
  %v143 = vunpack.c.l.b16 %v15
  %v144 = vunpack.c.h.b16 %v15
  %v145 = vunpack.c.l.b16 %v16
  %v146 = vunpack.c.l.b16 %v17
  %v147 = vunpack.c.h.b16 %v17
  %v148 = vunpack.c.l.b16 %v18
  %v149 = vunpack.c.l.b16 %v19
  %v150 = vunpack.c.h.b16 %v19
  %v151 = vunpack.c.l.b16 %v20
  %v152 = vunpack.c.l.b16 %v21
  %v153 = vunpack.c.h.b16 %v21
  %v154 = vunpack.c.l.b16 %v22
  %v155 = vunpack.c.l.b16 %v23
  %v156 = vunpack.c.h.b16 %v23
  %v157 = vunpack.c.l.b16 %v24
  %v158 = vunpack.c.l.b16 %v25
  %v159 = vunpack.c.h.b16 %v25
  %v160 = vunpack.c.l.b16 %v26
  %v161 = vunpack.c.l.b16 %v27
  %v162 = vunpack.c.h.b16 %v27
  %v163 = vunpack.c.l.b16 %v28
  %v164 = vunpack.c.l.b16 %v29
  %v165 = vunpack.c.h.b16 %v29
  %v166 = vunpack.c.l.b16 %v30
  %v167 = vpack.c.b16 %v146, %v143
  %v168 = vpack.c.b16 %v147, %v144
  %v169 = vpack.c.b16 %v148, %v145
  %v170 = vpack.c.b16 %v152, %v149
  %v171 = vpack.c.b16 %v153, %v150
  %v172 = vpack.c.b16 %v154, %v151
  %v173 = vpack.c.b16 %v158, %v155
  %v174 = vpack.c.b16 %v159, %v156
  %v175 = vpack.c.b16 %v160, %v157
  %v176 = vpack.c.b16 %v164, %v161
  %v177 = vpack.c.b16 %v165, %v162
  %v178 = vpack.c.b16 %v166, %v163
  %v239 = vunpack.c.l.b16 %v31
  %v240 = vunpack.c.l.b16 %v32
  %v241 = vunpack.c.l.b16 %v33
  %v242 = vunpack.c.l.b16 %v34
  %v243 = vunpack.c.l.b16 %v35
  %v244 = vunpack.c.l.b16 %v36
  %v245 = vunpack.c.l.b16 %v37
  %v246 = vunpack.c.l.b16 %v38
  %v247 = vunpack.c.l.b16 %v39
  %v248 = vunpack.c.l.b16 %v40
  %v249 = vunpack.c.l.b16 %v41
  %v250 = vunpack.c.l.b16 %v42
  %v251 = vunpack.c.l.b16 %v43
  %v252 = vunpack.c.l.b16 %v44
  %v253 = vunpack.c.l.b16 %v45
  %v254 = vunpack.c.l.b16 %v46
  %v255 = vunpack.c.l.b16 %v47
  %v256 = vunpack.c.l.b16 %v48
  %v257 = vunpack.c.l.b16 %v49
  %v258 = vunpack.c.l.b16 %v50
  %v259 = vunpack.c.l.b16 %v51
  %v260 = vunpack.c.l.b16 %v52
  %v261 = vunpack.c.l.b16 %v53
  %v262 = vunpack.c.l.b16 %v54
  %v263 = vunpack.c.l.b16 %v55
  %v264 = vunpack.c.l.b16 %v56
  %v265 = vunpack.c.l.b16 %v57
  %v266 = vunpack.c.l.b16 %v58
  %v267 = vunpack.c.l.b16 %v59
  %v268 = vunpack.c.l.b16 %v60
  %v269 = vunpack.c.l.b16 %v61
  %v270 = vunpack.c.l.b16 %v62
  %v271 = vunpack.c.l.b16 %v63
  %v272 = vunpack.c.l.b16 %v64
  %v273 = vunpack.c.l.b16 %v65
  %v274 = vunpack.c.l.b16 %v66
  %v275 = vunpack.c.l.b16 %v67
  %v276 = vunpack.c.l.b16 %v68
  %v277 = vunpack.c.l.b16 %v69
  %v278 = vunpack.c.l.b16 %v70
  %v279 = vunpack.c.l.b16 %v71
  %v280 = vunpack.c.l.b16 %v72
  %v281 = vunpack.c.l.b16 %v73
  %v282 = vunpack.c.l.b16 %v74
  %v283 = vunpack.c.l.b16 %v75
  %v284 = vunpack.c.l.b16 %v76
  %v285 = vunpack.c.l.b16 %v77
  %v286 = vunpack.c.l.b16 %v78
  %v287 = vpack.c.b16 %v240, %v239
  %v288 = vpack.c.b16 %v242, %v241
  %v289 = vpack.c.b16 %v244, %v243
  %v290 = vpack.c.b16 %v246, %v245
  %v291 = vpack.c.b16 %v248, %v247
  %v292 = vpack.c.b16 %v250, %v249
  %v293 = vpack.c.b16 %v252, %v251
  %v294 = vpack.c.b16 %v254, %v253
  %v295 = vpack.c.b16 %v256, %v255
  %v296 = vpack.c.b16 %v258, %v257
  %v297 = vpack.c.b16 %v260, %v259
  %v298 = vpack.c.b16 %v262, %v261
  %v299 = vpack.c.b16 %v264, %v263
  %v300 = vpack.c.b16 %v266, %v265
  %v301 = vpack.c.b16 %v268, %v267
  %v302 = vpack.c.b16 %v270, %v269
  %v303 = vpack.c.b16 %v272, %v271
  %v304 = vpack.c.b16 %v274, %v273
  %v305 = vpack.c.b16 %v276, %v275
  %v306 = vpack.c.b16 %v278, %v277
  %v307 = vpack.c.b16 %v280, %v279
  %v308 = vpack.c.b16 %v282, %v281
  %v309 = vpack.c.b16 %v284, %v283
  %v310 = vpack.c.b16 %v286, %v285
  %335 = vmatprep.subr.bf16.mxu0 0
  %336 = vmatpush1.bf16.msra.mxu0 %v287
  %337 = vmatprep.subr.bf16.mxu0 0
  %338 = vmatpush1.bf16.msra.mxu0 %v288
  %339 = vmatprep.subr.bf16.mxu0 0
  %340 = vmatpush1.bf16.msra.mxu0 %v289
  %341 = vmatprep.subr.bf16.mxu0 0
  %342 = vmatpush1.bf16.msra.mxu0 %v290
  %343 = vmatprep.subr.bf16.mxu0 0
  %344 = vmatpush1.bf16.msra.mxu0 %v291
  %345 = vmatprep.subr.bf16.mxu0 0
  %346 = vmatpush1.bf16.msra.mxu0 %v292
  %347 = vmatprep.subr.bf16.mxu0 0
  %348 = vmatpush1.bf16.msra.mxu0 %v293
  %349 = vmatprep.subr.bf16.mxu0 0
  %350 = vmatpush1.bf16.msra.mxu0 %v294
  %351 = vmatprep.subr.bf16.mxu0 0
  %352 = vmatpush1.bf16.msra.mxu0 %v295
  %353 = vmatprep.subr.bf16.mxu0 0
  %354 = vmatpush1.bf16.msra.mxu0 %v296
  %355 = vmatprep.subr.bf16.mxu0 0
  %356 = vmatpush1.bf16.msra.mxu0 %v297
  %357 = vmatprep.subr.bf16.mxu0 0
  %358 = vmatpush1.bf16.msra.mxu0 %v298
  %359 = vmatprep.subr.bf16.mxu0 0
  %360 = vmatpush1.bf16.msra.mxu0 %v299
  %361 = vmatprep.subr.bf16.mxu0 0
  %362 = vmatpush1.bf16.msra.mxu0 %v300
  %363 = vmatprep.subr.bf16.mxu0 0
  %364 = vmatpush1.bf16.msra.mxu0 %v301
  %365 = vmatprep.subr.bf16.mxu0 0
  %366 = vmatpush1.bf16.msra.mxu0 %v302
  %367 = vmatprep.mubr.bf16.mxu0 %v168
  %368 = vmatmul.mubr.bf16.gmra.mrb[0].mxu0 %v167
  %v369 = vpop.f32.mrb[0].mxu0
  %v370 = vadd.f32 %v90, %v369
  %v371 = vpop.f32.mrb[0].mxu0
  %v372 = vpop.f32.mrb[0].mxu0
  %v373 = vadd.f32 %v95, %v372
  %v374 = vpop.f32.mrb[0].mxu0
  %375 = vmatprep.mubr.bf16.mxu0 %v171
  %376 = vmatmul.mubr.bf16.gmra.mrb[0].mxu0 %v170
  %v377 = vpop.f32.mrb[0].mxu0
  %v378 = vadd.f32 %v100, %v377
  %v379 = vpop.f32.mrb[0].mxu0
  %v380 = vpop.f32.mrb[0].mxu0
  %v381 = vadd.f32 %v105, %v380
  %v382 = vpop.f32.mrb[0].mxu0
  %383 = vmatprep.mubr.bf16.mxu0 %v174
  %384 = vmatmul.mubr.bf16.gmra.mrb[0].mxu0 %v173
  %v385 = vpop.f32.mrb[0].mxu0
  %v386 = vadd.f32 %v110, %v385
  %v387 = vpop.f32.mrb[0].mxu0
  %v388 = vpop.f32.mrb[0].mxu0
  %v389 = vadd.f32 %v115, %v388
  %v390 = vpop.f32.mrb[0].mxu0
  %391 = vmatprep.mubr.bf16.mxu0 %v177
  %392 = vmatmul.mubr.bf16.gmra.mrb[0].mxu0 %v176
  %v393 = vpop.f32.mrb[0].mxu0
  %v394 = vadd.f32 %v120, %v393
  %v395 = vpop.f32.mrb[0].mxu0
  %v396 = vpop.f32.mrb[0].mxu0
  %v397 = vadd.f32 %v125, %v396
  %v398 = vpop.f32.mrb[0].mxu0
  %399 = vdwg.mxu0
  %400 = vmatprep.subr.bf16.mxu0 0
  %401 = vmatpush1.bf16.msra.mxu0 %v303
  %402 = vmatprep.subr.bf16.mxu0 0
  %403 = vmatpush1.bf16.msra.mxu0 %v304
  %404 = vmatprep.subr.bf16.mxu0 0
  %405 = vmatpush1.bf16.msra.mxu0 %v305
  %406 = vmatprep.subr.bf16.mxu0 0
  %407 = vmatpush1.bf16.msra.mxu0 %v306
  %408 = vmatprep.subr.bf16.mxu0 0
  %409 = vmatpush1.bf16.msra.mxu0 %v307
  %410 = vmatprep.subr.bf16.mxu0 0
  %411 = vmatpush1.bf16.msra.mxu0 %v308
  %412 = vmatprep.subr.bf16.mxu0 0
  %413 = vmatpush1.bf16.msra.mxu0 %v309
  %414 = vmatprep.subr.bf16.mxu0 0
  %415 = vmatpush1.bf16.msra.mxu0 %v310
  %416 = vmatprep.subr.bf16.mxu0 0
  %417 = vmatpush1.bf16.msra.mxu0 0
  %418 = vmatprep.subr.bf16.mxu0 0
  %419 = vmatpush1.bf16.msra.mxu0 0
  %420 = vmatprep.subr.bf16.mxu0 0
  %421 = vmatpush1.bf16.msra.mxu0 0
  %422 = vmatprep.subr.bf16.mxu0 0
  %423 = vmatpush1.bf16.msra.mxu0 0
  %424 = vmatprep.subr.bf16.mxu0 0
  %425 = vmatpush1.bf16.msra.mxu0 0
  %426 = vmatprep.subr.bf16.mxu0 0
  %427 = vmatpush1.bf16.msra.mxu0 0
  %428 = vmatprep.subr.bf16.mxu0 0
  %429 = vmatpush1.bf16.msra.mxu0 0
  %430 = vmatprep.subr.bf16.mxu0 0
  %431 = vmatpush1.bf16.msra.mxu0 0
  %432 = vmatprep.mubr.bf16.mxu0 0
  %433 = vmatmul.mubr.bf16.gmra.mrb[0].mxu0 %v169
  %v434 = vpop.f32.mrb[0].mxu0
  %v435 = vadd.f32 %v370, %v434
  %v436 = vpop.f32.mrb[0].mxu0
  %v437 = vpop.f32.mrb[0].mxu0
  %v438 = vadd.f32 %v373, %v437
  %v439 = vpop.f32.mrb[0].mxu0
  %440 = vmatprep.mubr.bf16.mxu0 0
  %441 = vmatmul.mubr.bf16.gmra.mrb[0].mxu0 %v172
  %v442 = vpop.f32.mrb[0].mxu0
  %v443 = vadd.f32 %v378, %v442
  %v444 = vpop.f32.mrb[0].mxu0
  %v445 = vpop.f32.mrb[0].mxu0
  %v446 = vadd.f32 %v381, %v445
  %v447 = vpop.f32.mrb[0].mxu0
  %448 = vmatprep.mubr.bf16.mxu0 0
  %449 = vmatmul.mubr.bf16.gmra.mrb[0].mxu0 %v175
  %v450 = vpop.f32.mrb[0].mxu0
  %v451 = vadd.f32 %v386, %v450
  %v452 = vpop.f32.mrb[0].mxu0
  %v453 = vpop.f32.mrb[0].mxu0
  %v454 = vadd.f32 %v389, %v453
  %v455 = vpop.f32.mrb[0].mxu0
  %456 = vmatprep.mubr.bf16.mxu0 0
  %457 = vmatmul.mubr.bf16.gmra.mrb[0].mxu0 %v178
  %v458 = vpop.f32.mrb[0].mxu0
  %v459 = vadd.f32 %v394, %v458
  %v460 = vpop.f32.mrb[0].mxu0
  %v461 = vpop.f32.mrb[0].mxu0
  %v462 = vadd.f32 %v397, %v461
  %v463 = vpop.f32.mrb[0].mxu0
  %464 = vdwg.mxu0
  %v465 = vmax.f32 %v435, 0.0
  %v466 = vmax.f32 %v438, 0.0
  %v467 = vmax.f32 %v443, 0.0
  %v468 = vmax.f32 %v446, 0.0
  %v469 = vmax.f32 %v451, 0.0
  %v470 = vmax.f32 %v454, 0.0
  %v471 = vmax.f32 %v459, 0.0
  %v472 = vmax.f32 %v462, 0.0
  %v473 = vpack.c.bf16 %v466, %v465
  %v474 = vpack.c.bf16 %v468, %v467
  %v475 = vpack.c.bf16 %v470, %v469
  %v476 = vpack.c.bf16 %v472, %v471
  %v481 = vunpack.c.l.b16 %v473
  %v482 = vunpack.c.h.b16 %v473
  %v483 = vunpack.c.l.b16 %v474
  %v484 = vunpack.c.h.b16 %v474
  %v485 = vunpack.c.l.b16 %v475
  %v486 = vunpack.c.h.b16 %v475
  %v487 = vunpack.c.l.b16 %v476
  %v488 = vunpack.c.h.b16 %v476
  %v489 = vpack.c.b16 %v481, %v481
  %v490 = vpack.c.b16 %v482, %v482
  %v491 = vpack.c.b16 %v483, %v483
  %v492 = vpack.c.b16 %v484, %v484
  %v493 = vpack.c.b16 %v485, %v485
  %v494 = vpack.c.b16 %v486, %v486
  %v495 = vpack.c.b16 %v487, %v487
  %v496 = vpack.c.b16 %v488, %v488
  %505 = vst [vmem:[%s3] sm:$0xf] %v489
  %506 = vst [vmem:[%s3 + $0x4] sm:$0xf] %v490
  %507 = vst [vmem:[%s3 + $0x8] sm:$0xf] %v491
  %508 = vst [vmem:[%s3 + $0xc] sm:$0xf] %v492
  %509 = vst [vmem:[%s3 + $0x10] sm:$0xf] %v493
  %510 = vst [vmem:[%s3 + $0x14] sm:$0xf] %v494
  %511 = vst [vmem:[%s3 + $0x18] sm:$0xf] %v495
  %512 = vst [vmem:[%s3 + $0x1c] sm:$0xf] %v496
  // Predicated region
  $region14: #{convnet_forward.7} parent=0 // pred_check
    _
  $region15: #{convnet_forward.7} parent=0 // pred_check_branch
    %514 = sbr.rel (0) target = $region17
  $region16: #{convnet_forward.7} parent=0 // pred_region
    _
  $region17: #{convnet_forward.7} parent=0 // pred_fallthru
    _
  // Predicated region
  $region18: #{convnet_forward.7} parent=0 // pred_check
    _
  $region19: #{convnet_forward.7} parent=0 // pred_check_branch
    %516 = sbr.rel (0) target = $region21
  $region20: #{convnet_forward.7} parent=0 // pred_region
    _
  $region21: #{convnet_forward.7} parent=0 // pred_fallthru
    _

// kernel: convnet_forward.8
$region0: #{convnet_forward.8}
  #allocation0 [shape = 'u32[]', space=smem, size = 0x4, offset = 0x4, fixed_abs, tag = 'smem constant byte address 0x4 - core index']
  #allocation1 [shape = 'u32[144,128]{1,0:T(1,128)}', space=vmem, size = 0x12000, scoped, tag = 'internal scratch']
  %s0 = inlined_call_operand.vmem [shape: bf16[32,640], index: 0, kind: input, shape index: {}]
  %s1 = inlined_call_operand.vmem [shape: bf16[640,32], index: 1, kind: input, shape index: {}]
  %s2 = inlined_call_operand.vmem [shape: f32[32,1], index: 2, kind: input, shape index: {}]
  %s3 = inlined_call_operand.vmem [shape: bf16[32,32], index: 3, kind: output, shape index: {}]
  %s4 = sld [smem:[#allocation0]]
  $region22: #{convnet_forward.8} parent=0
    _
  %s6 = ssub.s32 1, %s4
  %s7 = scalar_select 0, %s6, %s4
  // Predicated region
  $region2: #{convnet_forward.8} parent=0 // pred_check
    _
  $region3: #{convnet_forward.8} parent=0 // pred_check_branch
    %9 = sbr.rel (0) target = $region5
  $region4: #{convnet_forward.8} parent=0 // pred_region
    _
  $region5: #{convnet_forward.8} parent=0 // pred_fallthru
    _
  // Predicated region
  $region6: #{convnet_forward.8} parent=0 // pred_check
    _
  $region7: #{convnet_forward.8} parent=0 // pred_check_branch
    %11 = sbr.rel (0) target = $region9
  $region8: #{convnet_forward.8} parent=0 // pred_region
    _
  $region9: #{convnet_forward.8} parent=0 // pred_fallthru
    _
  // Predicated region
  $region10: #{convnet_forward.8} parent=0 // pred_check
    _
  $region11: #{convnet_forward.8} parent=0 // pred_check_branch
    %13 = sbr.rel (0) target = $region13
  $region12: #{convnet_forward.8} parent=0 // pred_region
    _
  $region13: #{convnet_forward.8} parent=0 // pred_fallthru
    _
  %v15 = vld [vmem:[%s0] sm:$0xff]
  %v16 = vld [vmem:[%s0 + $0x8] sm:$0xff]
  %v17 = vld [vmem:[%s0 + $0x10] sm:$0xf]
  %v18 = vld [vmem:[%s0 + $0x14] sm:$0xff]
  %v19 = vld [vmem:[%s0 + $0x1c] sm:$0xff]
  %v20 = vld [vmem:[%s0 + $0x24] sm:$0xf]
  %v21 = vld [vmem:[%s0 + $0x28] sm:$0xff]
  %v22 = vld [vmem:[%s0 + $0x30] sm:$0xff]
  %v23 = vld [vmem:[%s0 + $0x38] sm:$0xf]
  %v24 = vld [vmem:[%s0 + $0x3c] sm:$0xff]
  %v25 = vld [vmem:[%s0 + $0x44] sm:$0xff]
  %v26 = vld [vmem:[%s0 + $0x4c] sm:$0xf]
  %v27 = vld [vmem:[%s1] sm:$0xf]
  %v28 = vld [vmem:[%s1 + $0x4] sm:$0xf]
  %v29 = vld [vmem:[%s1 + $0x8] sm:$0xf]
  %v30 = vld [vmem:[%s1 + $0xc] sm:$0xf]
  %v31 = vld [vmem:[%s1 + $0x10] sm:$0xf]
  %v32 = vld [vmem:[%s1 + $0x14] sm:$0xf]
  %v33 = vld [vmem:[%s1 + $0x18] sm:$0xf]
  %v34 = vld [vmem:[%s1 + $0x1c] sm:$0xf]
  %v35 = vld [vmem:[%s1 + $0x20] sm:$0xf]
  %v36 = vld [vmem:[%s1 + $0x24] sm:$0xf]
  %v37 = vld [vmem:[%s1 + $0x28] sm:$0xf]
  %v38 = vld [vmem:[%s1 + $0x2c] sm:$0xf]
  %v39 = vld [vmem:[%s1 + $0x30] sm:$0xf]
  %v40 = vld [vmem:[%s1 + $0x34] sm:$0xf]
  %v41 = vld [vmem:[%s1 + $0x38] sm:$0xf]
  %v42 = vld [vmem:[%s1 + $0x3c] sm:$0xf]
  %v43 = vld [vmem:[%s1 + $0x40] sm:$0xf]
  %v44 = vld [vmem:[%s1 + $0x44] sm:$0xf]
  %v45 = vld [vmem:[%s1 + $0x48] sm:$0xf]
  %v46 = vld [vmem:[%s1 + $0x4c] sm:$0xf]
  %v47 = vld [vmem:[%s1 + $0x50] sm:$0xf]
  %v48 = vld [vmem:[%s1 + $0x54] sm:$0xf]
  %v49 = vld [vmem:[%s1 + $0x58] sm:$0xf]
  %v50 = vld [vmem:[%s1 + $0x5c] sm:$0xf]
  %v51 = vld [vmem:[%s1 + $0x60] sm:$0xf]
  %v52 = vld [vmem:[%s1 + $0x64] sm:$0xf]
  %v53 = vld [vmem:[%s1 + $0x68] sm:$0xf]
  %v54 = vld [vmem:[%s1 + $0x6c] sm:$0xf]
  %v55 = vld [vmem:[%s1 + $0x70] sm:$0xf]
  %v56 = vld [vmem:[%s1 + $0x74] sm:$0xf]
  %v57 = vld [vmem:[%s1 + $0x78] sm:$0xf]
  %v58 = vld [vmem:[%s1 + $0x7c] sm:$0xf]
  %v59 = vld [vmem:[%s1 + $0x80] sm:$0xf]
  %v60 = vld [vmem:[%s1 + $0x84] sm:$0xf]
  %v61 = vld [vmem:[%s1 + $0x88] sm:$0xf]
  %v62 = vld [vmem:[%s1 + $0x8c] sm:$0xf]
  %v63 = vld [vmem:[%s1 + $0x90] sm:$0xf]
  %v64 = vld [vmem:[%s1 + $0x94] sm:$0xf]
  %v65 = vld [vmem:[%s1 + $0x98] sm:$0xf]
  %v66 = vld [vmem:[%s1 + $0x9c] sm:$0xf]
  %v67 = vld [vmem:[%s1 + $0xa0] sm:$0xf]
  %v68 = vld [vmem:[%s1 + $0xa4] sm:$0xf]
  %v69 = vld [vmem:[%s1 + $0xa8] sm:$0xf]
  %v70 = vld [vmem:[%s1 + $0xac] sm:$0xf]
  %v71 = vld [vmem:[%s1 + $0xb0] sm:$0xf]
  %v72 = vld [vmem:[%s1 + $0xb4] sm:$0xf]
  %v73 = vld [vmem:[%s1 + $0xb8] sm:$0xf]
  %v74 = vld [vmem:[%s1 + $0xbc] sm:$0xf]
  %v75 = vld [vmem:[%s1 + $0xc0] sm:$0xf]
  %v76 = vld [vmem:[%s1 + $0xc4] sm:$0xf]
  %v77 = vld [vmem:[%s1 + $0xc8] sm:$0xf]
  %v78 = vld [vmem:[%s1 + $0xcc] sm:$0xf]
  %v79 = vld [vmem:[%s1 + $0xd0] sm:$0xf]
  %v80 = vld [vmem:[%s1 + $0xd4] sm:$0xf]
  %v81 = vld [vmem:[%s1 + $0xd8] sm:$0xf]
  %v82 = vld [vmem:[%s1 + $0xdc] sm:$0xf]
  %v83 = vld [vmem:[%s1 + $0xe0] sm:$0xf]
  %v84 = vld [vmem:[%s1 + $0xe4] sm:$0xf]
  %v85 = vld [vmem:[%s1 + $0xe8] sm:$0xf]
  %v86 = vld [vmem:[%s1 + $0xec] sm:$0xf]
  %v87 = vld [vmem:[%s1 + $0xf0] sm:$0xf]
  %v88 = vld [vmem:[%s1 + $0xf4] sm:$0xf]
  %v89 = vld [vmem:[%s1 + $0xf8] sm:$0xf]
  %v90 = vld [vmem:[%s1 + $0xfc] sm:$0xf]
  %v91 = vld [vmem:[%s1 + $0x100] sm:$0xf]
  %v92 = vld [vmem:[%s1 + $0x104] sm:$0xf]
  %v93 = vld [vmem:[%s1 + $0x108] sm:$0xf]
  %v94 = vld [vmem:[%s1 + $0x10c] sm:$0xf]
  %v95 = vld [vmem:[%s1 + $0x110] sm:$0xf]
  %v96 = vld [vmem:[%s1 + $0x114] sm:$0xf]
  %v97 = vld [vmem:[%s1 + $0x118] sm:$0xf]
  %v98 = vld [vmem:[%s1 + $0x11c] sm:$0xf]
  %v99 = vld [vmem:[%s1 + $0x120] sm:$0xf]
  %v100 = vld [vmem:[%s1 + $0x124] sm:$0xf]
  %v101 = vld [vmem:[%s1 + $0x128] sm:$0xf]
  %v102 = vld [vmem:[%s1 + $0x12c] sm:$0xf]
  %v103 = vld [vmem:[%s1 + $0x130] sm:$0xf]
  %v104 = vld [vmem:[%s1 + $0x134] sm:$0xf]
  %v105 = vld [vmem:[%s1 + $0x138] sm:$0xf]
  %v106 = vld [vmem:[%s1 + $0x13c] sm:$0xf]
  %v107 = vld [vmem:[%s2] sm:$0xff]
  %v108 = vld [vmem:[%s2 + $0x8] sm:$0xff]
  %v109 = vld [vmem:[%s2 + $0x10] sm:$0xff]
  %v110 = vld [vmem:[%s2 + $0x18] sm:$0xff]
  %112 = vset.pattern.permute.xlu0 0
  %113 = vperm.xlu0 %112, %v107
  %v114 = vpop.permute.xlu0 %113
  %117 = vset.pattern.permute.xlu0 0
  %118 = vperm.xlu0 %117, %v108
  %v119 = vpop.permute.xlu0 %118
  %122 = vset.pattern.permute.xlu0 0
  %123 = vperm.xlu0 %122, %v109
  %v124 = vpop.permute.xlu0 %123
  %127 = vset.pattern.permute.xlu0 0
  %128 = vperm.xlu0 %127, %v110
  %v129 = vpop.permute.xlu0 %128
  %v143 = vunpack.c.l.b16 %v15
  %v144 = vunpack.c.h.b16 %v15
  %v145 = vunpack.c.l.b16 %v16
  %v146 = vunpack.c.h.b16 %v16
  %v147 = vunpack.c.l.b16 %v17
  %v148 = vunpack.c.l.b16 %v18
  %v149 = vunpack.c.h.b16 %v18
  %v150 = vunpack.c.l.b16 %v19
  %v151 = vunpack.c.h.b16 %v19
  %v152 = vunpack.c.l.b16 %v20
  %v153 = vunpack.c.l.b16 %v21
  %v154 = vunpack.c.h.b16 %v21
  %v155 = vunpack.c.l.b16 %v22
  %v156 = vunpack.c.h.b16 %v22
  %v157 = vunpack.c.l.b16 %v23
  %v158 = vunpack.c.l.b16 %v24
  %v159 = vunpack.c.h.b16 %v24
  %v160 = vunpack.c.l.b16 %v25
  %v161 = vunpack.c.h.b16 %v25
  %v162 = vunpack.c.l.b16 %v26
  %v163 = vpack.c.b16 %v148, %v143
  %v164 = vpack.c.b16 %v149, %v144
  %v165 = vpack.c.b16 %v150, %v145
  %v166 = vpack.c.b16 %v151, %v146
  %v167 = vpack.c.b16 %v152, %v147
  %v168 = vpack.c.b16 %v158, %v153
  %v169 = vpack.c.b16 %v159, %v154
  %v170 = vpack.c.b16 %v160, %v155
  %v171 = vpack.c.b16 %v161, %v156
  %v172 = vpack.c.b16 %v162, %v157
  %v263 = vunpack.c.l.b16 %v27
  %v264 = vunpack.c.l.b16 %v28
  %v265 = vunpack.c.l.b16 %v29
  %v266 = vunpack.c.l.b16 %v30
  %v267 = vunpack.c.l.b16 %v31
  %v268 = vunpack.c.l.b16 %v32
  %v269 = vunpack.c.l.b16 %v33
  %v270 = vunpack.c.l.b16 %v34
  %v271 = vunpack.c.l.b16 %v35
  %v272 = vunpack.c.l.b16 %v36
  %v273 = vunpack.c.l.b16 %v37
  %v274 = vunpack.c.l.b16 %v38
  %v275 = vunpack.c.l.b16 %v39
  %v276 = vunpack.c.l.b16 %v40
  %v277 = vunpack.c.l.b16 %v41
  %v278 = vunpack.c.l.b16 %v42
  %v279 = vunpack.c.l.b16 %v43
  %v280 = vunpack.c.l.b16 %v44
  %v281 = vunpack.c.l.b16 %v45
  %v282 = vunpack.c.l.b16 %v46
  %v283 = vunpack.c.l.b16 %v47
  %v284 = vunpack.c.l.b16 %v48
  %v285 = vunpack.c.l.b16 %v49
  %v286 = vunpack.c.l.b16 %v50
  %v287 = vunpack.c.l.b16 %v51
  %v288 = vunpack.c.l.b16 %v52
  %v289 = vunpack.c.l.b16 %v53
  %v290 = vunpack.c.l.b16 %v54
  %v291 = vunpack.c.l.b16 %v55
  %v292 = vunpack.c.l.b16 %v56
  %v293 = vunpack.c.l.b16 %v57
  %v294 = vunpack.c.l.b16 %v58
  %v295 = vunpack.c.l.b16 %v59
  %v296 = vunpack.c.l.b16 %v60
  %v297 = vunpack.c.l.b16 %v61
  %v298 = vunpack.c.l.b16 %v62
  %v299 = vunpack.c.l.b16 %v63
  %v300 = vunpack.c.l.b16 %v64
  %v301 = vunpack.c.l.b16 %v65
  %v302 = vunpack.c.l.b16 %v66
  %v303 = vunpack.c.l.b16 %v67
  %v304 = vunpack.c.l.b16 %v68
  %v305 = vunpack.c.l.b16 %v69
  %v306 = vunpack.c.l.b16 %v70
  %v307 = vunpack.c.l.b16 %v71
  %v308 = vunpack.c.l.b16 %v72
  %v309 = vunpack.c.l.b16 %v73
  %v310 = vunpack.c.l.b16 %v74
  %v311 = vunpack.c.l.b16 %v75
  %v312 = vunpack.c.l.b16 %v76
  %v313 = vunpack.c.l.b16 %v77
  %v314 = vunpack.c.l.b16 %v78
  %v315 = vunpack.c.l.b16 %v79
  %v316 = vunpack.c.l.b16 %v80
  %v317 = vunpack.c.l.b16 %v81
  %v318 = vunpack.c.l.b16 %v82
  %v319 = vunpack.c.l.b16 %v83
  %v320 = vunpack.c.l.b16 %v84
  %v321 = vunpack.c.l.b16 %v85
  %v322 = vunpack.c.l.b16 %v86
  %v323 = vunpack.c.l.b16 %v87
  %v324 = vunpack.c.l.b16 %v88
  %v325 = vunpack.c.l.b16 %v89
  %v326 = vunpack.c.l.b16 %v90
  %v327 = vunpack.c.l.b16 %v91
  %v328 = vunpack.c.l.b16 %v92
  %v329 = vunpack.c.l.b16 %v93
  %v330 = vunpack.c.l.b16 %v94
  %v331 = vunpack.c.l.b16 %v95
  %v332 = vunpack.c.l.b16 %v96
  %v333 = vunpack.c.l.b16 %v97
  %v334 = vunpack.c.l.b16 %v98
  %v335 = vunpack.c.l.b16 %v99
  %v336 = vunpack.c.l.b16 %v100
  %v337 = vunpack.c.l.b16 %v101
  %v338 = vunpack.c.l.b16 %v102
  %v339 = vunpack.c.l.b16 %v103
  %v340 = vunpack.c.l.b16 %v104
  %v341 = vunpack.c.l.b16 %v105
  %v342 = vunpack.c.l.b16 %v106
  %v343 = vpack.c.b16 %v264, %v263
  %v344 = vpack.c.b16 %v266, %v265
  %v345 = vpack.c.b16 %v268, %v267
  %v346 = vpack.c.b16 %v270, %v269
  %v347 = vpack.c.b16 %v272, %v271
  %v348 = vpack.c.b16 %v274, %v273
  %v349 = vpack.c.b16 %v276, %v275
  %v350 = vpack.c.b16 %v278, %v277
  %v351 = vpack.c.b16 %v280, %v279
  %v352 = vpack.c.b16 %v282, %v281
  %v353 = vpack.c.b16 %v284, %v283
  %v354 = vpack.c.b16 %v286, %v285
  %v355 = vpack.c.b16 %v288, %v287
  %v356 = vpack.c.b16 %v290, %v289
  %v357 = vpack.c.b16 %v292, %v291
  %v358 = vpack.c.b16 %v294, %v293
  %v359 = vpack.c.b16 %v296, %v295
  %v360 = vpack.c.b16 %v298, %v297
  %v361 = vpack.c.b16 %v300, %v299
  %v362 = vpack.c.b16 %v302, %v301
  %v363 = vpack.c.b16 %v304, %v303
  %v364 = vpack.c.b16 %v306, %v305
  %v365 = vpack.c.b16 %v308, %v307
  %v366 = vpack.c.b16 %v310, %v309
  %v367 = vpack.c.b16 %v312, %v311
  %v368 = vpack.c.b16 %v314, %v313
  %v369 = vpack.c.b16 %v316, %v315
  %v370 = vpack.c.b16 %v318, %v317
  %v371 = vpack.c.b16 %v320, %v319
  %v372 = vpack.c.b16 %v322, %v321
  %v373 = vpack.c.b16 %v324, %v323
  %v374 = vpack.c.b16 %v326, %v325
  %v375 = vpack.c.b16 %v328, %v327
  %v376 = vpack.c.b16 %v330, %v329
  %v377 = vpack.c.b16 %v332, %v331
  %v378 = vpack.c.b16 %v334, %v333
  %v379 = vpack.c.b16 %v336, %v335
  %v380 = vpack.c.b16 %v338, %v337
  %v381 = vpack.c.b16 %v340, %v339
  %v382 = vpack.c.b16 %v342, %v341
  %423 = vmatprep.subr.bf16.mxu0 0
  %424 = vmatpush1.bf16.msra.mxu0 %v343
  %425 = vmatprep.subr.bf16.mxu0 0
  %426 = vmatpush1.bf16.msra.mxu0 %v344
  %427 = vmatprep.subr.bf16.mxu0 0
  %428 = vmatpush1.bf16.msra.mxu0 %v345
  %429 = vmatprep.subr.bf16.mxu0 0
  %430 = vmatpush1.bf16.msra.mxu0 %v346
  %431 = vmatprep.subr.bf16.mxu0 0
  %432 = vmatpush1.bf16.msra.mxu0 %v347
  %433 = vmatprep.subr.bf16.mxu0 0
  %434 = vmatpush1.bf16.msra.mxu0 %v348
  %435 = vmatprep.subr.bf16.mxu0 0
  %436 = vmatpush1.bf16.msra.mxu0 %v349
  %437 = vmatprep.subr.bf16.mxu0 0
  %438 = vmatpush1.bf16.msra.mxu0 %v350
  %439 = vmatprep.subr.bf16.mxu0 0
  %440 = vmatpush1.bf16.msra.mxu0 %v351
  %441 = vmatprep.subr.bf16.mxu0 0
  %442 = vmatpush1.bf16.msra.mxu0 %v352
  %443 = vmatprep.subr.bf16.mxu0 0
  %444 = vmatpush1.bf16.msra.mxu0 %v353
  %445 = vmatprep.subr.bf16.mxu0 0
  %446 = vmatpush1.bf16.msra.mxu0 %v354
  %447 = vmatprep.subr.bf16.mxu0 0
  %448 = vmatpush1.bf16.msra.mxu0 %v355
  %449 = vmatprep.subr.bf16.mxu0 0
  %450 = vmatpush1.bf16.msra.mxu0 %v356
  %451 = vmatprep.subr.bf16.mxu0 0
  %452 = vmatpush1.bf16.msra.mxu0 %v357
  %453 = vmatprep.subr.bf16.mxu0 0
  %454 = vmatpush1.bf16.msra.mxu0 %v358
  %455 = vmatprep.mubr.bf16.mxu0 %v164
  %456 = vmatmul.mubr.bf16.gmra.mrb[0].mxu0 %v163
  %v457 = vpop.f32.mrb[0].mxu0
  %v458 = vadd.f32 %v114, %v457
  %v459 = vpop.f32.mrb[0].mxu0
  %v460 = vpop.f32.mrb[0].mxu0
  %v461 = vadd.f32 %v119, %v460
  %v462 = vpop.f32.mrb[0].mxu0
  %463 = vmatprep.mubr.bf16.mxu0 %v169
  %464 = vmatmul.mubr.bf16.gmra.mrb[0].mxu0 %v168
  %v465 = vpop.f32.mrb[0].mxu0
  %v466 = vadd.f32 %v124, %v465
  %v467 = vpop.f32.mrb[0].mxu0
  %v468 = vpop.f32.mrb[0].mxu0
  %v469 = vadd.f32 %v129, %v468
  %v470 = vpop.f32.mrb[0].mxu0
  %471 = vdwg.mxu0
  %472 = vmatprep.subr.bf16.mxu0 0
  %473 = vmatpush1.bf16.msra.mxu0 %v359
  %474 = vmatprep.subr.bf16.mxu0 0
  %475 = vmatpush1.bf16.msra.mxu0 %v360
  %476 = vmatprep.subr.bf16.mxu0 0
  %477 = vmatpush1.bf16.msra.mxu0 %v361
  %478 = vmatprep.subr.bf16.mxu0 0
  %479 = vmatpush1.bf16.msra.mxu0 %v362
  %480 = vmatprep.subr.bf16.mxu0 0
  %481 = vmatpush1.bf16.msra.mxu0 %v363
  %482 = vmatprep.subr.bf16.mxu0 0
  %483 = vmatpush1.bf16.msra.mxu0 %v364
  %484 = vmatprep.subr.bf16.mxu0 0
  %485 = vmatpush1.bf16.msra.mxu0 %v365
  %486 = vmatprep.subr.bf16.mxu0 0
  %487 = vmatpush1.bf16.msra.mxu0 %v366
  %488 = vmatprep.subr.bf16.mxu0 0
  %489 = vmatpush1.bf16.msra.mxu0 %v367
  %490 = vmatprep.subr.bf16.mxu0 0
  %491 = vmatpush1.bf16.msra.mxu0 %v368
  %492 = vmatprep.subr.bf16.mxu0 0
  %493 = vmatpush1.bf16.msra.mxu0 %v369
  %494 = vmatprep.subr.bf16.mxu0 0
  %495 = vmatpush1.bf16.msra.mxu0 %v370
  %496 = vmatprep.subr.bf16.mxu0 0
  %497 = vmatpush1.bf16.msra.mxu0 %v371
  %498 = vmatprep.subr.bf16.mxu0 0
  %499 = vmatpush1.bf16.msra.mxu0 %v372
  %500 = vmatprep.subr.bf16.mxu0 0
  %501 = vmatpush1.bf16.msra.mxu0 %v373
  %502 = vmatprep.subr.bf16.mxu0 0
  %503 = vmatpush1.bf16.msra.mxu0 %v374
  %504 = vmatprep.mubr.bf16.mxu0 %v166
  %505 = vmatmul.mubr.bf16.gmra.mrb[0].mxu0 %v165
  %v506 = vpop.f32.mrb[0].mxu0
  %v507 = vadd.f32 %v458, %v506
  %v508 = vpop.f32.mrb[0].mxu0
  %v509 = vpop.f32.mrb[0].mxu0
  %v510 = vadd.f32 %v461, %v509
  %v511 = vpop.f32.mrb[0].mxu0
  %512 = vmatprep.mubr.bf16.mxu0 %v171
  %513 = vmatmul.mubr.bf16.gmra.mrb[0].mxu0 %v170
  %v514 = vpop.f32.mrb[0].mxu0
  %v515 = vadd.f32 %v466, %v514
  %v516 = vpop.f32.mrb[0].mxu0
  %v517 = vpop.f32.mrb[0].mxu0
  %v518 = vadd.f32 %v469, %v517
  %v519 = vpop.f32.mrb[0].mxu0
  %520 = vdwg.mxu0
  %521 = vmatprep.subr.bf16.mxu0 0
  %522 = vmatpush1.bf16.msra.mxu0 %v375
  %523 = vmatprep.subr.bf16.mxu0 0
  %524 = vmatpush1.bf16.msra.mxu0 %v376
  %525 = vmatprep.subr.bf16.mxu0 0
  %526 = vmatpush1.bf16.msra.mxu0 %v377
  %527 = vmatprep.subr.bf16.mxu0 0
  %528 = vmatpush1.bf16.msra.mxu0 %v378
  %529 = vmatprep.subr.bf16.mxu0 0
  %530 = vmatpush1.bf16.msra.mxu0 %v379
  %531 = vmatprep.subr.bf16.mxu0 0
  %532 = vmatpush1.bf16.msra.mxu0 %v380
  %533 = vmatprep.subr.bf16.mxu0 0
  %534 = vmatpush1.bf16.msra.mxu0 %v381
  %535 = vmatprep.subr.bf16.mxu0 0
  %536 = vmatpush1.bf16.msra.mxu0 %v382
  %537 = vmatprep.subr.bf16.mxu0 0
  %538 = vmatpush1.bf16.msra.mxu0 0
  %539 = vmatprep.subr.bf16.mxu0 0
  %540 = vmatpush1.bf16.msra.mxu0 0
  %541 = vmatprep.subr.bf16.mxu0 0
  %542 = vmatpush1.bf16.msra.mxu0 0
  %543 = vmatprep.subr.bf16.mxu0 0
  %544 = vmatpush1.bf16.msra.mxu0 0
  %545 = vmatprep.subr.bf16.mxu0 0
  %546 = vmatpush1.bf16.msra.mxu0 0
  %547 = vmatprep.subr.bf16.mxu0 0
  %548 = vmatpush1.bf16.msra.mxu0 0
  %549 = vmatprep.subr.bf16.mxu0 0
  %550 = vmatpush1.bf16.msra.mxu0 0
  %551 = vmatprep.subr.bf16.mxu0 0
  %552 = vmatpush1.bf16.msra.mxu0 0
  %553 = vmatprep.mubr.bf16.mxu0 0
  %554 = vmatmul.mubr.bf16.gmra.mrb[0].mxu0 %v167
  %v555 = vpop.f32.mrb[0].mxu0
  %v556 = vadd.f32 %v507, %v555
  %v557 = vpop.f32.mrb[0].mxu0
  %v558 = vpop.f32.mrb[0].mxu0
  %v559 = vadd.f32 %v510, %v558
  %v560 = vpop.f32.mrb[0].mxu0
  %561 = vmatprep.mubr.bf16.mxu0 0
  %562 = vmatmul.mubr.bf16.gmra.mrb[0].mxu0 %v172
  %v563 = vpop.f32.mrb[0].mxu0
  %v564 = vadd.f32 %v515, %v563
  %v565 = vpop.f32.mrb[0].mxu0
  %v566 = vpop.f32.mrb[0].mxu0
  %v567 = vadd.f32 %v518, %v566
  %v568 = vpop.f32.mrb[0].mxu0
  %569 = vdwg.mxu0
  %v570 = vmax.f32 %v556, 0.0
  %v571 = vmax.f32 %v559, 0.0
  %v572 = vmax.f32 %v564, 0.0
  %v573 = vmax.f32 %v567, 0.0
  %v574 = vpack.c.bf16 %v571, %v570
  %v575 = vpack.c.bf16 %v573, %v572
  %v578 = vunpack.c.l.b16 %v574
  %v579 = vunpack.c.h.b16 %v574
  %v580 = vunpack.c.l.b16 %v575
  %v581 = vunpack.c.h.b16 %v575
  %v582 = vpack.c.b16 %v578, %v578
  %v583 = vpack.c.b16 %v579, %v579
  %v584 = vpack.c.b16 %v580, %v580
  %v585 = vpack.c.b16 %v581, %v581
  %vm590 = vcmask 257024
  %591 = vst.msk [vmem:[%s3] sm:$0xf] %vm590, %v582
  %592 = vst.msk [vmem:[%s3 + $0x4] sm:$0xf] %vm590, %v583
  %593 = vst.msk [vmem:[%s3 + $0x8] sm:$0xf] %vm590, %v584
  %594 = vst.msk [vmem:[%s3 + $0xc] sm:$0xf] %vm590, %v585
  // Predicated region
  $region14: #{convnet_forward.8} parent=0 // pred_check
    _
  $region15: #{convnet_forward.8} parent=0 // pred_check_branch
    %596 = sbr.rel (0) target = $region17
  $region16: #{convnet_forward.8} parent=0 // pred_region
    _
  $region17: #{convnet_forward.8} parent=0 // pred_fallthru
    _
  // Predicated region
  $region18: #{convnet_forward.8} parent=0 // pred_check
    _
  $region19: #{convnet_forward.8} parent=0 // pred_check_branch
    %598 = sbr.rel (0) target = $region21
  $region20: #{convnet_forward.8} parent=0 // pred_region
    _
  $region21: #{convnet_forward.8} parent=0 // pred_fallthru
    _

// kernel: convnet_forward.9
$region0: #{convnet_forward.9}
  #allocation0 [shape = 'u32[]', space=smem, size = 0x4, offset = 0x4, fixed_abs, tag = 'smem constant byte address 0x4 - core index']
  #allocation1 [shape = 'u32[144,128]{1,0:T(1,128)}', space=vmem, size = 0x12000, scoped, tag = 'internal scratch']
  %s0 = inlined_call_operand.vmem [shape: bf16[512,2], index: 0, kind: input, shape index: {}]
  %s1 = inlined_call_operand.vmem [shape: bf16[64,512], index: 1, kind: input, shape index: {}]
  %s2 = inlined_call_operand.vmem [shape: f32[64,1], index: 2, kind: input, shape index: {}]
  %s3 = inlined_call_operand.vmem [shape: f32[2,64], index: 3, kind: input, shape index: {}]
  %s4 = inlined_call_operand.vmem [shape: f32[2,1], index: 4, kind: input, shape index: {}]
  %s5 = inlined_call_operand.vmem [shape: f32[2,2], index: 5, kind: output, shape index: {}]
  %s6 = sld [smem:[#allocation0]]
  $region30: #{convnet_forward.9} parent=0
    _
  %s8 = ssub.s32 1, %s6
  %s9 = scalar_select 0, %s8, %s6
  // Predicated region
  $region2: #{convnet_forward.9} parent=0 // pred_check
    _
  $region3: #{convnet_forward.9} parent=0 // pred_check_branch
    %11 = sbr.rel (0) target = $region5
  $region4: #{convnet_forward.9} parent=0 // pred_region
    _
  $region5: #{convnet_forward.9} parent=0 // pred_fallthru
    _
  // Predicated region
  $region6: #{convnet_forward.9} parent=0 // pred_check
    _
  $region7: #{convnet_forward.9} parent=0 // pred_check_branch
    %13 = sbr.rel (0) target = $region9
  $region8: #{convnet_forward.9} parent=0 // pred_region
    _
  $region9: #{convnet_forward.9} parent=0 // pred_fallthru
    _
  // Predicated region
  $region10: #{convnet_forward.9} parent=0 // pred_check
    _
  $region11: #{convnet_forward.9} parent=0 // pred_check_branch
    %15 = sbr.rel (0) target = $region13
  $region12: #{convnet_forward.9} parent=0 // pred_region
    _
  $region13: #{convnet_forward.9} parent=0 // pred_fallthru
    _
  // Predicated region
  $region14: #{convnet_forward.9} parent=0 // pred_check
    _
  $region15: #{convnet_forward.9} parent=0 // pred_check_branch
    %17 = sbr.rel (0) target = $region17
  $region16: #{convnet_forward.9} parent=0 // pred_region
    _
  $region17: #{convnet_forward.9} parent=0 // pred_fallthru
    _
  // Predicated region
  $region18: #{convnet_forward.9} parent=0 // pred_check
    _
  $region19: #{convnet_forward.9} parent=0 // pred_check_branch
    %19 = sbr.rel (0) target = $region21
  $region20: #{convnet_forward.9} parent=0 // pred_region
    _
  $region21: #{convnet_forward.9} parent=0 // pred_fallthru
    _
  %v21 = vld [vmem:[%s1] sm:$0xff]
  %v22 = vld [vmem:[%s1 + $0x8] sm:$0xff]
  %v23 = vld [vmem:[%s1 + $0x10] sm:$0xff]
  %v24 = vld [vmem:[%s1 + $0x18] sm:$0xff]
  %v25 = vld [vmem:[%s1 + $0x20] sm:$0xff]
  %v26 = vld [vmem:[%s1 + $0x28] sm:$0xff]
  %v27 = vld [vmem:[%s1 + $0x30] sm:$0xff]
  %v28 = vld [vmem:[%s1 + $0x38] sm:$0xff]
  %v29 = vld [vmem:[%s1 + $0x40] sm:$0xff]
  %v30 = vld [vmem:[%s1 + $0x48] sm:$0xff]
  %v31 = vld [vmem:[%s1 + $0x50] sm:$0xff]
  %v32 = vld [vmem:[%s1 + $0x58] sm:$0xff]
  %v33 = vld [vmem:[%s1 + $0x60] sm:$0xff]
  %v34 = vld [vmem:[%s1 + $0x68] sm:$0xff]
  %v35 = vld [vmem:[%s1 + $0x70] sm:$0xff]
  %v36 = vld [vmem:[%s1 + $0x78] sm:$0xff]
  %v37 = vld [vmem:[%s0] sm:$0xf]
  %v38 = vld [vmem:[%s0 + $0x4] sm:$0xf]
  %v39 = vld [vmem:[%s0 + $0x8] sm:$0xf]
  %v40 = vld [vmem:[%s0 + $0xc] sm:$0xf]
  %v41 = vld [vmem:[%s0 + $0x10] sm:$0xf]
  %v42 = vld [vmem:[%s0 + $0x14] sm:$0xf]
  %v43 = vld [vmem:[%s0 + $0x18] sm:$0xf]
  %v44 = vld [vmem:[%s0 + $0x1c] sm:$0xf]
  %v45 = vld [vmem:[%s0 + $0x20] sm:$0xf]
  %v46 = vld [vmem:[%s0 + $0x24] sm:$0xf]
  %v47 = vld [vmem:[%s0 + $0x28] sm:$0xf]
  %v48 = vld [vmem:[%s0 + $0x2c] sm:$0xf]
  %v49 = vld [vmem:[%s0 + $0x30] sm:$0xf]
  %v50 = vld [vmem:[%s0 + $0x34] sm:$0xf]
  %v51 = vld [vmem:[%s0 + $0x38] sm:$0xf]
  %v52 = vld [vmem:[%s0 + $0x3c] sm:$0xf]
  %v53 = vld [vmem:[%s0 + $0x40] sm:$0xf]
  %v54 = vld [vmem:[%s0 + $0x44] sm:$0xf]
  %v55 = vld [vmem:[%s0 + $0x48] sm:$0xf]
  %v56 = vld [vmem:[%s0 + $0x4c] sm:$0xf]
  %v57 = vld [vmem:[%s0 + $0x50] sm:$0xf]
  %v58 = vld [vmem:[%s0 + $0x54] sm:$0xf]
  %v59 = vld [vmem:[%s0 + $0x58] sm:$0xf]
  %v60 = vld [vmem:[%s0 + $0x5c] sm:$0xf]
  %v61 = vld [vmem:[%s0 + $0x60] sm:$0xf]
  %v62 = vld [vmem:[%s0 + $0x64] sm:$0xf]
  %v63 = vld [vmem:[%s0 + $0x68] sm:$0xf]
  %v64 = vld [vmem:[%s0 + $0x6c] sm:$0xf]
  %v65 = vld [vmem:[%s0 + $0x70] sm:$0xf]
  %v66 = vld [vmem:[%s0 + $0x74] sm:$0xf]
  %v67 = vld [vmem:[%s0 + $0x78] sm:$0xf]
  %v68 = vld [vmem:[%s0 + $0x7c] sm:$0xf]
  %v69 = vld [vmem:[%s0 + $0x80] sm:$0xf]
  %v70 = vld [vmem:[%s0 + $0x84] sm:$0xf]
  %v71 = vld [vmem:[%s0 + $0x88] sm:$0xf]
  %v72 = vld [vmem:[%s0 + $0x8c] sm:$0xf]
  %v73 = vld [vmem:[%s0 + $0x90] sm:$0xf]
  %v74 = vld [vmem:[%s0 + $0x94] sm:$0xf]
  %v75 = vld [vmem:[%s0 + $0x98] sm:$0xf]
  %v76 = vld [vmem:[%s0 + $0x9c] sm:$0xf]
  %v77 = vld [vmem:[%s0 + $0xa0] sm:$0xf]
  %v78 = vld [vmem:[%s0 + $0xa4] sm:$0xf]
  %v79 = vld [vmem:[%s0 + $0xa8] sm:$0xf]
  %v80 = vld [vmem:[%s0 + $0xac] sm:$0xf]
  %v81 = vld [vmem:[%s0 + $0xb0] sm:$0xf]
  %v82 = vld [vmem:[%s0 + $0xb4] sm:$0xf]
  %v83 = vld [vmem:[%s0 + $0xb8] sm:$0xf]
  %v84 = vld [vmem:[%s0 + $0xbc] sm:$0xf]
  %v85 = vld [vmem:[%s0 + $0xc0] sm:$0xf]
  %v86 = vld [vmem:[%s0 + $0xc4] sm:$0xf]
  %v87 = vld [vmem:[%s0 + $0xc8] sm:$0xf]
  %v88 = vld [vmem:[%s0 + $0xcc] sm:$0xf]
  %v89 = vld [vmem:[%s0 + $0xd0] sm:$0xf]
  %v90 = vld [vmem:[%s0 + $0xd4] sm:$0xf]
  %v91 = vld [vmem:[%s0 + $0xd8] sm:$0xf]
  %v92 = vld [vmem:[%s0 + $0xdc] sm:$0xf]
  %v93 = vld [vmem:[%s0 + $0xe0] sm:$0xf]
  %v94 = vld [vmem:[%s0 + $0xe4] sm:$0xf]
  %v95 = vld [vmem:[%s0 + $0xe8] sm:$0xf]
  %v96 = vld [vmem:[%s0 + $0xec] sm:$0xf]
  %v97 = vld [vmem:[%s0 + $0xf0] sm:$0xf]
  %v98 = vld [vmem:[%s0 + $0xf4] sm:$0xf]
  %v99 = vld [vmem:[%s0 + $0xf8] sm:$0xf]
  %v100 = vld [vmem:[%s0 + $0xfc] sm:$0xf]
  %v101 = vld [vmem:[%s2] sm:$0xff]
  %v102 = vld [vmem:[%s2 + $0x8] sm:$0xff]
  %v103 = vld [vmem:[%s2 + $0x10] sm:$0xff]
  %v104 = vld [vmem:[%s2 + $0x18] sm:$0xff]
  %v105 = vld [vmem:[%s2 + $0x20] sm:$0xff]
  %v106 = vld [vmem:[%s2 + $0x28] sm:$0xff]
  %v107 = vld [vmem:[%s2 + $0x30] sm:$0xff]
  %v108 = vld [vmem:[%s2 + $0x38] sm:$0xff]
  %110 = vset.pattern.permute.xlu0 0
  %111 = vperm.xlu0 %110, %v101
  %v112 = vpop.permute.xlu0 %111
  %115 = vset.pattern.permute.xlu0 0
  %116 = vperm.xlu0 %115, %v102
  %v117 = vpop.permute.xlu0 %116
  %120 = vset.pattern.permute.xlu0 0
  %121 = vperm.xlu0 %120, %v103
  %v122 = vpop.permute.xlu0 %121
  %125 = vset.pattern.permute.xlu0 0
  %126 = vperm.xlu0 %125, %v104
  %v127 = vpop.permute.xlu0 %126
  %130 = vset.pattern.permute.xlu0 0
  %131 = vperm.xlu0 %130, %v105
  %v132 = vpop.permute.xlu0 %131
  %135 = vset.pattern.permute.xlu0 0
  %136 = vperm.xlu0 %135, %v106
  %v137 = vpop.permute.xlu0 %136
  %140 = vset.pattern.permute.xlu0 0
  %141 = vperm.xlu0 %140, %v107
  %v142 = vpop.permute.xlu0 %141
  %145 = vset.pattern.permute.xlu0 0
  %146 = vperm.xlu0 %145, %v108
  %v147 = vpop.permute.xlu0 %146
  %v165 = vunpack.c.l.b16 %v21
  %v166 = vunpack.c.h.b16 %v21
  %v167 = vunpack.c.l.b16 %v22
  %v168 = vunpack.c.h.b16 %v22
  %v169 = vunpack.c.l.b16 %v23
  %v170 = vunpack.c.h.b16 %v23
  %v171 = vunpack.c.l.b16 %v24
  %v172 = vunpack.c.h.b16 %v24
  %v173 = vunpack.c.l.b16 %v25
  %v174 = vunpack.c.h.b16 %v25
  %v175 = vunpack.c.l.b16 %v26
  %v176 = vunpack.c.h.b16 %v26
  %v177 = vunpack.c.l.b16 %v27
  %v178 = vunpack.c.h.b16 %v27
  %v179 = vunpack.c.l.b16 %v28
  %v180 = vunpack.c.h.b16 %v28
  %v181 = vunpack.c.l.b16 %v29
  %v182 = vunpack.c.h.b16 %v29
  %v183 = vunpack.c.l.b16 %v30
  %v184 = vunpack.c.h.b16 %v30
  %v185 = vunpack.c.l.b16 %v31
  %v186 = vunpack.c.h.b16 %v31
  %v187 = vunpack.c.l.b16 %v32
  %v188 = vunpack.c.h.b16 %v32
  %v189 = vunpack.c.l.b16 %v33
  %v190 = vunpack.c.h.b16 %v33
  %v191 = vunpack.c.l.b16 %v34
  %v192 = vunpack.c.h.b16 %v34
  %v193 = vunpack.c.l.b16 %v35
  %v194 = vunpack.c.h.b16 %v35
  %v195 = vunpack.c.l.b16 %v36
  %v196 = vunpack.c.h.b16 %v36
  %v197 = vpack.c.b16 %v169, %v165
  %v198 = vpack.c.b16 %v170, %v166
  %v199 = vpack.c.b16 %v171, %v167
  %v200 = vpack.c.b16 %v172, %v168
  %v201 = vpack.c.b16 %v177, %v173
  %v202 = vpack.c.b16 %v178, %v174
  %v203 = vpack.c.b16 %v179, %v175
  %v204 = vpack.c.b16 %v180, %v176
  %v205 = vpack.c.b16 %v185, %v181
  %v206 = vpack.c.b16 %v186, %v182
  %v207 = vpack.c.b16 %v187, %v183
  %v208 = vpack.c.b16 %v188, %v184
  %v209 = vpack.c.b16 %v193, %v189
  %v210 = vpack.c.b16 %v194, %v190
  %v211 = vpack.c.b16 %v195, %v191
  %v212 = vpack.c.b16 %v196, %v192
  %v293 = vunpack.c.l.b16 %v37
  %v294 = vunpack.c.l.b16 %v38
  %v295 = vunpack.c.l.b16 %v39
  %v296 = vunpack.c.l.b16 %v40
  %v297 = vunpack.c.l.b16 %v41
  %v298 = vunpack.c.l.b16 %v42
  %v299 = vunpack.c.l.b16 %v43
  %v300 = vunpack.c.l.b16 %v44
  %v301 = vunpack.c.l.b16 %v45
  %v302 = vunpack.c.l.b16 %v46
  %v303 = vunpack.c.l.b16 %v47
  %v304 = vunpack.c.l.b16 %v48
  %v305 = vunpack.c.l.b16 %v49
  %v306 = vunpack.c.l.b16 %v50
  %v307 = vunpack.c.l.b16 %v51
  %v308 = vunpack.c.l.b16 %v52
  %v309 = vunpack.c.l.b16 %v53
  %v310 = vunpack.c.l.b16 %v54
  %v311 = vunpack.c.l.b16 %v55
  %v312 = vunpack.c.l.b16 %v56
  %v313 = vunpack.c.l.b16 %v57
  %v314 = vunpack.c.l.b16 %v58
  %v315 = vunpack.c.l.b16 %v59
  %v316 = vunpack.c.l.b16 %v60
  %v317 = vunpack.c.l.b16 %v61
  %v318 = vunpack.c.l.b16 %v62
  %v319 = vunpack.c.l.b16 %v63
  %v320 = vunpack.c.l.b16 %v64
  %v321 = vunpack.c.l.b16 %v65
  %v322 = vunpack.c.l.b16 %v66
  %v323 = vunpack.c.l.b16 %v67
  %v324 = vunpack.c.l.b16 %v68
  %v325 = vunpack.c.l.b16 %v69
  %v326 = vunpack.c.l.b16 %v70
  %v327 = vunpack.c.l.b16 %v71
  %v328 = vunpack.c.l.b16 %v72
  %v329 = vunpack.c.l.b16 %v73
  %v330 = vunpack.c.l.b16 %v74
  %v331 = vunpack.c.l.b16 %v75
  %v332 = vunpack.c.l.b16 %v76
  %v333 = vunpack.c.l.b16 %v77
  %v334 = vunpack.c.l.b16 %v78
  %v335 = vunpack.c.l.b16 %v79
  %v336 = vunpack.c.l.b16 %v80
  %v337 = vunpack.c.l.b16 %v81
  %v338 = vunpack.c.l.b16 %v82
  %v339 = vunpack.c.l.b16 %v83
  %v340 = vunpack.c.l.b16 %v84
  %v341 = vunpack.c.l.b16 %v85
  %v342 = vunpack.c.l.b16 %v86
  %v343 = vunpack.c.l.b16 %v87
  %v344 = vunpack.c.l.b16 %v88
  %v345 = vunpack.c.l.b16 %v89
  %v346 = vunpack.c.l.b16 %v90
  %v347 = vunpack.c.l.b16 %v91
  %v348 = vunpack.c.l.b16 %v92
  %v349 = vunpack.c.l.b16 %v93
  %v350 = vunpack.c.l.b16 %v94
  %v351 = vunpack.c.l.b16 %v95
  %v352 = vunpack.c.l.b16 %v96
  %v353 = vunpack.c.l.b16 %v97
  %v354 = vunpack.c.l.b16 %v98
  %v355 = vunpack.c.l.b16 %v99
  %v356 = vunpack.c.l.b16 %v100
  %v357 = vpack.c.b16 %v294, %v293
  %v358 = vpack.c.b16 %v296, %v295
  %v359 = vpack.c.b16 %v298, %v297
  %v360 = vpack.c.b16 %v300, %v299
  %v361 = vpack.c.b16 %v302, %v301
  %v362 = vpack.c.b16 %v304, %v303
  %v363 = vpack.c.b16 %v306, %v305
  %v364 = vpack.c.b16 %v308, %v307
  %v365 = vpack.c.b16 %v310, %v309
  %v366 = vpack.c.b16 %v312, %v311
  %v367 = vpack.c.b16 %v314, %v313
  %v368 = vpack.c.b16 %v316, %v315
  %v369 = vpack.c.b16 %v318, %v317
  %v370 = vpack.c.b16 %v320, %v319
  %v371 = vpack.c.b16 %v322, %v321
  %v372 = vpack.c.b16 %v324, %v323
  %v373 = vpack.c.b16 %v326, %v325
  %v374 = vpack.c.b16 %v328, %v327
  %v375 = vpack.c.b16 %v330, %v329
  %v376 = vpack.c.b16 %v332, %v331
  %v377 = vpack.c.b16 %v334, %v333
  %v378 = vpack.c.b16 %v336, %v335
  %v379 = vpack.c.b16 %v338, %v337
  %v380 = vpack.c.b16 %v340, %v339
  %v381 = vpack.c.b16 %v342, %v341
  %v382 = vpack.c.b16 %v344, %v343
  %v383 = vpack.c.b16 %v346, %v345
  %v384 = vpack.c.b16 %v348, %v347
  %v385 = vpack.c.b16 %v350, %v349
  %v386 = vpack.c.b16 %v352, %v351
  %v387 = vpack.c.b16 %v354, %v353
  %v388 = vpack.c.b16 %v356, %v355
  %421 = vmatprep.subr.bf16.mxu0 0
  %422 = vmatpush1.bf16.msra.mxu0 %v357
  %423 = vmatprep.subr.bf16.mxu0 0
  %424 = vmatpush1.bf16.msra.mxu0 %v358
  %425 = vmatprep.subr.bf16.mxu0 0
  %426 = vmatpush1.bf16.msra.mxu0 %v359
  %427 = vmatprep.subr.bf16.mxu0 0
  %428 = vmatpush1.bf16.msra.mxu0 %v360
  %429 = vmatprep.subr.bf16.mxu0 0
  %430 = vmatpush1.bf16.msra.mxu0 %v361
  %431 = vmatprep.subr.bf16.mxu0 0
  %432 = vmatpush1.bf16.msra.mxu0 %v362
  %433 = vmatprep.subr.bf16.mxu0 0
  %434 = vmatpush1.bf16.msra.mxu0 %v363
  %435 = vmatprep.subr.bf16.mxu0 0
  %436 = vmatpush1.bf16.msra.mxu0 %v364
  %437 = vmatprep.subr.bf16.mxu0 0
  %438 = vmatpush1.bf16.msra.mxu0 %v365
  %439 = vmatprep.subr.bf16.mxu0 0
  %440 = vmatpush1.bf16.msra.mxu0 %v366
  %441 = vmatprep.subr.bf16.mxu0 0
  %442 = vmatpush1.bf16.msra.mxu0 %v367
  %443 = vmatprep.subr.bf16.mxu0 0
  %444 = vmatpush1.bf16.msra.mxu0 %v368
  %445 = vmatprep.subr.bf16.mxu0 0
  %446 = vmatpush1.bf16.msra.mxu0 %v369
  %447 = vmatprep.subr.bf16.mxu0 0
  %448 = vmatpush1.bf16.msra.mxu0 %v370
  %449 = vmatprep.subr.bf16.mxu0 0
  %450 = vmatpush1.bf16.msra.mxu0 %v371
  %451 = vmatprep.subr.bf16.mxu0 0
  %452 = vmatpush1.bf16.msra.mxu0 %v372
  %453 = vmatprep.mubr.bf16.mxu0 %v198
  %454 = vmatmul.mubr.bf16.gmra.mrb[0].mxu0 %v197
  %v455 = vpop.f32.mrb[0].mxu0
  %v456 = vadd.f32 %v112, %v455
  %v457 = vpop.f32.mrb[0].mxu0
  %v458 = vpop.f32.mrb[0].mxu0
  %v459 = vadd.f32 %v117, %v458
  %v460 = vpop.f32.mrb[0].mxu0
  %461 = vmatprep.mubr.bf16.mxu0 %v202
  %462 = vmatmul.mubr.bf16.gmra.mrb[0].mxu0 %v201
  %v463 = vpop.f32.mrb[0].mxu0
  %v464 = vadd.f32 %v122, %v463
  %v465 = vpop.f32.mrb[0].mxu0
  %v466 = vpop.f32.mrb[0].mxu0
  %v467 = vadd.f32 %v127, %v466
  %v468 = vpop.f32.mrb[0].mxu0
  %469 = vmatprep.mubr.bf16.mxu0 %v206
  %470 = vmatmul.mubr.bf16.gmra.mrb[0].mxu0 %v205
  %v471 = vpop.f32.mrb[0].mxu0
  %v472 = vadd.f32 %v132, %v471
  %v473 = vpop.f32.mrb[0].mxu0
  %v474 = vpop.f32.mrb[0].mxu0
  %v475 = vadd.f32 %v137, %v474
  %v476 = vpop.f32.mrb[0].mxu0
  %477 = vmatprep.mubr.bf16.mxu0 %v210
  %478 = vmatmul.mubr.bf16.gmra.mrb[0].mxu0 %v209
  %v479 = vpop.f32.mrb[0].mxu0
  %v480 = vadd.f32 %v142, %v479
  %v481 = vpop.f32.mrb[0].mxu0
  %v482 = vpop.f32.mrb[0].mxu0
  %v483 = vadd.f32 %v147, %v482
  %v484 = vpop.f32.mrb[0].mxu0
  %485 = vdwg.mxu0
  %486 = vmatprep.subr.bf16.mxu0 0
  %487 = vmatpush1.bf16.msra.mxu0 %v373
  %488 = vmatprep.subr.bf16.mxu0 0
  %489 = vmatpush1.bf16.msra.mxu0 %v374
  %490 = vmatprep.subr.bf16.mxu0 0
  %491 = vmatpush1.bf16.msra.mxu0 %v375
  %492 = vmatprep.subr.bf16.mxu0 0
  %493 = vmatpush1.bf16.msra.mxu0 %v376
  %494 = vmatprep.subr.bf16.mxu0 0
  %495 = vmatpush1.bf16.msra.mxu0 %v377
  %496 = vmatprep.subr.bf16.mxu0 0
  %497 = vmatpush1.bf16.msra.mxu0 %v378
  %498 = vmatprep.subr.bf16.mxu0 0
  %499 = vmatpush1.bf16.msra.mxu0 %v379
  %500 = vmatprep.subr.bf16.mxu0 0
  %501 = vmatpush1.bf16.msra.mxu0 %v380
  %502 = vmatprep.subr.bf16.mxu0 0
  %503 = vmatpush1.bf16.msra.mxu0 %v381
  %504 = vmatprep.subr.bf16.mxu0 0
  %505 = vmatpush1.bf16.msra.mxu0 %v382
  %506 = vmatprep.subr.bf16.mxu0 0
  %507 = vmatpush1.bf16.msra.mxu0 %v383
  %508 = vmatprep.subr.bf16.mxu0 0
  %509 = vmatpush1.bf16.msra.mxu0 %v384
  %510 = vmatprep.subr.bf16.mxu0 0
  %511 = vmatpush1.bf16.msra.mxu0 %v385
  %512 = vmatprep.subr.bf16.mxu0 0
  %513 = vmatpush1.bf16.msra.mxu0 %v386
  %514 = vmatprep.subr.bf16.mxu0 0
  %515 = vmatpush1.bf16.msra.mxu0 %v387
  %516 = vmatprep.subr.bf16.mxu0 0
  %517 = vmatpush1.bf16.msra.mxu0 %v388
  %518 = vmatprep.mubr.bf16.mxu0 %v200
  %519 = vmatmul.mubr.bf16.gmra.mrb[0].mxu0 %v199
  %v520 = vpop.f32.mrb[0].mxu0
  %v521 = vadd.f32 %v456, %v520
  %v522 = vpop.f32.mrb[0].mxu0
  %v523 = vpop.f32.mrb[0].mxu0
  %v524 = vadd.f32 %v459, %v523
  %v525 = vpop.f32.mrb[0].mxu0
  %526 = vmatprep.mubr.bf16.mxu0 %v204
  %527 = vmatmul.mubr.bf16.gmra.mrb[0].mxu0 %v203
  %v528 = vpop.f32.mrb[0].mxu0
  %v529 = vadd.f32 %v464, %v528
  %v530 = vpop.f32.mrb[0].mxu0
  %v531 = vpop.f32.mrb[0].mxu0
  %v532 = vadd.f32 %v467, %v531
  %v533 = vpop.f32.mrb[0].mxu0
  %534 = vmatprep.mubr.bf16.mxu0 %v208
  %535 = vmatmul.mubr.bf16.gmra.mrb[0].mxu0 %v207
  %v536 = vpop.f32.mrb[0].mxu0
  %v537 = vadd.f32 %v472, %v536
  %v538 = vpop.f32.mrb[0].mxu0
  %v539 = vpop.f32.mrb[0].mxu0
  %v540 = vadd.f32 %v475, %v539
  %v541 = vpop.f32.mrb[0].mxu0
  %542 = vmatprep.mubr.bf16.mxu0 %v212
  %543 = vmatmul.mubr.bf16.gmra.mrb[0].mxu0 %v211
  %v544 = vpop.f32.mrb[0].mxu0
  %v545 = vadd.f32 %v480, %v544
  %v546 = vpop.f32.mrb[0].mxu0
  %v547 = vpop.f32.mrb[0].mxu0
  %v548 = vadd.f32 %v483, %v547
  %v549 = vpop.f32.mrb[0].mxu0
  %550 = vdwg.mxu0
  %v551 = vmax.f32 %v521, 0.0
  %v552 = vmax.f32 %v524, 0.0
  %v553 = vmax.f32 %v529, 0.0
  %v554 = vmax.f32 %v532, 0.0
  %v555 = vmax.f32 %v537, 0.0
  %v556 = vmax.f32 %v540, 0.0
  %v557 = vmax.f32 %v545, 0.0
  %v558 = vmax.f32 %v548, 0.0
  %v559 = vld [vmem:[%s3] sm:$0x3]
  %v560 = vld [vmem:[%s4] sm:$0x3]
  %562 = vset.pattern.permute.xlu0 0
  %563 = vperm.xlu0 %562, %v560
  %v564 = vpop.permute.xlu0 %563
  %vm566 = vcmask 523264
  %v568 = vsel %vm566, %v559, 0
  %570 = vmatprep.subr.mxu0 0.0
  %571 = vmatpush1.msra.mxu0 %v551
  %572 = vmatprep.subr.mxu0 0.0
  %573 = vmatpush1.msra.mxu0 %v552
  %574 = vmatprep.subr.mxu0 0.0
  %575 = vmatpush1.msra.mxu0 %v553
  %576 = vmatprep.subr.mxu0 0.0
  %577 = vmatpush1.msra.mxu0 %v554
  %578 = vmatprep.subr.mxu0 0.0
  %579 = vmatpush1.msra.mxu0 %v555
  %580 = vmatprep.subr.mxu0 0.0
  %581 = vmatpush1.msra.mxu0 %v556
  %582 = vmatprep.subr.mxu0 0.0
  %583 = vmatpush1.msra.mxu0 %v557
  %584 = vmatprep.subr.mxu0 0.0
  %585 = vmatpush1.msra.mxu0 %v558
  %586 = vmatprep.subr.mxu0 0.0
  %587 = vmatpush1.msra.mxu0 0.0
  %588 = vmatprep.subr.mxu0 0.0
  %589 = vmatpush1.msra.mxu0 0.0
  %590 = vmatprep.subr.mxu0 0.0
  %591 = vmatpush1.msra.mxu0 0.0
  %592 = vmatprep.subr.mxu0 0.0
  %593 = vmatpush1.msra.mxu0 0.0
  %594 = vmatprep.subr.mxu0 0.0
  %595 = vmatpush1.msra.mxu0 0.0
  %596 = vmatprep.subr.mxu0 0.0
  %597 = vmatpush1.msra.mxu0 0.0
  %598 = vmatprep.subr.mxu0 0.0
  %599 = vmatpush1.msra.mxu0 0.0
  %600 = vmatprep.subr.mxu0 0.0
  %601 = vmatpush1.msra.mxu0 0.0
  %602 = vmatprep.subr.mxu0 0.0
  %603 = vmatpush1.msra.mxu0 0.0
  %604 = vmatprep.subr.mxu0 0.0
  %605 = vmatpush1.msra.mxu0 0.0
  %606 = vmatprep.subr.mxu0 0.0
  %607 = vmatpush1.msra.mxu0 0.0
  %608 = vmatprep.subr.mxu0 0.0
  %609 = vmatpush1.msra.mxu0 0.0
  %610 = vmatprep.subr.mxu0 0.0
  %611 = vmatpush1.msra.mxu0 0.0
  %612 = vmatprep.subr.mxu0 0.0
  %613 = vmatpush1.msra.mxu0 0.0
  %614 = vmatprep.subr.mxu0 0.0
  %615 = vmatpush1.msra.mxu0 0.0
  %616 = vmatprep.subr.mxu0 0.0
  %617 = vmatpush1.msra.mxu0 0.0
  %618 = vmatprep.subr.mxu0 0.0
  %619 = vmatpush1.msra.mxu0 0.0
  %620 = vmatprep.subr.mxu0 0.0
  %621 = vmatpush1.msra.mxu0 0.0
  %622 = vmatprep.subr.mxu0 0.0
  %623 = vmatpush1.msra.mxu0 0.0
  %624 = vmatprep.subr.mxu0 0.0
  %625 = vmatpush1.msra.mxu0 0.0
  %626 = vmatprep.subr.mxu0 0.0
  %627 = vmatpush1.msra.mxu0 0.0
  %628 = vmatprep.subr.mxu0 0.0
  %629 = vmatpush1.msra.mxu0 0.0
  %630 = vmatprep.subr.mxu0 0.0
  %631 = vmatpush1.msra.mxu0 0.0
  %632 = vmatprep.subr.mxu0 0.0
  %633 = vmatpush1.msra.mxu0 0.0
  %634 = vmatprep.mubr.f32.mxu0 0.0
  %635 = vmatmul.mubr.f32.gmra.mrb[0].mxu0 %v568
  %v636 = vpop.f32.mrb[0].mxu0
  %v637 = vadd.f32 %v564, %v636
  %v638 = vpop.f32.mrb[0].mxu0
  %639 = vdwg.mxu0
  %vm640 = vcmask 9216
  %641 = vst.msk [vmem:[%s5] sm:$0x3] %vm640, %v637
  // Predicated region
  $region22: #{convnet_forward.9} parent=0 // pred_check
    _
  $region23: #{convnet_forward.9} parent=0 // pred_check_branch
    %643 = sbr.rel (0) target = $region25
  $region24: #{convnet_forward.9} parent=0 // pred_region
    _
  $region25: #{convnet_forward.9} parent=0 // pred_fallthru
    _
  // Predicated region
  $region26: #{convnet_forward.9} parent=0 // pred_check
    _
  $region27: #{convnet_forward.9} parent=0 // pred_check_branch
    %645 = sbr.rel (0) target = $region29
  $region28: #{convnet_forward.9} parent=0 // pred_region
    _
  $region29: #{convnet_forward.9} parent=0 // pred_fallthru
    _

</llo_original>
